<compile_context>
chip_gen: v7x
topology: tpu7x:2x2x1
jax: 0.10.0
libtpu: 0.0.40
codegen_flags: <defaults>
</compile_context>

<pallas_src>
import math
from functools import partial

import jax
import jax.numpy as jnp
from jax.experimental import pallas as pl
from jax.experimental.pallas import tpu as pltpu


# ---------------------------------------------------------------------------
# Fused Bottleneck1 kernel (B batch images per grid step)
# ---------------------------------------------------------------------------

def _bottleneck_kernel(*refs, B, H, W, P, has_shortcut):
    if has_shortcut:
        (x_ref, w1_ref, b1_ref, w2_ref, b2_ref, w3_ref, b3_ref,
         ws_ref, bs_ref, y2_ref, y_ref, u_ref) = refs
    else:
        (x_ref, w1_ref, b1_ref, w2_ref, b2_ref, w3_ref, b3_ref,
         y2_ref, y_ref, u_ref) = refs
        ws_ref = bs_ref = None

    HW = H * W
    M = B * HW
    NT = 9 * P                              # wide "per-tap" channel dim (lane-dense)
    cdt = w1_ref.dtype                      # matmul compute dtype (bf16)

    x = x_ref[...]                          # (B, H, W, Cin) f32
    cin = x.shape[-1]
    x_flat = x.reshape(M, cin)              # f32, kept for the identity residual
    x_mm = x_flat.astype(cdt)

    # ---- conv1 (1x1, BN scale folded into w1) + bias + ReLU -----------------
    h1 = jnp.dot(x_mm, w1_ref[...], preferred_element_type=jnp.float32)
    h1 = jnp.maximum(h1 + b1_ref[...], 0.0)                    # (M, P) f32

    # ---- conv2 (3x3, stride 1, pad 1): shift-after-matmul -------------------
    # One MXU pass produces, for every pixel, all 9 per-tap contributions
    # (N = 9P = 288, lane-dense); the 3x3 spatial reduction then becomes 9
    # shifted adds through a zero-haloed VMEM scratch.
    u = jnp.dot(h1.astype(cdt), w2_ref[...],
                preferred_element_type=jnp.float32)             # (M, 9P) f32

    # Zero only the 1-pixel halo (rows 0 / H+1, cols 0 / W+1).  NOTE: done every
    # step (not under pl.when(program_id == 0)) so it stays correct when the
    # "parallel" batch axis is split across TensorCores.  The interior is fully
    # overwritten below, so nothing else needs clearing.
    u_ref[:, 0:1, :, :] = jnp.zeros((B, 1, W + 2, NT), jnp.float32)
    u_ref[:, H + 1:H + 2, :, :] = jnp.zeros((B, 1, W + 2, NT), jnp.float32)
    u_ref[:, :, 0:1, :] = jnp.zeros((B, H + 2, 1, NT), jnp.float32)
    u_ref[:, :, W + 1:W + 2, :] = jnp.zeros((B, H + 2, 1, NT), jnp.float32)
    u_ref[:, 1:H + 1, 1:W + 1, :] = u.reshape(B, H, W, NT)

    acc = None
    for ky in range(3):
        for kx in range(3):
            tap = ky * 3 + kx
            contrib = u_ref[:, ky:ky + H, kx:kx + W, tap * P:(tap + 1) * P]
            acc = contrib if acc is None else acc + contrib     # (B, H, W, P) f32
    h2 = jnp.maximum(acc.reshape(M, P) + b2_ref[...], 0.0)      # (M, P) f32

    # ---- conv3 (1x1, BN scale folded) + bias (no ReLU) ----------------------
    y = jnp.dot(h2.astype(cdt), w3_ref[...],
                preferred_element_type=jnp.float32)
    y = y + b3_ref[...]                                          # (M, 4P) f32

    # ---- residual (identity or fused 1x1-conv + BN projection) + ReLU -------
    if has_shortcut:
        res = jnp.dot(x_mm, ws_ref[...],
                      preferred_element_type=jnp.float32) + bs_ref[...]
    else:
        res = x_flat                                             # Cin == 4P
    y2 = jnp.maximum(res + y, 0.0)

    c4 = y_ref.shape[-1]
    y_ref[...] = y.reshape(B, H, W, c4).astype(y_ref.dtype)      # lane-dense stores
    y2_ref[...] = y2.reshape(B, H, W, c4).astype(y2_ref.dtype)


# ---------------------------------------------------------------------------
# Wrapper around pallas_call (NHWC end-to-end, no layout passes)
# ---------------------------------------------------------------------------

@partial(jax.jit, static_argnames=("out_dtype",))
def bottleneck1_forward(x_nhwc, kparams, out_dtype=jnp.float32):
    """x_nhwc: (N, H, W, Cin).  Returns (y2, y) in NHWC."""
    x = x_nhwc.astype(jnp.float32)
    N, H, W, Cin = x.shape
    P = kparams["w1"].shape[-1]
    c4 = kparams["w3"].shape[-1]
    has_shortcut = "ws" in kparams
    if not has_shortcut:
        assert Cin == c4, "identity residual requires in_planes == 4 * planes"

    # Images per grid step: largest divisor of N up to 4 (keeps the working set
    # well inside v7x's 64 MiB VMEM while amortizing per-step overhead).
    B = 1
    for cand in (4, 2, 1):
        if N % cand == 0:
            B = cand
            break

    args = [
        x,
        kparams["w1"], kparams["b1"],
        kparams["w2"], kparams["b2"],
        kparams["w3"], kparams["b3"],
    ]
    in_specs = [
        pl.BlockSpec((B, H, W, Cin), lambda n: (n, 0, 0, 0)),
        pl.BlockSpec((Cin, P), lambda n: (0, 0)),
        pl.BlockSpec((1, P), lambda n: (0, 0)),
        pl.BlockSpec((P, 9 * P), lambda n: (0, 0)),
        pl.BlockSpec((1, P), lambda n: (0, 0)),
        pl.BlockSpec((P, c4), lambda n: (0, 0)),
        pl.BlockSpec((1, c4), lambda n: (0, 0)),
    ]
    if has_shortcut:
        args += [kparams["ws"], kparams["bs"]]
        in_specs += [
            pl.BlockSpec((Cin, c4), lambda n: (0, 0)),
            pl.BlockSpec((1, c4), lambda n: (0, 0)),
        ]

    kernel = partial(_bottleneck_kernel, B=B, H=H, W=W, P=P,
                     has_shortcut=has_shortcut)

    y2, y = pl.pallas_call(
        kernel,
        out_shape=(jax.ShapeDtypeStruct((N, H, W, c4), out_dtype),
                   jax.ShapeDtypeStruct((N, H, W, c4), out_dtype)),
        grid=(N // B,),
        in_specs=in_specs,
        out_specs=(pl.BlockSpec((B, H, W, c4), lambda n: (n, 0, 0, 0)),
                   pl.BlockSpec((B, H, W, c4), lambda n: (n, 0, 0, 0))),
        scratch_shapes=[pltpu.VMEM((B, H + 2, W + 2, 9 * P), jnp.float32)],
        compiler_params=pltpu.CompilerParams(
            dimension_semantics=("parallel",),
            vmem_limit_bytes=32 * 1024 * 1024,
        ),
    )(*args)
    return y2, y


def bottleneck1_forward_nchw(x_nchw, kparams, out_dtype=jnp.float32):
    """Compatibility adapter for NCHW callers.  Prefer bottleneck1_forward
    (NHWC end-to-end) in a full network to avoid the layout passes."""
    x = jnp.transpose(x_nchw, (0, 2, 3, 1))
    y2, y = bottleneck1_forward(x, kparams, out_dtype=out_dtype)
    t = lambda a: jnp.transpose(a, (0, 3, 1, 2))
    return t(y2), t(y)


# ---------------------------------------------------------------------------
# Parameter setup: PyTorch-layout raw params -> folded kernel params
# ---------------------------------------------------------------------------

def _fold_bn_into_conv(conv_w, bn, eps=1e-5):
    """Fold inference-mode BN into the conv weight (per output channel) in f32."""
    scale = bn["gamma"] / jnp.sqrt(bn["var"] + eps)              # (O,)
    bias = bn["beta"] - bn["mean"] * scale                       # (O,)
    w = conv_w.astype(jnp.float32) * scale[:, None, None, None]  # fold BEFORE bf16 cast
    return w, bias.astype(jnp.float32)


def prepare_params(raw, compute_dtype=jnp.bfloat16):
    """Fold BN (inference mode) and convert conv weights to kernel layout."""
    # TODO(synk): stride > 1 is not implemented in the fused kernel; the module
    # default (stride=1) is what is supported here.
    assert raw["stride"] == 1
    p = {}

    w1, b1 = _fold_bn_into_conv(raw["conv1_w"], raw["bn1"])
    p["w1"] = jnp.transpose(w1[:, :, 0, 0], (1, 0)).astype(compute_dtype)   # (Cin, P)
    p["b1"] = b1.reshape(1, -1)

    w2, b2 = _fold_bn_into_conv(raw["conv2_w"], raw["bn2"])
    # (O, I, 3, 3) -> wide (I, 9*O): column (ky*3+kx)*P + co  <->  w2[co, ci, ky, kx]
    p["w2"] = jnp.transpose(w2, (1, 2, 3, 0)).reshape(w2.shape[1], -1).astype(compute_dtype)
    p["b2"] = b2.reshape(1, -1)

    w3, b3 = _fold_bn_into_conv(raw["conv3_w"], raw["bn3"])
    p["w3"] = jnp.transpose(w3[:, :, 0, 0], (1, 0)).astype(compute_dtype)   # (P, 4P)
    p["b3"] = b3.reshape(1, -1)

    if raw.get("shortcut") is not None:
        # TODO(synk): only the standard 1x1-conv + BN projection shortcut is
        # supported (arbitrary user-supplied shortcut modules are not).
        ws, bs = _fold_bn_into_conv(raw["shortcut"]["conv_w"], raw["shortcut"]["bn"])
        p["ws"] = jnp.transpose(ws[:, :, 0, 0], (1, 0)).astype(compute_dtype)
        p["bs"] = bs.reshape(1, -1)
    return p


def init_bottleneck_params(key, in_planes, planes, with_shortcut, stride=1):
    expansion = 4
    out_planes = planes * expansion
    ks = jax.random.split(key, 8)

    def conv_w(k, cout, cin, kh, kw):
        fan_in = cin * kh * kw
        return jax.random.normal(k, (cout, cin, kh, kw), jnp.float32) / math.sqrt(fan_in)

    def bn_params(k, c):
        k1, k2, k3, k4 = jax.random.split(k, 4)
        return {
            "gamma": 1.0 + 0.1 * jax.random.normal(k1, (c,), jnp.float32),
            "beta": 0.1 * jax.random.normal(k2, (c,), jnp.float32),
            "mean": 0.1 * jax.random.normal(k3, (c,), jnp.float32),
            "var": 1.0 + 0.1 * jax.random.uniform(k4, (c,), jnp.float32),
        }

    raw = {
        "stride": stride,
        "conv1_w": conv_w(ks[0], planes, in_planes, 1, 1),
        "bn1": bn_params(ks[1], planes),
        "conv2_w": conv_w(ks[2], planes, planes, 3, 3),
        "bn2": bn_params(ks[3], planes),
        "conv3_w": conv_w(ks[4], out_planes, planes, 1, 1),
        "bn3": bn_params(ks[5], out_planes),
        "shortcut": None,
    }
    if with_shortcut:
        raw["shortcut"] = {
            "conv_w": conv_w(ks[6], out_planes, in_planes, 1, 1),
            "bn": bn_params(ks[7], out_planes),
        }
    return raw


# ---------------------------------------------------------------------------
# Pure-JAX reference (inference-mode BN), NHWC, for correctness checking
# ---------------------------------------------------------------------------

def _conv2d_nhwc(x, w_oihw, stride=1, padding=0):
    return jax.lax.conv_general_dilated(
        x, w_oihw, window_strides=(stride, stride),
        padding=((padding, padding), (padding, padding)),
        dimension_numbers=("NHWC", "OIHW", "NHWC"))


def _bn_nhwc(x, bn, eps=1e-5):
    scale = bn["gamma"] / jnp.sqrt(bn["var"] + eps)
    bias = bn["beta"] - bn["mean"] * scale
    return x * scale + bias


def bottleneck1_reference(x, raw):
    h = jax.nn.relu(_bn_nhwc(_conv2d_nhwc(x, raw["conv1_w"]), raw["bn1"]))
    h = jax.nn.relu(_bn_nhwc(
        _conv2d_nhwc(h, raw["conv2_w"], stride=raw["stride"], padding=1), raw["bn2"]))
    y = _bn_nhwc(_conv2d_nhwc(h, raw["conv3_w"]), raw["bn3"])
    if raw.get("shortcut") is not None:
        res = _bn_nhwc(_conv2d_nhwc(x, raw["shortcut"]["conv_w"], stride=raw["stride"]),
                       raw["shortcut"]["bn"])
    else:
        res = x
    y2 = jax.nn.relu(res + y)
    return y2, y


# ---------------------------------------------------------------------------
# Main
# ---------------------------------------------------------------------------

if __name__ == "__main__":
    key = jax.random.PRNGKey(0)
    k1, k2, kx1, kx2 = jax.random.split(key, 4)

    # Case 1: identity residual (shortcut=None): in_planes == planes * 4, f32 out
    raw1 = init_bottleneck_params(k1, in_planes=128, planes=32, with_shortcut=False)
    kp1 = prepare_params(raw1)
    x1 = jax.random.normal(kx1, (2, 16, 16, 128), jnp.float32)    # NHWC
    y2_a, y_a = bottleneck1_forward(x1, kp1)
    y2_ra, y_ra = bottleneck1_reference(x1, raw1)

    # Case 2: projection shortcut (1x1 conv + BN), bf16 outputs (halved HBM writes)
    raw2 = init_bottleneck_params(k2, in_planes=64, planes=32, with_shortcut=True)
    kp2 = prepare_params(raw2)
    x2 = jax.random.normal(kx2, (2, 16, 16, 64), jnp.float32)     # NHWC
    y2_b, y_b = bottleneck1_forward(x2, kp2, out_dtype=jnp.bfloat16)
    y2_rb, y_rb = bottleneck1_reference(x2, raw2)

    jax.block_until_ready((y2_a, y_a, y2_b, y_b))

    assert y2_a.shape == (2, 16, 16, 128) and y_a.shape == (2, 16, 16, 128)
    assert y2_b.shape == (2, 16, 16, 128) and y_b.shape == (2, 16, 16, 128)

    def check(got, want, name, tol=2e-2):
        assert got.shape == want.shape, name
        got = got.astype(jnp.float32)
        assert bool(jnp.all(jnp.isfinite(got))), name
        num = float(jnp.linalg.norm((got - want).ravel()))
        den = float(jnp.linalg.norm(want.ravel())) + 1e-6
        assert num / den < tol, (name, num / den)    # bf16-matmul tolerance

    check(y2_a, y2_ra, "y2 identity")
    check(y_a, y_ra, "y identity")
    check(y2_b, y2_rb, "y2 projection (bf16 out)")
    check(y_b, y_rb, "y projection (bf16 out)")

    print("KERNEL_OK")
</pallas_src>

<mosaic_0001>
module attributes {stable_mosaic.version = 11 : i64} {
  func.func @_bottleneck_kernel(%arg0: i32, %arg1: memref<2x16x16x128xf32, #tpu.memory_space<vmem>>, %arg2: memref<128x32xbf16, #tpu.memory_space<vmem>>, %arg3: memref<1x32xf32, #tpu.memory_space<vmem>>, %arg4: memref<32x288xbf16, #tpu.memory_space<vmem>>, %arg5: memref<1x32xf32, #tpu.memory_space<vmem>>, %arg6: memref<32x128xbf16, #tpu.memory_space<vmem>>, %arg7: memref<1x128xf32, #tpu.memory_space<vmem>>, %arg8: memref<2x16x16x128xf32, #tpu.memory_space<vmem>>, %arg9: memref<2x16x16x128xf32, #tpu.memory_space<vmem>>, %arg10: memref<2x18x18x288xf32, #tpu.memory_space<vmem>>) attributes {dimension_semantics = [#tpu.dimension_semantics<parallel>], iteration_bounds = array<i64: 1>, scalar_prefetch = 0 : i64, scratch_operands = 1 : i64, tpu.core_type = #tpu.core_type<tc>, window_params = [{transform_indices = @transform_0, window_bounds = array<i64: 2, 16, 16, 128>}, {pipeline_mode = #tpu.pipeline_mode<synchronous>, transform_indices = @transform_1, window_bounds = array<i64: 128, 32>}, {pipeline_mode = #tpu.pipeline_mode<synchronous>, transform_indices = @transform_2, window_bounds = array<i64: 1, 32>}, {pipeline_mode = #tpu.pipeline_mode<synchronous>, transform_indices = @transform_3, window_bounds = array<i64: 32, 288>}, {pipeline_mode = #tpu.pipeline_mode<synchronous>, transform_indices = @transform_4, window_bounds = array<i64: 1, 32>}, {pipeline_mode = #tpu.pipeline_mode<synchronous>, transform_indices = @transform_5, window_bounds = array<i64: 32, 128>}, {pipeline_mode = #tpu.pipeline_mode<synchronous>, transform_indices = @transform_6, window_bounds = array<i64: 1, 128>}, {transform_indices = @transform_7, window_bounds = array<i64: 2, 16, 16, 128>}, {transform_indices = @transform_8, window_bounds = array<i64: 2, 16, 16, 128>}]} {
    %c0 = arith.constant 0 : index
    %c0_0 = arith.constant 0 : index
    %c0_1 = arith.constant 0 : index
    %c0_2 = arith.constant 0 : index
    %0 = vector.load %arg1[%c0, %c0_0, %c0_1, %c0_2] : memref<2x16x16x128xf32, #tpu.memory_space<vmem>>, vector<2x16x16x128xf32>
    %1 = vector.shape_cast %0 : vector<2x16x16x128xf32> to vector<512x128xf32>
    %2 = arith.truncf %1 : vector<512x128xf32> to vector<512x128xbf16>
    %c0_3 = arith.constant 0 : index
    %c0_4 = arith.constant 0 : index
    %3 = vector.load %arg2[%c0_3, %c0_4] : memref<128x32xbf16, #tpu.memory_space<vmem>>, vector<128x32xbf16>
    %cst = arith.constant dense<0.000000e+00> : vector<512x32xf32>
    %4 = tpu.matmul %2, %3, %cst {dimension_numbers = #tpu.dot_dimension_numbers<[1], [0], [0], [1], [0, 0, 1, 1], [], []>} : vector<512x128xbf16>, vector<128x32xbf16>, vector<512x32xf32> -> vector<512x32xf32>
    %c0_5 = arith.constant 0 : index
    %c0_6 = arith.constant 0 : index
    %5 = vector.load %arg3[%c0_5, %c0_6] : memref<1x32xf32, #tpu.memory_space<vmem>>, vector<1x32xf32>
    %6 = vector.broadcast %5 : vector<1x32xf32> to vector<512x32xf32>
    %7 = arith.addf %4, %6 : vector<512x32xf32>
    %cst_7 = arith.constant 0.000000e+00 : f32
    %8 = vector.broadcast %cst_7 : f32 to vector<512x32xf32>
    %9 = arith.maximumf %7, %8 : vector<512x32xf32>
    %10 = arith.truncf %9 : vector<512x32xf32> to vector<512x32xbf16>
    %c0_8 = arith.constant 0 : index
    %c0_9 = arith.constant 0 : index
    %11 = vector.load %arg4[%c0_8, %c0_9] : memref<32x288xbf16, #tpu.memory_space<vmem>>, vector<32x288xbf16>
    %cst_10 = arith.constant dense<0.000000e+00> : vector<512x288xf32>
    %12 = tpu.matmul %10, %11, %cst_10 {dimension_numbers = #tpu.dot_dimension_numbers<[1], [0], [0], [1], [0, 0, 1, 1], [], []>} : vector<512x32xbf16>, vector<32x288xbf16>, vector<512x288xf32> -> vector<512x288xf32>
    %cst_11 = arith.constant 0.000000e+00 : f32
    %13 = vector.broadcast %cst_11 : f32 to vector<2x1x18x288xf32>
    %c0_12 = arith.constant 0 : index
    %c0_13 = arith.constant 0 : index
    %c0_14 = arith.constant 0 : index
    %c0_15 = arith.constant 0 : index
    %14 = vector.load %arg10[%c0_12, %c0_13, %c0_14, %c0_15] : memref<2x18x18x288xf32, #tpu.memory_space<vmem>>, vector<2x1x18x288xf32>
    tpu.vector_store %arg10[%c0_12, %c0_13, %c0_14, %c0_15], %13 {strides = array<i32>} : memref<2x18x18x288xf32, #tpu.memory_space<vmem>>, vector<2x1x18x288xf32>,
    %cst_16 = arith.constant 0.000000e+00 : f32
    %15 = vector.broadcast %cst_16 : f32 to vector<2x1x18x288xf32>
    %c0_17 = arith.constant 0 : index
    %c17 = arith.constant 17 : index
    %c0_18 = arith.constant 0 : index
    %c0_19 = arith.constant 0 : index
    %16 = vector.load %arg10[%c0_17, %c17, %c0_18, %c0_19] : memref<2x18x18x288xf32, #tpu.memory_space<vmem>>, vector<2x1x18x288xf32>
    tpu.vector_store %arg10[%c0_17, %c17, %c0_18, %c0_19], %15 {strides = array<i32>} : memref<2x18x18x288xf32, #tpu.memory_space<vmem>>, vector<2x1x18x288xf32>,
    %cst_20 = arith.constant 0.000000e+00 : f32
    %17 = vector.broadcast %cst_20 : f32 to vector<2x18x1x288xf32>
    %c0_21 = arith.constant 0 : index
    %c0_22 = arith.constant 0 : index
    %c0_23 = arith.constant 0 : index
    %c0_24 = arith.constant 0 : index
    %18 = vector.load %arg10[%c0_21, %c0_22, %c0_23, %c0_24] : memref<2x18x18x288xf32, #tpu.memory_space<vmem>>, vector<2x18x1x288xf32>
    tpu.vector_store %arg10[%c0_21, %c0_22, %c0_23, %c0_24], %17 {strides = array<i32>} : memref<2x18x18x288xf32, #tpu.memory_space<vmem>>, vector<2x18x1x288xf32>,
    %cst_25 = arith.constant 0.000000e+00 : f32
    %19 = vector.broadcast %cst_25 : f32 to vector<2x18x1x288xf32>
    %c0_26 = arith.constant 0 : index
    %c0_27 = arith.constant 0 : index
    %c17_28 = arith.constant 17 : index
    %c0_29 = arith.constant 0 : index
    %20 = vector.load %arg10[%c0_26, %c0_27, %c17_28, %c0_29] : memref<2x18x18x288xf32, #tpu.memory_space<vmem>>, vector<2x18x1x288xf32>
    tpu.vector_store %arg10[%c0_26, %c0_27, %c17_28, %c0_29], %19 {strides = array<i32>} : memref<2x18x18x288xf32, #tpu.memory_space<vmem>>, vector<2x18x1x288xf32>,
    %21 = vector.shape_cast %12 : vector<512x288xf32> to vector<2x16x16x288xf32>
    %c0_30 = arith.constant 0 : index
    %c1 = arith.constant 1 : index
    %c1_31 = arith.constant 1 : index
    %c0_32 = arith.constant 0 : index
    %22 = vector.load %arg10[%c0_30, %c1, %c1_31, %c0_32] : memref<2x18x18x288xf32, #tpu.memory_space<vmem>>, vector<2x16x16x288xf32>
    tpu.vector_store %arg10[%c0_30, %c1, %c1_31, %c0_32], %21 {strides = array<i32>} : memref<2x18x18x288xf32, #tpu.memory_space<vmem>>, vector<2x16x16x288xf32>,
    %c0_33 = arith.constant 0 : index
    %c0_34 = arith.constant 0 : index
    %c0_35 = arith.constant 0 : index
    %c0_36 = arith.constant 0 : index
    %23 = vector.load %arg10[%c0_33, %c0_34, %c0_35, %c0_36] : memref<2x18x18x288xf32, #tpu.memory_space<vmem>>, vector<2x16x16x32xf32>
    %c0_37 = arith.constant 0 : index
    %c0_38 = arith.constant 0 : index
    %c1_39 = arith.constant 1 : index
    %c32 = arith.constant 32 : index
    %24 = vector.load %arg10[%c0_37, %c0_38, %c1_39, %c32] : memref<2x18x18x288xf32, #tpu.memory_space<vmem>>, vector<2x16x16x32xf32>
    %25 = arith.addf %23, %24 : vector<2x16x16x32xf32>
    %c0_40 = arith.constant 0 : index
    %c0_41 = arith.constant 0 : index
    %c2 = arith.constant 2 : index
    %c64 = arith.constant 64 : index
    %26 = vector.load %arg10[%c0_40, %c0_41, %c2, %c64] : memref<2x18x18x288xf32, #tpu.memory_space<vmem>>, vector<2x16x16x32xf32>
    %27 = arith.addf %25, %26 : vector<2x16x16x32xf32>
    %c0_42 = arith.constant 0 : index
    %c1_43 = arith.constant 1 : index
    %c0_44 = arith.constant 0 : index
    %c96 = arith.constant 96 : index
    %28 = vector.load %arg10[%c0_42, %c1_43, %c0_44, %c96] : memref<2x18x18x288xf32, #tpu.memory_space<vmem>>, vector<2x16x16x32xf32>
    %29 = arith.addf %27, %28 : vector<2x16x16x32xf32>
    %c0_45 = arith.constant 0 : index
    %c1_46 = arith.constant 1 : index
    %c1_47 = arith.constant 1 : index
    %c128 = arith.constant 128 : index
    %30 = vector.load %arg10[%c0_45, %c1_46, %c1_47, %c128] : memref<2x18x18x288xf32, #tpu.memory_space<vmem>>, vector<2x16x16x32xf32>
    %31 = arith.addf %29, %30 : vector<2x16x16x32xf32>
    %c0_48 = arith.constant 0 : index
    %c1_49 = arith.constant 1 : index
    %c2_50 = arith.constant 2 : index
    %c160 = arith.constant 160 : index
    %32 = vector.load %arg10[%c0_48, %c1_49, %c2_50, %c160] : memref<2x18x18x288xf32, #tpu.memory_space<vmem>>, vector<2x16x16x32xf32>
    %33 = arith.addf %31, %32 : vector<2x16x16x32xf32>
    %c0_51 = arith.constant 0 : index
    %c2_52 = arith.constant 2 : index
    %c0_53 = arith.constant 0 : index
    %c192 = arith.constant 192 : index
    %34 = vector.load %arg10[%c0_51, %c2_52, %c0_53, %c192] : memref<2x18x18x288xf32, #tpu.memory_space<vmem>>, vector<2x16x16x32xf32>
    %35 = arith.addf %33, %34 : vector<2x16x16x32xf32>
    %c0_54 = arith.constant 0 : index
    %c2_55 = arith.constant 2 : index
    %c1_56 = arith.constant 1 : index
    %c224 = arith.constant 224 : index
    %36 = vector.load %arg10[%c0_54, %c2_55, %c1_56, %c224] : memref<2x18x18x288xf32, #tpu.memory_space<vmem>>, vector<2x16x16x32xf32>
    %37 = arith.addf %35, %36 : vector<2x16x16x32xf32>
    %c0_57 = arith.constant 0 : index
    %c2_58 = arith.constant 2 : index
    %c2_59 = arith.constant 2 : index
    %c256 = arith.constant 256 : index
    %38 = vector.load %arg10[%c0_57, %c2_58, %c2_59, %c256] : memref<2x18x18x288xf32, #tpu.memory_space<vmem>>, vector<2x16x16x32xf32>
    %39 = arith.addf %37, %38 : vector<2x16x16x32xf32>
    %40 = vector.shape_cast %39 : vector<2x16x16x32xf32> to vector<512x32xf32>
    %c0_60 = arith.constant 0 : index
    %c0_61 = arith.constant 0 : index
    %41 = vector.load %arg5[%c0_60, %c0_61] : memref<1x32xf32, #tpu.memory_space<vmem>>, vector<1x32xf32>
    %42 = vector.broadcast %41 : vector<1x32xf32> to vector<512x32xf32>
    %43 = arith.addf %40, %42 : vector<512x32xf32>
    %cst_62 = arith.constant 0.000000e+00 : f32
    %44 = vector.broadcast %cst_62 : f32 to vector<512x32xf32>
    %45 = arith.maximumf %43, %44 : vector<512x32xf32>
    %46 = arith.truncf %45 : vector<512x32xf32> to vector<512x32xbf16>
    %c0_63 = arith.constant 0 : index
    %c0_64 = arith.constant 0 : index
    %47 = vector.load %arg6[%c0_63, %c0_64] : memref<32x128xbf16, #tpu.memory_space<vmem>>, vector<32x128xbf16>
    %cst_65 = arith.constant dense<0.000000e+00> : vector<512x128xf32>
    %48 = tpu.matmul %46, %47, %cst_65 {dimension_numbers = #tpu.dot_dimension_numbers<[1], [0], [0], [1], [0, 0, 1, 1], [], []>} : vector<512x32xbf16>, vector<32x128xbf16>, vector<512x128xf32> -> vector<512x128xf32>
    %c0_66 = arith.constant 0 : index
    %c0_67 = arith.constant 0 : index
    %49 = vector.load %arg7[%c0_66, %c0_67] : memref<1x128xf32, #tpu.memory_space<vmem>>, vector<1x128xf32>
    %50 = vector.broadcast %49 : vector<1x128xf32> to vector<512x128xf32>
    %51 = arith.addf %48, %50 : vector<512x128xf32>
    %52 = arith.addf %1, %51 : vector<512x128xf32>
    %cst_68 = arith.constant 0.000000e+00 : f32
    %53 = vector.broadcast %cst_68 : f32 to vector<512x128xf32>
    %54 = arith.maximumf %52, %53 : vector<512x128xf32>
    %55 = vector.shape_cast %51 : vector<512x128xf32> to vector<2x16x16x128xf32>
    %c0_69 = arith.constant 0 : index
    %c0_70 = arith.constant 0 : index
    %c0_71 = arith.constant 0 : index
    %c0_72 = arith.constant 0 : index
    %56 = vector.load %arg9[%c0_69, %c0_70, %c0_71, %c0_72] : memref<2x16x16x128xf32, #tpu.memory_space<vmem>>, vector<2x16x16x128xf32>
    tpu.vector_store %arg9[%c0_69, %c0_70, %c0_71, %c0_72], %55 {strides = array<i32>} : memref<2x16x16x128xf32, #tpu.memory_space<vmem>>, vector<2x16x16x128xf32>,
    %57 = vector.shape_cast %54 : vector<512x128xf32> to vector<2x16x16x128xf32>
    %c0_73 = arith.constant 0 : index
    %c0_74 = arith.constant 0 : index
    %c0_75 = arith.constant 0 : index
    %c0_76 = arith.constant 0 : index
    %58 = vector.load %arg8[%c0_73, %c0_74, %c0_75, %c0_76] : memref<2x16x16x128xf32, #tpu.memory_space<vmem>>, vector<2x16x16x128xf32>
    tpu.vector_store %arg8[%c0_73, %c0_74, %c0_75, %c0_76], %57 {strides = array<i32>} : memref<2x16x16x128xf32, #tpu.memory_space<vmem>>, vector<2x16x16x128xf32>,
    return
  }
  func.func @transform_0(%arg0: i32) -> (i32, i32, i32, i32) {
    %c0_i32 = arith.constant 0 : i32
    %c0_i32_0 = arith.constant 0 : i32
    %c0_i32_1 = arith.constant 0 : i32
    %c0_i32_2 = arith.constant 0 : i32
    return %arg0, %c0_i32, %c0_i32_0, %c0_i32_1 : i32, i32, i32, i32
  }
  func.func @transform_1(%arg0: i32) -> (i32, i32) {
    %c0_i32 = arith.constant 0 : i32
    %c0_i32_0 = arith.constant 0 : i32
    %c0_i32_1 = arith.constant 0 : i32
    return %c0_i32, %c0_i32_0 : i32, i32
  }
  func.func @transform_2(%arg0: i32) -> (i32, i32) {
    %c0_i32 = arith.constant 0 : i32
    %c0_i32_0 = arith.constant 0 : i32
    %c0_i32_1 = arith.constant 0 : i32
    return %c0_i32, %c0_i32_0 : i32, i32
  }
  func.func @transform_3(%arg0: i32) -> (i32, i32) {
    %c0_i32 = arith.constant 0 : i32
    %c0_i32_0 = arith.constant 0 : i32
    %c0_i32_1 = arith.constant 0 : i32
    return %c0_i32, %c0_i32_0 : i32, i32
  }
  func.func @transform_4(%arg0: i32) -> (i32, i32) {
    %c0_i32 = arith.constant 0 : i32
    %c0_i32_0 = arith.constant 0 : i32
    %c0_i32_1 = arith.constant 0 : i32
    return %c0_i32, %c0_i32_0 : i32, i32
  }
  func.func @transform_5(%arg0: i32) -> (i32, i32) {
    %c0_i32 = arith.constant 0 : i32
    %c0_i32_0 = arith.constant 0 : i32
    %c0_i32_1 = arith.constant 0 : i32
    return %c0_i32, %c0_i32_0 : i32, i32
  }
  func.func @transform_6(%arg0: i32) -> (i32, i32) {
    %c0_i32 = arith.constant 0 : i32
    %c0_i32_0 = arith.constant 0 : i32
    %c0_i32_1 = arith.constant 0 : i32
    return %c0_i32, %c0_i32_0 : i32, i32
  }
  func.func @transform_7(%arg0: i32) -> (i32, i32, i32, i32) {
    %c0_i32 = arith.constant 0 : i32
    %c0_i32_0 = arith.constant 0 : i32
    %c0_i32_1 = arith.constant 0 : i32
    %c0_i32_2 = arith.constant 0 : i32
    return %arg0, %c0_i32, %c0_i32_0, %c0_i32_1 : i32, i32, i32, i32
  }
  func.func @transform_8(%arg0: i32) -> (i32, i32, i32, i32) {
    %c0_i32 = arith.constant 0 : i32
    %c0_i32_0 = arith.constant 0 : i32
    %c0_i32_1 = arith.constant 0 : i32
    %c0_i32_2 = arith.constant 0 : i32
    return %arg0, %c0_i32, %c0_i32_0, %c0_i32_1 : i32, i32, i32, i32
  }
}

</mosaic_0001>

<llo_original>
// kernel: bottleneck1_forward.1
$region0: #{bottleneck1_forward.1}
  #allocation0 [shape = 'u32[]', space=smem, size = 0x4, offset = 0x4, fixed_abs, tag = 'smem constant byte address 0x4 - core index']
  #allocation1 [shape = 'u32[144,128]{1,0:T(1,128)}', space=vmem, size = 0x12000, scoped, tag = 'internal scratch']
  #allocation2 [shape = 'f32[2,18,18,288]{3,2,1,0:T(8,128)}', space=vmem, size = 0x144000, scoped, tag = 'scratch operand']
  %s0 = inlined_call_operand.hbm [shape: f32[2,16,16,128], index: 0, kind: input, shape index: {}]
  %s1 = inlined_call_operand.vmem [shape: bf16[128,32], index: 1, kind: input, shape index: {}]
  %s2 = inlined_call_operand.vmem [shape: f32[1,32], index: 2, kind: input, shape index: {}]
  %s3 = inlined_call_operand.vmem [shape: bf16[32,288], index: 3, kind: input, shape index: {}]
  %s4 = inlined_call_operand.vmem [shape: f32[1,32], index: 4, kind: input, shape index: {}]
  %s5 = inlined_call_operand.vmem [shape: bf16[32,128], index: 5, kind: input, shape index: {}]
  %s6 = inlined_call_operand.vmem [shape: f32[1,128], index: 6, kind: input, shape index: {}]
  %s7 = inlined_call_operand.hbm [shape: f32[2,16,16,128], index: 7, kind: output, shape index: {0}]
  %s8 = inlined_call_operand.hbm [shape: f32[2,16,16,128], index: 8, kind: output, shape index: {1}]
  %9 = xla_tuple %s7, %s8
  %s10 = sld [smem:[#allocation0]]
  $region50: #{bottleneck1_forward.1} parent=0
    _
  %s12 = ssub.s32 1, %s10
  %s13 = scalar_select 0, %s12, %s10
  $region1: #{bottleneck1_forward.1} parent=0
    #allocation3 [shape = 'u8[262144]{0}', space=vmem, size = 0x40000, scoped, tag = 'input window, operand 0, single buffered']
    #allocation4 [shape = 's32[1]{0}', space=sflag, size = 0x4, scoped, tag = 'scoped memory for bottleneck1_forward.1']
    #allocation5 [shape = 's32[1]{0}', space=sflag, size = 0x4, scoped, tag = 'scoped memory for bottleneck1_forward.1']
    #allocation6 [shape = 'u8[262144]{0}', space=vmem, size = 0x40000, scoped, tag = 'output window, operand 0, single buffered']
    #allocation7 [shape = 'u8[262144]{0}', space=vmem, size = 0x40000, scoped, tag = 'output window, operand 1, single buffered']
    #allocation8 [shape = 's32[1]{0}', space=sflag, size = 0x4, scoped, tag = 'scoped memory for bottleneck1_forward.1']
    %14 = vsyncpa [#allocation4], 0
    %15 = vsyncpa [#allocation5], 0
    %16 = vsyncpa [#allocation8], 0
    // Predicated region
    $region2: #{bottleneck1_forward.1} parent=1 // pred_check
      _
    $region3: #{bottleneck1_forward.1} parent=1 // pred_check_branch
      %18 = sbr.rel (0) target = $region5
    $region4: #{bottleneck1_forward.1} parent=1 // pred_region
      %s20 = ssub.s32 8192, 8192
      %21 = vsyncadd [#allocation4], %s20
      %s22 = sshll.u32 [#allocation3], 4
      %s23 = int_to_ptr.vmem [resolvable:$true] %s22
      %28 = dma.hbm_to_vmem [thread:$0]  %s0, 8192, %s23, [#allocation4], 128, 128, 8
    $region5: #{bottleneck1_forward.1} parent=1 // pred_fallthru
      _
    // Predicated region
    $region6: #{bottleneck1_forward.1} parent=1 // pred_check
      _
    $region7: #{bottleneck1_forward.1} parent=1 // pred_check_branch
      %30 = sbr.rel (0) target = $region9
    $region8: #{bottleneck1_forward.1} parent=1 // pred_region
      _
    $region9: #{bottleneck1_forward.1} parent=1 // pred_fallthru
      _
    // Predicated region
    $region10: #{bottleneck1_forward.1} parent=1 // pred_check
      _
    $region11: #{bottleneck1_forward.1} parent=1 // pred_check_branch
      %32 = sbr.rel (0) target = $region13
    $region12: #{bottleneck1_forward.1} parent=1 // pred_region
      _
    $region13: #{bottleneck1_forward.1} parent=1 // pred_fallthru
      _
    // Predicated region
    $region14: #{bottleneck1_forward.1} parent=1 // pred_check
      _
    $region15: #{bottleneck1_forward.1} parent=1 // pred_check_branch
      %34 = sbr.rel (0) target = $region17
    $region16: #{bottleneck1_forward.1} parent=1 // pred_region
      _
    $region17: #{bottleneck1_forward.1} parent=1 // pred_fallthru
      _
    // Predicated region
    $region18: #{bottleneck1_forward.1} parent=1 // pred_check
      _
    $region19: #{bottleneck1_forward.1} parent=1 // pred_check_branch
      %36 = sbr.rel (0) target = $region21
    $region20: #{bottleneck1_forward.1} parent=1 // pred_region
      _
    $region21: #{bottleneck1_forward.1} parent=1 // pred_fallthru
      _
    // Predicated region
    $region22: #{bottleneck1_forward.1} parent=1 // pred_check
      _
    $region23: #{bottleneck1_forward.1} parent=1 // pred_check_branch
      %38 = sbr.rel (0) target = $region25
    $region24: #{bottleneck1_forward.1} parent=1 // pred_region
      _
    $region25: #{bottleneck1_forward.1} parent=1 // pred_fallthru
      _
    // Predicated region
    $region26: #{bottleneck1_forward.1} parent=1 // pred_check
      _
    $region27: #{bottleneck1_forward.1} parent=1 // pred_check_branch
      %40 = sbr.rel (0) target = $region29
    $region28: #{bottleneck1_forward.1} parent=1 // pred_region
      _
    $region29: #{bottleneck1_forward.1} parent=1 // pred_fallthru
      _
    // Predicated region
    $region30: #{bottleneck1_forward.1} parent=1 // pred_check
      _
    $region31: #{bottleneck1_forward.1} parent=1 // pred_check_branch
      %42 = sbr.rel (0) target = $region33
    $region32: #{bottleneck1_forward.1} parent=1 // pred_region
      %43 = dma.done [#allocation4], 8192
    $region33: #{bottleneck1_forward.1} parent=1 // pred_fallthru
      _
    %v45 = vld [vmem:[#allocation3] sm:$0xff]
    %v46 = vld [vmem:[#allocation3 + $0x8] sm:$0xff]
    %v47 = vld [vmem:[#allocation3 + $0x10] sm:$0xff]
    %v48 = vld [vmem:[#allocation3 + $0x18] sm:$0xff]
    %v49 = vld [vmem:[#allocation3 + $0x20] sm:$0xff]
    %v50 = vld [vmem:[#allocation3 + $0x28] sm:$0xff]
    %v51 = vld [vmem:[#allocation3 + $0x30] sm:$0xff]
    %v52 = vld [vmem:[#allocation3 + $0x38] sm:$0xff]
    %v53 = vld [vmem:[#allocation3 + $0x40] sm:$0xff]
    %v54 = vld [vmem:[#allocation3 + $0x48] sm:$0xff]
    %v55 = vld [vmem:[#allocation3 + $0x50] sm:$0xff]
    %v56 = vld [vmem:[#allocation3 + $0x58] sm:$0xff]
    %v57 = vld [vmem:[#allocation3 + $0x60] sm:$0xff]
    %v58 = vld [vmem:[#allocation3 + $0x68] sm:$0xff]
    %v59 = vld [vmem:[#allocation3 + $0x70] sm:$0xff]
    %v60 = vld [vmem:[#allocation3 + $0x78] sm:$0xff]
    %v61 = vld [vmem:[#allocation3 + $0x80] sm:$0xff]
    %v62 = vld [vmem:[#allocation3 + $0x88] sm:$0xff]
    %v63 = vld [vmem:[#allocation3 + $0x90] sm:$0xff]
    %v64 = vld [vmem:[#allocation3 + $0x98] sm:$0xff]
    %v65 = vld [vmem:[#allocation3 + $0xa0] sm:$0xff]
    %v66 = vld [vmem:[#allocation3 + $0xa8] sm:$0xff]
    %v67 = vld [vmem:[#allocation3 + $0xb0] sm:$0xff]
    %v68 = vld [vmem:[#allocation3 + $0xb8] sm:$0xff]
    %v69 = vld [vmem:[#allocation3 + $0xc0] sm:$0xff]
    %v70 = vld [vmem:[#allocation3 + $0xc8] sm:$0xff]
    %v71 = vld [vmem:[#allocation3 + $0xd0] sm:$0xff]
    %v72 = vld [vmem:[#allocation3 + $0xd8] sm:$0xff]
    %v73 = vld [vmem:[#allocation3 + $0xe0] sm:$0xff]
    %v74 = vld [vmem:[#allocation3 + $0xe8] sm:$0xff]
    %v75 = vld [vmem:[#allocation3 + $0xf0] sm:$0xff]
    %v76 = vld [vmem:[#allocation3 + $0xf8] sm:$0xff]
    %v77 = vld [vmem:[#allocation3 + $0x100] sm:$0xff]
    %v78 = vld [vmem:[#allocation3 + $0x108] sm:$0xff]
    %v79 = vld [vmem:[#allocation3 + $0x110] sm:$0xff]
    %v80 = vld [vmem:[#allocation3 + $0x118] sm:$0xff]
    %v81 = vld [vmem:[#allocation3 + $0x120] sm:$0xff]
    %v82 = vld [vmem:[#allocation3 + $0x128] sm:$0xff]
    %v83 = vld [vmem:[#allocation3 + $0x130] sm:$0xff]
    %v84 = vld [vmem:[#allocation3 + $0x138] sm:$0xff]
    %v85 = vld [vmem:[#allocation3 + $0x140] sm:$0xff]
    %v86 = vld [vmem:[#allocation3 + $0x148] sm:$0xff]
    %v87 = vld [vmem:[#allocation3 + $0x150] sm:$0xff]
    %v88 = vld [vmem:[#allocation3 + $0x158] sm:$0xff]
    %v89 = vld [vmem:[#allocation3 + $0x160] sm:$0xff]
    %v90 = vld [vmem:[#allocation3 + $0x168] sm:$0xff]
    %v91 = vld [vmem:[#allocation3 + $0x170] sm:$0xff]
    %v92 = vld [vmem:[#allocation3 + $0x178] sm:$0xff]
    %v93 = vld [vmem:[#allocation3 + $0x180] sm:$0xff]
    %v94 = vld [vmem:[#allocation3 + $0x188] sm:$0xff]
    %v95 = vld [vmem:[#allocation3 + $0x190] sm:$0xff]
    %v96 = vld [vmem:[#allocation3 + $0x198] sm:$0xff]
    %v97 = vld [vmem:[#allocation3 + $0x1a0] sm:$0xff]
    %v98 = vld [vmem:[#allocation3 + $0x1a8] sm:$0xff]
    %v99 = vld [vmem:[#allocation3 + $0x1b0] sm:$0xff]
    %v100 = vld [vmem:[#allocation3 + $0x1b8] sm:$0xff]
    %v101 = vld [vmem:[#allocation3 + $0x1c0] sm:$0xff]
    %v102 = vld [vmem:[#allocation3 + $0x1c8] sm:$0xff]
    %v103 = vld [vmem:[#allocation3 + $0x1d0] sm:$0xff]
    %v104 = vld [vmem:[#allocation3 + $0x1d8] sm:$0xff]
    %v105 = vld [vmem:[#allocation3 + $0x1e0] sm:$0xff]
    %v106 = vld [vmem:[#allocation3 + $0x1e8] sm:$0xff]
    %v107 = vld [vmem:[#allocation3 + $0x1f0] sm:$0xff]
    %v108 = vld [vmem:[#allocation3 + $0x1f8] sm:$0xff]
    %v109 = vpack.c.bf16 %v46, %v45
    %v110 = vpack.c.bf16 %v48, %v47
    %v111 = vpack.c.bf16 %v50, %v49
    %v112 = vpack.c.bf16 %v52, %v51
    %v113 = vpack.c.bf16 %v54, %v53
    %v114 = vpack.c.bf16 %v56, %v55
    %v115 = vpack.c.bf16 %v58, %v57
    %v116 = vpack.c.bf16 %v60, %v59
    %v117 = vpack.c.bf16 %v62, %v61
    %v118 = vpack.c.bf16 %v64, %v63
    %v119 = vpack.c.bf16 %v66, %v65
    %v120 = vpack.c.bf16 %v68, %v67
    %v121 = vpack.c.bf16 %v70, %v69
    %v122 = vpack.c.bf16 %v72, %v71
    %v123 = vpack.c.bf16 %v74, %v73
    %v124 = vpack.c.bf16 %v76, %v75
    %v125 = vpack.c.bf16 %v78, %v77
    %v126 = vpack.c.bf16 %v80, %v79
    %v127 = vpack.c.bf16 %v82, %v81
    %v128 = vpack.c.bf16 %v84, %v83
    %v129 = vpack.c.bf16 %v86, %v85
    %v130 = vpack.c.bf16 %v88, %v87
    %v131 = vpack.c.bf16 %v90, %v89
    %v132 = vpack.c.bf16 %v92, %v91
    %v133 = vpack.c.bf16 %v94, %v93
    %v134 = vpack.c.bf16 %v96, %v95
    %v135 = vpack.c.bf16 %v98, %v97
    %v136 = vpack.c.bf16 %v100, %v99
    %v137 = vpack.c.bf16 %v102, %v101
    %v138 = vpack.c.bf16 %v104, %v103
    %v139 = vpack.c.bf16 %v106, %v105
    %v140 = vpack.c.bf16 %v108, %v107
    %v141 = vld [vmem:[%s1] sm:$0xf]
    %v142 = vld [vmem:[%s1 + $0x4] sm:$0xf]
    %v143 = vld [vmem:[%s1 + $0x8] sm:$0xf]
    %v144 = vld [vmem:[%s1 + $0xc] sm:$0xf]
    %v145 = vld [vmem:[%s1 + $0x10] sm:$0xf]
    %v146 = vld [vmem:[%s1 + $0x14] sm:$0xf]
    %v147 = vld [vmem:[%s1 + $0x18] sm:$0xf]
    %v148 = vld [vmem:[%s1 + $0x1c] sm:$0xf]
    %v149 = vld [vmem:[%s1 + $0x20] sm:$0xf]
    %v150 = vld [vmem:[%s1 + $0x24] sm:$0xf]
    %v151 = vld [vmem:[%s1 + $0x28] sm:$0xf]
    %v152 = vld [vmem:[%s1 + $0x2c] sm:$0xf]
    %v153 = vld [vmem:[%s1 + $0x30] sm:$0xf]
    %v154 = vld [vmem:[%s1 + $0x34] sm:$0xf]
    %v155 = vld [vmem:[%s1 + $0x38] sm:$0xf]
    %v156 = vld [vmem:[%s1 + $0x3c] sm:$0xf]
    %v157 = vld [vmem:[%s2] sm:$0x1]
    %v159 = vlaneseq
    %v160 = vshrl.u32 %v159, 7
    %v161 = vsub.s32 0, %v160
    %v162 = vrot.slane %v157, %v161
    %v180 = vunpack.c.l.b16 %v141
    %v181 = vunpack.c.l.b16 %v142
    %v182 = vunpack.c.l.b16 %v143
    %v183 = vunpack.c.l.b16 %v144
    %v184 = vunpack.c.l.b16 %v145
    %v185 = vunpack.c.l.b16 %v146
    %v186 = vunpack.c.l.b16 %v147
    %v187 = vunpack.c.l.b16 %v148
    %v188 = vunpack.c.l.b16 %v149
    %v189 = vunpack.c.l.b16 %v150
    %v190 = vunpack.c.l.b16 %v151
    %v191 = vunpack.c.l.b16 %v152
    %v192 = vunpack.c.l.b16 %v153
    %v193 = vunpack.c.l.b16 %v154
    %v194 = vunpack.c.l.b16 %v155
    %v195 = vunpack.c.l.b16 %v156
    %v196 = vpack.c.b16 %v181, %v180
    %v197 = vpack.c.b16 %v183, %v182
    %v198 = vpack.c.b16 %v185, %v184
    %v199 = vpack.c.b16 %v187, %v186
    %v200 = vpack.c.b16 %v189, %v188
    %v201 = vpack.c.b16 %v191, %v190
    %v202 = vpack.c.b16 %v193, %v192
    %v203 = vpack.c.b16 %v195, %v194
    %212 = vmatprep.subr.bf16.mxu0 0
    %213 = vmatpush1.bf16.msra.mxu0 %v196
    %214 = vmatprep.subr.bf16.mxu0 0
    %215 = vmatpush1.bf16.msra.mxu0 %v197
    %216 = vmatprep.subr.bf16.mxu0 0
    %217 = vmatpush1.bf16.msra.mxu0 %v198
    %218 = vmatprep.subr.bf16.mxu0 0
    %219 = vmatpush1.bf16.msra.mxu0 %v199
    %220 = vmatprep.subr.bf16.mxu0 0
    %221 = vmatpush1.bf16.msra.mxu0 %v200
    %222 = vmatprep.subr.bf16.mxu0 0
    %223 = vmatpush1.bf16.msra.mxu0 %v201
    %224 = vmatprep.subr.bf16.mxu0 0
    %225 = vmatpush1.bf16.msra.mxu0 %v202
    %226 = vmatprep.subr.bf16.mxu0 0
    %227 = vmatpush1.bf16.msra.mxu0 %v203
    %228 = vmatprep.subr.bf16.mxu0 0
    %229 = vmatpush1.bf16.msra.mxu0 0
    %230 = vmatprep.subr.bf16.mxu0 0
    %231 = vmatpush1.bf16.msra.mxu0 0
    %232 = vmatprep.subr.bf16.mxu0 0
    %233 = vmatpush1.bf16.msra.mxu0 0
    %234 = vmatprep.subr.bf16.mxu0 0
    %235 = vmatpush1.bf16.msra.mxu0 0
    %236 = vmatprep.subr.bf16.mxu0 0
    %237 = vmatpush1.bf16.msra.mxu0 0
    %238 = vmatprep.subr.bf16.mxu0 0
    %239 = vmatpush1.bf16.msra.mxu0 0
    %240 = vmatprep.subr.bf16.mxu0 0
    %241 = vmatpush1.bf16.msra.mxu0 0
    %242 = vmatprep.subr.bf16.mxu0 0
    %243 = vmatpush1.bf16.msra.mxu0 0
    %244 = vmatprep.mubr.bf16.mxu0 0
    %245 = vmatmul.mubr.bf16.gmra.mrb[0].mxu0 %v109
    %v246 = vpop.f32.mrb[0].mxu0
    %v247 = vadd.f32 %v162, %v246
    %v248 = vpop.f32.mrb[0].mxu0
    %v249 = vpop.f32.mrb[0].mxu0
    %v250 = vadd.f32 %v162, %v249
    %v251 = vpop.f32.mrb[0].mxu0
    %252 = vmatprep.mubr.bf16.mxu0 0
    %253 = vmatmul.mubr.bf16.gmra.mrb[0].mxu0 %v110
    %v254 = vpop.f32.mrb[0].mxu0
    %v255 = vadd.f32 %v162, %v254
    %v256 = vpop.f32.mrb[0].mxu0
    %v257 = vpop.f32.mrb[0].mxu0
    %v258 = vadd.f32 %v162, %v257
    %v259 = vpop.f32.mrb[0].mxu0
    %260 = vmatprep.mubr.bf16.mxu0 0
    %261 = vmatmul.mubr.bf16.gmra.mrb[0].mxu0 %v111
    %v262 = vpop.f32.mrb[0].mxu0
    %v263 = vadd.f32 %v162, %v262
    %v264 = vpop.f32.mrb[0].mxu0
    %v265 = vpop.f32.mrb[0].mxu0
    %v266 = vadd.f32 %v162, %v265
    %v267 = vpop.f32.mrb[0].mxu0
    %268 = vmatprep.mubr.bf16.mxu0 0
    %269 = vmatmul.mubr.bf16.gmra.mrb[0].mxu0 %v112
    %v270 = vpop.f32.mrb[0].mxu0
    %v271 = vadd.f32 %v162, %v270
    %v272 = vpop.f32.mrb[0].mxu0
    %v273 = vpop.f32.mrb[0].mxu0
    %v274 = vadd.f32 %v162, %v273
    %v275 = vpop.f32.mrb[0].mxu0
    %276 = vmatprep.mubr.bf16.mxu0 0
    %277 = vmatmul.mubr.bf16.gmra.mrb[0].mxu0 %v113
    %v278 = vpop.f32.mrb[0].mxu0
    %v279 = vadd.f32 %v162, %v278
    %v280 = vpop.f32.mrb[0].mxu0
    %v281 = vpop.f32.mrb[0].mxu0
    %v282 = vadd.f32 %v162, %v281
    %v283 = vpop.f32.mrb[0].mxu0
    %284 = vmatprep.mubr.bf16.mxu0 0
    %285 = vmatmul.mubr.bf16.gmra.mrb[0].mxu0 %v114
    %v286 = vpop.f32.mrb[0].mxu0
    %v287 = vadd.f32 %v162, %v286
    %v288 = vpop.f32.mrb[0].mxu0
    %v289 = vpop.f32.mrb[0].mxu0
    %v290 = vadd.f32 %v162, %v289
    %v291 = vpop.f32.mrb[0].mxu0
    %292 = vmatprep.mubr.bf16.mxu0 0
    %293 = vmatmul.mubr.bf16.gmra.mrb[0].mxu0 %v115
    %v294 = vpop.f32.mrb[0].mxu0
    %v295 = vadd.f32 %v162, %v294
    %v296 = vpop.f32.mrb[0].mxu0
    %v297 = vpop.f32.mrb[0].mxu0
    %v298 = vadd.f32 %v162, %v297
    %v299 = vpop.f32.mrb[0].mxu0
    %300 = vmatprep.mubr.bf16.mxu0 0
    %301 = vmatmul.mubr.bf16.gmra.mrb[0].mxu0 %v116
    %v302 = vpop.f32.mrb[0].mxu0
    %v303 = vadd.f32 %v162, %v302
    %v304 = vpop.f32.mrb[0].mxu0
    %v305 = vpop.f32.mrb[0].mxu0
    %v306 = vadd.f32 %v162, %v305
    %v307 = vpop.f32.mrb[0].mxu0
    %308 = vmatprep.mubr.bf16.mxu0 0
    %309 = vmatmul.mubr.bf16.gmra.mrb[0].mxu0 %v117
    %v310 = vpop.f32.mrb[0].mxu0
    %v311 = vadd.f32 %v162, %v310
    %v312 = vpop.f32.mrb[0].mxu0
    %v313 = vpop.f32.mrb[0].mxu0
    %v314 = vadd.f32 %v162, %v313
    %v315 = vpop.f32.mrb[0].mxu0
    %316 = vmatprep.mubr.bf16.mxu0 0
    %317 = vmatmul.mubr.bf16.gmra.mrb[0].mxu0 %v118
    %v318 = vpop.f32.mrb[0].mxu0
    %v319 = vadd.f32 %v162, %v318
    %v320 = vpop.f32.mrb[0].mxu0
    %v321 = vpop.f32.mrb[0].mxu0
    %v322 = vadd.f32 %v162, %v321
    %v323 = vpop.f32.mrb[0].mxu0
    %324 = vmatprep.mubr.bf16.mxu0 0
    %325 = vmatmul.mubr.bf16.gmra.mrb[0].mxu0 %v119
    %v326 = vpop.f32.mrb[0].mxu0
    %v327 = vadd.f32 %v162, %v326
    %v328 = vpop.f32.mrb[0].mxu0
    %v329 = vpop.f32.mrb[0].mxu0
    %v330 = vadd.f32 %v162, %v329
    %v331 = vpop.f32.mrb[0].mxu0
    %332 = vmatprep.mubr.bf16.mxu0 0
    %333 = vmatmul.mubr.bf16.gmra.mrb[0].mxu0 %v120
    %v334 = vpop.f32.mrb[0].mxu0
    %v335 = vadd.f32 %v162, %v334
    %v336 = vpop.f32.mrb[0].mxu0
    %v337 = vpop.f32.mrb[0].mxu0
    %v338 = vadd.f32 %v162, %v337
    %v339 = vpop.f32.mrb[0].mxu0
    %340 = vmatprep.mubr.bf16.mxu0 0
    %341 = vmatmul.mubr.bf16.gmra.mrb[0].mxu0 %v121
    %v342 = vpop.f32.mrb[0].mxu0
    %v343 = vadd.f32 %v162, %v342
    %v344 = vpop.f32.mrb[0].mxu0
    %v345 = vpop.f32.mrb[0].mxu0
    %v346 = vadd.f32 %v162, %v345
    %v347 = vpop.f32.mrb[0].mxu0
    %348 = vmatprep.mubr.bf16.mxu0 0
    %349 = vmatmul.mubr.bf16.gmra.mrb[0].mxu0 %v122
    %v350 = vpop.f32.mrb[0].mxu0
    %v351 = vadd.f32 %v162, %v350
    %v352 = vpop.f32.mrb[0].mxu0
    %v353 = vpop.f32.mrb[0].mxu0
    %v354 = vadd.f32 %v162, %v353
    %v355 = vpop.f32.mrb[0].mxu0
    %356 = vmatprep.mubr.bf16.mxu0 0
    %357 = vmatmul.mubr.bf16.gmra.mrb[0].mxu0 %v123
    %v358 = vpop.f32.mrb[0].mxu0
    %v359 = vadd.f32 %v162, %v358
    %v360 = vpop.f32.mrb[0].mxu0
    %v361 = vpop.f32.mrb[0].mxu0
    %v362 = vadd.f32 %v162, %v361
    %v363 = vpop.f32.mrb[0].mxu0
    %364 = vmatprep.mubr.bf16.mxu0 0
    %365 = vmatmul.mubr.bf16.gmra.mrb[0].mxu0 %v124
    %v366 = vpop.f32.mrb[0].mxu0
    %v367 = vadd.f32 %v162, %v366
    %v368 = vpop.f32.mrb[0].mxu0
    %v369 = vpop.f32.mrb[0].mxu0
    %v370 = vadd.f32 %v162, %v369
    %v371 = vpop.f32.mrb[0].mxu0
    %372 = vmatprep.mubr.bf16.mxu0 0
    %373 = vmatmul.mubr.bf16.gmra.mrb[0].mxu0 %v125
    %v374 = vpop.f32.mrb[0].mxu0
    %v375 = vadd.f32 %v162, %v374
    %v376 = vpop.f32.mrb[0].mxu0
    %v377 = vpop.f32.mrb[0].mxu0
    %v378 = vadd.f32 %v162, %v377
    %v379 = vpop.f32.mrb[0].mxu0
    %380 = vmatprep.mubr.bf16.mxu0 0
    %381 = vmatmul.mubr.bf16.gmra.mrb[0].mxu0 %v126
    %v382 = vpop.f32.mrb[0].mxu0
    %v383 = vadd.f32 %v162, %v382
    %v384 = vpop.f32.mrb[0].mxu0
    %v385 = vpop.f32.mrb[0].mxu0
    %v386 = vadd.f32 %v162, %v385
    %v387 = vpop.f32.mrb[0].mxu0
    %388 = vmatprep.mubr.bf16.mxu0 0
    %389 = vmatmul.mubr.bf16.gmra.mrb[0].mxu0 %v127
    %v390 = vpop.f32.mrb[0].mxu0
    %v391 = vadd.f32 %v162, %v390
    %v392 = vpop.f32.mrb[0].mxu0
    %v393 = vpop.f32.mrb[0].mxu0
    %v394 = vadd.f32 %v162, %v393
    %v395 = vpop.f32.mrb[0].mxu0
    %396 = vmatprep.mubr.bf16.mxu0 0
    %397 = vmatmul.mubr.bf16.gmra.mrb[0].mxu0 %v128
    %v398 = vpop.f32.mrb[0].mxu0
    %v399 = vadd.f32 %v162, %v398
    %v400 = vpop.f32.mrb[0].mxu0
    %v401 = vpop.f32.mrb[0].mxu0
    %v402 = vadd.f32 %v162, %v401
    %v403 = vpop.f32.mrb[0].mxu0
    %404 = vmatprep.mubr.bf16.mxu0 0
    %405 = vmatmul.mubr.bf16.gmra.mrb[0].mxu0 %v129
    %v406 = vpop.f32.mrb[0].mxu0
    %v407 = vadd.f32 %v162, %v406
    %v408 = vpop.f32.mrb[0].mxu0
    %v409 = vpop.f32.mrb[0].mxu0
    %v410 = vadd.f32 %v162, %v409
    %v411 = vpop.f32.mrb[0].mxu0
    %412 = vmatprep.mubr.bf16.mxu0 0
    %413 = vmatmul.mubr.bf16.gmra.mrb[0].mxu0 %v130
    %v414 = vpop.f32.mrb[0].mxu0
    %v415 = vadd.f32 %v162, %v414
    %v416 = vpop.f32.mrb[0].mxu0
    %v417 = vpop.f32.mrb[0].mxu0
    %v418 = vadd.f32 %v162, %v417
    %v419 = vpop.f32.mrb[0].mxu0
    %420 = vmatprep.mubr.bf16.mxu0 0
    %421 = vmatmul.mubr.bf16.gmra.mrb[0].mxu0 %v131
    %v422 = vpop.f32.mrb[0].mxu0
    %v423 = vadd.f32 %v162, %v422
    %v424 = vpop.f32.mrb[0].mxu0
    %v425 = vpop.f32.mrb[0].mxu0
    %v426 = vadd.f32 %v162, %v425
    %v427 = vpop.f32.mrb[0].mxu0
    %428 = vmatprep.mubr.bf16.mxu0 0
    %429 = vmatmul.mubr.bf16.gmra.mrb[0].mxu0 %v132
    %v430 = vpop.f32.mrb[0].mxu0
    %v431 = vadd.f32 %v162, %v430
    %v432 = vpop.f32.mrb[0].mxu0
    %v433 = vpop.f32.mrb[0].mxu0
    %v434 = vadd.f32 %v162, %v433
    %v435 = vpop.f32.mrb[0].mxu0
    %436 = vmatprep.mubr.bf16.mxu0 0
    %437 = vmatmul.mubr.bf16.gmra.mrb[0].mxu0 %v133
    %v438 = vpop.f32.mrb[0].mxu0
    %v439 = vadd.f32 %v162, %v438
    %v440 = vpop.f32.mrb[0].mxu0
    %v441 = vpop.f32.mrb[0].mxu0
    %v442 = vadd.f32 %v162, %v441
    %v443 = vpop.f32.mrb[0].mxu0
    %444 = vmatprep.mubr.bf16.mxu0 0
    %445 = vmatmul.mubr.bf16.gmra.mrb[0].mxu0 %v134
    %v446 = vpop.f32.mrb[0].mxu0
    %v447 = vadd.f32 %v162, %v446
    %v448 = vpop.f32.mrb[0].mxu0
    %v449 = vpop.f32.mrb[0].mxu0
    %v450 = vadd.f32 %v162, %v449
    %v451 = vpop.f32.mrb[0].mxu0
    %452 = vmatprep.mubr.bf16.mxu0 0
    %453 = vmatmul.mubr.bf16.gmra.mrb[0].mxu0 %v135
    %v454 = vpop.f32.mrb[0].mxu0
    %v455 = vadd.f32 %v162, %v454
    %v456 = vpop.f32.mrb[0].mxu0
    %v457 = vpop.f32.mrb[0].mxu0
    %v458 = vadd.f32 %v162, %v457
    %v459 = vpop.f32.mrb[0].mxu0
    %460 = vmatprep.mubr.bf16.mxu0 0
    %461 = vmatmul.mubr.bf16.gmra.mrb[0].mxu0 %v136
    %v462 = vpop.f32.mrb[0].mxu0
    %v463 = vadd.f32 %v162, %v462
    %v464 = vpop.f32.mrb[0].mxu0
    %v465 = vpop.f32.mrb[0].mxu0
    %v466 = vadd.f32 %v162, %v465
    %v467 = vpop.f32.mrb[0].mxu0
    %468 = vmatprep.mubr.bf16.mxu0 0
    %469 = vmatmul.mubr.bf16.gmra.mrb[0].mxu0 %v137
    %v470 = vpop.f32.mrb[0].mxu0
    %v471 = vadd.f32 %v162, %v470
    %v472 = vpop.f32.mrb[0].mxu0
    %v473 = vpop.f32.mrb[0].mxu0
    %v474 = vadd.f32 %v162, %v473
    %v475 = vpop.f32.mrb[0].mxu0
    %476 = vmatprep.mubr.bf16.mxu0 0
    %477 = vmatmul.mubr.bf16.gmra.mrb[0].mxu0 %v138
    %v478 = vpop.f32.mrb[0].mxu0
    %v479 = vadd.f32 %v162, %v478
    %v480 = vpop.f32.mrb[0].mxu0
    %v481 = vpop.f32.mrb[0].mxu0
    %v482 = vadd.f32 %v162, %v481
    %v483 = vpop.f32.mrb[0].mxu0
    %484 = vmatprep.mubr.bf16.mxu0 0
    %485 = vmatmul.mubr.bf16.gmra.mrb[0].mxu0 %v139
    %v486 = vpop.f32.mrb[0].mxu0
    %v487 = vadd.f32 %v162, %v486
    %v488 = vpop.f32.mrb[0].mxu0
    %v489 = vpop.f32.mrb[0].mxu0
    %v490 = vadd.f32 %v162, %v489
    %v491 = vpop.f32.mrb[0].mxu0
    %492 = vmatprep.mubr.bf16.mxu0 0
    %493 = vmatmul.mubr.bf16.gmra.mrb[0].mxu0 %v140
    %v494 = vpop.f32.mrb[0].mxu0
    %v495 = vadd.f32 %v162, %v494
    %v496 = vpop.f32.mrb[0].mxu0
    %v497 = vpop.f32.mrb[0].mxu0
    %v498 = vadd.f32 %v162, %v497
    %v499 = vpop.f32.mrb[0].mxu0
    %500 = vdwg.mxu0
    %v501 = vmax.f32 %v247, 0.0
    %v502 = vmax.f32 %v250, 0.0
    %v503 = vmax.f32 %v255, 0.0
    %v504 = vmax.f32 %v258, 0.0
    %v505 = vmax.f32 %v263, 0.0
    %v506 = vmax.f32 %v266, 0.0
    %v507 = vmax.f32 %v271, 0.0
    %v508 = vmax.f32 %v274, 0.0
    %v509 = vmax.f32 %v279, 0.0
    %v510 = vmax.f32 %v282, 0.0
    %v511 = vmax.f32 %v287, 0.0
    %v512 = vmax.f32 %v290, 0.0
    %v513 = vmax.f32 %v295, 0.0
    %v514 = vmax.f32 %v298, 0.0
    %v515 = vmax.f32 %v303, 0.0
    %v516 = vmax.f32 %v306, 0.0
    %v517 = vmax.f32 %v311, 0.0
    %v518 = vmax.f32 %v314, 0.0
    %v519 = vmax.f32 %v319, 0.0
    %v520 = vmax.f32 %v322, 0.0
    %v521 = vmax.f32 %v327, 0.0
    %v522 = vmax.f32 %v330, 0.0
    %v523 = vmax.f32 %v335, 0.0
    %v524 = vmax.f32 %v338, 0.0
    %v525 = vmax.f32 %v343, 0.0
    %v526 = vmax.f32 %v346, 0.0
    %v527 = vmax.f32 %v351, 0.0
    %v528 = vmax.f32 %v354, 0.0
    %v529 = vmax.f32 %v359, 0.0
    %v530 = vmax.f32 %v362, 0.0
    %v531 = vmax.f32 %v367, 0.0
    %v532 = vmax.f32 %v370, 0.0
    %v533 = vmax.f32 %v375, 0.0
    %v534 = vmax.f32 %v378, 0.0
    %v535 = vmax.f32 %v383, 0.0
    %v536 = vmax.f32 %v386, 0.0
    %v537 = vmax.f32 %v391, 0.0
    %v538 = vmax.f32 %v394, 0.0
    %v539 = vmax.f32 %v399, 0.0
    %v540 = vmax.f32 %v402, 0.0
    %v541 = vmax.f32 %v407, 0.0
    %v542 = vmax.f32 %v410, 0.0
    %v543 = vmax.f32 %v415, 0.0
    %v544 = vmax.f32 %v418, 0.0
    %v545 = vmax.f32 %v423, 0.0
    %v546 = vmax.f32 %v426, 0.0
    %v547 = vmax.f32 %v431, 0.0
    %v548 = vmax.f32 %v434, 0.0
    %v549 = vmax.f32 %v439, 0.0
    %v550 = vmax.f32 %v442, 0.0
    %v551 = vmax.f32 %v447, 0.0
    %v552 = vmax.f32 %v450, 0.0
    %v553 = vmax.f32 %v455, 0.0
    %v554 = vmax.f32 %v458, 0.0
    %v555 = vmax.f32 %v463, 0.0
    %v556 = vmax.f32 %v466, 0.0
    %v557 = vmax.f32 %v471, 0.0
    %v558 = vmax.f32 %v474, 0.0
    %v559 = vmax.f32 %v479, 0.0
    %v560 = vmax.f32 %v482, 0.0
    %v561 = vmax.f32 %v487, 0.0
    %v562 = vmax.f32 %v490, 0.0
    %v563 = vmax.f32 %v495, 0.0
    %v564 = vmax.f32 %v498, 0.0
    %v565 = vpack.c.bf16 %v502, %v501
    %v566 = vpack.c.bf16 %v504, %v503
    %v567 = vpack.c.bf16 %v506, %v505
    %v568 = vpack.c.bf16 %v508, %v507
    %v569 = vpack.c.bf16 %v510, %v509
    %v570 = vpack.c.bf16 %v512, %v511
    %v571 = vpack.c.bf16 %v514, %v513
    %v572 = vpack.c.bf16 %v516, %v515
    %v573 = vpack.c.bf16 %v518, %v517
    %v574 = vpack.c.bf16 %v520, %v519
    %v575 = vpack.c.bf16 %v522, %v521
    %v576 = vpack.c.bf16 %v524, %v523
    %v577 = vpack.c.bf16 %v526, %v525
    %v578 = vpack.c.bf16 %v528, %v527
    %v579 = vpack.c.bf16 %v530, %v529
    %v580 = vpack.c.bf16 %v532, %v531
    %v581 = vpack.c.bf16 %v534, %v533
    %v582 = vpack.c.bf16 %v536, %v535
    %v583 = vpack.c.bf16 %v538, %v537
    %v584 = vpack.c.bf16 %v540, %v539
    %v585 = vpack.c.bf16 %v542, %v541
    %v586 = vpack.c.bf16 %v544, %v543
    %v587 = vpack.c.bf16 %v546, %v545
    %v588 = vpack.c.bf16 %v548, %v547
    %v589 = vpack.c.bf16 %v550, %v549
    %v590 = vpack.c.bf16 %v552, %v551
    %v591 = vpack.c.bf16 %v554, %v553
    %v592 = vpack.c.bf16 %v556, %v555
    %v593 = vpack.c.bf16 %v558, %v557
    %v594 = vpack.c.bf16 %v560, %v559
    %v595 = vpack.c.bf16 %v562, %v561
    %v596 = vpack.c.bf16 %v564, %v563
    %v597 = vld [vmem:[%s3] sm:$0xff]
    %v598 = vld [vmem:[%s3 + $0x8] sm:$0xf]
    %v599 = vld [vmem:[%s3 + $0xc] sm:$0xff]
    %v600 = vld [vmem:[%s3 + $0x14] sm:$0xf]
    %v601 = vld [vmem:[%s3 + $0x18] sm:$0xff]
    %v602 = vld [vmem:[%s3 + $0x20] sm:$0xf]
    %v603 = vld [vmem:[%s3 + $0x24] sm:$0xff]
    %v604 = vld [vmem:[%s3 + $0x2c] sm:$0xf]
    %v613 = vunpack.c.l.b16 %v597
    %v614 = vunpack.c.h.b16 %v597
    %v615 = vunpack.c.l.b16 %v598
    %v616 = vunpack.c.l.b16 %v599
    %v617 = vunpack.c.h.b16 %v599
    %v618 = vunpack.c.l.b16 %v600
    %v619 = vunpack.c.l.b16 %v601
    %v620 = vunpack.c.h.b16 %v601
    %v621 = vunpack.c.l.b16 %v602
    %v622 = vunpack.c.l.b16 %v603
    %v623 = vunpack.c.h.b16 %v603
    %v624 = vunpack.c.l.b16 %v604
    %v625 = vpack.c.b16 %v616, %v613
    %v626 = vpack.c.b16 %v617, %v614
    %v627 = vpack.c.b16 %v618, %v615
    %v628 = vpack.c.b16 %v622, %v619
    %v629 = vpack.c.b16 %v623, %v620
    %v630 = vpack.c.b16 %v624, %v621
    %vm637 = vcmask 261120
    %v639 = vsel %vm637, %v565, 0
    %v642 = vsel %vm637, %v566, 0
    %v645 = vsel %vm637, %v567, 0
    %v648 = vsel %vm637, %v568, 0
    %v651 = vsel %vm637, %v569, 0
    %v654 = vsel %vm637, %v570, 0
    %v657 = vsel %vm637, %v571, 0
    %v660 = vsel %vm637, %v572, 0
    %v663 = vsel %vm637, %v573, 0
    %v666 = vsel %vm637, %v574, 0
    %v669 = vsel %vm637, %v575, 0
    %v672 = vsel %vm637, %v576, 0
    %v675 = vsel %vm637, %v577, 0
    %v678 = vsel %vm637, %v578, 0
    %v681 = vsel %vm637, %v579, 0
    %v684 = vsel %vm637, %v580, 0
    %v687 = vsel %vm637, %v581, 0
    %v690 = vsel %vm637, %v582, 0
    %v693 = vsel %vm637, %v583, 0
    %v696 = vsel %vm637, %v584, 0
    %v699 = vsel %vm637, %v585, 0
    %v702 = vsel %vm637, %v586, 0
    %v705 = vsel %vm637, %v587, 0
    %v708 = vsel %vm637, %v588, 0
    %v711 = vsel %vm637, %v589, 0
    %v714 = vsel %vm637, %v590, 0
    %v717 = vsel %vm637, %v591, 0
    %v720 = vsel %vm637, %v592, 0
    %v723 = vsel %vm637, %v593, 0
    %v726 = vsel %vm637, %v594, 0
    %v729 = vsel %vm637, %v595, 0
    %v732 = vsel %vm637, %v596, 0
    %734 = vmatprep.subr.bf16.mxu0 %v626
    %735 = vmatpush1.bf16.msra.mxu0 %v625
    %736 = vmatprep.subr.bf16.mxu0 %v629
    %737 = vmatpush1.bf16.msra.mxu0 %v628
    %738 = vmatprep.subr.bf16.mxu0 0
    %739 = vmatpush1.bf16.msra.mxu0 0
    %740 = vmatprep.subr.bf16.mxu0 0
    %741 = vmatpush1.bf16.msra.mxu0 0
    %742 = vmatprep.subr.bf16.mxu0 0
    %743 = vmatpush1.bf16.msra.mxu0 0
    %744 = vmatprep.subr.bf16.mxu0 0
    %745 = vmatpush1.bf16.msra.mxu0 0
    %746 = vmatprep.subr.bf16.mxu0 0
    %747 = vmatpush1.bf16.msra.mxu0 0
    %748 = vmatprep.subr.bf16.mxu0 0
    %749 = vmatpush1.bf16.msra.mxu0 0
    %750 = vmatprep.subr.bf16.mxu0 0
    %751 = vmatpush1.bf16.msra.mxu0 0
    %752 = vmatprep.subr.bf16.mxu0 0
    %753 = vmatpush1.bf16.msra.mxu0 0
    %754 = vmatprep.subr.bf16.mxu0 0
    %755 = vmatpush1.bf16.msra.mxu0 0
    %756 = vmatprep.subr.bf16.mxu0 0
    %757 = vmatpush1.bf16.msra.mxu0 0
    %758 = vmatprep.subr.bf16.mxu0 0
    %759 = vmatpush1.bf16.msra.mxu0 0
    %760 = vmatprep.subr.bf16.mxu0 0
    %761 = vmatpush1.bf16.msra.mxu0 0
    %762 = vmatprep.subr.bf16.mxu0 0
    %763 = vmatpush1.bf16.msra.mxu0 0
    %764 = vmatprep.subr.bf16.mxu0 0
    %765 = vmatpush1.bf16.msra.mxu0 0
    %766 = vmatprep.mubr.bf16.mxu0 0
    %767 = vmatmul.mubr.bf16.gmra.mrb[0].mxu0 %v639
    %v768 = vpop.f32.mrb[0].mxu0
    %v769 = vadd.f32 0.0, %v768
    %v770 = vpop.f32.mrb[0].mxu0
    %v771 = vadd.f32 0.0, %v770
    %v772 = vpop.f32.mrb[0].mxu0
    %v773 = vadd.f32 0.0, %v772
    %v774 = vpop.f32.mrb[0].mxu0
    %v775 = vadd.f32 0.0, %v774
    %776 = vmatprep.mubr.bf16.mxu0 0
    %777 = vmatmul.mubr.bf16.gmra.mrb[0].mxu0 %v642
    %v778 = vpop.f32.mrb[0].mxu0
    %v779 = vadd.f32 0.0, %v778
    %v780 = vpop.f32.mrb[0].mxu0
    %v781 = vadd.f32 0.0, %v780
    %v782 = vpop.f32.mrb[0].mxu0
    %v783 = vadd.f32 0.0, %v782
    %v784 = vpop.f32.mrb[0].mxu0
    %v785 = vadd.f32 0.0, %v784
    %786 = vmatprep.mubr.bf16.mxu0 0
    %787 = vmatmul.mubr.bf16.gmra.mrb[0].mxu0 %v645
    %v788 = vpop.f32.mrb[0].mxu0
    %v789 = vadd.f32 0.0, %v788
    %v790 = vpop.f32.mrb[0].mxu0
    %v791 = vadd.f32 0.0, %v790
    %v792 = vpop.f32.mrb[0].mxu0
    %v793 = vadd.f32 0.0, %v792
    %v794 = vpop.f32.mrb[0].mxu0
    %v795 = vadd.f32 0.0, %v794
    %796 = vmatprep.mubr.bf16.mxu0 0
    %797 = vmatmul.mubr.bf16.gmra.mrb[0].mxu0 %v648
    %v798 = vpop.f32.mrb[0].mxu0
    %v799 = vadd.f32 0.0, %v798
    %v800 = vpop.f32.mrb[0].mxu0
    %v801 = vadd.f32 0.0, %v800
    %v802 = vpop.f32.mrb[0].mxu0
    %v803 = vadd.f32 0.0, %v802
    %v804 = vpop.f32.mrb[0].mxu0
    %v805 = vadd.f32 0.0, %v804
    %806 = vmatprep.mubr.bf16.mxu0 0
    %807 = vmatmul.mubr.bf16.gmra.mrb[0].mxu0 %v651
    %v808 = vpop.f32.mrb[0].mxu0
    %v809 = vadd.f32 0.0, %v808
    %v810 = vpop.f32.mrb[0].mxu0
    %v811 = vadd.f32 0.0, %v810
    %v812 = vpop.f32.mrb[0].mxu0
    %v813 = vadd.f32 0.0, %v812
    %v814 = vpop.f32.mrb[0].mxu0
    %v815 = vadd.f32 0.0, %v814
    %816 = vmatprep.mubr.bf16.mxu0 0
    %817 = vmatmul.mubr.bf16.gmra.mrb[0].mxu0 %v654
    %v818 = vpop.f32.mrb[0].mxu0
    %v819 = vadd.f32 0.0, %v818
    %v820 = vpop.f32.mrb[0].mxu0
    %v821 = vadd.f32 0.0, %v820
    %v822 = vpop.f32.mrb[0].mxu0
    %v823 = vadd.f32 0.0, %v822
    %v824 = vpop.f32.mrb[0].mxu0
    %v825 = vadd.f32 0.0, %v824
    %826 = vmatprep.mubr.bf16.mxu0 0
    %827 = vmatmul.mubr.bf16.gmra.mrb[0].mxu0 %v657
    %v828 = vpop.f32.mrb[0].mxu0
    %v829 = vadd.f32 0.0, %v828
    %v830 = vpop.f32.mrb[0].mxu0
    %v831 = vadd.f32 0.0, %v830
    %v832 = vpop.f32.mrb[0].mxu0
    %v833 = vadd.f32 0.0, %v832
    %v834 = vpop.f32.mrb[0].mxu0
    %v835 = vadd.f32 0.0, %v834
    %836 = vmatprep.mubr.bf16.mxu0 0
    %837 = vmatmul.mubr.bf16.gmra.mrb[0].mxu0 %v660
    %v838 = vpop.f32.mrb[0].mxu0
    %v839 = vadd.f32 0.0, %v838
    %v840 = vpop.f32.mrb[0].mxu0
    %v841 = vadd.f32 0.0, %v840
    %v842 = vpop.f32.mrb[0].mxu0
    %v843 = vadd.f32 0.0, %v842
    %v844 = vpop.f32.mrb[0].mxu0
    %v845 = vadd.f32 0.0, %v844
    %846 = vmatprep.mubr.bf16.mxu0 0
    %847 = vmatmul.mubr.bf16.gmra.mrb[0].mxu0 %v663
    %v848 = vpop.f32.mrb[0].mxu0
    %v849 = vadd.f32 0.0, %v848
    %v850 = vpop.f32.mrb[0].mxu0
    %v851 = vadd.f32 0.0, %v850
    %v852 = vpop.f32.mrb[0].mxu0
    %v853 = vadd.f32 0.0, %v852
    %v854 = vpop.f32.mrb[0].mxu0
    %v855 = vadd.f32 0.0, %v854
    %856 = vmatprep.mubr.bf16.mxu0 0
    %857 = vmatmul.mubr.bf16.gmra.mrb[0].mxu0 %v666
    %v858 = vpop.f32.mrb[0].mxu0
    %v859 = vadd.f32 0.0, %v858
    %v860 = vpop.f32.mrb[0].mxu0
    %v861 = vadd.f32 0.0, %v860
    %v862 = vpop.f32.mrb[0].mxu0
    %v863 = vadd.f32 0.0, %v862
    %v864 = vpop.f32.mrb[0].mxu0
    %v865 = vadd.f32 0.0, %v864
    %866 = vmatprep.mubr.bf16.mxu0 0
    %867 = vmatmul.mubr.bf16.gmra.mrb[0].mxu0 %v669
    %v868 = vpop.f32.mrb[0].mxu0
    %v869 = vadd.f32 0.0, %v868
    %v870 = vpop.f32.mrb[0].mxu0
    %v871 = vadd.f32 0.0, %v870
    %v872 = vpop.f32.mrb[0].mxu0
    %v873 = vadd.f32 0.0, %v872
    %v874 = vpop.f32.mrb[0].mxu0
    %v875 = vadd.f32 0.0, %v874
    %876 = vmatprep.mubr.bf16.mxu0 0
    %877 = vmatmul.mubr.bf16.gmra.mrb[0].mxu0 %v672
    %v878 = vpop.f32.mrb[0].mxu0
    %v879 = vadd.f32 0.0, %v878
    %v880 = vpop.f32.mrb[0].mxu0
    %v881 = vadd.f32 0.0, %v880
    %v882 = vpop.f32.mrb[0].mxu0
    %v883 = vadd.f32 0.0, %v882
    %v884 = vpop.f32.mrb[0].mxu0
    %v885 = vadd.f32 0.0, %v884
    %886 = vmatprep.mubr.bf16.mxu0 0
    %887 = vmatmul.mubr.bf16.gmra.mrb[0].mxu0 %v675
    %v888 = vpop.f32.mrb[0].mxu0
    %v889 = vadd.f32 0.0, %v888
    %v890 = vpop.f32.mrb[0].mxu0
    %v891 = vadd.f32 0.0, %v890
    %v892 = vpop.f32.mrb[0].mxu0
    %v893 = vadd.f32 0.0, %v892
    %v894 = vpop.f32.mrb[0].mxu0
    %v895 = vadd.f32 0.0, %v894
    %896 = vmatprep.mubr.bf16.mxu0 0
    %897 = vmatmul.mubr.bf16.gmra.mrb[0].mxu0 %v678
    %v898 = vpop.f32.mrb[0].mxu0
    %v899 = vadd.f32 0.0, %v898
    %v900 = vpop.f32.mrb[0].mxu0
    %v901 = vadd.f32 0.0, %v900
    %v902 = vpop.f32.mrb[0].mxu0
    %v903 = vadd.f32 0.0, %v902
    %v904 = vpop.f32.mrb[0].mxu0
    %v905 = vadd.f32 0.0, %v904
    %906 = vmatprep.mubr.bf16.mxu0 0
    %907 = vmatmul.mubr.bf16.gmra.mrb[0].mxu0 %v681
    %v908 = vpop.f32.mrb[0].mxu0
    %v909 = vadd.f32 0.0, %v908
    %v910 = vpop.f32.mrb[0].mxu0
    %v911 = vadd.f32 0.0, %v910
    %v912 = vpop.f32.mrb[0].mxu0
    %v913 = vadd.f32 0.0, %v912
    %v914 = vpop.f32.mrb[0].mxu0
    %v915 = vadd.f32 0.0, %v914
    %916 = vmatprep.mubr.bf16.mxu0 0
    %917 = vmatmul.mubr.bf16.gmra.mrb[0].mxu0 %v684
    %v918 = vpop.f32.mrb[0].mxu0
    %v919 = vadd.f32 0.0, %v918
    %v920 = vpop.f32.mrb[0].mxu0
    %v921 = vadd.f32 0.0, %v920
    %v922 = vpop.f32.mrb[0].mxu0
    %v923 = vadd.f32 0.0, %v922
    %v924 = vpop.f32.mrb[0].mxu0
    %v925 = vadd.f32 0.0, %v924
    %926 = vmatprep.mubr.bf16.mxu0 0
    %927 = vmatmul.mubr.bf16.gmra.mrb[0].mxu0 %v687
    %v928 = vpop.f32.mrb[0].mxu0
    %v929 = vadd.f32 0.0, %v928
    %v930 = vpop.f32.mrb[0].mxu0
    %v931 = vadd.f32 0.0, %v930
    %v932 = vpop.f32.mrb[0].mxu0
    %v933 = vadd.f32 0.0, %v932
    %v934 = vpop.f32.mrb[0].mxu0
    %v935 = vadd.f32 0.0, %v934
    %936 = vmatprep.mubr.bf16.mxu0 0
    %937 = vmatmul.mubr.bf16.gmra.mrb[0].mxu0 %v690
    %v938 = vpop.f32.mrb[0].mxu0
    %v939 = vadd.f32 0.0, %v938
    %v940 = vpop.f32.mrb[0].mxu0
    %v941 = vadd.f32 0.0, %v940
    %v942 = vpop.f32.mrb[0].mxu0
    %v943 = vadd.f32 0.0, %v942
    %v944 = vpop.f32.mrb[0].mxu0
    %v945 = vadd.f32 0.0, %v944
    %946 = vmatprep.mubr.bf16.mxu0 0
    %947 = vmatmul.mubr.bf16.gmra.mrb[0].mxu0 %v693
    %v948 = vpop.f32.mrb[0].mxu0
    %v949 = vadd.f32 0.0, %v948
    %v950 = vpop.f32.mrb[0].mxu0
    %v951 = vadd.f32 0.0, %v950
    %v952 = vpop.f32.mrb[0].mxu0
    %v953 = vadd.f32 0.0, %v952
    %v954 = vpop.f32.mrb[0].mxu0
    %v955 = vadd.f32 0.0, %v954
    %956 = vmatprep.mubr.bf16.mxu0 0
    %957 = vmatmul.mubr.bf16.gmra.mrb[0].mxu0 %v696
    %v958 = vpop.f32.mrb[0].mxu0
    %v959 = vadd.f32 0.0, %v958
    %v960 = vpop.f32.mrb[0].mxu0
    %v961 = vadd.f32 0.0, %v960
    %v962 = vpop.f32.mrb[0].mxu0
    %v963 = vadd.f32 0.0, %v962
    %v964 = vpop.f32.mrb[0].mxu0
    %v965 = vadd.f32 0.0, %v964
    %966 = vmatprep.mubr.bf16.mxu0 0
    %967 = vmatmul.mubr.bf16.gmra.mrb[0].mxu0 %v699
    %v968 = vpop.f32.mrb[0].mxu0
    %v969 = vadd.f32 0.0, %v968
    %v970 = vpop.f32.mrb[0].mxu0
    %v971 = vadd.f32 0.0, %v970
    %v972 = vpop.f32.mrb[0].mxu0
    %v973 = vadd.f32 0.0, %v972
    %v974 = vpop.f32.mrb[0].mxu0
    %v975 = vadd.f32 0.0, %v974
    %976 = vmatprep.mubr.bf16.mxu0 0
    %977 = vmatmul.mubr.bf16.gmra.mrb[0].mxu0 %v702
    %v978 = vpop.f32.mrb[0].mxu0
    %v979 = vadd.f32 0.0, %v978
    %v980 = vpop.f32.mrb[0].mxu0
    %v981 = vadd.f32 0.0, %v980
    %v982 = vpop.f32.mrb[0].mxu0
    %v983 = vadd.f32 0.0, %v982
    %v984 = vpop.f32.mrb[0].mxu0
    %v985 = vadd.f32 0.0, %v984
    %986 = vmatprep.mubr.bf16.mxu0 0
    %987 = vmatmul.mubr.bf16.gmra.mrb[0].mxu0 %v705
    %v988 = vpop.f32.mrb[0].mxu0
    %v989 = vadd.f32 0.0, %v988
    %v990 = vpop.f32.mrb[0].mxu0
    %v991 = vadd.f32 0.0, %v990
    %v992 = vpop.f32.mrb[0].mxu0
    %v993 = vadd.f32 0.0, %v992
    %v994 = vpop.f32.mrb[0].mxu0
    %v995 = vadd.f32 0.0, %v994
    %996 = vmatprep.mubr.bf16.mxu0 0
    %997 = vmatmul.mubr.bf16.gmra.mrb[0].mxu0 %v708
    %v998 = vpop.f32.mrb[0].mxu0
    %v999 = vadd.f32 0.0, %v998
    %v1000 = vpop.f32.mrb[0].mxu0
    %v1001 = vadd.f32 0.0, %v1000
    %v1002 = vpop.f32.mrb[0].mxu0
    %v1003 = vadd.f32 0.0, %v1002
    %v1004 = vpop.f32.mrb[0].mxu0
    %v1005 = vadd.f32 0.0, %v1004
    %1006 = vmatprep.mubr.bf16.mxu0 0
    %1007 = vmatmul.mubr.bf16.gmra.mrb[0].mxu0 %v711
    %v1008 = vpop.f32.mrb[0].mxu0
    %v1009 = vadd.f32 0.0, %v1008
    %v1010 = vpop.f32.mrb[0].mxu0
    %v1011 = vadd.f32 0.0, %v1010
    %v1012 = vpop.f32.mrb[0].mxu0
    %v1013 = vadd.f32 0.0, %v1012
    %v1014 = vpop.f32.mrb[0].mxu0
    %v1015 = vadd.f32 0.0, %v1014
    %1016 = vmatprep.mubr.bf16.mxu0 0
    %1017 = vmatmul.mubr.bf16.gmra.mrb[0].mxu0 %v714
    %v1018 = vpop.f32.mrb[0].mxu0
    %v1019 = vadd.f32 0.0, %v1018
    %v1020 = vpop.f32.mrb[0].mxu0
    %v1021 = vadd.f32 0.0, %v1020
    %v1022 = vpop.f32.mrb[0].mxu0
    %v1023 = vadd.f32 0.0, %v1022
    %v1024 = vpop.f32.mrb[0].mxu0
    %v1025 = vadd.f32 0.0, %v1024
    %1026 = vmatprep.mubr.bf16.mxu0 0
    %1027 = vmatmul.mubr.bf16.gmra.mrb[0].mxu0 %v717
    %v1028 = vpop.f32.mrb[0].mxu0
    %v1029 = vadd.f32 0.0, %v1028
    %v1030 = vpop.f32.mrb[0].mxu0
    %v1031 = vadd.f32 0.0, %v1030
    %v1032 = vpop.f32.mrb[0].mxu0
    %v1033 = vadd.f32 0.0, %v1032
    %v1034 = vpop.f32.mrb[0].mxu0
    %v1035 = vadd.f32 0.0, %v1034
    %1036 = vmatprep.mubr.bf16.mxu0 0
    %1037 = vmatmul.mubr.bf16.gmra.mrb[0].mxu0 %v720
    %v1038 = vpop.f32.mrb[0].mxu0
    %v1039 = vadd.f32 0.0, %v1038
    %v1040 = vpop.f32.mrb[0].mxu0
    %v1041 = vadd.f32 0.0, %v1040
    %v1042 = vpop.f32.mrb[0].mxu0
    %v1043 = vadd.f32 0.0, %v1042
    %v1044 = vpop.f32.mrb[0].mxu0
    %v1045 = vadd.f32 0.0, %v1044
    %1046 = vmatprep.mubr.bf16.mxu0 0
    %1047 = vmatmul.mubr.bf16.gmra.mrb[0].mxu0 %v723
    %v1048 = vpop.f32.mrb[0].mxu0
    %v1049 = vadd.f32 0.0, %v1048
    %v1050 = vpop.f32.mrb[0].mxu0
    %v1051 = vadd.f32 0.0, %v1050
    %v1052 = vpop.f32.mrb[0].mxu0
    %v1053 = vadd.f32 0.0, %v1052
    %v1054 = vpop.f32.mrb[0].mxu0
    %v1055 = vadd.f32 0.0, %v1054
    %1056 = vmatprep.mubr.bf16.mxu0 0
    %1057 = vmatmul.mubr.bf16.gmra.mrb[0].mxu0 %v726
    %v1058 = vpop.f32.mrb[0].mxu0
    %v1059 = vadd.f32 0.0, %v1058
    %v1060 = vpop.f32.mrb[0].mxu0
    %v1061 = vadd.f32 0.0, %v1060
    %v1062 = vpop.f32.mrb[0].mxu0
    %v1063 = vadd.f32 0.0, %v1062
    %v1064 = vpop.f32.mrb[0].mxu0
    %v1065 = vadd.f32 0.0, %v1064
    %1066 = vmatprep.mubr.bf16.mxu0 0
    %1067 = vmatmul.mubr.bf16.gmra.mrb[0].mxu0 %v729
    %v1068 = vpop.f32.mrb[0].mxu0
    %v1069 = vadd.f32 0.0, %v1068
    %v1070 = vpop.f32.mrb[0].mxu0
    %v1071 = vadd.f32 0.0, %v1070
    %v1072 = vpop.f32.mrb[0].mxu0
    %v1073 = vadd.f32 0.0, %v1072
    %v1074 = vpop.f32.mrb[0].mxu0
    %v1075 = vadd.f32 0.0, %v1074
    %1076 = vmatprep.mubr.bf16.mxu0 0
    %1077 = vmatmul.mubr.bf16.gmra.mrb[0].mxu0 %v732
    %v1078 = vpop.f32.mrb[0].mxu0
    %v1079 = vadd.f32 0.0, %v1078
    %v1080 = vpop.f32.mrb[0].mxu0
    %v1081 = vadd.f32 0.0, %v1080
    %v1082 = vpop.f32.mrb[0].mxu0
    %v1083 = vadd.f32 0.0, %v1082
    %v1084 = vpop.f32.mrb[0].mxu0
    %v1085 = vadd.f32 0.0, %v1084
    %1086 = vdwg.mxu0
    %1087 = vmatprep.subr.bf16.mxu0 0
    %1088 = vmatpush1.bf16.msra.mxu0 %v627
    %1089 = vmatprep.subr.bf16.mxu0 0
    %1090 = vmatpush1.bf16.msra.mxu0 %v630
    %1091 = vmatprep.subr.bf16.mxu0 0
    %1092 = vmatpush1.bf16.msra.mxu0 0
    %1093 = vmatprep.subr.bf16.mxu0 0
    %1094 = vmatpush1.bf16.msra.mxu0 0
    %1095 = vmatprep.subr.bf16.mxu0 0
    %1096 = vmatpush1.bf16.msra.mxu0 0
    %1097 = vmatprep.subr.bf16.mxu0 0
    %1098 = vmatpush1.bf16.msra.mxu0 0
    %1099 = vmatprep.subr.bf16.mxu0 0
    %1100 = vmatpush1.bf16.msra.mxu0 0
    %1101 = vmatprep.subr.bf16.mxu0 0
    %1102 = vmatpush1.bf16.msra.mxu0 0
    %1103 = vmatprep.subr.bf16.mxu0 0
    %1104 = vmatpush1.bf16.msra.mxu0 0
    %1105 = vmatprep.subr.bf16.mxu0 0
    %1106 = vmatpush1.bf16.msra.mxu0 0
    %1107 = vmatprep.subr.bf16.mxu0 0
    %1108 = vmatpush1.bf16.msra.mxu0 0
    %1109 = vmatprep.subr.bf16.mxu0 0
    %1110 = vmatpush1.bf16.msra.mxu0 0
    %1111 = vmatprep.subr.bf16.mxu0 0
    %1112 = vmatpush1.bf16.msra.mxu0 0
    %1113 = vmatprep.subr.bf16.mxu0 0
    %1114 = vmatpush1.bf16.msra.mxu0 0
    %1115 = vmatprep.subr.bf16.mxu0 0
    %1116 = vmatpush1.bf16.msra.mxu0 0
    %1117 = vmatprep.subr.bf16.mxu0 0
    %1118 = vmatpush1.bf16.msra.mxu0 0
    %1119 = vmatprep.mubr.bf16.mxu0 0
    %1120 = vmatmul.mubr.bf16.gmra.mrb[0].mxu0 %v639
    %v1121 = vpop.f32.mrb[0].mxu0
    %v1122 = vadd.f32 0.0, %v1121
    %v1123 = vpop.f32.mrb[0].mxu0
    %v1124 = vpop.f32.mrb[0].mxu0
    %v1125 = vadd.f32 0.0, %v1124
    %v1126 = vpop.f32.mrb[0].mxu0
    %1127 = vmatprep.mubr.bf16.mxu0 0
    %1128 = vmatmul.mubr.bf16.gmra.mrb[0].mxu0 %v642
    %v1129 = vpop.f32.mrb[0].mxu0
    %v1130 = vadd.f32 0.0, %v1129
    %v1131 = vpop.f32.mrb[0].mxu0
    %v1132 = vpop.f32.mrb[0].mxu0
    %v1133 = vadd.f32 0.0, %v1132
    %v1134 = vpop.f32.mrb[0].mxu0
    %1135 = vmatprep.mubr.bf16.mxu0 0
    %1136 = vmatmul.mubr.bf16.gmra.mrb[0].mxu0 %v645
    %v1137 = vpop.f32.mrb[0].mxu0
    %v1138 = vadd.f32 0.0, %v1137
    %v1139 = vpop.f32.mrb[0].mxu0
    %v1140 = vpop.f32.mrb[0].mxu0
    %v1141 = vadd.f32 0.0, %v1140
    %v1142 = vpop.f32.mrb[0].mxu0
    %1143 = vmatprep.mubr.bf16.mxu0 0
    %1144 = vmatmul.mubr.bf16.gmra.mrb[0].mxu0 %v648
    %v1145 = vpop.f32.mrb[0].mxu0
    %v1146 = vadd.f32 0.0, %v1145
    %v1147 = vpop.f32.mrb[0].mxu0
    %v1148 = vpop.f32.mrb[0].mxu0
    %v1149 = vadd.f32 0.0, %v1148
    %v1150 = vpop.f32.mrb[0].mxu0
    %1151 = vmatprep.mubr.bf16.mxu0 0
    %1152 = vmatmul.mubr.bf16.gmra.mrb[0].mxu0 %v651
    %v1153 = vpop.f32.mrb[0].mxu0
    %v1154 = vadd.f32 0.0, %v1153
    %v1155 = vpop.f32.mrb[0].mxu0
    %v1156 = vpop.f32.mrb[0].mxu0
    %v1157 = vadd.f32 0.0, %v1156
    %v1158 = vpop.f32.mrb[0].mxu0
    %1159 = vmatprep.mubr.bf16.mxu0 0
    %1160 = vmatmul.mubr.bf16.gmra.mrb[0].mxu0 %v654
    %v1161 = vpop.f32.mrb[0].mxu0
    %v1162 = vadd.f32 0.0, %v1161
    %v1163 = vpop.f32.mrb[0].mxu0
    %v1164 = vpop.f32.mrb[0].mxu0
    %v1165 = vadd.f32 0.0, %v1164
    %v1166 = vpop.f32.mrb[0].mxu0
    %1167 = vmatprep.mubr.bf16.mxu0 0
    %1168 = vmatmul.mubr.bf16.gmra.mrb[0].mxu0 %v657
    %v1169 = vpop.f32.mrb[0].mxu0
    %v1170 = vadd.f32 0.0, %v1169
    %v1171 = vpop.f32.mrb[0].mxu0
    %v1172 = vpop.f32.mrb[0].mxu0
    %v1173 = vadd.f32 0.0, %v1172
    %v1174 = vpop.f32.mrb[0].mxu0
    %1175 = vmatprep.mubr.bf16.mxu0 0
    %1176 = vmatmul.mubr.bf16.gmra.mrb[0].mxu0 %v660
    %v1177 = vpop.f32.mrb[0].mxu0
    %v1178 = vadd.f32 0.0, %v1177
    %v1179 = vpop.f32.mrb[0].mxu0
    %v1180 = vpop.f32.mrb[0].mxu0
    %v1181 = vadd.f32 0.0, %v1180
    %v1182 = vpop.f32.mrb[0].mxu0
    %1183 = vmatprep.mubr.bf16.mxu0 0
    %1184 = vmatmul.mubr.bf16.gmra.mrb[0].mxu0 %v663
    %v1185 = vpop.f32.mrb[0].mxu0
    %v1186 = vadd.f32 0.0, %v1185
    %v1187 = vpop.f32.mrb[0].mxu0
    %v1188 = vpop.f32.mrb[0].mxu0
    %v1189 = vadd.f32 0.0, %v1188
    %v1190 = vpop.f32.mrb[0].mxu0
    %1191 = vmatprep.mubr.bf16.mxu0 0
    %1192 = vmatmul.mubr.bf16.gmra.mrb[0].mxu0 %v666
    %v1193 = vpop.f32.mrb[0].mxu0
    %v1194 = vadd.f32 0.0, %v1193
    %v1195 = vpop.f32.mrb[0].mxu0
    %v1196 = vpop.f32.mrb[0].mxu0
    %v1197 = vadd.f32 0.0, %v1196
    %v1198 = vpop.f32.mrb[0].mxu0
    %1199 = vmatprep.mubr.bf16.mxu0 0
    %1200 = vmatmul.mubr.bf16.gmra.mrb[0].mxu0 %v669
    %v1201 = vpop.f32.mrb[0].mxu0
    %v1202 = vadd.f32 0.0, %v1201
    %v1203 = vpop.f32.mrb[0].mxu0
    %v1204 = vpop.f32.mrb[0].mxu0
    %v1205 = vadd.f32 0.0, %v1204
    %v1206 = vpop.f32.mrb[0].mxu0
    %1207 = vmatprep.mubr.bf16.mxu0 0
    %1208 = vmatmul.mubr.bf16.gmra.mrb[0].mxu0 %v672
    %v1209 = vpop.f32.mrb[0].mxu0
    %v1210 = vadd.f32 0.0, %v1209
    %v1211 = vpop.f32.mrb[0].mxu0
    %v1212 = vpop.f32.mrb[0].mxu0
    %v1213 = vadd.f32 0.0, %v1212
    %v1214 = vpop.f32.mrb[0].mxu0
    %1215 = vmatprep.mubr.bf16.mxu0 0
    %1216 = vmatmul.mubr.bf16.gmra.mrb[0].mxu0 %v675
    %v1217 = vpop.f32.mrb[0].mxu0
    %v1218 = vadd.f32 0.0, %v1217
    %v1219 = vpop.f32.mrb[0].mxu0
    %v1220 = vpop.f32.mrb[0].mxu0
    %v1221 = vadd.f32 0.0, %v1220
    %v1222 = vpop.f32.mrb[0].mxu0
    %1223 = vmatprep.mubr.bf16.mxu0 0
    %1224 = vmatmul.mubr.bf16.gmra.mrb[0].mxu0 %v678
    %v1225 = vpop.f32.mrb[0].mxu0
    %v1226 = vadd.f32 0.0, %v1225
    %v1227 = vpop.f32.mrb[0].mxu0
    %v1228 = vpop.f32.mrb[0].mxu0
    %v1229 = vadd.f32 0.0, %v1228
    %v1230 = vpop.f32.mrb[0].mxu0
    %1231 = vmatprep.mubr.bf16.mxu0 0
    %1232 = vmatmul.mubr.bf16.gmra.mrb[0].mxu0 %v681
    %v1233 = vpop.f32.mrb[0].mxu0
    %v1234 = vadd.f32 0.0, %v1233
    %v1235 = vpop.f32.mrb[0].mxu0
    %v1236 = vpop.f32.mrb[0].mxu0
    %v1237 = vadd.f32 0.0, %v1236
    %v1238 = vpop.f32.mrb[0].mxu0
    %1239 = vmatprep.mubr.bf16.mxu0 0
    %1240 = vmatmul.mubr.bf16.gmra.mrb[0].mxu0 %v684
    %v1241 = vpop.f32.mrb[0].mxu0
    %v1242 = vadd.f32 0.0, %v1241
    %v1243 = vpop.f32.mrb[0].mxu0
    %v1244 = vpop.f32.mrb[0].mxu0
    %v1245 = vadd.f32 0.0, %v1244
    %v1246 = vpop.f32.mrb[0].mxu0
    %1247 = vmatprep.mubr.bf16.mxu0 0
    %1248 = vmatmul.mubr.bf16.gmra.mrb[0].mxu0 %v687
    %v1249 = vpop.f32.mrb[0].mxu0
    %v1250 = vadd.f32 0.0, %v1249
    %v1251 = vpop.f32.mrb[0].mxu0
    %v1252 = vpop.f32.mrb[0].mxu0
    %v1253 = vadd.f32 0.0, %v1252
    %v1254 = vpop.f32.mrb[0].mxu0
    %1255 = vmatprep.mubr.bf16.mxu0 0
    %1256 = vmatmul.mubr.bf16.gmra.mrb[0].mxu0 %v690
    %v1257 = vpop.f32.mrb[0].mxu0
    %v1258 = vadd.f32 0.0, %v1257
    %v1259 = vpop.f32.mrb[0].mxu0
    %v1260 = vpop.f32.mrb[0].mxu0
    %v1261 = vadd.f32 0.0, %v1260
    %v1262 = vpop.f32.mrb[0].mxu0
    %1263 = vmatprep.mubr.bf16.mxu0 0
    %1264 = vmatmul.mubr.bf16.gmra.mrb[0].mxu0 %v693
    %v1265 = vpop.f32.mrb[0].mxu0
    %v1266 = vadd.f32 0.0, %v1265
    %v1267 = vpop.f32.mrb[0].mxu0
    %v1268 = vpop.f32.mrb[0].mxu0
    %v1269 = vadd.f32 0.0, %v1268
    %v1270 = vpop.f32.mrb[0].mxu0
    %1271 = vmatprep.mubr.bf16.mxu0 0
    %1272 = vmatmul.mubr.bf16.gmra.mrb[0].mxu0 %v696
    %v1273 = vpop.f32.mrb[0].mxu0
    %v1274 = vadd.f32 0.0, %v1273
    %v1275 = vpop.f32.mrb[0].mxu0
    %v1276 = vpop.f32.mrb[0].mxu0
    %v1277 = vadd.f32 0.0, %v1276
    %v1278 = vpop.f32.mrb[0].mxu0
    %1279 = vmatprep.mubr.bf16.mxu0 0
    %1280 = vmatmul.mubr.bf16.gmra.mrb[0].mxu0 %v699
    %v1281 = vpop.f32.mrb[0].mxu0
    %v1282 = vadd.f32 0.0, %v1281
    %v1283 = vpop.f32.mrb[0].mxu0
    %v1284 = vpop.f32.mrb[0].mxu0
    %v1285 = vadd.f32 0.0, %v1284
    %v1286 = vpop.f32.mrb[0].mxu0
    %1287 = vmatprep.mubr.bf16.mxu0 0
    %1288 = vmatmul.mubr.bf16.gmra.mrb[0].mxu0 %v702
    %v1289 = vpop.f32.mrb[0].mxu0
    %v1290 = vadd.f32 0.0, %v1289
    %v1291 = vpop.f32.mrb[0].mxu0
    %v1292 = vpop.f32.mrb[0].mxu0
    %v1293 = vadd.f32 0.0, %v1292
    %v1294 = vpop.f32.mrb[0].mxu0
    %1295 = vmatprep.mubr.bf16.mxu0 0
    %1296 = vmatmul.mubr.bf16.gmra.mrb[0].mxu0 %v705
    %v1297 = vpop.f32.mrb[0].mxu0
    %v1298 = vadd.f32 0.0, %v1297
    %v1299 = vpop.f32.mrb[0].mxu0
    %v1300 = vpop.f32.mrb[0].mxu0
    %v1301 = vadd.f32 0.0, %v1300
    %v1302 = vpop.f32.mrb[0].mxu0
    %1303 = vmatprep.mubr.bf16.mxu0 0
    %1304 = vmatmul.mubr.bf16.gmra.mrb[0].mxu0 %v708
    %v1305 = vpop.f32.mrb[0].mxu0
    %v1306 = vadd.f32 0.0, %v1305
    %v1307 = vpop.f32.mrb[0].mxu0
    %v1308 = vpop.f32.mrb[0].mxu0
    %v1309 = vadd.f32 0.0, %v1308
    %v1310 = vpop.f32.mrb[0].mxu0
    %1311 = vmatprep.mubr.bf16.mxu0 0
    %1312 = vmatmul.mubr.bf16.gmra.mrb[0].mxu0 %v711
    %v1313 = vpop.f32.mrb[0].mxu0
    %v1314 = vadd.f32 0.0, %v1313
    %v1315 = vpop.f32.mrb[0].mxu0
    %v1316 = vpop.f32.mrb[0].mxu0
    %v1317 = vadd.f32 0.0, %v1316
    %v1318 = vpop.f32.mrb[0].mxu0
    %1319 = vmatprep.mubr.bf16.mxu0 0
    %1320 = vmatmul.mubr.bf16.gmra.mrb[0].mxu0 %v714
    %v1321 = vpop.f32.mrb[0].mxu0
    %v1322 = vadd.f32 0.0, %v1321
    %v1323 = vpop.f32.mrb[0].mxu0
    %v1324 = vpop.f32.mrb[0].mxu0
    %v1325 = vadd.f32 0.0, %v1324
    %v1326 = vpop.f32.mrb[0].mxu0
    %1327 = vmatprep.mubr.bf16.mxu0 0
    %1328 = vmatmul.mubr.bf16.gmra.mrb[0].mxu0 %v717
    %v1329 = vpop.f32.mrb[0].mxu0
    %v1330 = vadd.f32 0.0, %v1329
    %v1331 = vpop.f32.mrb[0].mxu0
    %v1332 = vpop.f32.mrb[0].mxu0
    %v1333 = vadd.f32 0.0, %v1332
    %v1334 = vpop.f32.mrb[0].mxu0
    %1335 = vmatprep.mubr.bf16.mxu0 0
    %1336 = vmatmul.mubr.bf16.gmra.mrb[0].mxu0 %v720
    %v1337 = vpop.f32.mrb[0].mxu0
    %v1338 = vadd.f32 0.0, %v1337
    %v1339 = vpop.f32.mrb[0].mxu0
    %v1340 = vpop.f32.mrb[0].mxu0
    %v1341 = vadd.f32 0.0, %v1340
    %v1342 = vpop.f32.mrb[0].mxu0
    %1343 = vmatprep.mubr.bf16.mxu0 0
    %1344 = vmatmul.mubr.bf16.gmra.mrb[0].mxu0 %v723
    %v1345 = vpop.f32.mrb[0].mxu0
    %v1346 = vadd.f32 0.0, %v1345
    %v1347 = vpop.f32.mrb[0].mxu0
    %v1348 = vpop.f32.mrb[0].mxu0
    %v1349 = vadd.f32 0.0, %v1348
    %v1350 = vpop.f32.mrb[0].mxu0
    %1351 = vmatprep.mubr.bf16.mxu0 0
    %1352 = vmatmul.mubr.bf16.gmra.mrb[0].mxu0 %v726
    %v1353 = vpop.f32.mrb[0].mxu0
    %v1354 = vadd.f32 0.0, %v1353
    %v1355 = vpop.f32.mrb[0].mxu0
    %v1356 = vpop.f32.mrb[0].mxu0
    %v1357 = vadd.f32 0.0, %v1356
    %v1358 = vpop.f32.mrb[0].mxu0
    %1359 = vmatprep.mubr.bf16.mxu0 0
    %1360 = vmatmul.mubr.bf16.gmra.mrb[0].mxu0 %v729
    %v1361 = vpop.f32.mrb[0].mxu0
    %v1362 = vadd.f32 0.0, %v1361
    %v1363 = vpop.f32.mrb[0].mxu0
    %v1364 = vpop.f32.mrb[0].mxu0
    %v1365 = vadd.f32 0.0, %v1364
    %v1366 = vpop.f32.mrb[0].mxu0
    %1367 = vmatprep.mubr.bf16.mxu0 0
    %1368 = vmatmul.mubr.bf16.gmra.mrb[0].mxu0 %v732
    %v1369 = vpop.f32.mrb[0].mxu0
    %v1370 = vadd.f32 0.0, %v1369
    %v1371 = vpop.f32.mrb[0].mxu0
    %v1372 = vpop.f32.mrb[0].mxu0
    %v1373 = vadd.f32 0.0, %v1372
    %v1374 = vpop.f32.mrb[0].mxu0
    %1375 = vdwg.mxu0
    %1376 = vst [vmem:[#allocation2] sm:$0xff] 0.0
    %1377 = vst [vmem:[#allocation2 + $0x8] sm:$0xff] 0.0
    %1378 = vst.msk [vmem:[#allocation2 + $0x10] sm:$0xff] %vm637, 0.0
    %1379 = vst [vmem:[#allocation2 + $0x18] sm:$0xff] 0.0
    %1380 = vst [vmem:[#allocation2 + $0x20] sm:$0xff] 0.0
    %1381 = vst.msk [vmem:[#allocation2 + $0x28] sm:$0xff] %vm637, 0.0
    %1382 = vst [vmem:[#allocation2 + $0x30] sm:$0x3] 0.0
    %1383 = vst [vmem:[#allocation2 + $0x38] sm:$0x3] 0.0
    %vm1384 = vcmask 254976
    %1385 = vst.msk [vmem:[#allocation2 + $0x40] sm:$0x3] %vm1384, 0.0
    %1386 = vst [vmem:[#allocation2 + $0x510] sm:$0xff] 0.0
    %1387 = vst [vmem:[#allocation2 + $0x518] sm:$0xff] 0.0
    %1388 = vst.msk [vmem:[#allocation2 + $0x520] sm:$0xff] %vm637, 0.0
    %1389 = vst [vmem:[#allocation2 + $0x528] sm:$0xff] 0.0
    %1390 = vst [vmem:[#allocation2 + $0x530] sm:$0xff] 0.0
    %1391 = vst.msk [vmem:[#allocation2 + $0x538] sm:$0xff] %vm637, 0.0
    %1392 = vst [vmem:[#allocation2 + $0x540] sm:$0x3] 0.0
    %1393 = vst [vmem:[#allocation2 + $0x548] sm:$0x3] 0.0
    %1394 = vst.msk [vmem:[#allocation2 + $0x550] sm:$0x3] %vm1384, 0.0
    %s1395 = scalar_lea.vmem [#allocation2], 1224
    %1396 = vst [vmem:[%s1395] sm:$0xff] 0.0
    %1397 = vst [vmem:[%s1395 + $0x8] sm:$0xff] 0.0
    %1398 = vst.msk [vmem:[%s1395 + $0x10] sm:$0xff] %vm637, 0.0
    %1399 = vst [vmem:[%s1395 + $0x18] sm:$0xff] 0.0
    %1400 = vst [vmem:[%s1395 + $0x20] sm:$0xff] 0.0
    %1401 = vst.msk [vmem:[%s1395 + $0x28] sm:$0xff] %vm637, 0.0
    %1402 = vst [vmem:[%s1395 + $0x30] sm:$0x3] 0.0
    %1403 = vst [vmem:[%s1395 + $0x38] sm:$0x3] 0.0
    %1404 = vst.msk [vmem:[%s1395 + $0x40] sm:$0x3] %vm1384, 0.0
    %1405 = vst [vmem:[%s1395 + $0x510] sm:$0xff] 0.0
    %1406 = vst [vmem:[%s1395 + $0x518] sm:$0xff] 0.0
    %1407 = vst.msk [vmem:[%s1395 + $0x520] sm:$0xff] %vm637, 0.0
    %1408 = vst [vmem:[%s1395 + $0x528] sm:$0xff] 0.0
    %1409 = vst [vmem:[%s1395 + $0x530] sm:$0xff] 0.0
    %1410 = vst.msk [vmem:[%s1395 + $0x538] sm:$0xff] %vm637, 0.0
    %1411 = vst [vmem:[%s1395 + $0x540] sm:$0x3] 0.0
    %1412 = vst [vmem:[%s1395 + $0x548] sm:$0x3] 0.0
    %1413 = vst.msk [vmem:[%s1395 + $0x550] sm:$0x3] %vm1384, 0.0
    %v1414 = vlaneseq
    %vm1415 = vcmp.ge.s32.totalorder %v1414, 0
    %vm1416 = vcmp.lt.s32.totalorder %v1414, 288
    %vm1417 = vmand %vm1415, %vm1416
    %1418 = vst.msk [vmem:[#allocation2] ss:$8 sm:$0x7] %vm1417, 0.0
    %1419 = vst.msk [vmem:[#allocation2] ss:$8 sm:$0x0] %vm1417, 0.0
    %s1420 = scalar_lea.vmem [#allocation2], 72
    %1421 = vst.msk [vmem:[%s1420] ss:$8 sm:$0x7] %vm1417, 0.0
    %1422 = vst.msk [vmem:[%s1420] ss:$8 sm:$0x0] %vm1417, 0.0
    %s1423 = scalar_lea.vmem [#allocation2], 144
    %1424 = vst.msk [vmem:[%s1423] ss:$8 sm:$0x7] %vm1417, 0.0
    %1425 = vst.msk [vmem:[%s1423] ss:$8 sm:$0x0] %vm1417, 0.0
    %s1426 = scalar_lea.vmem [#allocation2], 216
    %1427 = vst.msk [vmem:[%s1426] ss:$8 sm:$0x7] %vm1417, 0.0
    %1428 = vst.msk [vmem:[%s1426] ss:$8 sm:$0x0] %vm1417, 0.0
    %s1429 = scalar_lea.vmem [#allocation2], 288
    %1430 = vst.msk [vmem:[%s1429] ss:$8 sm:$0x7] %vm1417, 0.0
    %1431 = vst.msk [vmem:[%s1429] ss:$8 sm:$0x0] %vm1417, 0.0
    %s1432 = scalar_lea.vmem [#allocation2], 360
    %1433 = vst.msk [vmem:[%s1432] ss:$8 sm:$0x7] %vm1417, 0.0
    %1434 = vst.msk [vmem:[%s1432] ss:$8 sm:$0x0] %vm1417, 0.0
    %s1435 = scalar_lea.vmem [#allocation2], 432
    %1436 = vst.msk [vmem:[%s1435] ss:$8 sm:$0x7] %vm1417, 0.0
    %1437 = vst.msk [vmem:[%s1435] ss:$8 sm:$0x0] %vm1417, 0.0
    %s1438 = scalar_lea.vmem [#allocation2], 504
    %1439 = vst.msk [vmem:[%s1438] ss:$8 sm:$0x7] %vm1417, 0.0
    %1440 = vst.msk [vmem:[%s1438] ss:$8 sm:$0x0] %vm1417, 0.0
    %s1441 = scalar_lea.vmem [#allocation2], 576
    %1442 = vst.msk [vmem:[%s1441] ss:$8 sm:$0x7] %vm1417, 0.0
    %1443 = vst.msk [vmem:[%s1441] ss:$8 sm:$0x0] %vm1417, 0.0
    %s1444 = scalar_lea.vmem [#allocation2], 648
    %1445 = vst.msk [vmem:[%s1444] ss:$8 sm:$0x7] %vm1417, 0.0
    %1446 = vst.msk [vmem:[%s1444] ss:$8 sm:$0x0] %vm1417, 0.0
    %s1447 = scalar_lea.vmem [#allocation2], 720
    %1448 = vst.msk [vmem:[%s1447] ss:$8 sm:$0x7] %vm1417, 0.0
    %1449 = vst.msk [vmem:[%s1447] ss:$8 sm:$0x0] %vm1417, 0.0
    %s1450 = scalar_lea.vmem [#allocation2], 792
    %1451 = vst.msk [vmem:[%s1450] ss:$8 sm:$0x7] %vm1417, 0.0
    %1452 = vst.msk [vmem:[%s1450] ss:$8 sm:$0x0] %vm1417, 0.0
    %s1453 = scalar_lea.vmem [#allocation2], 864
    %1454 = vst.msk [vmem:[%s1453] ss:$8 sm:$0x7] %vm1417, 0.0
    %1455 = vst.msk [vmem:[%s1453] ss:$8 sm:$0x0] %vm1417, 0.0
    %s1456 = scalar_lea.vmem [#allocation2], 936
    %1457 = vst.msk [vmem:[%s1456] ss:$8 sm:$0x7] %vm1417, 0.0
    %1458 = vst.msk [vmem:[%s1456] ss:$8 sm:$0x0] %vm1417, 0.0
    %s1459 = scalar_lea.vmem [#allocation2], 1008
    %1460 = vst.msk [vmem:[%s1459] ss:$8 sm:$0x7] %vm1417, 0.0
    %1461 = vst.msk [vmem:[%s1459] ss:$8 sm:$0x0] %vm1417, 0.0
    %s1462 = scalar_lea.vmem [#allocation2], 1080
    %1463 = vst.msk [vmem:[%s1462] ss:$8 sm:$0x7] %vm1417, 0.0
    %1464 = vst.msk [vmem:[%s1462] ss:$8 sm:$0x0] %vm1417, 0.0
    %s1465 = scalar_lea.vmem [#allocation2], 1152
    %1466 = vst.msk [vmem:[%s1465] ss:$8 sm:$0x7] %vm1417, 0.0
    %1467 = vst.msk [vmem:[%s1465] ss:$8 sm:$0x0] %vm1417, 0.0
    %s1468 = scalar_lea.vmem [#allocation2], 1224
    %1469 = vst.msk [vmem:[%s1468] ss:$8 sm:$0x7] %vm1417, 0.0
    %1470 = vst.msk [vmem:[%s1468] ss:$8 sm:$0x0] %vm1417, 0.0
    %s1471 = scalar_lea.vmem [#allocation2], 1296
    %1472 = vst.msk [vmem:[%s1471] ss:$8 sm:$0x7] %vm1417, 0.0
    %1473 = vst.msk [vmem:[%s1471] ss:$8 sm:$0x0] %vm1417, 0.0
    %s1474 = scalar_lea.vmem [#allocation2], 1368
    %1475 = vst.msk [vmem:[%s1474] ss:$8 sm:$0x7] %vm1417, 0.0
    %1476 = vst.msk [vmem:[%s1474] ss:$8 sm:$0x0] %vm1417, 0.0
    %s1477 = scalar_lea.vmem [#allocation2], 1440
    %1478 = vst.msk [vmem:[%s1477] ss:$8 sm:$0x7] %vm1417, 0.0
    %1479 = vst.msk [vmem:[%s1477] ss:$8 sm:$0x0] %vm1417, 0.0
    %s1480 = scalar_lea.vmem [#allocation2], 1512
    %1481 = vst.msk [vmem:[%s1480] ss:$8 sm:$0x7] %vm1417, 0.0
    %1482 = vst.msk [vmem:[%s1480] ss:$8 sm:$0x0] %vm1417, 0.0
    %s1483 = scalar_lea.vmem [#allocation2], 1584
    %1484 = vst.msk [vmem:[%s1483] ss:$8 sm:$0x7] %vm1417, 0.0
    %1485 = vst.msk [vmem:[%s1483] ss:$8 sm:$0x0] %vm1417, 0.0
    %s1486 = scalar_lea.vmem [#allocation2], 1656
    %1487 = vst.msk [vmem:[%s1486] ss:$8 sm:$0x7] %vm1417, 0.0
    %1488 = vst.msk [vmem:[%s1486] ss:$8 sm:$0x0] %vm1417, 0.0
    %s1489 = scalar_lea.vmem [#allocation2], 1728
    %1490 = vst.msk [vmem:[%s1489] ss:$8 sm:$0x7] %vm1417, 0.0
    %1491 = vst.msk [vmem:[%s1489] ss:$8 sm:$0x0] %vm1417, 0.0
    %s1492 = scalar_lea.vmem [#allocation2], 1800
    %1493 = vst.msk [vmem:[%s1492] ss:$8 sm:$0x7] %vm1417, 0.0
    %1494 = vst.msk [vmem:[%s1492] ss:$8 sm:$0x0] %vm1417, 0.0
    %s1495 = scalar_lea.vmem [#allocation2], 1872
    %1496 = vst.msk [vmem:[%s1495] ss:$8 sm:$0x7] %vm1417, 0.0
    %1497 = vst.msk [vmem:[%s1495] ss:$8 sm:$0x0] %vm1417, 0.0
    %s1498 = scalar_lea.vmem [#allocation2], 1944
    %1499 = vst.msk [vmem:[%s1498] ss:$8 sm:$0x7] %vm1417, 0.0
    %1500 = vst.msk [vmem:[%s1498] ss:$8 sm:$0x0] %vm1417, 0.0
    %s1501 = scalar_lea.vmem [#allocation2], 2016
    %1502 = vst.msk [vmem:[%s1501] ss:$8 sm:$0x7] %vm1417, 0.0
    %1503 = vst.msk [vmem:[%s1501] ss:$8 sm:$0x0] %vm1417, 0.0
    %s1504 = scalar_lea.vmem [#allocation2], 2088
    %1505 = vst.msk [vmem:[%s1504] ss:$8 sm:$0x7] %vm1417, 0.0
    %1506 = vst.msk [vmem:[%s1504] ss:$8 sm:$0x0] %vm1417, 0.0
    %s1507 = scalar_lea.vmem [#allocation2], 2160
    %1508 = vst.msk [vmem:[%s1507] ss:$8 sm:$0x7] %vm1417, 0.0
    %1509 = vst.msk [vmem:[%s1507] ss:$8 sm:$0x0] %vm1417, 0.0
    %s1510 = scalar_lea.vmem [#allocation2], 2232
    %1511 = vst.msk [vmem:[%s1510] ss:$8 sm:$0x7] %vm1417, 0.0
    %1512 = vst.msk [vmem:[%s1510] ss:$8 sm:$0x0] %vm1417, 0.0
    %s1513 = scalar_lea.vmem [#allocation2], 2304
    %1514 = vst.msk [vmem:[%s1513] ss:$8 sm:$0x7] %vm1417, 0.0
    %1515 = vst.msk [vmem:[%s1513] ss:$8 sm:$0x0] %vm1417, 0.0
    %s1516 = scalar_lea.vmem [#allocation2], 2376
    %1517 = vst.msk [vmem:[%s1516] ss:$8 sm:$0x7] %vm1417, 0.0
    %1518 = vst.msk [vmem:[%s1516] ss:$8 sm:$0x0] %vm1417, 0.0
    %s1519 = scalar_lea.vmem [#allocation2], 2448
    %1520 = vst.msk [vmem:[%s1519] ss:$8 sm:$0x7] %vm1417, 0.0
    %1521 = vst.msk [vmem:[%s1519] ss:$8 sm:$0x0] %vm1417, 0.0
    %s1522 = scalar_lea.vmem [#allocation2], 2520
    %1523 = vst.msk [vmem:[%s1522] ss:$8 sm:$0x7] %vm1417, 0.0
    %1524 = vst.msk [vmem:[%s1522] ss:$8 sm:$0x0] %vm1417, 0.0
    %s1525 = scalar_lea.vmem [#allocation2], 49
    %1526 = vst.msk [vmem:[%s1525] ss:$8 sm:$0x7] %vm1417, 0.0
    %1527 = vst.msk [vmem:[%s1525] ss:$8 sm:$0x0] %vm1417, 0.0
    %s1528 = scalar_lea.vmem [#allocation2], 121
    %1529 = vst.msk [vmem:[%s1528] ss:$8 sm:$0x7] %vm1417, 0.0
    %1530 = vst.msk [vmem:[%s1528] ss:$8 sm:$0x0] %vm1417, 0.0
    %s1531 = scalar_lea.vmem [#allocation2], 193
    %1532 = vst.msk [vmem:[%s1531] ss:$8 sm:$0x7] %vm1417, 0.0
    %1533 = vst.msk [vmem:[%s1531] ss:$8 sm:$0x0] %vm1417, 0.0
    %s1534 = scalar_lea.vmem [#allocation2], 265
    %1535 = vst.msk [vmem:[%s1534] ss:$8 sm:$0x7] %vm1417, 0.0
    %1536 = vst.msk [vmem:[%s1534] ss:$8 sm:$0x0] %vm1417, 0.0
    %s1537 = scalar_lea.vmem [#allocation2], 337
    %1538 = vst.msk [vmem:[%s1537] ss:$8 sm:$0x7] %vm1417, 0.0
    %1539 = vst.msk [vmem:[%s1537] ss:$8 sm:$0x0] %vm1417, 0.0
    %s1540 = scalar_lea.vmem [#allocation2], 409
    %1541 = vst.msk [vmem:[%s1540] ss:$8 sm:$0x7] %vm1417, 0.0
    %1542 = vst.msk [vmem:[%s1540] ss:$8 sm:$0x0] %vm1417, 0.0
    %s1543 = scalar_lea.vmem [#allocation2], 481
    %1544 = vst.msk [vmem:[%s1543] ss:$8 sm:$0x7] %vm1417, 0.0
    %1545 = vst.msk [vmem:[%s1543] ss:$8 sm:$0x0] %vm1417, 0.0
    %s1546 = scalar_lea.vmem [#allocation2], 553
    %1547 = vst.msk [vmem:[%s1546] ss:$8 sm:$0x7] %vm1417, 0.0
    %1548 = vst.msk [vmem:[%s1546] ss:$8 sm:$0x0] %vm1417, 0.0
    %s1549 = scalar_lea.vmem [#allocation2], 625
    %1550 = vst.msk [vmem:[%s1549] ss:$8 sm:$0x7] %vm1417, 0.0
    %1551 = vst.msk [vmem:[%s1549] ss:$8 sm:$0x0] %vm1417, 0.0
    %s1552 = scalar_lea.vmem [#allocation2], 697
    %1553 = vst.msk [vmem:[%s1552] ss:$8 sm:$0x7] %vm1417, 0.0
    %1554 = vst.msk [vmem:[%s1552] ss:$8 sm:$0x0] %vm1417, 0.0
    %s1555 = scalar_lea.vmem [#allocation2], 769
    %1556 = vst.msk [vmem:[%s1555] ss:$8 sm:$0x7] %vm1417, 0.0
    %1557 = vst.msk [vmem:[%s1555] ss:$8 sm:$0x0] %vm1417, 0.0
    %s1558 = scalar_lea.vmem [#allocation2], 841
    %1559 = vst.msk [vmem:[%s1558] ss:$8 sm:$0x7] %vm1417, 0.0
    %1560 = vst.msk [vmem:[%s1558] ss:$8 sm:$0x0] %vm1417, 0.0
    %s1561 = scalar_lea.vmem [#allocation2], 913
    %1562 = vst.msk [vmem:[%s1561] ss:$8 sm:$0x7] %vm1417, 0.0
    %1563 = vst.msk [vmem:[%s1561] ss:$8 sm:$0x0] %vm1417, 0.0
    %s1564 = scalar_lea.vmem [#allocation2], 985
    %1565 = vst.msk [vmem:[%s1564] ss:$8 sm:$0x7] %vm1417, 0.0
    %1566 = vst.msk [vmem:[%s1564] ss:$8 sm:$0x0] %vm1417, 0.0
    %s1567 = scalar_lea.vmem [#allocation2], 1057
    %1568 = vst.msk [vmem:[%s1567] ss:$8 sm:$0x7] %vm1417, 0.0
    %1569 = vst.msk [vmem:[%s1567] ss:$8 sm:$0x0] %vm1417, 0.0
    %s1570 = scalar_lea.vmem [#allocation2], 1129
    %1571 = vst.msk [vmem:[%s1570] ss:$8 sm:$0x7] %vm1417, 0.0
    %1572 = vst.msk [vmem:[%s1570] ss:$8 sm:$0x0] %vm1417, 0.0
    %s1573 = scalar_lea.vmem [#allocation2], 1201
    %1574 = vst.msk [vmem:[%s1573] ss:$8 sm:$0x7] %vm1417, 0.0
    %1575 = vst.msk [vmem:[%s1573] ss:$8 sm:$0x0] %vm1417, 0.0
    %s1576 = scalar_lea.vmem [#allocation2], 1273
    %1577 = vst.msk [vmem:[%s1576] ss:$8 sm:$0x7] %vm1417, 0.0
    %1578 = vst.msk [vmem:[%s1576] ss:$8 sm:$0x0] %vm1417, 0.0
    %s1579 = scalar_lea.vmem [#allocation2], 1345
    %1580 = vst.msk [vmem:[%s1579] ss:$8 sm:$0x7] %vm1417, 0.0
    %1581 = vst.msk [vmem:[%s1579] ss:$8 sm:$0x0] %vm1417, 0.0
    %s1582 = scalar_lea.vmem [#allocation2], 1417
    %1583 = vst.msk [vmem:[%s1582] ss:$8 sm:$0x7] %vm1417, 0.0
    %1584 = vst.msk [vmem:[%s1582] ss:$8 sm:$0x0] %vm1417, 0.0
    %s1585 = scalar_lea.vmem [#allocation2], 1489
    %1586 = vst.msk [vmem:[%s1585] ss:$8 sm:$0x7] %vm1417, 0.0
    %1587 = vst.msk [vmem:[%s1585] ss:$8 sm:$0x0] %vm1417, 0.0
    %s1588 = scalar_lea.vmem [#allocation2], 1561
    %1589 = vst.msk [vmem:[%s1588] ss:$8 sm:$0x7] %vm1417, 0.0
    %1590 = vst.msk [vmem:[%s1588] ss:$8 sm:$0x0] %vm1417, 0.0
    %s1591 = scalar_lea.vmem [#allocation2], 1633
    %1592 = vst.msk [vmem:[%s1591] ss:$8 sm:$0x7] %vm1417, 0.0
    %1593 = vst.msk [vmem:[%s1591] ss:$8 sm:$0x0] %vm1417, 0.0
    %s1594 = scalar_lea.vmem [#allocation2], 1705
    %1595 = vst.msk [vmem:[%s1594] ss:$8 sm:$0x7] %vm1417, 0.0
    %1596 = vst.msk [vmem:[%s1594] ss:$8 sm:$0x0] %vm1417, 0.0
    %s1597 = scalar_lea.vmem [#allocation2], 1777
    %1598 = vst.msk [vmem:[%s1597] ss:$8 sm:$0x7] %vm1417, 0.0
    %1599 = vst.msk [vmem:[%s1597] ss:$8 sm:$0x0] %vm1417, 0.0
    %s1600 = scalar_lea.vmem [#allocation2], 1849
    %1601 = vst.msk [vmem:[%s1600] ss:$8 sm:$0x7] %vm1417, 0.0
    %1602 = vst.msk [vmem:[%s1600] ss:$8 sm:$0x0] %vm1417, 0.0
    %s1603 = scalar_lea.vmem [#allocation2], 1921
    %1604 = vst.msk [vmem:[%s1603] ss:$8 sm:$0x7] %vm1417, 0.0
    %1605 = vst.msk [vmem:[%s1603] ss:$8 sm:$0x0] %vm1417, 0.0
    %s1606 = scalar_lea.vmem [#allocation2], 1993
    %1607 = vst.msk [vmem:[%s1606] ss:$8 sm:$0x7] %vm1417, 0.0
    %1608 = vst.msk [vmem:[%s1606] ss:$8 sm:$0x0] %vm1417, 0.0
    %s1609 = scalar_lea.vmem [#allocation2], 2065
    %1610 = vst.msk [vmem:[%s1609] ss:$8 sm:$0x7] %vm1417, 0.0
    %1611 = vst.msk [vmem:[%s1609] ss:$8 sm:$0x0] %vm1417, 0.0
    %s1612 = scalar_lea.vmem [#allocation2], 2137
    %1613 = vst.msk [vmem:[%s1612] ss:$8 sm:$0x7] %vm1417, 0.0
    %1614 = vst.msk [vmem:[%s1612] ss:$8 sm:$0x0] %vm1417, 0.0
    %s1615 = scalar_lea.vmem [#allocation2], 2209
    %1616 = vst.msk [vmem:[%s1615] ss:$8 sm:$0x7] %vm1417, 0.0
    %1617 = vst.msk [vmem:[%s1615] ss:$8 sm:$0x0] %vm1417, 0.0
    %s1618 = scalar_lea.vmem [#allocation2], 2281
    %1619 = vst.msk [vmem:[%s1618] ss:$8 sm:$0x7] %vm1417, 0.0
    %1620 = vst.msk [vmem:[%s1618] ss:$8 sm:$0x0] %vm1417, 0.0
    %s1621 = scalar_lea.vmem [#allocation2], 2353
    %1622 = vst.msk [vmem:[%s1621] ss:$8 sm:$0x7] %vm1417, 0.0
    %1623 = vst.msk [vmem:[%s1621] ss:$8 sm:$0x0] %vm1417, 0.0
    %s1624 = scalar_lea.vmem [#allocation2], 2425
    %1625 = vst.msk [vmem:[%s1624] ss:$8 sm:$0x7] %vm1417, 0.0
    %1626 = vst.msk [vmem:[%s1624] ss:$8 sm:$0x0] %vm1417, 0.0
    %s1627 = scalar_lea.vmem [#allocation2], 2497
    %1628 = vst.msk [vmem:[%s1627] ss:$8 sm:$0x7] %vm1417, 0.0
    %1629 = vst.msk [vmem:[%s1627] ss:$8 sm:$0x0] %vm1417, 0.0
    %s1630 = scalar_lea.vmem [#allocation2], 2569
    %1631 = vst.msk [vmem:[%s1630] ss:$8 sm:$0x7] %vm1417, 0.0
    %1632 = vst.msk [vmem:[%s1630] ss:$8 sm:$0x0] %vm1417, 0.0
    %vm1825 = vcmask 1040384
    %v1826 = vrot.slane %v769, 7
    %v1827 = vrot.slane %v771, 7
    %v1828 = vrot.slane %v1122, 7
    %v1829 = vrot.slane %v773, 7
    %v1830 = vsel %vm1825, %v1826, %v1829
    %v1831 = vrot.slane %v775, 7
    %v1832 = vsel %vm1825, %v1827, %v1831
    %v1833 = vrot.slane %v1125, 7
    %v1834 = vsel %vm1825, %v1828, %v1833
    %v1835 = vrot.slane %v779, 7
    %v1836 = vrot.slane %v781, 7
    %v1837 = vrot.slane %v1130, 7
    %v1838 = vrot.slane %v783, 7
    %v1839 = vsel %vm1825, %v1835, %v1838
    %v1840 = vrot.slane %v785, 7
    %v1841 = vsel %vm1825, %v1836, %v1840
    %v1842 = vrot.slane %v1133, 7
    %v1843 = vsel %vm1825, %v1837, %v1842
    %v1844 = vrot.slane %v789, 7
    %v1845 = vrot.slane %v791, 7
    %v1846 = vrot.slane %v1138, 7
    %v1847 = vrot.slane %v793, 7
    %v1848 = vsel %vm1825, %v1844, %v1847
    %v1849 = vrot.slane %v795, 7
    %v1850 = vsel %vm1825, %v1845, %v1849
    %v1851 = vrot.slane %v1141, 7
    %v1852 = vsel %vm1825, %v1846, %v1851
    %v1853 = vrot.slane %v799, 7
    %v1854 = vrot.slane %v801, 7
    %v1855 = vrot.slane %v1146, 7
    %v1856 = vrot.slane %v803, 7
    %v1857 = vsel %vm1825, %v1853, %v1856
    %v1858 = vrot.slane %v805, 7
    %v1859 = vsel %vm1825, %v1854, %v1858
    %v1860 = vrot.slane %v1149, 7
    %v1861 = vsel %vm1825, %v1855, %v1860
    %v1862 = vrot.slane %v809, 7
    %v1863 = vrot.slane %v811, 7
    %v1864 = vrot.slane %v1154, 7
    %v1865 = vrot.slane %v813, 7
    %v1866 = vsel %vm1825, %v1862, %v1865
    %v1867 = vrot.slane %v815, 7
    %v1868 = vsel %vm1825, %v1863, %v1867
    %v1869 = vrot.slane %v1157, 7
    %v1870 = vsel %vm1825, %v1864, %v1869
    %v1871 = vrot.slane %v819, 7
    %v1872 = vrot.slane %v821, 7
    %v1873 = vrot.slane %v1162, 7
    %v1874 = vrot.slane %v823, 7
    %v1875 = vsel %vm1825, %v1871, %v1874
    %v1876 = vrot.slane %v825, 7
    %v1877 = vsel %vm1825, %v1872, %v1876
    %v1878 = vrot.slane %v1165, 7
    %v1879 = vsel %vm1825, %v1873, %v1878
    %v1880 = vrot.slane %v829, 7
    %v1881 = vrot.slane %v831, 7
    %v1882 = vrot.slane %v1170, 7
    %v1883 = vrot.slane %v833, 7
    %v1884 = vsel %vm1825, %v1880, %v1883
    %v1885 = vrot.slane %v835, 7
    %v1886 = vsel %vm1825, %v1881, %v1885
    %v1887 = vrot.slane %v1173, 7
    %v1888 = vsel %vm1825, %v1882, %v1887
    %v1889 = vrot.slane %v839, 7
    %v1890 = vrot.slane %v841, 7
    %v1891 = vrot.slane %v1178, 7
    %v1892 = vrot.slane %v843, 7
    %v1893 = vsel %vm1825, %v1889, %v1892
    %v1894 = vrot.slane %v845, 7
    %v1895 = vsel %vm1825, %v1890, %v1894
    %v1896 = vrot.slane %v1181, 7
    %v1897 = vsel %vm1825, %v1891, %v1896
    %v1898 = vrot.slane %v849, 7
    %v1899 = vrot.slane %v851, 7
    %v1900 = vrot.slane %v1186, 7
    %v1901 = vrot.slane %v853, 7
    %v1902 = vsel %vm1825, %v1898, %v1901
    %v1903 = vrot.slane %v855, 7
    %v1904 = vsel %vm1825, %v1899, %v1903
    %v1905 = vrot.slane %v1189, 7
    %v1906 = vsel %vm1825, %v1900, %v1905
    %v1907 = vrot.slane %v859, 7
    %v1908 = vrot.slane %v861, 7
    %v1909 = vrot.slane %v1194, 7
    %v1910 = vrot.slane %v863, 7
    %v1911 = vsel %vm1825, %v1907, %v1910
    %v1912 = vrot.slane %v865, 7
    %v1913 = vsel %vm1825, %v1908, %v1912
    %v1914 = vrot.slane %v1197, 7
    %v1915 = vsel %vm1825, %v1909, %v1914
    %v1916 = vrot.slane %v869, 7
    %v1917 = vrot.slane %v871, 7
    %v1918 = vrot.slane %v1202, 7
    %v1919 = vrot.slane %v873, 7
    %v1920 = vsel %vm1825, %v1916, %v1919
    %v1921 = vrot.slane %v875, 7
    %v1922 = vsel %vm1825, %v1917, %v1921
    %v1923 = vrot.slane %v1205, 7
    %v1924 = vsel %vm1825, %v1918, %v1923
    %v1925 = vrot.slane %v879, 7
    %v1926 = vrot.slane %v881, 7
    %v1927 = vrot.slane %v1210, 7
    %v1928 = vrot.slane %v883, 7
    %v1929 = vsel %vm1825, %v1925, %v1928
    %v1930 = vrot.slane %v885, 7
    %v1931 = vsel %vm1825, %v1926, %v1930
    %v1932 = vrot.slane %v1213, 7
    %v1933 = vsel %vm1825, %v1927, %v1932
    %v1934 = vrot.slane %v889, 7
    %v1935 = vrot.slane %v891, 7
    %v1936 = vrot.slane %v1218, 7
    %v1937 = vrot.slane %v893, 7
    %v1938 = vsel %vm1825, %v1934, %v1937
    %v1939 = vrot.slane %v895, 7
    %v1940 = vsel %vm1825, %v1935, %v1939
    %v1941 = vrot.slane %v1221, 7
    %v1942 = vsel %vm1825, %v1936, %v1941
    %v1943 = vrot.slane %v899, 7
    %v1944 = vrot.slane %v901, 7
    %v1945 = vrot.slane %v1226, 7
    %v1946 = vrot.slane %v903, 7
    %v1947 = vsel %vm1825, %v1943, %v1946
    %v1948 = vrot.slane %v905, 7
    %v1949 = vsel %vm1825, %v1944, %v1948
    %v1950 = vrot.slane %v1229, 7
    %v1951 = vsel %vm1825, %v1945, %v1950
    %v1952 = vrot.slane %v909, 7
    %v1953 = vrot.slane %v911, 7
    %v1954 = vrot.slane %v1234, 7
    %v1955 = vrot.slane %v913, 7
    %v1956 = vsel %vm1825, %v1952, %v1955
    %v1957 = vrot.slane %v915, 7
    %v1958 = vsel %vm1825, %v1953, %v1957
    %v1959 = vrot.slane %v1237, 7
    %v1960 = vsel %vm1825, %v1954, %v1959
    %v1961 = vrot.slane %v919, 7
    %v1962 = vrot.slane %v921, 7
    %v1963 = vrot.slane %v1242, 7
    %v1964 = vrot.slane %v923, 7
    %v1965 = vsel %vm1825, %v1961, %v1964
    %v1966 = vrot.slane %v925, 7
    %v1967 = vsel %vm1825, %v1962, %v1966
    %v1968 = vrot.slane %v1245, 7
    %v1969 = vsel %vm1825, %v1963, %v1968
    %v1970 = vrot.slane %v929, 7
    %v1971 = vrot.slane %v931, 7
    %v1972 = vrot.slane %v1250, 7
    %v1973 = vrot.slane %v933, 7
    %v1974 = vsel %vm1825, %v1970, %v1973
    %v1975 = vrot.slane %v935, 7
    %v1976 = vsel %vm1825, %v1971, %v1975
    %v1977 = vrot.slane %v1253, 7
    %v1978 = vsel %vm1825, %v1972, %v1977
    %v1979 = vrot.slane %v939, 7
    %v1980 = vrot.slane %v941, 7
    %v1981 = vrot.slane %v1258, 7
    %v1982 = vrot.slane %v943, 7
    %v1983 = vsel %vm1825, %v1979, %v1982
    %v1984 = vrot.slane %v945, 7
    %v1985 = vsel %vm1825, %v1980, %v1984
    %v1986 = vrot.slane %v1261, 7
    %v1987 = vsel %vm1825, %v1981, %v1986
    %v1988 = vrot.slane %v949, 7
    %v1989 = vrot.slane %v951, 7
    %v1990 = vrot.slane %v1266, 7
    %v1991 = vrot.slane %v953, 7
    %v1992 = vsel %vm1825, %v1988, %v1991
    %v1993 = vrot.slane %v955, 7
    %v1994 = vsel %vm1825, %v1989, %v1993
    %v1995 = vrot.slane %v1269, 7
    %v1996 = vsel %vm1825, %v1990, %v1995
    %v1997 = vrot.slane %v959, 7
    %v1998 = vrot.slane %v961, 7
    %v1999 = vrot.slane %v1274, 7
    %v2000 = vrot.slane %v963, 7
    %v2001 = vsel %vm1825, %v1997, %v2000
    %v2002 = vrot.slane %v965, 7
    %v2003 = vsel %vm1825, %v1998, %v2002
    %v2004 = vrot.slane %v1277, 7
    %v2005 = vsel %vm1825, %v1999, %v2004
    %v2006 = vrot.slane %v969, 7
    %v2007 = vrot.slane %v971, 7
    %v2008 = vrot.slane %v1282, 7
    %v2009 = vrot.slane %v973, 7
    %v2010 = vsel %vm1825, %v2006, %v2009
    %v2011 = vrot.slane %v975, 7
    %v2012 = vsel %vm1825, %v2007, %v2011
    %v2013 = vrot.slane %v1285, 7
    %v2014 = vsel %vm1825, %v2008, %v2013
    %v2015 = vrot.slane %v979, 7
    %v2016 = vrot.slane %v981, 7
    %v2017 = vrot.slane %v1290, 7
    %v2018 = vrot.slane %v983, 7
    %v2019 = vsel %vm1825, %v2015, %v2018
    %v2020 = vrot.slane %v985, 7
    %v2021 = vsel %vm1825, %v2016, %v2020
    %v2022 = vrot.slane %v1293, 7
    %v2023 = vsel %vm1825, %v2017, %v2022
    %v2024 = vrot.slane %v989, 7
    %v2025 = vrot.slane %v991, 7
    %v2026 = vrot.slane %v1298, 7
    %v2027 = vrot.slane %v993, 7
    %v2028 = vsel %vm1825, %v2024, %v2027
    %v2029 = vrot.slane %v995, 7
    %v2030 = vsel %vm1825, %v2025, %v2029
    %v2031 = vrot.slane %v1301, 7
    %v2032 = vsel %vm1825, %v2026, %v2031
    %v2033 = vrot.slane %v999, 7
    %v2034 = vrot.slane %v1001, 7
    %v2035 = vrot.slane %v1306, 7
    %v2036 = vrot.slane %v1003, 7
    %v2037 = vsel %vm1825, %v2033, %v2036
    %v2038 = vrot.slane %v1005, 7
    %v2039 = vsel %vm1825, %v2034, %v2038
    %v2040 = vrot.slane %v1309, 7
    %v2041 = vsel %vm1825, %v2035, %v2040
    %v2042 = vrot.slane %v1009, 7
    %v2043 = vrot.slane %v1011, 7
    %v2044 = vrot.slane %v1314, 7
    %v2045 = vrot.slane %v1013, 7
    %v2046 = vsel %vm1825, %v2042, %v2045
    %v2047 = vrot.slane %v1015, 7
    %v2048 = vsel %vm1825, %v2043, %v2047
    %v2049 = vrot.slane %v1317, 7
    %v2050 = vsel %vm1825, %v2044, %v2049
    %v2051 = vrot.slane %v1019, 7
    %v2052 = vrot.slane %v1021, 7
    %v2053 = vrot.slane %v1322, 7
    %v2054 = vrot.slane %v1023, 7
    %v2055 = vsel %vm1825, %v2051, %v2054
    %v2056 = vrot.slane %v1025, 7
    %v2057 = vsel %vm1825, %v2052, %v2056
    %v2058 = vrot.slane %v1325, 7
    %v2059 = vsel %vm1825, %v2053, %v2058
    %v2060 = vrot.slane %v1029, 7
    %v2061 = vrot.slane %v1031, 7
    %v2062 = vrot.slane %v1330, 7
    %v2063 = vrot.slane %v1033, 7
    %v2064 = vsel %vm1825, %v2060, %v2063
    %v2065 = vrot.slane %v1035, 7
    %v2066 = vsel %vm1825, %v2061, %v2065
    %v2067 = vrot.slane %v1333, 7
    %v2068 = vsel %vm1825, %v2062, %v2067
    %v2069 = vrot.slane %v1039, 7
    %v2070 = vrot.slane %v1041, 7
    %v2071 = vrot.slane %v1338, 7
    %v2072 = vrot.slane %v1043, 7
    %v2073 = vsel %vm1825, %v2069, %v2072
    %v2074 = vrot.slane %v1045, 7
    %v2075 = vsel %vm1825, %v2070, %v2074
    %v2076 = vrot.slane %v1341, 7
    %v2077 = vsel %vm1825, %v2071, %v2076
    %v2078 = vrot.slane %v1049, 7
    %v2079 = vrot.slane %v1051, 7
    %v2080 = vrot.slane %v1346, 7
    %v2081 = vrot.slane %v1053, 7
    %v2082 = vsel %vm1825, %v2078, %v2081
    %v2083 = vrot.slane %v1055, 7
    %v2084 = vsel %vm1825, %v2079, %v2083
    %v2085 = vrot.slane %v1349, 7
    %v2086 = vsel %vm1825, %v2080, %v2085
    %v2087 = vrot.slane %v1059, 7
    %v2088 = vrot.slane %v1061, 7
    %v2089 = vrot.slane %v1354, 7
    %v2090 = vrot.slane %v1063, 7
    %v2091 = vsel %vm1825, %v2087, %v2090
    %v2092 = vrot.slane %v1065, 7
    %v2093 = vsel %vm1825, %v2088, %v2092
    %v2094 = vrot.slane %v1357, 7
    %v2095 = vsel %vm1825, %v2089, %v2094
    %v2096 = vrot.slane %v1069, 7
    %v2097 = vrot.slane %v1071, 7
    %v2098 = vrot.slane %v1362, 7
    %v2099 = vrot.slane %v1073, 7
    %v2100 = vsel %vm1825, %v2096, %v2099
    %v2101 = vrot.slane %v1075, 7
    %v2102 = vsel %vm1825, %v2097, %v2101
    %v2103 = vrot.slane %v1365, 7
    %v2104 = vsel %vm1825, %v2098, %v2103
    %v2105 = vrot.slane %v1079, 7
    %v2106 = vrot.slane %v1081, 7
    %v2107 = vrot.slane %v1370, 7
    %v2108 = vrot.slane %v1083, 7
    %v2109 = vsel %vm1825, %v2105, %v2108
    %v2110 = vrot.slane %v1085, 7
    %v2111 = vsel %vm1825, %v2106, %v2110
    %v2112 = vrot.slane %v1373, 7
    %v2113 = vsel %vm1825, %v2107, %v2112
    %s2402 = scalar_lea.vmem [#allocation2], 72
    %2403 = vst [vmem:[%s2402] sm:$0xfe] %v1826
    %2404 = vst [vmem:[%s2402 + $0x8] sm:$0xfe] %v1827
    %vm2405 = vcmask 261121
    %2406 = vst.msk [vmem:[%s2402 + $0x10] sm:$0xfe] %vm2405, %v1828
    %2407 = vst [vmem:[%s2402 + $0x18] sm:$0xff] %v1830
    %2408 = vst [vmem:[%s2402 + $0x20] sm:$0xff] %v1832
    %2409 = vst.msk [vmem:[%s2402 + $0x28] sm:$0xff] %vm637, %v1834
    %2410 = vst [vmem:[%s2402 + $0x30] sm:$0x1] %v1829
    %2411 = vst [vmem:[%s2402 + $0x38] sm:$0x1] %v1831
    %vm2412 = vcmask 253952
    %2413 = vst.msk [vmem:[%s2402 + $0x40] sm:$0x1] %vm2412, %v1833
    %2414 = vst [vmem:[%s2402 + $0x48] sm:$0xfe] %v1835
    %2415 = vst [vmem:[%s2402 + $0x50] sm:$0xfe] %v1836
    %2416 = vst.msk [vmem:[%s2402 + $0x58] sm:$0xfe] %vm2405, %v1837
    %2417 = vst [vmem:[%s2402 + $0x60] sm:$0xff] %v1839
    %2418 = vst [vmem:[%s2402 + $0x68] sm:$0xff] %v1841
    %2419 = vst.msk [vmem:[%s2402 + $0x70] sm:$0xff] %vm637, %v1843
    %2420 = vst [vmem:[%s2402 + $0x78] sm:$0x1] %v1838
    %2421 = vst [vmem:[%s2402 + $0x80] sm:$0x1] %v1840
    %2422 = vst.msk [vmem:[%s2402 + $0x88] sm:$0x1] %vm2412, %v1842
    %2423 = vst [vmem:[%s2402 + $0x90] sm:$0xfe] %v1844
    %2424 = vst [vmem:[%s2402 + $0x98] sm:$0xfe] %v1845
    %2425 = vst.msk [vmem:[%s2402 + $0xa0] sm:$0xfe] %vm2405, %v1846
    %2426 = vst [vmem:[%s2402 + $0xa8] sm:$0xff] %v1848
    %2427 = vst [vmem:[%s2402 + $0xb0] sm:$0xff] %v1850
    %2428 = vst.msk [vmem:[%s2402 + $0xb8] sm:$0xff] %vm637, %v1852
    %2429 = vst [vmem:[%s2402 + $0xc0] sm:$0x1] %v1847
    %2430 = vst [vmem:[%s2402 + $0xc8] sm:$0x1] %v1849
    %2431 = vst.msk [vmem:[%s2402 + $0xd0] sm:$0x1] %vm2412, %v1851
    %2432 = vst [vmem:[%s2402 + $0xd8] sm:$0xfe] %v1853
    %2433 = vst [vmem:[%s2402 + $0xe0] sm:$0xfe] %v1854
    %2434 = vst.msk [vmem:[%s2402 + $0xe8] sm:$0xfe] %vm2405, %v1855
    %2435 = vst [vmem:[%s2402 + $0xf0] sm:$0xff] %v1857
    %2436 = vst [vmem:[%s2402 + $0xf8] sm:$0xff] %v1859
    %2437 = vst.msk [vmem:[%s2402 + $0x100] sm:$0xff] %vm637, %v1861
    %2438 = vst [vmem:[%s2402 + $0x108] sm:$0x1] %v1856
    %2439 = vst [vmem:[%s2402 + $0x110] sm:$0x1] %v1858
    %2440 = vst.msk [vmem:[%s2402 + $0x118] sm:$0x1] %vm2412, %v1860
    %2441 = vst [vmem:[%s2402 + $0x120] sm:$0xfe] %v1862
    %2442 = vst [vmem:[%s2402 + $0x128] sm:$0xfe] %v1863
    %2443 = vst.msk [vmem:[%s2402 + $0x130] sm:$0xfe] %vm2405, %v1864
    %2444 = vst [vmem:[%s2402 + $0x138] sm:$0xff] %v1866
    %2445 = vst [vmem:[%s2402 + $0x140] sm:$0xff] %v1868
    %2446 = vst.msk [vmem:[%s2402 + $0x148] sm:$0xff] %vm637, %v1870
    %2447 = vst [vmem:[%s2402 + $0x150] sm:$0x1] %v1865
    %2448 = vst [vmem:[%s2402 + $0x158] sm:$0x1] %v1867
    %2449 = vst.msk [vmem:[%s2402 + $0x160] sm:$0x1] %vm2412, %v1869
    %2450 = vst [vmem:[%s2402 + $0x168] sm:$0xfe] %v1871
    %2451 = vst [vmem:[%s2402 + $0x170] sm:$0xfe] %v1872
    %2452 = vst.msk [vmem:[%s2402 + $0x178] sm:$0xfe] %vm2405, %v1873
    %2453 = vst [vmem:[%s2402 + $0x180] sm:$0xff] %v1875
    %2454 = vst [vmem:[%s2402 + $0x188] sm:$0xff] %v1877
    %2455 = vst.msk [vmem:[%s2402 + $0x190] sm:$0xff] %vm637, %v1879
    %2456 = vst [vmem:[%s2402 + $0x198] sm:$0x1] %v1874
    %2457 = vst [vmem:[%s2402 + $0x1a0] sm:$0x1] %v1876
    %2458 = vst.msk [vmem:[%s2402 + $0x1a8] sm:$0x1] %vm2412, %v1878
    %2459 = vst [vmem:[%s2402 + $0x1b0] sm:$0xfe] %v1880
    %2460 = vst [vmem:[%s2402 + $0x1b8] sm:$0xfe] %v1881
    %2461 = vst.msk [vmem:[%s2402 + $0x1c0] sm:$0xfe] %vm2405, %v1882
    %2462 = vst [vmem:[%s2402 + $0x1c8] sm:$0xff] %v1884
    %2463 = vst [vmem:[%s2402 + $0x1d0] sm:$0xff] %v1886
    %2464 = vst.msk [vmem:[%s2402 + $0x1d8] sm:$0xff] %vm637, %v1888
    %2465 = vst [vmem:[%s2402 + $0x1e0] sm:$0x1] %v1883
    %2466 = vst [vmem:[%s2402 + $0x1e8] sm:$0x1] %v1885
    %2467 = vst.msk [vmem:[%s2402 + $0x1f0] sm:$0x1] %vm2412, %v1887
    %2468 = vst [vmem:[%s2402 + $0x1f8] sm:$0xfe] %v1889
    %2469 = vst [vmem:[%s2402 + $0x200] sm:$0xfe] %v1890
    %2470 = vst.msk [vmem:[%s2402 + $0x208] sm:$0xfe] %vm2405, %v1891
    %2471 = vst [vmem:[%s2402 + $0x210] sm:$0xff] %v1893
    %2472 = vst [vmem:[%s2402 + $0x218] sm:$0xff] %v1895
    %2473 = vst.msk [vmem:[%s2402 + $0x220] sm:$0xff] %vm637, %v1897
    %2474 = vst [vmem:[%s2402 + $0x228] sm:$0x1] %v1892
    %2475 = vst [vmem:[%s2402 + $0x230] sm:$0x1] %v1894
    %2476 = vst.msk [vmem:[%s2402 + $0x238] sm:$0x1] %vm2412, %v1896
    %2477 = vst [vmem:[%s2402 + $0x240] sm:$0xfe] %v1898
    %2478 = vst [vmem:[%s2402 + $0x248] sm:$0xfe] %v1899
    %2479 = vst.msk [vmem:[%s2402 + $0x250] sm:$0xfe] %vm2405, %v1900
    %2480 = vst [vmem:[%s2402 + $0x258] sm:$0xff] %v1902
    %2481 = vst [vmem:[%s2402 + $0x260] sm:$0xff] %v1904
    %2482 = vst.msk [vmem:[%s2402 + $0x268] sm:$0xff] %vm637, %v1906
    %2483 = vst [vmem:[%s2402 + $0x270] sm:$0x1] %v1901
    %2484 = vst [vmem:[%s2402 + $0x278] sm:$0x1] %v1903
    %2485 = vst.msk [vmem:[%s2402 + $0x280] sm:$0x1] %vm2412, %v1905
    %2486 = vst [vmem:[%s2402 + $0x288] sm:$0xfe] %v1907
    %2487 = vst [vmem:[%s2402 + $0x290] sm:$0xfe] %v1908
    %2488 = vst.msk [vmem:[%s2402 + $0x298] sm:$0xfe] %vm2405, %v1909
    %2489 = vst [vmem:[%s2402 + $0x2a0] sm:$0xff] %v1911
    %2490 = vst [vmem:[%s2402 + $0x2a8] sm:$0xff] %v1913
    %2491 = vst.msk [vmem:[%s2402 + $0x2b0] sm:$0xff] %vm637, %v1915
    %2492 = vst [vmem:[%s2402 + $0x2b8] sm:$0x1] %v1910
    %2493 = vst [vmem:[%s2402 + $0x2c0] sm:$0x1] %v1912
    %2494 = vst.msk [vmem:[%s2402 + $0x2c8] sm:$0x1] %vm2412, %v1914
    %2495 = vst [vmem:[%s2402 + $0x2d0] sm:$0xfe] %v1916
    %2496 = vst [vmem:[%s2402 + $0x2d8] sm:$0xfe] %v1917
    %2497 = vst.msk [vmem:[%s2402 + $0x2e0] sm:$0xfe] %vm2405, %v1918
    %2498 = vst [vmem:[%s2402 + $0x2e8] sm:$0xff] %v1920
    %2499 = vst [vmem:[%s2402 + $0x2f0] sm:$0xff] %v1922
    %2500 = vst.msk [vmem:[%s2402 + $0x2f8] sm:$0xff] %vm637, %v1924
    %2501 = vst [vmem:[%s2402 + $0x300] sm:$0x1] %v1919
    %2502 = vst [vmem:[%s2402 + $0x308] sm:$0x1] %v1921
    %2503 = vst.msk [vmem:[%s2402 + $0x310] sm:$0x1] %vm2412, %v1923
    %2504 = vst [vmem:[%s2402 + $0x318] sm:$0xfe] %v1925
    %2505 = vst [vmem:[%s2402 + $0x320] sm:$0xfe] %v1926
    %2506 = vst.msk [vmem:[%s2402 + $0x328] sm:$0xfe] %vm2405, %v1927
    %2507 = vst [vmem:[%s2402 + $0x330] sm:$0xff] %v1929
    %2508 = vst [vmem:[%s2402 + $0x338] sm:$0xff] %v1931
    %2509 = vst.msk [vmem:[%s2402 + $0x340] sm:$0xff] %vm637, %v1933
    %2510 = vst [vmem:[%s2402 + $0x348] sm:$0x1] %v1928
    %2511 = vst [vmem:[%s2402 + $0x350] sm:$0x1] %v1930
    %2512 = vst.msk [vmem:[%s2402 + $0x358] sm:$0x1] %vm2412, %v1932
    %2513 = vst [vmem:[%s2402 + $0x360] sm:$0xfe] %v1934
    %2514 = vst [vmem:[%s2402 + $0x368] sm:$0xfe] %v1935
    %2515 = vst.msk [vmem:[%s2402 + $0x370] sm:$0xfe] %vm2405, %v1936
    %2516 = vst [vmem:[%s2402 + $0x378] sm:$0xff] %v1938
    %2517 = vst [vmem:[%s2402 + $0x380] sm:$0xff] %v1940
    %2518 = vst.msk [vmem:[%s2402 + $0x388] sm:$0xff] %vm637, %v1942
    %2519 = vst [vmem:[%s2402 + $0x390] sm:$0x1] %v1937
    %2520 = vst [vmem:[%s2402 + $0x398] sm:$0x1] %v1939
    %2521 = vst.msk [vmem:[%s2402 + $0x3a0] sm:$0x1] %vm2412, %v1941
    %2522 = vst [vmem:[%s2402 + $0x3a8] sm:$0xfe] %v1943
    %2523 = vst [vmem:[%s2402 + $0x3b0] sm:$0xfe] %v1944
    %2524 = vst.msk [vmem:[%s2402 + $0x3b8] sm:$0xfe] %vm2405, %v1945
    %2525 = vst [vmem:[%s2402 + $0x3c0] sm:$0xff] %v1947
    %2526 = vst [vmem:[%s2402 + $0x3c8] sm:$0xff] %v1949
    %2527 = vst.msk [vmem:[%s2402 + $0x3d0] sm:$0xff] %vm637, %v1951
    %2528 = vst [vmem:[%s2402 + $0x3d8] sm:$0x1] %v1946
    %2529 = vst [vmem:[%s2402 + $0x3e0] sm:$0x1] %v1948
    %2530 = vst.msk [vmem:[%s2402 + $0x3e8] sm:$0x1] %vm2412, %v1950
    %2531 = vst [vmem:[%s2402 + $0x3f0] sm:$0xfe] %v1952
    %2532 = vst [vmem:[%s2402 + $0x3f8] sm:$0xfe] %v1953
    %2533 = vst.msk [vmem:[%s2402 + $0x400] sm:$0xfe] %vm2405, %v1954
    %2534 = vst [vmem:[%s2402 + $0x408] sm:$0xff] %v1956
    %2535 = vst [vmem:[%s2402 + $0x410] sm:$0xff] %v1958
    %2536 = vst.msk [vmem:[%s2402 + $0x418] sm:$0xff] %vm637, %v1960
    %2537 = vst [vmem:[%s2402 + $0x420] sm:$0x1] %v1955
    %2538 = vst [vmem:[%s2402 + $0x428] sm:$0x1] %v1957
    %2539 = vst.msk [vmem:[%s2402 + $0x430] sm:$0x1] %vm2412, %v1959
    %2540 = vst [vmem:[%s2402 + $0x438] sm:$0xfe] %v1961
    %2541 = vst [vmem:[%s2402 + $0x440] sm:$0xfe] %v1962
    %2542 = vst.msk [vmem:[%s2402 + $0x448] sm:$0xfe] %vm2405, %v1963
    %2543 = vst [vmem:[%s2402 + $0x450] sm:$0xff] %v1965
    %2544 = vst [vmem:[%s2402 + $0x458] sm:$0xff] %v1967
    %2545 = vst.msk [vmem:[%s2402 + $0x460] sm:$0xff] %vm637, %v1969
    %2546 = vst [vmem:[%s2402 + $0x468] sm:$0x1] %v1964
    %2547 = vst [vmem:[%s2402 + $0x470] sm:$0x1] %v1966
    %2548 = vst.msk [vmem:[%s2402 + $0x478] sm:$0x1] %vm2412, %v1968
    %2549 = vst [vmem:[%s2402 + $0x510] sm:$0xfe] %v1970
    %2550 = vst [vmem:[%s2402 + $0x518] sm:$0xfe] %v1971
    %2551 = vst.msk [vmem:[%s2402 + $0x520] sm:$0xfe] %vm2405, %v1972
    %2552 = vst [vmem:[%s2402 + $0x528] sm:$0xff] %v1974
    %2553 = vst [vmem:[%s2402 + $0x530] sm:$0xff] %v1976
    %2554 = vst.msk [vmem:[%s2402 + $0x538] sm:$0xff] %vm637, %v1978
    %2555 = vst [vmem:[%s2402 + $0x540] sm:$0x1] %v1973
    %2556 = vst [vmem:[%s2402 + $0x548] sm:$0x1] %v1975
    %2557 = vst.msk [vmem:[%s2402 + $0x550] sm:$0x1] %vm2412, %v1977
    %2558 = vst [vmem:[%s2402 + $0x558] sm:$0xfe] %v1979
    %2559 = vst [vmem:[%s2402 + $0x560] sm:$0xfe] %v1980
    %2560 = vst.msk [vmem:[%s2402 + $0x568] sm:$0xfe] %vm2405, %v1981
    %2561 = vst [vmem:[%s2402 + $0x570] sm:$0xff] %v1983
    %2562 = vst [vmem:[%s2402 + $0x578] sm:$0xff] %v1985
    %2563 = vst.msk [vmem:[%s2402 + $0x580] sm:$0xff] %vm637, %v1987
    %2564 = vst [vmem:[%s2402 + $0x588] sm:$0x1] %v1982
    %2565 = vst [vmem:[%s2402 + $0x590] sm:$0x1] %v1984
    %2566 = vst.msk [vmem:[%s2402 + $0x598] sm:$0x1] %vm2412, %v1986
    %2567 = vst [vmem:[%s2402 + $0x5a0] sm:$0xfe] %v1988
    %2568 = vst [vmem:[%s2402 + $0x5a8] sm:$0xfe] %v1989
    %2569 = vst.msk [vmem:[%s2402 + $0x5b0] sm:$0xfe] %vm2405, %v1990
    %2570 = vst [vmem:[%s2402 + $0x5b8] sm:$0xff] %v1992
    %2571 = vst [vmem:[%s2402 + $0x5c0] sm:$0xff] %v1994
    %2572 = vst.msk [vmem:[%s2402 + $0x5c8] sm:$0xff] %vm637, %v1996
    %2573 = vst [vmem:[%s2402 + $0x5d0] sm:$0x1] %v1991
    %2574 = vst [vmem:[%s2402 + $0x5d8] sm:$0x1] %v1993
    %2575 = vst.msk [vmem:[%s2402 + $0x5e0] sm:$0x1] %vm2412, %v1995
    %2576 = vst [vmem:[%s2402 + $0x5e8] sm:$0xfe] %v1997
    %2577 = vst [vmem:[%s2402 + $0x5f0] sm:$0xfe] %v1998
    %2578 = vst.msk [vmem:[%s2402 + $0x5f8] sm:$0xfe] %vm2405, %v1999
    %2579 = vst [vmem:[%s2402 + $0x600] sm:$0xff] %v2001
    %2580 = vst [vmem:[%s2402 + $0x608] sm:$0xff] %v2003
    %2581 = vst.msk [vmem:[%s2402 + $0x610] sm:$0xff] %vm637, %v2005
    %2582 = vst [vmem:[%s2402 + $0x618] sm:$0x1] %v2000
    %2583 = vst [vmem:[%s2402 + $0x620] sm:$0x1] %v2002
    %2584 = vst.msk [vmem:[%s2402 + $0x628] sm:$0x1] %vm2412, %v2004
    %2585 = vst [vmem:[%s2402 + $0x630] sm:$0xfe] %v2006
    %2586 = vst [vmem:[%s2402 + $0x638] sm:$0xfe] %v2007
    %2587 = vst.msk [vmem:[%s2402 + $0x640] sm:$0xfe] %vm2405, %v2008
    %2588 = vst [vmem:[%s2402 + $0x648] sm:$0xff] %v2010
    %2589 = vst [vmem:[%s2402 + $0x650] sm:$0xff] %v2012
    %2590 = vst.msk [vmem:[%s2402 + $0x658] sm:$0xff] %vm637, %v2014
    %2591 = vst [vmem:[%s2402 + $0x660] sm:$0x1] %v2009
    %2592 = vst [vmem:[%s2402 + $0x668] sm:$0x1] %v2011
    %2593 = vst.msk [vmem:[%s2402 + $0x670] sm:$0x1] %vm2412, %v2013
    %2594 = vst [vmem:[%s2402 + $0x678] sm:$0xfe] %v2015
    %2595 = vst [vmem:[%s2402 + $0x680] sm:$0xfe] %v2016
    %2596 = vst.msk [vmem:[%s2402 + $0x688] sm:$0xfe] %vm2405, %v2017
    %2597 = vst [vmem:[%s2402 + $0x690] sm:$0xff] %v2019
    %2598 = vst [vmem:[%s2402 + $0x698] sm:$0xff] %v2021
    %2599 = vst.msk [vmem:[%s2402 + $0x6a0] sm:$0xff] %vm637, %v2023
    %2600 = vst [vmem:[%s2402 + $0x6a8] sm:$0x1] %v2018
    %2601 = vst [vmem:[%s2402 + $0x6b0] sm:$0x1] %v2020
    %2602 = vst.msk [vmem:[%s2402 + $0x6b8] sm:$0x1] %vm2412, %v2022
    %2603 = vst [vmem:[%s2402 + $0x6c0] sm:$0xfe] %v2024
    %2604 = vst [vmem:[%s2402 + $0x6c8] sm:$0xfe] %v2025
    %2605 = vst.msk [vmem:[%s2402 + $0x6d0] sm:$0xfe] %vm2405, %v2026
    %2606 = vst [vmem:[%s2402 + $0x6d8] sm:$0xff] %v2028
    %2607 = vst [vmem:[%s2402 + $0x6e0] sm:$0xff] %v2030
    %2608 = vst.msk [vmem:[%s2402 + $0x6e8] sm:$0xff] %vm637, %v2032
    %2609 = vst [vmem:[%s2402 + $0x6f0] sm:$0x1] %v2027
    %2610 = vst [vmem:[%s2402 + $0x6f8] sm:$0x1] %v2029
    %2611 = vst.msk [vmem:[%s2402 + $0x700] sm:$0x1] %vm2412, %v2031
    %2612 = vst [vmem:[%s2402 + $0x708] sm:$0xfe] %v2033
    %2613 = vst [vmem:[%s2402 + $0x710] sm:$0xfe] %v2034
    %2614 = vst.msk [vmem:[%s2402 + $0x718] sm:$0xfe] %vm2405, %v2035
    %2615 = vst [vmem:[%s2402 + $0x720] sm:$0xff] %v2037
    %2616 = vst [vmem:[%s2402 + $0x728] sm:$0xff] %v2039
    %2617 = vst.msk [vmem:[%s2402 + $0x730] sm:$0xff] %vm637, %v2041
    %2618 = vst [vmem:[%s2402 + $0x738] sm:$0x1] %v2036
    %2619 = vst [vmem:[%s2402 + $0x740] sm:$0x1] %v2038
    %2620 = vst.msk [vmem:[%s2402 + $0x748] sm:$0x1] %vm2412, %v2040
    %2621 = vst [vmem:[%s2402 + $0x750] sm:$0xfe] %v2042
    %2622 = vst [vmem:[%s2402 + $0x758] sm:$0xfe] %v2043
    %2623 = vst.msk [vmem:[%s2402 + $0x760] sm:$0xfe] %vm2405, %v2044
    %2624 = vst [vmem:[%s2402 + $0x768] sm:$0xff] %v2046
    %2625 = vst [vmem:[%s2402 + $0x770] sm:$0xff] %v2048
    %2626 = vst.msk [vmem:[%s2402 + $0x778] sm:$0xff] %vm637, %v2050
    %2627 = vst [vmem:[%s2402 + $0x780] sm:$0x1] %v2045
    %2628 = vst [vmem:[%s2402 + $0x788] sm:$0x1] %v2047
    %2629 = vst.msk [vmem:[%s2402 + $0x790] sm:$0x1] %vm2412, %v2049
    %2630 = vst [vmem:[%s2402 + $0x798] sm:$0xfe] %v2051
    %2631 = vst [vmem:[%s2402 + $0x7a0] sm:$0xfe] %v2052
    %2632 = vst.msk [vmem:[%s2402 + $0x7a8] sm:$0xfe] %vm2405, %v2053
    %2633 = vst [vmem:[%s2402 + $0x7b0] sm:$0xff] %v2055
    %2634 = vst [vmem:[%s2402 + $0x7b8] sm:$0xff] %v2057
    %2635 = vst.msk [vmem:[%s2402 + $0x7c0] sm:$0xff] %vm637, %v2059
    %2636 = vst [vmem:[%s2402 + $0x7c8] sm:$0x1] %v2054
    %2637 = vst [vmem:[%s2402 + $0x7d0] sm:$0x1] %v2056
    %2638 = vst.msk [vmem:[%s2402 + $0x7d8] sm:$0x1] %vm2412, %v2058
    %2639 = vst [vmem:[%s2402 + $0x7e0] sm:$0xfe] %v2060
    %2640 = vst [vmem:[%s2402 + $0x7e8] sm:$0xfe] %v2061
    %2641 = vst.msk [vmem:[%s2402 + $0x7f0] sm:$0xfe] %vm2405, %v2062
    %2642 = vst [vmem:[%s2402 + $0x7f8] sm:$0xff] %v2064
    %2643 = vst [vmem:[%s2402 + $0x800] sm:$0xff] %v2066
    %2644 = vst.msk [vmem:[%s2402 + $0x808] sm:$0xff] %vm637, %v2068
    %2645 = vst [vmem:[%s2402 + $0x810] sm:$0x1] %v2063
    %2646 = vst [vmem:[%s2402 + $0x818] sm:$0x1] %v2065
    %2647 = vst.msk [vmem:[%s2402 + $0x820] sm:$0x1] %vm2412, %v2067
    %2648 = vst [vmem:[%s2402 + $0x828] sm:$0xfe] %v2069
    %2649 = vst [vmem:[%s2402 + $0x830] sm:$0xfe] %v2070
    %2650 = vst.msk [vmem:[%s2402 + $0x838] sm:$0xfe] %vm2405, %v2071
    %2651 = vst [vmem:[%s2402 + $0x840] sm:$0xff] %v2073
    %2652 = vst [vmem:[%s2402 + $0x848] sm:$0xff] %v2075
    %2653 = vst.msk [vmem:[%s2402 + $0x850] sm:$0xff] %vm637, %v2077
    %2654 = vst [vmem:[%s2402 + $0x858] sm:$0x1] %v2072
    %2655 = vst [vmem:[%s2402 + $0x860] sm:$0x1] %v2074
    %2656 = vst.msk [vmem:[%s2402 + $0x868] sm:$0x1] %vm2412, %v2076
    %2657 = vst [vmem:[%s2402 + $0x870] sm:$0xfe] %v2078
    %2658 = vst [vmem:[%s2402 + $0x878] sm:$0xfe] %v2079
    %2659 = vst.msk [vmem:[%s2402 + $0x880] sm:$0xfe] %vm2405, %v2080
    %2660 = vst [vmem:[%s2402 + $0x888] sm:$0xff] %v2082
    %2661 = vst [vmem:[%s2402 + $0x890] sm:$0xff] %v2084
    %2662 = vst.msk [vmem:[%s2402 + $0x898] sm:$0xff] %vm637, %v2086
    %2663 = vst [vmem:[%s2402 + $0x8a0] sm:$0x1] %v2081
    %2664 = vst [vmem:[%s2402 + $0x8a8] sm:$0x1] %v2083
    %2665 = vst.msk [vmem:[%s2402 + $0x8b0] sm:$0x1] %vm2412, %v2085
    %2666 = vst [vmem:[%s2402 + $0x8b8] sm:$0xfe] %v2087
    %2667 = vst [vmem:[%s2402 + $0x8c0] sm:$0xfe] %v2088
    %2668 = vst.msk [vmem:[%s2402 + $0x8c8] sm:$0xfe] %vm2405, %v2089
    %2669 = vst [vmem:[%s2402 + $0x8d0] sm:$0xff] %v2091
    %2670 = vst [vmem:[%s2402 + $0x8d8] sm:$0xff] %v2093
    %2671 = vst.msk [vmem:[%s2402 + $0x8e0] sm:$0xff] %vm637, %v2095
    %2672 = vst [vmem:[%s2402 + $0x8e8] sm:$0x1] %v2090
    %2673 = vst [vmem:[%s2402 + $0x8f0] sm:$0x1] %v2092
    %2674 = vst.msk [vmem:[%s2402 + $0x8f8] sm:$0x1] %vm2412, %v2094
    %2675 = vst [vmem:[%s2402 + $0x900] sm:$0xfe] %v2096
    %2676 = vst [vmem:[%s2402 + $0x908] sm:$0xfe] %v2097
    %2677 = vst.msk [vmem:[%s2402 + $0x910] sm:$0xfe] %vm2405, %v2098
    %2678 = vst [vmem:[%s2402 + $0x918] sm:$0xff] %v2100
    %2679 = vst [vmem:[%s2402 + $0x920] sm:$0xff] %v2102
    %2680 = vst.msk [vmem:[%s2402 + $0x928] sm:$0xff] %vm637, %v2104
    %2681 = vst [vmem:[%s2402 + $0x930] sm:$0x1] %v2099
    %2682 = vst [vmem:[%s2402 + $0x938] sm:$0x1] %v2101
    %2683 = vst.msk [vmem:[%s2402 + $0x940] sm:$0x1] %vm2412, %v2103
    %2684 = vst [vmem:[%s2402 + $0x948] sm:$0xfe] %v2105
    %2685 = vst [vmem:[%s2402 + $0x950] sm:$0xfe] %v2106
    %2686 = vst.msk [vmem:[%s2402 + $0x958] sm:$0xfe] %vm2405, %v2107
    %2687 = vst [vmem:[%s2402 + $0x960] sm:$0xff] %v2109
    %2688 = vst [vmem:[%s2402 + $0x968] sm:$0xff] %v2111
    %2689 = vst.msk [vmem:[%s2402 + $0x970] sm:$0xff] %vm637, %v2113
    %2690 = vst [vmem:[%s2402 + $0x978] sm:$0x1] %v2108
    %2691 = vst [vmem:[%s2402 + $0x980] sm:$0x1] %v2110
    %2692 = vst.msk [vmem:[%s2402 + $0x988] sm:$0x1] %vm2412, %v2112
    %v2693 = vld [vmem:[#allocation2] sm:$0xff]
    %v2694 = vld [vmem:[#allocation2 + $0x18] sm:$0xff]
    %v2695 = vld [vmem:[#allocation2 + $0x48] sm:$0xff]
    %v2696 = vld [vmem:[#allocation2 + $0x60] sm:$0xff]
    %v2697 = vld [vmem:[#allocation2 + $0x90] sm:$0xff]
    %v2698 = vld [vmem:[#allocation2 + $0xa8] sm:$0xff]
    %v2699 = vld [vmem:[#allocation2 + $0xd8] sm:$0xff]
    %v2700 = vld [vmem:[#allocation2 + $0xf0] sm:$0xff]
    %v2701 = vld [vmem:[#allocation2 + $0x120] sm:$0xff]
    %v2702 = vld [vmem:[#allocation2 + $0x138] sm:$0xff]
    %v2703 = vld [vmem:[#allocation2 + $0x168] sm:$0xff]
    %v2704 = vld [vmem:[#allocation2 + $0x180] sm:$0xff]
    %v2705 = vld [vmem:[#allocation2 + $0x1b0] sm:$0xff]
    %v2706 = vld [vmem:[#allocation2 + $0x1c8] sm:$0xff]
    %v2707 = vld [vmem:[#allocation2 + $0x1f8] sm:$0xff]
    %v2708 = vld [vmem:[#allocation2 + $0x210] sm:$0xff]
    %v2709 = vld [vmem:[#allocation2 + $0x240] sm:$0xff]
    %v2710 = vld [vmem:[#allocation2 + $0x258] sm:$0xff]
    %v2711 = vld [vmem:[#allocation2 + $0x288] sm:$0xff]
    %v2712 = vld [vmem:[#allocation2 + $0x2a0] sm:$0xff]
    %v2713 = vld [vmem:[#allocation2 + $0x2d0] sm:$0xff]
    %v2714 = vld [vmem:[#allocation2 + $0x2e8] sm:$0xff]
    %v2715 = vld [vmem:[#allocation2 + $0x318] sm:$0xff]
    %v2716 = vld [vmem:[#allocation2 + $0x330] sm:$0xff]
    %v2717 = vld [vmem:[#allocation2 + $0x360] sm:$0xff]
    %v2718 = vld [vmem:[#allocation2 + $0x378] sm:$0xff]
    %v2719 = vld [vmem:[#allocation2 + $0x3a8] sm:$0xff]
    %v2720 = vld [vmem:[#allocation2 + $0x3c0] sm:$0xff]
    %v2721 = vld [vmem:[#allocation2 + $0x3f0] sm:$0xff]
    %v2722 = vld [vmem:[#allocation2 + $0x408] sm:$0xff]
    %v2723 = vld [vmem:[#allocation2 + $0x438] sm:$0xff]
    %v2724 = vld [vmem:[#allocation2 + $0x450] sm:$0xff]
    %v2725 = vld [vmem:[#allocation2 + $0x510] sm:$0xff]
    %v2726 = vld [vmem:[#allocation2 + $0x528] sm:$0xff]
    %v2727 = vld [vmem:[#allocation2 + $0x558] sm:$0xff]
    %v2728 = vld [vmem:[#allocation2 + $0x570] sm:$0xff]
    %v2729 = vld [vmem:[#allocation2 + $0x5a0] sm:$0xff]
    %v2730 = vld [vmem:[#allocation2 + $0x5b8] sm:$0xff]
    %v2731 = vld [vmem:[#allocation2 + $0x5e8] sm:$0xff]
    %v2732 = vld [vmem:[#allocation2 + $0x600] sm:$0xff]
    %v2733 = vld [vmem:[#allocation2 + $0x630] sm:$0xff]
    %v2734 = vld [vmem:[#allocation2 + $0x648] sm:$0xff]
    %v2735 = vld [vmem:[#allocation2 + $0x678] sm:$0xff]
    %v2736 = vld [vmem:[#allocation2 + $0x690] sm:$0xff]
    %v2737 = vld [vmem:[#allocation2 + $0x6c0] sm:$0xff]
    %v2738 = vld [vmem:[#allocation2 + $0x6d8] sm:$0xff]
    %v2739 = vld [vmem:[#allocation2 + $0x708] sm:$0xff]
    %v2740 = vld [vmem:[#allocation2 + $0x720] sm:$0xff]
    %v2741 = vld [vmem:[#allocation2 + $0x750] sm:$0xff]
    %v2742 = vld [vmem:[#allocation2 + $0x768] sm:$0xff]
    %v2743 = vld [vmem:[#allocation2 + $0x798] sm:$0xff]
    %v2744 = vld [vmem:[#allocation2 + $0x7b0] sm:$0xff]
    %v2745 = vld [vmem:[#allocation2 + $0x7e0] sm:$0xff]
    %v2746 = vld [vmem:[#allocation2 + $0x7f8] sm:$0xff]
    %v2747 = vld [vmem:[#allocation2 + $0x828] sm:$0xff]
    %v2748 = vld [vmem:[#allocation2 + $0x840] sm:$0xff]
    %v2749 = vld [vmem:[#allocation2 + $0x870] sm:$0xff]
    %v2750 = vld [vmem:[#allocation2 + $0x888] sm:$0xff]
    %v2751 = vld [vmem:[#allocation2 + $0x8b8] sm:$0xff]
    %v2752 = vld [vmem:[#allocation2 + $0x8d0] sm:$0xff]
    %v2753 = vld [vmem:[#allocation2 + $0x900] sm:$0xff]
    %v2754 = vld [vmem:[#allocation2 + $0x918] sm:$0xff]
    %v2755 = vld [vmem:[#allocation2 + $0x948] sm:$0xff]
    %v2756 = vld [vmem:[#allocation2 + $0x960] sm:$0xff]
    %v2757 = vld [vmem:[#allocation2] sm:$0xfe]
    %v2758 = vld [vmem:[#allocation2 + $0x30] sm:$0x1]
    %v2759 = vld [vmem:[#allocation2 + $0x48] sm:$0xfe]
    %v2760 = vld [vmem:[#allocation2 + $0x78] sm:$0x1]
    %v2761 = vld [vmem:[#allocation2 + $0x90] sm:$0xfe]
    %v2762 = vld [vmem:[#allocation2 + $0xc0] sm:$0x1]
    %v2763 = vld [vmem:[#allocation2 + $0xd8] sm:$0xfe]
    %v2764 = vld [vmem:[#allocation2 + $0x108] sm:$0x1]
    %v2765 = vld [vmem:[#allocation2 + $0x120] sm:$0xfe]
    %v2766 = vld [vmem:[#allocation2 + $0x150] sm:$0x1]
    %v2767 = vld [vmem:[#allocation2 + $0x168] sm:$0xfe]
    %v2768 = vld [vmem:[#allocation2 + $0x198] sm:$0x1]
    %v2769 = vld [vmem:[#allocation2 + $0x1b0] sm:$0xfe]
    %v2770 = vld [vmem:[#allocation2 + $0x1e0] sm:$0x1]
    %v2771 = vld [vmem:[#allocation2 + $0x1f8] sm:$0xfe]
    %v2772 = vld [vmem:[#allocation2 + $0x228] sm:$0x1]
    %v2773 = vld [vmem:[#allocation2 + $0x240] sm:$0xfe]
    %v2774 = vld [vmem:[#allocation2 + $0x270] sm:$0x1]
    %v2775 = vld [vmem:[#allocation2 + $0x288] sm:$0xfe]
    %v2776 = vld [vmem:[#allocation2 + $0x2b8] sm:$0x1]
    %v2777 = vld [vmem:[#allocation2 + $0x2d0] sm:$0xfe]
    %v2778 = vld [vmem:[#allocation2 + $0x300] sm:$0x1]
    %v2779 = vld [vmem:[#allocation2 + $0x318] sm:$0xfe]
    %v2780 = vld [vmem:[#allocation2 + $0x348] sm:$0x1]
    %v2781 = vld [vmem:[#allocation2 + $0x360] sm:$0xfe]
    %v2782 = vld [vmem:[#allocation2 + $0x390] sm:$0x1]
    %v2783 = vld [vmem:[#allocation2 + $0x3a8] sm:$0xfe]
    %v2784 = vld [vmem:[#allocation2 + $0x3d8] sm:$0x1]
    %v2785 = vld [vmem:[#allocation2 + $0x3f0] sm:$0xfe]
    %v2786 = vld [vmem:[#allocation2 + $0x420] sm:$0x1]
    %v2787 = vld [vmem:[#allocation2 + $0x438] sm:$0xfe]
    %v2788 = vld [vmem:[#allocation2 + $0x468] sm:$0x1]
    %v2789 = vld [vmem:[#allocation2 + $0x510] sm:$0xfe]
    %v2790 = vld [vmem:[#allocation2 + $0x540] sm:$0x1]
    %v2791 = vld [vmem:[#allocation2 + $0x558] sm:$0xfe]
    %v2792 = vld [vmem:[#allocation2 + $0x588] sm:$0x1]
    %v2793 = vld [vmem:[#allocation2 + $0x5a0] sm:$0xfe]
    %v2794 = vld [vmem:[#allocation2 + $0x5d0] sm:$0x1]
    %v2795 = vld [vmem:[#allocation2 + $0x5e8] sm:$0xfe]
    %v2796 = vld [vmem:[#allocation2 + $0x618] sm:$0x1]
    %v2797 = vld [vmem:[#allocation2 + $0x630] sm:$0xfe]
    %v2798 = vld [vmem:[#allocation2 + $0x660] sm:$0x1]
    %v2799 = vld [vmem:[#allocation2 + $0x678] sm:$0xfe]
    %v2800 = vld [vmem:[#allocation2 + $0x6a8] sm:$0x1]
    %v2801 = vld [vmem:[#allocation2 + $0x6c0] sm:$0xfe]
    %v2802 = vld [vmem:[#allocation2 + $0x6f0] sm:$0x1]
    %v2803 = vld [vmem:[#allocation2 + $0x708] sm:$0xfe]
    %v2804 = vld [vmem:[#allocation2 + $0x738] sm:$0x1]
    %v2805 = vld [vmem:[#allocation2 + $0x750] sm:$0xfe]
    %v2806 = vld [vmem:[#allocation2 + $0x780] sm:$0x1]
    %v2807 = vld [vmem:[#allocation2 + $0x798] sm:$0xfe]
    %v2808 = vld [vmem:[#allocation2 + $0x7c8] sm:$0x1]
    %v2809 = vld [vmem:[#allocation2 + $0x7e0] sm:$0xfe]
    %v2810 = vld [vmem:[#allocation2 + $0x810] sm:$0x1]
    %v2811 = vld [vmem:[#allocation2 + $0x828] sm:$0xfe]
    %v2812 = vld [vmem:[#allocation2 + $0x858] sm:$0x1]
    %v2813 = vld [vmem:[#allocation2 + $0x870] sm:$0xfe]
    %v2814 = vld [vmem:[#allocation2 + $0x8a0] sm:$0x1]
    %v2815 = vld [vmem:[#allocation2 + $0x8b8] sm:$0xfe]
    %v2816 = vld [vmem:[#allocation2 + $0x8e8] sm:$0x1]
    %v2817 = vld [vmem:[#allocation2 + $0x900] sm:$0xfe]
    %v2818 = vld [vmem:[#allocation2 + $0x930] sm:$0x1]
    %v2819 = vld [vmem:[#allocation2 + $0x948] sm:$0xfe]
    %v2820 = vld [vmem:[#allocation2 + $0x978] sm:$0x1]
    %vm2917 = vcmask 1046528
    %v2918 = vrot.slane %v2757, 1
    %v2919 = vrot.slane %v2694, 1
    %v2920 = vsel %vm2917, %v2918, %v2919
    %v2921 = vrot.slane %v2758, 1
    %v2922 = vsel %vm2917, %v2919, %v2921
    %v2923 = vrot.slane %v2759, 1
    %v2924 = vrot.slane %v2696, 1
    %v2925 = vsel %vm2917, %v2923, %v2924
    %v2926 = vrot.slane %v2760, 1
    %v2927 = vsel %vm2917, %v2924, %v2926
    %v2928 = vrot.slane %v2761, 1
    %v2929 = vrot.slane %v2698, 1
    %v2930 = vsel %vm2917, %v2928, %v2929
    %v2931 = vrot.slane %v2762, 1
    %v2932 = vsel %vm2917, %v2929, %v2931
    %v2933 = vrot.slane %v2763, 1
    %v2934 = vrot.slane %v2700, 1
    %v2935 = vsel %vm2917, %v2933, %v2934
    %v2936 = vrot.slane %v2764, 1
    %v2937 = vsel %vm2917, %v2934, %v2936
    %v2938 = vrot.slane %v2765, 1
    %v2939 = vrot.slane %v2702, 1
    %v2940 = vsel %vm2917, %v2938, %v2939
    %v2941 = vrot.slane %v2766, 1
    %v2942 = vsel %vm2917, %v2939, %v2941
    %v2943 = vrot.slane %v2767, 1
    %v2944 = vrot.slane %v2704, 1
    %v2945 = vsel %vm2917, %v2943, %v2944
    %v2946 = vrot.slane %v2768, 1
    %v2947 = vsel %vm2917, %v2944, %v2946
    %v2948 = vrot.slane %v2769, 1
    %v2949 = vrot.slane %v2706, 1
    %v2950 = vsel %vm2917, %v2948, %v2949
    %v2951 = vrot.slane %v2770, 1
    %v2952 = vsel %vm2917, %v2949, %v2951
    %v2953 = vrot.slane %v2771, 1
    %v2954 = vrot.slane %v2708, 1
    %v2955 = vsel %vm2917, %v2953, %v2954
    %v2956 = vrot.slane %v2772, 1
    %v2957 = vsel %vm2917, %v2954, %v2956
    %v2958 = vrot.slane %v2773, 1
    %v2959 = vrot.slane %v2710, 1
    %v2960 = vsel %vm2917, %v2958, %v2959
    %v2961 = vrot.slane %v2774, 1
    %v2962 = vsel %vm2917, %v2959, %v2961
    %v2963 = vrot.slane %v2775, 1
    %v2964 = vrot.slane %v2712, 1
    %v2965 = vsel %vm2917, %v2963, %v2964
    %v2966 = vrot.slane %v2776, 1
    %v2967 = vsel %vm2917, %v2964, %v2966
    %v2968 = vrot.slane %v2777, 1
    %v2969 = vrot.slane %v2714, 1
    %v2970 = vsel %vm2917, %v2968, %v2969
    %v2971 = vrot.slane %v2778, 1
    %v2972 = vsel %vm2917, %v2969, %v2971
    %v2973 = vrot.slane %v2779, 1
    %v2974 = vrot.slane %v2716, 1
    %v2975 = vsel %vm2917, %v2973, %v2974
    %v2976 = vrot.slane %v2780, 1
    %v2977 = vsel %vm2917, %v2974, %v2976
    %v2978 = vrot.slane %v2781, 1
    %v2979 = vrot.slane %v2718, 1
    %v2980 = vsel %vm2917, %v2978, %v2979
    %v2981 = vrot.slane %v2782, 1
    %v2982 = vsel %vm2917, %v2979, %v2981
    %v2983 = vrot.slane %v2783, 1
    %v2984 = vrot.slane %v2720, 1
    %v2985 = vsel %vm2917, %v2983, %v2984
    %v2986 = vrot.slane %v2784, 1
    %v2987 = vsel %vm2917, %v2984, %v2986
    %v2988 = vrot.slane %v2785, 1
    %v2989 = vrot.slane %v2722, 1
    %v2990 = vsel %vm2917, %v2988, %v2989
    %v2991 = vrot.slane %v2786, 1
    %v2992 = vsel %vm2917, %v2989, %v2991
    %v2993 = vrot.slane %v2787, 1
    %v2994 = vrot.slane %v2724, 1
    %v2995 = vsel %vm2917, %v2993, %v2994
    %v2996 = vrot.slane %v2788, 1
    %v2997 = vsel %vm2917, %v2994, %v2996
    %v2998 = vrot.slane %v2789, 1
    %v2999 = vrot.slane %v2726, 1
    %v3000 = vsel %vm2917, %v2998, %v2999
    %v3001 = vrot.slane %v2790, 1
    %v3002 = vsel %vm2917, %v2999, %v3001
    %v3003 = vrot.slane %v2791, 1
    %v3004 = vrot.slane %v2728, 1
    %v3005 = vsel %vm2917, %v3003, %v3004
    %v3006 = vrot.slane %v2792, 1
    %v3007 = vsel %vm2917, %v3004, %v3006
    %v3008 = vrot.slane %v2793, 1
    %v3009 = vrot.slane %v2730, 1
    %v3010 = vsel %vm2917, %v3008, %v3009
    %v3011 = vrot.slane %v2794, 1
    %v3012 = vsel %vm2917, %v3009, %v3011
    %v3013 = vrot.slane %v2795, 1
    %v3014 = vrot.slane %v2732, 1
    %v3015 = vsel %vm2917, %v3013, %v3014
    %v3016 = vrot.slane %v2796, 1
    %v3017 = vsel %vm2917, %v3014, %v3016
    %v3018 = vrot.slane %v2797, 1
    %v3019 = vrot.slane %v2734, 1
    %v3020 = vsel %vm2917, %v3018, %v3019
    %v3021 = vrot.slane %v2798, 1
    %v3022 = vsel %vm2917, %v3019, %v3021
    %v3023 = vrot.slane %v2799, 1
    %v3024 = vrot.slane %v2736, 1
    %v3025 = vsel %vm2917, %v3023, %v3024
    %v3026 = vrot.slane %v2800, 1
    %v3027 = vsel %vm2917, %v3024, %v3026
    %v3028 = vrot.slane %v2801, 1
    %v3029 = vrot.slane %v2738, 1
    %v3030 = vsel %vm2917, %v3028, %v3029
    %v3031 = vrot.slane %v2802, 1
    %v3032 = vsel %vm2917, %v3029, %v3031
    %v3033 = vrot.slane %v2803, 1
    %v3034 = vrot.slane %v2740, 1
    %v3035 = vsel %vm2917, %v3033, %v3034
    %v3036 = vrot.slane %v2804, 1
    %v3037 = vsel %vm2917, %v3034, %v3036
    %v3038 = vrot.slane %v2805, 1
    %v3039 = vrot.slane %v2742, 1
    %v3040 = vsel %vm2917, %v3038, %v3039
    %v3041 = vrot.slane %v2806, 1
    %v3042 = vsel %vm2917, %v3039, %v3041
    %v3043 = vrot.slane %v2807, 1
    %v3044 = vrot.slane %v2744, 1
    %v3045 = vsel %vm2917, %v3043, %v3044
    %v3046 = vrot.slane %v2808, 1
    %v3047 = vsel %vm2917, %v3044, %v3046
    %v3048 = vrot.slane %v2809, 1
    %v3049 = vrot.slane %v2746, 1
    %v3050 = vsel %vm2917, %v3048, %v3049
    %v3051 = vrot.slane %v2810, 1
    %v3052 = vsel %vm2917, %v3049, %v3051
    %v3053 = vrot.slane %v2811, 1
    %v3054 = vrot.slane %v2748, 1
    %v3055 = vsel %vm2917, %v3053, %v3054
    %v3056 = vrot.slane %v2812, 1
    %v3057 = vsel %vm2917, %v3054, %v3056
    %v3058 = vrot.slane %v2813, 1
    %v3059 = vrot.slane %v2750, 1
    %v3060 = vsel %vm2917, %v3058, %v3059
    %v3061 = vrot.slane %v2814, 1
    %v3062 = vsel %vm2917, %v3059, %v3061
    %v3063 = vrot.slane %v2815, 1
    %v3064 = vrot.slane %v2752, 1
    %v3065 = vsel %vm2917, %v3063, %v3064
    %v3066 = vrot.slane %v2816, 1
    %v3067 = vsel %vm2917, %v3064, %v3066
    %v3068 = vrot.slane %v2817, 1
    %v3069 = vrot.slane %v2754, 1
    %v3070 = vsel %vm2917, %v3068, %v3069
    %v3071 = vrot.slane %v2818, 1
    %v3072 = vsel %vm2917, %v3069, %v3071
    %v3073 = vrot.slane %v2819, 1
    %v3074 = vrot.slane %v2756, 1
    %v3075 = vsel %vm2917, %v3073, %v3074
    %v3076 = vrot.slane %v2820, 1
    %v3077 = vsel %vm2917, %v3074, %v3076
    %3078 = vrot.lane.b32.xlu0 %v2920, 96
    %v3079 = vpop.permute.xlu0 %3078
    %3080 = vrot.lane.b32.xlu0 %v2922, 96
    %v3081 = vpop.permute.xlu0 %3080
    %3082 = vrot.lane.b32.xlu0 %v2925, 96
    %v3083 = vpop.permute.xlu0 %3082
    %3084 = vrot.lane.b32.xlu0 %v2927, 96
    %v3085 = vpop.permute.xlu0 %3084
    %3086 = vrot.lane.b32.xlu0 %v2930, 96
    %v3087 = vpop.permute.xlu0 %3086
    %3088 = vrot.lane.b32.xlu0 %v2932, 96
    %v3089 = vpop.permute.xlu0 %3088
    %3090 = vrot.lane.b32.xlu0 %v2935, 96
    %v3091 = vpop.permute.xlu0 %3090
    %3092 = vrot.lane.b32.xlu0 %v2937, 96
    %v3093 = vpop.permute.xlu0 %3092
    %3094 = vrot.lane.b32.xlu0 %v2940, 96
    %v3095 = vpop.permute.xlu0 %3094
    %3096 = vrot.lane.b32.xlu0 %v2942, 96
    %v3097 = vpop.permute.xlu0 %3096
    %3098 = vrot.lane.b32.xlu0 %v2945, 96
    %v3099 = vpop.permute.xlu0 %3098
    %3100 = vrot.lane.b32.xlu0 %v2947, 96
    %v3101 = vpop.permute.xlu0 %3100
    %3102 = vrot.lane.b32.xlu0 %v2950, 96
    %v3103 = vpop.permute.xlu0 %3102
    %3104 = vrot.lane.b32.xlu0 %v2952, 96
    %v3105 = vpop.permute.xlu0 %3104
    %3106 = vrot.lane.b32.xlu0 %v2955, 96
    %v3107 = vpop.permute.xlu0 %3106
    %3108 = vrot.lane.b32.xlu0 %v2957, 96
    %v3109 = vpop.permute.xlu0 %3108
    %3110 = vrot.lane.b32.xlu0 %v2960, 96
    %v3111 = vpop.permute.xlu0 %3110
    %3112 = vrot.lane.b32.xlu0 %v2962, 96
    %v3113 = vpop.permute.xlu0 %3112
    %3114 = vrot.lane.b32.xlu0 %v2965, 96
    %v3115 = vpop.permute.xlu0 %3114
    %3116 = vrot.lane.b32.xlu0 %v2967, 96
    %v3117 = vpop.permute.xlu0 %3116
    %3118 = vrot.lane.b32.xlu0 %v2970, 96
    %v3119 = vpop.permute.xlu0 %3118
    %3120 = vrot.lane.b32.xlu0 %v2972, 96
    %v3121 = vpop.permute.xlu0 %3120
    %3122 = vrot.lane.b32.xlu0 %v2975, 96
    %v3123 = vpop.permute.xlu0 %3122
    %3124 = vrot.lane.b32.xlu0 %v2977, 96
    %v3125 = vpop.permute.xlu0 %3124
    %3126 = vrot.lane.b32.xlu0 %v2980, 96
    %v3127 = vpop.permute.xlu0 %3126
    %3128 = vrot.lane.b32.xlu0 %v2982, 96
    %v3129 = vpop.permute.xlu0 %3128
    %3130 = vrot.lane.b32.xlu0 %v2985, 96
    %v3131 = vpop.permute.xlu0 %3130
    %3132 = vrot.lane.b32.xlu0 %v2987, 96
    %v3133 = vpop.permute.xlu0 %3132
    %3134 = vrot.lane.b32.xlu0 %v2990, 96
    %v3135 = vpop.permute.xlu0 %3134
    %3136 = vrot.lane.b32.xlu0 %v2992, 96
    %v3137 = vpop.permute.xlu0 %3136
    %3138 = vrot.lane.b32.xlu0 %v2995, 96
    %v3139 = vpop.permute.xlu0 %3138
    %3140 = vrot.lane.b32.xlu0 %v2997, 96
    %v3141 = vpop.permute.xlu0 %3140
    %3142 = vrot.lane.b32.xlu0 %v3000, 96
    %v3143 = vpop.permute.xlu0 %3142
    %3144 = vrot.lane.b32.xlu0 %v3002, 96
    %v3145 = vpop.permute.xlu0 %3144
    %3146 = vrot.lane.b32.xlu0 %v3005, 96
    %v3147 = vpop.permute.xlu0 %3146
    %3148 = vrot.lane.b32.xlu0 %v3007, 96
    %v3149 = vpop.permute.xlu0 %3148
    %3150 = vrot.lane.b32.xlu0 %v3010, 96
    %v3151 = vpop.permute.xlu0 %3150
    %3152 = vrot.lane.b32.xlu0 %v3012, 96
    %v3153 = vpop.permute.xlu0 %3152
    %3154 = vrot.lane.b32.xlu0 %v3015, 96
    %v3155 = vpop.permute.xlu0 %3154
    %3156 = vrot.lane.b32.xlu0 %v3017, 96
    %v3157 = vpop.permute.xlu0 %3156
    %3158 = vrot.lane.b32.xlu0 %v3020, 96
    %v3159 = vpop.permute.xlu0 %3158
    %3160 = vrot.lane.b32.xlu0 %v3022, 96
    %v3161 = vpop.permute.xlu0 %3160
    %3162 = vrot.lane.b32.xlu0 %v3025, 96
    %v3163 = vpop.permute.xlu0 %3162
    %3164 = vrot.lane.b32.xlu0 %v3027, 96
    %v3165 = vpop.permute.xlu0 %3164
    %3166 = vrot.lane.b32.xlu0 %v3030, 96
    %v3167 = vpop.permute.xlu0 %3166
    %3168 = vrot.lane.b32.xlu0 %v3032, 96
    %v3169 = vpop.permute.xlu0 %3168
    %3170 = vrot.lane.b32.xlu0 %v3035, 96
    %v3171 = vpop.permute.xlu0 %3170
    %3172 = vrot.lane.b32.xlu0 %v3037, 96
    %v3173 = vpop.permute.xlu0 %3172
    %3174 = vrot.lane.b32.xlu0 %v3040, 96
    %v3175 = vpop.permute.xlu0 %3174
    %3176 = vrot.lane.b32.xlu0 %v3042, 96
    %v3177 = vpop.permute.xlu0 %3176
    %3178 = vrot.lane.b32.xlu0 %v3045, 96
    %v3179 = vpop.permute.xlu0 %3178
    %3180 = vrot.lane.b32.xlu0 %v3047, 96
    %v3181 = vpop.permute.xlu0 %3180
    %3182 = vrot.lane.b32.xlu0 %v3050, 96
    %v3183 = vpop.permute.xlu0 %3182
    %3184 = vrot.lane.b32.xlu0 %v3052, 96
    %v3185 = vpop.permute.xlu0 %3184
    %3186 = vrot.lane.b32.xlu0 %v3055, 96
    %v3187 = vpop.permute.xlu0 %3186
    %3188 = vrot.lane.b32.xlu0 %v3057, 96
    %v3189 = vpop.permute.xlu0 %3188
    %3190 = vrot.lane.b32.xlu0 %v3060, 96
    %v3191 = vpop.permute.xlu0 %3190
    %3192 = vrot.lane.b32.xlu0 %v3062, 96
    %v3193 = vpop.permute.xlu0 %3192
    %3194 = vrot.lane.b32.xlu0 %v3065, 96
    %v3195 = vpop.permute.xlu0 %3194
    %3196 = vrot.lane.b32.xlu0 %v3067, 96
    %v3197 = vpop.permute.xlu0 %3196
    %3198 = vrot.lane.b32.xlu0 %v3070, 96
    %v3199 = vpop.permute.xlu0 %3198
    %3200 = vrot.lane.b32.xlu0 %v3072, 96
    %v3201 = vpop.permute.xlu0 %3200
    %3202 = vrot.lane.b32.xlu0 %v3075, 96
    %v3203 = vpop.permute.xlu0 %3202
    %3204 = vrot.lane.b32.xlu0 %v3077, 96
    %v3205 = vpop.permute.xlu0 %3204
    %v3270 = vadd.f32 %v2693, %v3079
    %v3271 = vadd.f32 %v2694, %v3081
    %v3272 = vadd.f32 %v2695, %v3083
    %v3273 = vadd.f32 %v2696, %v3085
    %v3274 = vadd.f32 %v2697, %v3087
    %v3275 = vadd.f32 %v2698, %v3089
    %v3276 = vadd.f32 %v2699, %v3091
    %v3277 = vadd.f32 %v2700, %v3093
    %v3278 = vadd.f32 %v2701, %v3095
    %v3279 = vadd.f32 %v2702, %v3097
    %v3280 = vadd.f32 %v2703, %v3099
    %v3281 = vadd.f32 %v2704, %v3101
    %v3282 = vadd.f32 %v2705, %v3103
    %v3283 = vadd.f32 %v2706, %v3105
    %v3284 = vadd.f32 %v2707, %v3107
    %v3285 = vadd.f32 %v2708, %v3109
    %v3286 = vadd.f32 %v2709, %v3111
    %v3287 = vadd.f32 %v2710, %v3113
    %v3288 = vadd.f32 %v2711, %v3115
    %v3289 = vadd.f32 %v2712, %v3117
    %v3290 = vadd.f32 %v2713, %v3119
    %v3291 = vadd.f32 %v2714, %v3121
    %v3292 = vadd.f32 %v2715, %v3123
    %v3293 = vadd.f32 %v2716, %v3125
    %v3294 = vadd.f32 %v2717, %v3127
    %v3295 = vadd.f32 %v2718, %v3129
    %v3296 = vadd.f32 %v2719, %v3131
    %v3297 = vadd.f32 %v2720, %v3133
    %v3298 = vadd.f32 %v2721, %v3135
    %v3299 = vadd.f32 %v2722, %v3137
    %v3300 = vadd.f32 %v2723, %v3139
    %v3301 = vadd.f32 %v2724, %v3141
    %v3302 = vadd.f32 %v2725, %v3143
    %v3303 = vadd.f32 %v2726, %v3145
    %v3304 = vadd.f32 %v2727, %v3147
    %v3305 = vadd.f32 %v2728, %v3149
    %v3306 = vadd.f32 %v2729, %v3151
    %v3307 = vadd.f32 %v2730, %v3153
    %v3308 = vadd.f32 %v2731, %v3155
    %v3309 = vadd.f32 %v2732, %v3157
    %v3310 = vadd.f32 %v2733, %v3159
    %v3311 = vadd.f32 %v2734, %v3161
    %v3312 = vadd.f32 %v2735, %v3163
    %v3313 = vadd.f32 %v2736, %v3165
    %v3314 = vadd.f32 %v2737, %v3167
    %v3315 = vadd.f32 %v2738, %v3169
    %v3316 = vadd.f32 %v2739, %v3171
    %v3317 = vadd.f32 %v2740, %v3173
    %v3318 = vadd.f32 %v2741, %v3175
    %v3319 = vadd.f32 %v2742, %v3177
    %v3320 = vadd.f32 %v2743, %v3179
    %v3321 = vadd.f32 %v2744, %v3181
    %v3322 = vadd.f32 %v2745, %v3183
    %v3323 = vadd.f32 %v2746, %v3185
    %v3324 = vadd.f32 %v2747, %v3187
    %v3325 = vadd.f32 %v2748, %v3189
    %v3326 = vadd.f32 %v2749, %v3191
    %v3327 = vadd.f32 %v2750, %v3193
    %v3328 = vadd.f32 %v2751, %v3195
    %v3329 = vadd.f32 %v2752, %v3197
    %v3330 = vadd.f32 %v2753, %v3199
    %v3331 = vadd.f32 %v2754, %v3201
    %v3332 = vadd.f32 %v2755, %v3203
    %v3333 = vadd.f32 %v2756, %v3205
    %v3334 = vld [vmem:[#allocation2] sm:$0xfc]
    %v3335 = vld [vmem:[#allocation2 + $0x30] sm:$0x3]
    %v3336 = vld [vmem:[#allocation2 + $0x48] sm:$0xfc]
    %v3337 = vld [vmem:[#allocation2 + $0x78] sm:$0x3]
    %v3338 = vld [vmem:[#allocation2 + $0x90] sm:$0xfc]
    %v3339 = vld [vmem:[#allocation2 + $0xc0] sm:$0x3]
    %v3340 = vld [vmem:[#allocation2 + $0xd8] sm:$0xfc]
    %v3341 = vld [vmem:[#allocation2 + $0x108] sm:$0x3]
    %v3342 = vld [vmem:[#allocation2 + $0x120] sm:$0xfc]
    %v3343 = vld [vmem:[#allocation2 + $0x150] sm:$0x3]
    %v3344 = vld [vmem:[#allocation2 + $0x168] sm:$0xfc]
    %v3345 = vld [vmem:[#allocation2 + $0x198] sm:$0x3]
    %v3346 = vld [vmem:[#allocation2 + $0x1b0] sm:$0xfc]
    %v3347 = vld [vmem:[#allocation2 + $0x1e0] sm:$0x3]
    %v3348 = vld [vmem:[#allocation2 + $0x1f8] sm:$0xfc]
    %v3349 = vld [vmem:[#allocation2 + $0x228] sm:$0x3]
    %v3350 = vld [vmem:[#allocation2 + $0x240] sm:$0xfc]
    %v3351 = vld [vmem:[#allocation2 + $0x270] sm:$0x3]
    %v3352 = vld [vmem:[#allocation2 + $0x288] sm:$0xfc]
    %v3353 = vld [vmem:[#allocation2 + $0x2b8] sm:$0x3]
    %v3354 = vld [vmem:[#allocation2 + $0x2d0] sm:$0xfc]
    %v3355 = vld [vmem:[#allocation2 + $0x300] sm:$0x3]
    %v3356 = vld [vmem:[#allocation2 + $0x318] sm:$0xfc]
    %v3357 = vld [vmem:[#allocation2 + $0x348] sm:$0x3]
    %v3358 = vld [vmem:[#allocation2 + $0x360] sm:$0xfc]
    %v3359 = vld [vmem:[#allocation2 + $0x390] sm:$0x3]
    %v3360 = vld [vmem:[#allocation2 + $0x3a8] sm:$0xfc]
    %v3361 = vld [vmem:[#allocation2 + $0x3d8] sm:$0x3]
    %v3362 = vld [vmem:[#allocation2 + $0x3f0] sm:$0xfc]
    %v3363 = vld [vmem:[#allocation2 + $0x420] sm:$0x3]
    %v3364 = vld [vmem:[#allocation2 + $0x438] sm:$0xfc]
    %v3365 = vld [vmem:[#allocation2 + $0x468] sm:$0x3]
    %v3366 = vld [vmem:[#allocation2 + $0x510] sm:$0xfc]
    %v3367 = vld [vmem:[#allocation2 + $0x540] sm:$0x3]
    %v3368 = vld [vmem:[#allocation2 + $0x558] sm:$0xfc]
    %v3369 = vld [vmem:[#allocation2 + $0x588] sm:$0x3]
    %v3370 = vld [vmem:[#allocation2 + $0x5a0] sm:$0xfc]
    %v3371 = vld [vmem:[#allocation2 + $0x5d0] sm:$0x3]
    %v3372 = vld [vmem:[#allocation2 + $0x5e8] sm:$0xfc]
    %v3373 = vld [vmem:[#allocation2 + $0x618] sm:$0x3]
    %v3374 = vld [vmem:[#allocation2 + $0x630] sm:$0xfc]
    %v3375 = vld [vmem:[#allocation2 + $0x660] sm:$0x3]
    %v3376 = vld [vmem:[#allocation2 + $0x678] sm:$0xfc]
    %v3377 = vld [vmem:[#allocation2 + $0x6a8] sm:$0x3]
    %v3378 = vld [vmem:[#allocation2 + $0x6c0] sm:$0xfc]
    %v3379 = vld [vmem:[#allocation2 + $0x6f0] sm:$0x3]
    %v3380 = vld [vmem:[#allocation2 + $0x708] sm:$0xfc]
    %v3381 = vld [vmem:[#allocation2 + $0x738] sm:$0x3]
    %v3382 = vld [vmem:[#allocation2 + $0x750] sm:$0xfc]
    %v3383 = vld [vmem:[#allocation2 + $0x780] sm:$0x3]
    %v3384 = vld [vmem:[#allocation2 + $0x798] sm:$0xfc]
    %v3385 = vld [vmem:[#allocation2 + $0x7c8] sm:$0x3]
    %v3386 = vld [vmem:[#allocation2 + $0x7e0] sm:$0xfc]
    %v3387 = vld [vmem:[#allocation2 + $0x810] sm:$0x3]
    %v3388 = vld [vmem:[#allocation2 + $0x828] sm:$0xfc]
    %v3389 = vld [vmem:[#allocation2 + $0x858] sm:$0x3]
    %v3390 = vld [vmem:[#allocation2 + $0x870] sm:$0xfc]
    %v3391 = vld [vmem:[#allocation2 + $0x8a0] sm:$0x3]
    %v3392 = vld [vmem:[#allocation2 + $0x8b8] sm:$0xfc]
    %v3393 = vld [vmem:[#allocation2 + $0x8e8] sm:$0x3]
    %v3394 = vld [vmem:[#allocation2 + $0x900] sm:$0xfc]
    %v3395 = vld [vmem:[#allocation2 + $0x930] sm:$0x3]
    %v3396 = vld [vmem:[#allocation2 + $0x948] sm:$0xfc]
    %v3397 = vld [vmem:[#allocation2 + $0x978] sm:$0x3]
    %vm3462 = vcmask 1045504
    %v3463 = vrot.slane %v3334, 2
    %v3464 = vrot.slane %v2694, 2
    %v3465 = vsel %vm3462, %v3463, %v3464
    %v3466 = vrot.slane %v3335, 2
    %v3467 = vsel %vm3462, %v3464, %v3466
    %v3468 = vrot.slane %v3336, 2
    %v3469 = vrot.slane %v2696, 2
    %v3470 = vsel %vm3462, %v3468, %v3469
    %v3471 = vrot.slane %v3337, 2
    %v3472 = vsel %vm3462, %v3469, %v3471
    %v3473 = vrot.slane %v3338, 2
    %v3474 = vrot.slane %v2698, 2
    %v3475 = vsel %vm3462, %v3473, %v3474
    %v3476 = vrot.slane %v3339, 2
    %v3477 = vsel %vm3462, %v3474, %v3476
    %v3478 = vrot.slane %v3340, 2
    %v3479 = vrot.slane %v2700, 2
    %v3480 = vsel %vm3462, %v3478, %v3479
    %v3481 = vrot.slane %v3341, 2
    %v3482 = vsel %vm3462, %v3479, %v3481
    %v3483 = vrot.slane %v3342, 2
    %v3484 = vrot.slane %v2702, 2
    %v3485 = vsel %vm3462, %v3483, %v3484
    %v3486 = vrot.slane %v3343, 2
    %v3487 = vsel %vm3462, %v3484, %v3486
    %v3488 = vrot.slane %v3344, 2
    %v3489 = vrot.slane %v2704, 2
    %v3490 = vsel %vm3462, %v3488, %v3489
    %v3491 = vrot.slane %v3345, 2
    %v3492 = vsel %vm3462, %v3489, %v3491
    %v3493 = vrot.slane %v3346, 2
    %v3494 = vrot.slane %v2706, 2
    %v3495 = vsel %vm3462, %v3493, %v3494
    %v3496 = vrot.slane %v3347, 2
    %v3497 = vsel %vm3462, %v3494, %v3496
    %v3498 = vrot.slane %v3348, 2
    %v3499 = vrot.slane %v2708, 2
    %v3500 = vsel %vm3462, %v3498, %v3499
    %v3501 = vrot.slane %v3349, 2
    %v3502 = vsel %vm3462, %v3499, %v3501
    %v3503 = vrot.slane %v3350, 2
    %v3504 = vrot.slane %v2710, 2
    %v3505 = vsel %vm3462, %v3503, %v3504
    %v3506 = vrot.slane %v3351, 2
    %v3507 = vsel %vm3462, %v3504, %v3506
    %v3508 = vrot.slane %v3352, 2
    %v3509 = vrot.slane %v2712, 2
    %v3510 = vsel %vm3462, %v3508, %v3509
    %v3511 = vrot.slane %v3353, 2
    %v3512 = vsel %vm3462, %v3509, %v3511
    %v3513 = vrot.slane %v3354, 2
    %v3514 = vrot.slane %v2714, 2
    %v3515 = vsel %vm3462, %v3513, %v3514
    %v3516 = vrot.slane %v3355, 2
    %v3517 = vsel %vm3462, %v3514, %v3516
    %v3518 = vrot.slane %v3356, 2
    %v3519 = vrot.slane %v2716, 2
    %v3520 = vsel %vm3462, %v3518, %v3519
    %v3521 = vrot.slane %v3357, 2
    %v3522 = vsel %vm3462, %v3519, %v3521
    %v3523 = vrot.slane %v3358, 2
    %v3524 = vrot.slane %v2718, 2
    %v3525 = vsel %vm3462, %v3523, %v3524
    %v3526 = vrot.slane %v3359, 2
    %v3527 = vsel %vm3462, %v3524, %v3526
    %v3528 = vrot.slane %v3360, 2
    %v3529 = vrot.slane %v2720, 2
    %v3530 = vsel %vm3462, %v3528, %v3529
    %v3531 = vrot.slane %v3361, 2
    %v3532 = vsel %vm3462, %v3529, %v3531
    %v3533 = vrot.slane %v3362, 2
    %v3534 = vrot.slane %v2722, 2
    %v3535 = vsel %vm3462, %v3533, %v3534
    %v3536 = vrot.slane %v3363, 2
    %v3537 = vsel %vm3462, %v3534, %v3536
    %v3538 = vrot.slane %v3364, 2
    %v3539 = vrot.slane %v2724, 2
    %v3540 = vsel %vm3462, %v3538, %v3539
    %v3541 = vrot.slane %v3365, 2
    %v3542 = vsel %vm3462, %v3539, %v3541
    %v3543 = vrot.slane %v3366, 2
    %v3544 = vrot.slane %v2726, 2
    %v3545 = vsel %vm3462, %v3543, %v3544
    %v3546 = vrot.slane %v3367, 2
    %v3547 = vsel %vm3462, %v3544, %v3546
    %v3548 = vrot.slane %v3368, 2
    %v3549 = vrot.slane %v2728, 2
    %v3550 = vsel %vm3462, %v3548, %v3549
    %v3551 = vrot.slane %v3369, 2
    %v3552 = vsel %vm3462, %v3549, %v3551
    %v3553 = vrot.slane %v3370, 2
    %v3554 = vrot.slane %v2730, 2
    %v3555 = vsel %vm3462, %v3553, %v3554
    %v3556 = vrot.slane %v3371, 2
    %v3557 = vsel %vm3462, %v3554, %v3556
    %v3558 = vrot.slane %v3372, 2
    %v3559 = vrot.slane %v2732, 2
    %v3560 = vsel %vm3462, %v3558, %v3559
    %v3561 = vrot.slane %v3373, 2
    %v3562 = vsel %vm3462, %v3559, %v3561
    %v3563 = vrot.slane %v3374, 2
    %v3564 = vrot.slane %v2734, 2
    %v3565 = vsel %vm3462, %v3563, %v3564
    %v3566 = vrot.slane %v3375, 2
    %v3567 = vsel %vm3462, %v3564, %v3566
    %v3568 = vrot.slane %v3376, 2
    %v3569 = vrot.slane %v2736, 2
    %v3570 = vsel %vm3462, %v3568, %v3569
    %v3571 = vrot.slane %v3377, 2
    %v3572 = vsel %vm3462, %v3569, %v3571
    %v3573 = vrot.slane %v3378, 2
    %v3574 = vrot.slane %v2738, 2
    %v3575 = vsel %vm3462, %v3573, %v3574
    %v3576 = vrot.slane %v3379, 2
    %v3577 = vsel %vm3462, %v3574, %v3576
    %v3578 = vrot.slane %v3380, 2
    %v3579 = vrot.slane %v2740, 2
    %v3580 = vsel %vm3462, %v3578, %v3579
    %v3581 = vrot.slane %v3381, 2
    %v3582 = vsel %vm3462, %v3579, %v3581
    %v3583 = vrot.slane %v3382, 2
    %v3584 = vrot.slane %v2742, 2
    %v3585 = vsel %vm3462, %v3583, %v3584
    %v3586 = vrot.slane %v3383, 2
    %v3587 = vsel %vm3462, %v3584, %v3586
    %v3588 = vrot.slane %v3384, 2
    %v3589 = vrot.slane %v2744, 2
    %v3590 = vsel %vm3462, %v3588, %v3589
    %v3591 = vrot.slane %v3385, 2
    %v3592 = vsel %vm3462, %v3589, %v3591
    %v3593 = vrot.slane %v3386, 2
    %v3594 = vrot.slane %v2746, 2
    %v3595 = vsel %vm3462, %v3593, %v3594
    %v3596 = vrot.slane %v3387, 2
    %v3597 = vsel %vm3462, %v3594, %v3596
    %v3598 = vrot.slane %v3388, 2
    %v3599 = vrot.slane %v2748, 2
    %v3600 = vsel %vm3462, %v3598, %v3599
    %v3601 = vrot.slane %v3389, 2
    %v3602 = vsel %vm3462, %v3599, %v3601
    %v3603 = vrot.slane %v3390, 2
    %v3604 = vrot.slane %v2750, 2
    %v3605 = vsel %vm3462, %v3603, %v3604
    %v3606 = vrot.slane %v3391, 2
    %v3607 = vsel %vm3462, %v3604, %v3606
    %v3608 = vrot.slane %v3392, 2
    %v3609 = vrot.slane %v2752, 2
    %v3610 = vsel %vm3462, %v3608, %v3609
    %v3611 = vrot.slane %v3393, 2
    %v3612 = vsel %vm3462, %v3609, %v3611
    %v3613 = vrot.slane %v3394, 2
    %v3614 = vrot.slane %v2754, 2
    %v3615 = vsel %vm3462, %v3613, %v3614
    %v3616 = vrot.slane %v3395, 2
    %v3617 = vsel %vm3462, %v3614, %v3616
    %v3618 = vrot.slane %v3396, 2
    %v3619 = vrot.slane %v2756, 2
    %v3620 = vsel %vm3462, %v3618, %v3619
    %v3621 = vrot.slane %v3397, 2
    %v3622 = vsel %vm3462, %v3619, %v3621
    %3623 = vrot.lane.b32.xlu0 %v3465, 64
    %v3624 = vpop.permute.xlu0 %3623
    %3625 = vrot.lane.b32.xlu0 %v3467, 64
    %v3626 = vpop.permute.xlu0 %3625
    %3627 = vrot.lane.b32.xlu0 %v3470, 64
    %v3628 = vpop.permute.xlu0 %3627
    %3629 = vrot.lane.b32.xlu0 %v3472, 64
    %v3630 = vpop.permute.xlu0 %3629
    %3631 = vrot.lane.b32.xlu0 %v3475, 64
    %v3632 = vpop.permute.xlu0 %3631
    %3633 = vrot.lane.b32.xlu0 %v3477, 64
    %v3634 = vpop.permute.xlu0 %3633
    %3635 = vrot.lane.b32.xlu0 %v3480, 64
    %v3636 = vpop.permute.xlu0 %3635
    %3637 = vrot.lane.b32.xlu0 %v3482, 64
    %v3638 = vpop.permute.xlu0 %3637
    %3639 = vrot.lane.b32.xlu0 %v3485, 64
    %v3640 = vpop.permute.xlu0 %3639
    %3641 = vrot.lane.b32.xlu0 %v3487, 64
    %v3642 = vpop.permute.xlu0 %3641
    %3643 = vrot.lane.b32.xlu0 %v3490, 64
    %v3644 = vpop.permute.xlu0 %3643
    %3645 = vrot.lane.b32.xlu0 %v3492, 64
    %v3646 = vpop.permute.xlu0 %3645
    %3647 = vrot.lane.b32.xlu0 %v3495, 64
    %v3648 = vpop.permute.xlu0 %3647
    %3649 = vrot.lane.b32.xlu0 %v3497, 64
    %v3650 = vpop.permute.xlu0 %3649
    %3651 = vrot.lane.b32.xlu0 %v3500, 64
    %v3652 = vpop.permute.xlu0 %3651
    %3653 = vrot.lane.b32.xlu0 %v3502, 64
    %v3654 = vpop.permute.xlu0 %3653
    %3655 = vrot.lane.b32.xlu0 %v3505, 64
    %v3656 = vpop.permute.xlu0 %3655
    %3657 = vrot.lane.b32.xlu0 %v3507, 64
    %v3658 = vpop.permute.xlu0 %3657
    %3659 = vrot.lane.b32.xlu0 %v3510, 64
    %v3660 = vpop.permute.xlu0 %3659
    %3661 = vrot.lane.b32.xlu0 %v3512, 64
    %v3662 = vpop.permute.xlu0 %3661
    %3663 = vrot.lane.b32.xlu0 %v3515, 64
    %v3664 = vpop.permute.xlu0 %3663
    %3665 = vrot.lane.b32.xlu0 %v3517, 64
    %v3666 = vpop.permute.xlu0 %3665
    %3667 = vrot.lane.b32.xlu0 %v3520, 64
    %v3668 = vpop.permute.xlu0 %3667
    %3669 = vrot.lane.b32.xlu0 %v3522, 64
    %v3670 = vpop.permute.xlu0 %3669
    %3671 = vrot.lane.b32.xlu0 %v3525, 64
    %v3672 = vpop.permute.xlu0 %3671
    %3673 = vrot.lane.b32.xlu0 %v3527, 64
    %v3674 = vpop.permute.xlu0 %3673
    %3675 = vrot.lane.b32.xlu0 %v3530, 64
    %v3676 = vpop.permute.xlu0 %3675
    %3677 = vrot.lane.b32.xlu0 %v3532, 64
    %v3678 = vpop.permute.xlu0 %3677
    %3679 = vrot.lane.b32.xlu0 %v3535, 64
    %v3680 = vpop.permute.xlu0 %3679
    %3681 = vrot.lane.b32.xlu0 %v3537, 64
    %v3682 = vpop.permute.xlu0 %3681
    %3683 = vrot.lane.b32.xlu0 %v3540, 64
    %v3684 = vpop.permute.xlu0 %3683
    %3685 = vrot.lane.b32.xlu0 %v3542, 64
    %v3686 = vpop.permute.xlu0 %3685
    %3687 = vrot.lane.b32.xlu0 %v3545, 64
    %v3688 = vpop.permute.xlu0 %3687
    %3689 = vrot.lane.b32.xlu0 %v3547, 64
    %v3690 = vpop.permute.xlu0 %3689
    %3691 = vrot.lane.b32.xlu0 %v3550, 64
    %v3692 = vpop.permute.xlu0 %3691
    %3693 = vrot.lane.b32.xlu0 %v3552, 64
    %v3694 = vpop.permute.xlu0 %3693
    %3695 = vrot.lane.b32.xlu0 %v3555, 64
    %v3696 = vpop.permute.xlu0 %3695
    %3697 = vrot.lane.b32.xlu0 %v3557, 64
    %v3698 = vpop.permute.xlu0 %3697
    %3699 = vrot.lane.b32.xlu0 %v3560, 64
    %v3700 = vpop.permute.xlu0 %3699
    %3701 = vrot.lane.b32.xlu0 %v3562, 64
    %v3702 = vpop.permute.xlu0 %3701
    %3703 = vrot.lane.b32.xlu0 %v3565, 64
    %v3704 = vpop.permute.xlu0 %3703
    %3705 = vrot.lane.b32.xlu0 %v3567, 64
    %v3706 = vpop.permute.xlu0 %3705
    %3707 = vrot.lane.b32.xlu0 %v3570, 64
    %v3708 = vpop.permute.xlu0 %3707
    %3709 = vrot.lane.b32.xlu0 %v3572, 64
    %v3710 = vpop.permute.xlu0 %3709
    %3711 = vrot.lane.b32.xlu0 %v3575, 64
    %v3712 = vpop.permute.xlu0 %3711
    %3713 = vrot.lane.b32.xlu0 %v3577, 64
    %v3714 = vpop.permute.xlu0 %3713
    %3715 = vrot.lane.b32.xlu0 %v3580, 64
    %v3716 = vpop.permute.xlu0 %3715
    %3717 = vrot.lane.b32.xlu0 %v3582, 64
    %v3718 = vpop.permute.xlu0 %3717
    %3719 = vrot.lane.b32.xlu0 %v3585, 64
    %v3720 = vpop.permute.xlu0 %3719
    %3721 = vrot.lane.b32.xlu0 %v3587, 64
    %v3722 = vpop.permute.xlu0 %3721
    %3723 = vrot.lane.b32.xlu0 %v3590, 64
    %v3724 = vpop.permute.xlu0 %3723
    %3725 = vrot.lane.b32.xlu0 %v3592, 64
    %v3726 = vpop.permute.xlu0 %3725
    %3727 = vrot.lane.b32.xlu0 %v3595, 64
    %v3728 = vpop.permute.xlu0 %3727
    %3729 = vrot.lane.b32.xlu0 %v3597, 64
    %v3730 = vpop.permute.xlu0 %3729
    %3731 = vrot.lane.b32.xlu0 %v3600, 64
    %v3732 = vpop.permute.xlu0 %3731
    %3733 = vrot.lane.b32.xlu0 %v3602, 64
    %v3734 = vpop.permute.xlu0 %3733
    %3735 = vrot.lane.b32.xlu0 %v3605, 64
    %v3736 = vpop.permute.xlu0 %3735
    %3737 = vrot.lane.b32.xlu0 %v3607, 64
    %v3738 = vpop.permute.xlu0 %3737
    %3739 = vrot.lane.b32.xlu0 %v3610, 64
    %v3740 = vpop.permute.xlu0 %3739
    %3741 = vrot.lane.b32.xlu0 %v3612, 64
    %v3742 = vpop.permute.xlu0 %3741
    %3743 = vrot.lane.b32.xlu0 %v3615, 64
    %v3744 = vpop.permute.xlu0 %3743
    %3745 = vrot.lane.b32.xlu0 %v3617, 64
    %v3746 = vpop.permute.xlu0 %3745
    %3747 = vrot.lane.b32.xlu0 %v3620, 64
    %v3748 = vpop.permute.xlu0 %3747
    %3749 = vrot.lane.b32.xlu0 %v3622, 64
    %v3750 = vpop.permute.xlu0 %3749
    %v3815 = vadd.f32 %v3270, %v3624
    %v3816 = vadd.f32 %v3271, %v3626
    %v3817 = vadd.f32 %v3272, %v3628
    %v3818 = vadd.f32 %v3273, %v3630
    %v3819 = vadd.f32 %v3274, %v3632
    %v3820 = vadd.f32 %v3275, %v3634
    %v3821 = vadd.f32 %v3276, %v3636
    %v3822 = vadd.f32 %v3277, %v3638
    %v3823 = vadd.f32 %v3278, %v3640
    %v3824 = vadd.f32 %v3279, %v3642
    %v3825 = vadd.f32 %v3280, %v3644
    %v3826 = vadd.f32 %v3281, %v3646
    %v3827 = vadd.f32 %v3282, %v3648
    %v3828 = vadd.f32 %v3283, %v3650
    %v3829 = vadd.f32 %v3284, %v3652
    %v3830 = vadd.f32 %v3285, %v3654
    %v3831 = vadd.f32 %v3286, %v3656
    %v3832 = vadd.f32 %v3287, %v3658
    %v3833 = vadd.f32 %v3288, %v3660
    %v3834 = vadd.f32 %v3289, %v3662
    %v3835 = vadd.f32 %v3290, %v3664
    %v3836 = vadd.f32 %v3291, %v3666
    %v3837 = vadd.f32 %v3292, %v3668
    %v3838 = vadd.f32 %v3293, %v3670
    %v3839 = vadd.f32 %v3294, %v3672
    %v3840 = vadd.f32 %v3295, %v3674
    %v3841 = vadd.f32 %v3296, %v3676
    %v3842 = vadd.f32 %v3297, %v3678
    %v3843 = vadd.f32 %v3298, %v3680
    %v3844 = vadd.f32 %v3299, %v3682
    %v3845 = vadd.f32 %v3300, %v3684
    %v3846 = vadd.f32 %v3301, %v3686
    %v3847 = vadd.f32 %v3302, %v3688
    %v3848 = vadd.f32 %v3303, %v3690
    %v3849 = vadd.f32 %v3304, %v3692
    %v3850 = vadd.f32 %v3305, %v3694
    %v3851 = vadd.f32 %v3306, %v3696
    %v3852 = vadd.f32 %v3307, %v3698
    %v3853 = vadd.f32 %v3308, %v3700
    %v3854 = vadd.f32 %v3309, %v3702
    %v3855 = vadd.f32 %v3310, %v3704
    %v3856 = vadd.f32 %v3311, %v3706
    %v3857 = vadd.f32 %v3312, %v3708
    %v3858 = vadd.f32 %v3313, %v3710
    %v3859 = vadd.f32 %v3314, %v3712
    %v3860 = vadd.f32 %v3315, %v3714
    %v3861 = vadd.f32 %v3316, %v3716
    %v3862 = vadd.f32 %v3317, %v3718
    %v3863 = vadd.f32 %v3318, %v3720
    %v3864 = vadd.f32 %v3319, %v3722
    %v3865 = vadd.f32 %v3320, %v3724
    %v3866 = vadd.f32 %v3321, %v3726
    %v3867 = vadd.f32 %v3322, %v3728
    %v3868 = vadd.f32 %v3323, %v3730
    %v3869 = vadd.f32 %v3324, %v3732
    %v3870 = vadd.f32 %v3325, %v3734
    %v3871 = vadd.f32 %v3326, %v3736
    %v3872 = vadd.f32 %v3327, %v3738
    %v3873 = vadd.f32 %v3328, %v3740
    %v3874 = vadd.f32 %v3329, %v3742
    %v3875 = vadd.f32 %v3330, %v3744
    %v3876 = vadd.f32 %v3331, %v3746
    %v3877 = vadd.f32 %v3332, %v3748
    %v3878 = vadd.f32 %v3333, %v3750
    %v3879 = vld [vmem:[%s2402] sm:$0xff]
    %v3880 = vld [vmem:[%s2402 + $0x18] sm:$0xff]
    %v3881 = vld [vmem:[%s2402 + $0x48] sm:$0xff]
    %v3882 = vld [vmem:[%s2402 + $0x60] sm:$0xff]
    %v3883 = vld [vmem:[%s2402 + $0x90] sm:$0xff]
    %v3884 = vld [vmem:[%s2402 + $0xa8] sm:$0xff]
    %v3885 = vld [vmem:[%s2402 + $0xd8] sm:$0xff]
    %v3886 = vld [vmem:[%s2402 + $0xf0] sm:$0xff]
    %v3887 = vld [vmem:[%s2402 + $0x120] sm:$0xff]
    %v3888 = vld [vmem:[%s2402 + $0x138] sm:$0xff]
    %v3889 = vld [vmem:[%s2402 + $0x168] sm:$0xff]
    %v3890 = vld [vmem:[%s2402 + $0x180] sm:$0xff]
    %v3891 = vld [vmem:[%s2402 + $0x1b0] sm:$0xff]
    %v3892 = vld [vmem:[%s2402 + $0x1c8] sm:$0xff]
    %v3893 = vld [vmem:[%s2402 + $0x1f8] sm:$0xff]
    %v3894 = vld [vmem:[%s2402 + $0x210] sm:$0xff]
    %v3895 = vld [vmem:[%s2402 + $0x240] sm:$0xff]
    %v3896 = vld [vmem:[%s2402 + $0x258] sm:$0xff]
    %v3897 = vld [vmem:[%s2402 + $0x288] sm:$0xff]
    %v3898 = vld [vmem:[%s2402 + $0x2a0] sm:$0xff]
    %v3899 = vld [vmem:[%s2402 + $0x2d0] sm:$0xff]
    %v3900 = vld [vmem:[%s2402 + $0x2e8] sm:$0xff]
    %v3901 = vld [vmem:[%s2402 + $0x318] sm:$0xff]
    %v3902 = vld [vmem:[%s2402 + $0x330] sm:$0xff]
    %v3903 = vld [vmem:[%s2402 + $0x360] sm:$0xff]
    %v3904 = vld [vmem:[%s2402 + $0x378] sm:$0xff]
    %v3905 = vld [vmem:[%s2402 + $0x3a8] sm:$0xff]
    %v3906 = vld [vmem:[%s2402 + $0x3c0] sm:$0xff]
    %v3907 = vld [vmem:[%s2402 + $0x3f0] sm:$0xff]
    %v3908 = vld [vmem:[%s2402 + $0x408] sm:$0xff]
    %v3909 = vld [vmem:[%s2402 + $0x438] sm:$0xff]
    %v3910 = vld [vmem:[%s2402 + $0x450] sm:$0xff]
    %v3911 = vld [vmem:[%s2402 + $0x510] sm:$0xff]
    %v3912 = vld [vmem:[%s2402 + $0x528] sm:$0xff]
    %v3913 = vld [vmem:[%s2402 + $0x558] sm:$0xff]
    %v3914 = vld [vmem:[%s2402 + $0x570] sm:$0xff]
    %v3915 = vld [vmem:[%s2402 + $0x5a0] sm:$0xff]
    %v3916 = vld [vmem:[%s2402 + $0x5b8] sm:$0xff]
    %v3917 = vld [vmem:[%s2402 + $0x5e8] sm:$0xff]
    %v3918 = vld [vmem:[%s2402 + $0x600] sm:$0xff]
    %v3919 = vld [vmem:[%s2402 + $0x630] sm:$0xff]
    %v3920 = vld [vmem:[%s2402 + $0x648] sm:$0xff]
    %v3921 = vld [vmem:[%s2402 + $0x678] sm:$0xff]
    %v3922 = vld [vmem:[%s2402 + $0x690] sm:$0xff]
    %v3923 = vld [vmem:[%s2402 + $0x6c0] sm:$0xff]
    %v3924 = vld [vmem:[%s2402 + $0x6d8] sm:$0xff]
    %v3925 = vld [vmem:[%s2402 + $0x708] sm:$0xff]
    %v3926 = vld [vmem:[%s2402 + $0x720] sm:$0xff]
    %v3927 = vld [vmem:[%s2402 + $0x750] sm:$0xff]
    %v3928 = vld [vmem:[%s2402 + $0x768] sm:$0xff]
    %v3929 = vld [vmem:[%s2402 + $0x798] sm:$0xff]
    %v3930 = vld [vmem:[%s2402 + $0x7b0] sm:$0xff]
    %v3931 = vld [vmem:[%s2402 + $0x7e0] sm:$0xff]
    %v3932 = vld [vmem:[%s2402 + $0x7f8] sm:$0xff]
    %v3933 = vld [vmem:[%s2402 + $0x828] sm:$0xff]
    %v3934 = vld [vmem:[%s2402 + $0x840] sm:$0xff]
    %v3935 = vld [vmem:[%s2402 + $0x870] sm:$0xff]
    %v3936 = vld [vmem:[%s2402 + $0x888] sm:$0xff]
    %v3937 = vld [vmem:[%s2402 + $0x8b8] sm:$0xff]
    %v3938 = vld [vmem:[%s2402 + $0x8d0] sm:$0xff]
    %v3939 = vld [vmem:[%s2402 + $0x900] sm:$0xff]
    %v3940 = vld [vmem:[%s2402 + $0x918] sm:$0xff]
    %v3941 = vld [vmem:[%s2402 + $0x948] sm:$0xff]
    %v3942 = vld [vmem:[%s2402 + $0x960] sm:$0xff]
    %4007 = vrot.lane.b32.xlu0 %v3879, 32
    %v4008 = vpop.permute.xlu0 %4007
    %4009 = vrot.lane.b32.xlu0 %v3880, 32
    %v4010 = vpop.permute.xlu0 %4009
    %4011 = vrot.lane.b32.xlu0 %v3881, 32
    %v4012 = vpop.permute.xlu0 %4011
    %4013 = vrot.lane.b32.xlu0 %v3882, 32
    %v4014 = vpop.permute.xlu0 %4013
    %4015 = vrot.lane.b32.xlu0 %v3883, 32
    %v4016 = vpop.permute.xlu0 %4015
    %4017 = vrot.lane.b32.xlu0 %v3884, 32
    %v4018 = vpop.permute.xlu0 %4017
    %4019 = vrot.lane.b32.xlu0 %v3885, 32
    %v4020 = vpop.permute.xlu0 %4019
    %4021 = vrot.lane.b32.xlu0 %v3886, 32
    %v4022 = vpop.permute.xlu0 %4021
    %4023 = vrot.lane.b32.xlu0 %v3887, 32
    %v4024 = vpop.permute.xlu0 %4023
    %4025 = vrot.lane.b32.xlu0 %v3888, 32
    %v4026 = vpop.permute.xlu0 %4025
    %4027 = vrot.lane.b32.xlu0 %v3889, 32
    %v4028 = vpop.permute.xlu0 %4027
    %4029 = vrot.lane.b32.xlu0 %v3890, 32
    %v4030 = vpop.permute.xlu0 %4029
    %4031 = vrot.lane.b32.xlu0 %v3891, 32
    %v4032 = vpop.permute.xlu0 %4031
    %4033 = vrot.lane.b32.xlu0 %v3892, 32
    %v4034 = vpop.permute.xlu0 %4033
    %4035 = vrot.lane.b32.xlu0 %v3893, 32
    %v4036 = vpop.permute.xlu0 %4035
    %4037 = vrot.lane.b32.xlu0 %v3894, 32
    %v4038 = vpop.permute.xlu0 %4037
    %4039 = vrot.lane.b32.xlu0 %v3895, 32
    %v4040 = vpop.permute.xlu0 %4039
    %4041 = vrot.lane.b32.xlu0 %v3896, 32
    %v4042 = vpop.permute.xlu0 %4041
    %4043 = vrot.lane.b32.xlu0 %v3897, 32
    %v4044 = vpop.permute.xlu0 %4043
    %4045 = vrot.lane.b32.xlu0 %v3898, 32
    %v4046 = vpop.permute.xlu0 %4045
    %4047 = vrot.lane.b32.xlu0 %v3899, 32
    %v4048 = vpop.permute.xlu0 %4047
    %4049 = vrot.lane.b32.xlu0 %v3900, 32
    %v4050 = vpop.permute.xlu0 %4049
    %4051 = vrot.lane.b32.xlu0 %v3901, 32
    %v4052 = vpop.permute.xlu0 %4051
    %4053 = vrot.lane.b32.xlu0 %v3902, 32
    %v4054 = vpop.permute.xlu0 %4053
    %4055 = vrot.lane.b32.xlu0 %v3903, 32
    %v4056 = vpop.permute.xlu0 %4055
    %4057 = vrot.lane.b32.xlu0 %v3904, 32
    %v4058 = vpop.permute.xlu0 %4057
    %4059 = vrot.lane.b32.xlu0 %v3905, 32
    %v4060 = vpop.permute.xlu0 %4059
    %4061 = vrot.lane.b32.xlu0 %v3906, 32
    %v4062 = vpop.permute.xlu0 %4061
    %4063 = vrot.lane.b32.xlu0 %v3907, 32
    %v4064 = vpop.permute.xlu0 %4063
    %4065 = vrot.lane.b32.xlu0 %v3908, 32
    %v4066 = vpop.permute.xlu0 %4065
    %4067 = vrot.lane.b32.xlu0 %v3909, 32
    %v4068 = vpop.permute.xlu0 %4067
    %4069 = vrot.lane.b32.xlu0 %v3910, 32
    %v4070 = vpop.permute.xlu0 %4069
    %4071 = vrot.lane.b32.xlu0 %v3911, 32
    %v4072 = vpop.permute.xlu0 %4071
    %4073 = vrot.lane.b32.xlu0 %v3912, 32
    %v4074 = vpop.permute.xlu0 %4073
    %4075 = vrot.lane.b32.xlu0 %v3913, 32
    %v4076 = vpop.permute.xlu0 %4075
    %4077 = vrot.lane.b32.xlu0 %v3914, 32
    %v4078 = vpop.permute.xlu0 %4077
    %4079 = vrot.lane.b32.xlu0 %v3915, 32
    %v4080 = vpop.permute.xlu0 %4079
    %4081 = vrot.lane.b32.xlu0 %v3916, 32
    %v4082 = vpop.permute.xlu0 %4081
    %4083 = vrot.lane.b32.xlu0 %v3917, 32
    %v4084 = vpop.permute.xlu0 %4083
    %4085 = vrot.lane.b32.xlu0 %v3918, 32
    %v4086 = vpop.permute.xlu0 %4085
    %4087 = vrot.lane.b32.xlu0 %v3919, 32
    %v4088 = vpop.permute.xlu0 %4087
    %4089 = vrot.lane.b32.xlu0 %v3920, 32
    %v4090 = vpop.permute.xlu0 %4089
    %4091 = vrot.lane.b32.xlu0 %v3921, 32
    %v4092 = vpop.permute.xlu0 %4091
    %4093 = vrot.lane.b32.xlu0 %v3922, 32
    %v4094 = vpop.permute.xlu0 %4093
    %4095 = vrot.lane.b32.xlu0 %v3923, 32
    %v4096 = vpop.permute.xlu0 %4095
    %4097 = vrot.lane.b32.xlu0 %v3924, 32
    %v4098 = vpop.permute.xlu0 %4097
    %4099 = vrot.lane.b32.xlu0 %v3925, 32
    %v4100 = vpop.permute.xlu0 %4099
    %4101 = vrot.lane.b32.xlu0 %v3926, 32
    %v4102 = vpop.permute.xlu0 %4101
    %4103 = vrot.lane.b32.xlu0 %v3927, 32
    %v4104 = vpop.permute.xlu0 %4103
    %4105 = vrot.lane.b32.xlu0 %v3928, 32
    %v4106 = vpop.permute.xlu0 %4105
    %4107 = vrot.lane.b32.xlu0 %v3929, 32
    %v4108 = vpop.permute.xlu0 %4107
    %4109 = vrot.lane.b32.xlu0 %v3930, 32
    %v4110 = vpop.permute.xlu0 %4109
    %4111 = vrot.lane.b32.xlu0 %v3931, 32
    %v4112 = vpop.permute.xlu0 %4111
    %4113 = vrot.lane.b32.xlu0 %v3932, 32
    %v4114 = vpop.permute.xlu0 %4113
    %4115 = vrot.lane.b32.xlu0 %v3933, 32
    %v4116 = vpop.permute.xlu0 %4115
    %4117 = vrot.lane.b32.xlu0 %v3934, 32
    %v4118 = vpop.permute.xlu0 %4117
    %4119 = vrot.lane.b32.xlu0 %v3935, 32
    %v4120 = vpop.permute.xlu0 %4119
    %4121 = vrot.lane.b32.xlu0 %v3936, 32
    %v4122 = vpop.permute.xlu0 %4121
    %4123 = vrot.lane.b32.xlu0 %v3937, 32
    %v4124 = vpop.permute.xlu0 %4123
    %4125 = vrot.lane.b32.xlu0 %v3938, 32
    %v4126 = vpop.permute.xlu0 %4125
    %4127 = vrot.lane.b32.xlu0 %v3939, 32
    %v4128 = vpop.permute.xlu0 %4127
    %4129 = vrot.lane.b32.xlu0 %v3940, 32
    %v4130 = vpop.permute.xlu0 %4129
    %4131 = vrot.lane.b32.xlu0 %v3941, 32
    %v4132 = vpop.permute.xlu0 %4131
    %4133 = vrot.lane.b32.xlu0 %v3942, 32
    %v4134 = vpop.permute.xlu0 %4133
    %v4199 = vadd.f32 %v3815, %v4008
    %v4200 = vadd.f32 %v3816, %v4010
    %v4201 = vadd.f32 %v3817, %v4012
    %v4202 = vadd.f32 %v3818, %v4014
    %v4203 = vadd.f32 %v3819, %v4016
    %v4204 = vadd.f32 %v3820, %v4018
    %v4205 = vadd.f32 %v3821, %v4020
    %v4206 = vadd.f32 %v3822, %v4022
    %v4207 = vadd.f32 %v3823, %v4024
    %v4208 = vadd.f32 %v3824, %v4026
    %v4209 = vadd.f32 %v3825, %v4028
    %v4210 = vadd.f32 %v3826, %v4030
    %v4211 = vadd.f32 %v3827, %v4032
    %v4212 = vadd.f32 %v3828, %v4034
    %v4213 = vadd.f32 %v3829, %v4036
    %v4214 = vadd.f32 %v3830, %v4038
    %v4215 = vadd.f32 %v3831, %v4040
    %v4216 = vadd.f32 %v3832, %v4042
    %v4217 = vadd.f32 %v3833, %v4044
    %v4218 = vadd.f32 %v3834, %v4046
    %v4219 = vadd.f32 %v3835, %v4048
    %v4220 = vadd.f32 %v3836, %v4050
    %v4221 = vadd.f32 %v3837, %v4052
    %v4222 = vadd.f32 %v3838, %v4054
    %v4223 = vadd.f32 %v3839, %v4056
    %v4224 = vadd.f32 %v3840, %v4058
    %v4225 = vadd.f32 %v3841, %v4060
    %v4226 = vadd.f32 %v3842, %v4062
    %v4227 = vadd.f32 %v3843, %v4064
    %v4228 = vadd.f32 %v3844, %v4066
    %v4229 = vadd.f32 %v3845, %v4068
    %v4230 = vadd.f32 %v3846, %v4070
    %v4231 = vadd.f32 %v3847, %v4072
    %v4232 = vadd.f32 %v3848, %v4074
    %v4233 = vadd.f32 %v3849, %v4076
    %v4234 = vadd.f32 %v3850, %v4078
    %v4235 = vadd.f32 %v3851, %v4080
    %v4236 = vadd.f32 %v3852, %v4082
    %v4237 = vadd.f32 %v3853, %v4084
    %v4238 = vadd.f32 %v3854, %v4086
    %v4239 = vadd.f32 %v3855, %v4088
    %v4240 = vadd.f32 %v3856, %v4090
    %v4241 = vadd.f32 %v3857, %v4092
    %v4242 = vadd.f32 %v3858, %v4094
    %v4243 = vadd.f32 %v3859, %v4096
    %v4244 = vadd.f32 %v3860, %v4098
    %v4245 = vadd.f32 %v3861, %v4100
    %v4246 = vadd.f32 %v3862, %v4102
    %v4247 = vadd.f32 %v3863, %v4104
    %v4248 = vadd.f32 %v3864, %v4106
    %v4249 = vadd.f32 %v3865, %v4108
    %v4250 = vadd.f32 %v3866, %v4110
    %v4251 = vadd.f32 %v3867, %v4112
    %v4252 = vadd.f32 %v3868, %v4114
    %v4253 = vadd.f32 %v3869, %v4116
    %v4254 = vadd.f32 %v3870, %v4118
    %v4255 = vadd.f32 %v3871, %v4120
    %v4256 = vadd.f32 %v3872, %v4122
    %v4257 = vadd.f32 %v3873, %v4124
    %v4258 = vadd.f32 %v3874, %v4126
    %v4259 = vadd.f32 %v3875, %v4128
    %v4260 = vadd.f32 %v3876, %v4130
    %v4261 = vadd.f32 %v3877, %v4132
    %v4262 = vadd.f32 %v3878, %v4134
    %v4263 = vld [vmem:[%s2402 + $0x8] sm:$0xfe]
    %v4264 = vld [vmem:[%s2402 + $0x20] sm:$0xff]
    %v4265 = vld [vmem:[%s2402 + $0x38] sm:$0x1]
    %v4266 = vld [vmem:[%s2402 + $0x50] sm:$0xfe]
    %v4267 = vld [vmem:[%s2402 + $0x68] sm:$0xff]
    %v4268 = vld [vmem:[%s2402 + $0x80] sm:$0x1]
    %v4269 = vld [vmem:[%s2402 + $0x98] sm:$0xfe]
    %v4270 = vld [vmem:[%s2402 + $0xb0] sm:$0xff]
    %v4271 = vld [vmem:[%s2402 + $0xc8] sm:$0x1]
    %v4272 = vld [vmem:[%s2402 + $0xe0] sm:$0xfe]
    %v4273 = vld [vmem:[%s2402 + $0xf8] sm:$0xff]
    %v4274 = vld [vmem:[%s2402 + $0x110] sm:$0x1]
    %v4275 = vld [vmem:[%s2402 + $0x128] sm:$0xfe]
    %v4276 = vld [vmem:[%s2402 + $0x140] sm:$0xff]
    %v4277 = vld [vmem:[%s2402 + $0x158] sm:$0x1]
    %v4278 = vld [vmem:[%s2402 + $0x170] sm:$0xfe]
    %v4279 = vld [vmem:[%s2402 + $0x188] sm:$0xff]
    %v4280 = vld [vmem:[%s2402 + $0x1a0] sm:$0x1]
    %v4281 = vld [vmem:[%s2402 + $0x1b8] sm:$0xfe]
    %v4282 = vld [vmem:[%s2402 + $0x1d0] sm:$0xff]
    %v4283 = vld [vmem:[%s2402 + $0x1e8] sm:$0x1]
    %v4284 = vld [vmem:[%s2402 + $0x200] sm:$0xfe]
    %v4285 = vld [vmem:[%s2402 + $0x218] sm:$0xff]
    %v4286 = vld [vmem:[%s2402 + $0x230] sm:$0x1]
    %v4287 = vld [vmem:[%s2402 + $0x248] sm:$0xfe]
    %v4288 = vld [vmem:[%s2402 + $0x260] sm:$0xff]
    %v4289 = vld [vmem:[%s2402 + $0x278] sm:$0x1]
    %v4290 = vld [vmem:[%s2402 + $0x290] sm:$0xfe]
    %v4291 = vld [vmem:[%s2402 + $0x2a8] sm:$0xff]
    %v4292 = vld [vmem:[%s2402 + $0x2c0] sm:$0x1]
    %v4293 = vld [vmem:[%s2402 + $0x2d8] sm:$0xfe]
    %v4294 = vld [vmem:[%s2402 + $0x2f0] sm:$0xff]
    %v4295 = vld [vmem:[%s2402 + $0x308] sm:$0x1]
    %v4296 = vld [vmem:[%s2402 + $0x320] sm:$0xfe]
    %v4297 = vld [vmem:[%s2402 + $0x338] sm:$0xff]
    %v4298 = vld [vmem:[%s2402 + $0x350] sm:$0x1]
    %v4299 = vld [vmem:[%s2402 + $0x368] sm:$0xfe]
    %v4300 = vld [vmem:[%s2402 + $0x380] sm:$0xff]
    %v4301 = vld [vmem:[%s2402 + $0x398] sm:$0x1]
    %v4302 = vld [vmem:[%s2402 + $0x3b0] sm:$0xfe]
    %v4303 = vld [vmem:[%s2402 + $0x3c8] sm:$0xff]
    %v4304 = vld [vmem:[%s2402 + $0x3e0] sm:$0x1]
    %v4305 = vld [vmem:[%s2402 + $0x3f8] sm:$0xfe]
    %v4306 = vld [vmem:[%s2402 + $0x410] sm:$0xff]
    %v4307 = vld [vmem:[%s2402 + $0x428] sm:$0x1]
    %v4308 = vld [vmem:[%s2402 + $0x440] sm:$0xfe]
    %v4309 = vld [vmem:[%s2402 + $0x458] sm:$0xff]
    %v4310 = vld [vmem:[%s2402 + $0x470] sm:$0x1]
    %v4311 = vld [vmem:[%s2402 + $0x518] sm:$0xfe]
    %v4312 = vld [vmem:[%s2402 + $0x530] sm:$0xff]
    %v4313 = vld [vmem:[%s2402 + $0x548] sm:$0x1]
    %v4314 = vld [vmem:[%s2402 + $0x560] sm:$0xfe]
    %v4315 = vld [vmem:[%s2402 + $0x578] sm:$0xff]
    %v4316 = vld [vmem:[%s2402 + $0x590] sm:$0x1]
    %v4317 = vld [vmem:[%s2402 + $0x5a8] sm:$0xfe]
    %v4318 = vld [vmem:[%s2402 + $0x5c0] sm:$0xff]
    %v4319 = vld [vmem:[%s2402 + $0x5d8] sm:$0x1]
    %v4320 = vld [vmem:[%s2402 + $0x5f0] sm:$0xfe]
    %v4321 = vld [vmem:[%s2402 + $0x608] sm:$0xff]
    %v4322 = vld [vmem:[%s2402 + $0x620] sm:$0x1]
    %v4323 = vld [vmem:[%s2402 + $0x638] sm:$0xfe]
    %v4324 = vld [vmem:[%s2402 + $0x650] sm:$0xff]
    %v4325 = vld [vmem:[%s2402 + $0x668] sm:$0x1]
    %v4326 = vld [vmem:[%s2402 + $0x680] sm:$0xfe]
    %v4327 = vld [vmem:[%s2402 + $0x698] sm:$0xff]
    %v4328 = vld [vmem:[%s2402 + $0x6b0] sm:$0x1]
    %v4329 = vld [vmem:[%s2402 + $0x6c8] sm:$0xfe]
    %v4330 = vld [vmem:[%s2402 + $0x6e0] sm:$0xff]
    %v4331 = vld [vmem:[%s2402 + $0x6f8] sm:$0x1]
    %v4332 = vld [vmem:[%s2402 + $0x710] sm:$0xfe]
    %v4333 = vld [vmem:[%s2402 + $0x728] sm:$0xff]
    %v4334 = vld [vmem:[%s2402 + $0x740] sm:$0x1]
    %v4335 = vld [vmem:[%s2402 + $0x758] sm:$0xfe]
    %v4336 = vld [vmem:[%s2402 + $0x770] sm:$0xff]
    %v4337 = vld [vmem:[%s2402 + $0x788] sm:$0x1]
    %v4338 = vld [vmem:[%s2402 + $0x7a0] sm:$0xfe]
    %v4339 = vld [vmem:[%s2402 + $0x7b8] sm:$0xff]
    %v4340 = vld [vmem:[%s2402 + $0x7d0] sm:$0x1]
    %v4341 = vld [vmem:[%s2402 + $0x7e8] sm:$0xfe]
    %v4342 = vld [vmem:[%s2402 + $0x800] sm:$0xff]
    %v4343 = vld [vmem:[%s2402 + $0x818] sm:$0x1]
    %v4344 = vld [vmem:[%s2402 + $0x830] sm:$0xfe]
    %v4345 = vld [vmem:[%s2402 + $0x848] sm:$0xff]
    %v4346 = vld [vmem:[%s2402 + $0x860] sm:$0x1]
    %v4347 = vld [vmem:[%s2402 + $0x878] sm:$0xfe]
    %v4348 = vld [vmem:[%s2402 + $0x890] sm:$0xff]
    %v4349 = vld [vmem:[%s2402 + $0x8a8] sm:$0x1]
    %v4350 = vld [vmem:[%s2402 + $0x8c0] sm:$0xfe]
    %v4351 = vld [vmem:[%s2402 + $0x8d8] sm:$0xff]
    %v4352 = vld [vmem:[%s2402 + $0x8f0] sm:$0x1]
    %v4353 = vld [vmem:[%s2402 + $0x908] sm:$0xfe]
    %v4354 = vld [vmem:[%s2402 + $0x920] sm:$0xff]
    %v4355 = vld [vmem:[%s2402 + $0x938] sm:$0x1]
    %v4356 = vld [vmem:[%s2402 + $0x950] sm:$0xfe]
    %v4357 = vld [vmem:[%s2402 + $0x968] sm:$0xff]
    %v4358 = vld [vmem:[%s2402 + $0x980] sm:$0x1]
    %v4455 = vrot.slane %v4263, 1
    %v4456 = vrot.slane %v4264, 1
    %v4457 = vsel %vm2917, %v4455, %v4456
    %v4458 = vrot.slane %v4265, 1
    %v4459 = vsel %vm2917, %v4456, %v4458
    %v4460 = vrot.slane %v4266, 1
    %v4461 = vrot.slane %v4267, 1
    %v4462 = vsel %vm2917, %v4460, %v4461
    %v4463 = vrot.slane %v4268, 1
    %v4464 = vsel %vm2917, %v4461, %v4463
    %v4465 = vrot.slane %v4269, 1
    %v4466 = vrot.slane %v4270, 1
    %v4467 = vsel %vm2917, %v4465, %v4466
    %v4468 = vrot.slane %v4271, 1
    %v4469 = vsel %vm2917, %v4466, %v4468
    %v4470 = vrot.slane %v4272, 1
    %v4471 = vrot.slane %v4273, 1
    %v4472 = vsel %vm2917, %v4470, %v4471
    %v4473 = vrot.slane %v4274, 1
    %v4474 = vsel %vm2917, %v4471, %v4473
    %v4475 = vrot.slane %v4275, 1
    %v4476 = vrot.slane %v4276, 1
    %v4477 = vsel %vm2917, %v4475, %v4476
    %v4478 = vrot.slane %v4277, 1
    %v4479 = vsel %vm2917, %v4476, %v4478
    %v4480 = vrot.slane %v4278, 1
    %v4481 = vrot.slane %v4279, 1
    %v4482 = vsel %vm2917, %v4480, %v4481
    %v4483 = vrot.slane %v4280, 1
    %v4484 = vsel %vm2917, %v4481, %v4483
    %v4485 = vrot.slane %v4281, 1
    %v4486 = vrot.slane %v4282, 1
    %v4487 = vsel %vm2917, %v4485, %v4486
    %v4488 = vrot.slane %v4283, 1
    %v4489 = vsel %vm2917, %v4486, %v4488
    %v4490 = vrot.slane %v4284, 1
    %v4491 = vrot.slane %v4285, 1
    %v4492 = vsel %vm2917, %v4490, %v4491
    %v4493 = vrot.slane %v4286, 1
    %v4494 = vsel %vm2917, %v4491, %v4493
    %v4495 = vrot.slane %v4287, 1
    %v4496 = vrot.slane %v4288, 1
    %v4497 = vsel %vm2917, %v4495, %v4496
    %v4498 = vrot.slane %v4289, 1
    %v4499 = vsel %vm2917, %v4496, %v4498
    %v4500 = vrot.slane %v4290, 1
    %v4501 = vrot.slane %v4291, 1
    %v4502 = vsel %vm2917, %v4500, %v4501
    %v4503 = vrot.slane %v4292, 1
    %v4504 = vsel %vm2917, %v4501, %v4503
    %v4505 = vrot.slane %v4293, 1
    %v4506 = vrot.slane %v4294, 1
    %v4507 = vsel %vm2917, %v4505, %v4506
    %v4508 = vrot.slane %v4295, 1
    %v4509 = vsel %vm2917, %v4506, %v4508
    %v4510 = vrot.slane %v4296, 1
    %v4511 = vrot.slane %v4297, 1
    %v4512 = vsel %vm2917, %v4510, %v4511
    %v4513 = vrot.slane %v4298, 1
    %v4514 = vsel %vm2917, %v4511, %v4513
    %v4515 = vrot.slane %v4299, 1
    %v4516 = vrot.slane %v4300, 1
    %v4517 = vsel %vm2917, %v4515, %v4516
    %v4518 = vrot.slane %v4301, 1
    %v4519 = vsel %vm2917, %v4516, %v4518
    %v4520 = vrot.slane %v4302, 1
    %v4521 = vrot.slane %v4303, 1
    %v4522 = vsel %vm2917, %v4520, %v4521
    %v4523 = vrot.slane %v4304, 1
    %v4524 = vsel %vm2917, %v4521, %v4523
    %v4525 = vrot.slane %v4305, 1
    %v4526 = vrot.slane %v4306, 1
    %v4527 = vsel %vm2917, %v4525, %v4526
    %v4528 = vrot.slane %v4307, 1
    %v4529 = vsel %vm2917, %v4526, %v4528
    %v4530 = vrot.slane %v4308, 1
    %v4531 = vrot.slane %v4309, 1
    %v4532 = vsel %vm2917, %v4530, %v4531
    %v4533 = vrot.slane %v4310, 1
    %v4534 = vsel %vm2917, %v4531, %v4533
    %v4535 = vrot.slane %v4311, 1
    %v4536 = vrot.slane %v4312, 1
    %v4537 = vsel %vm2917, %v4535, %v4536
    %v4538 = vrot.slane %v4313, 1
    %v4539 = vsel %vm2917, %v4536, %v4538
    %v4540 = vrot.slane %v4314, 1
    %v4541 = vrot.slane %v4315, 1
    %v4542 = vsel %vm2917, %v4540, %v4541
    %v4543 = vrot.slane %v4316, 1
    %v4544 = vsel %vm2917, %v4541, %v4543
    %v4545 = vrot.slane %v4317, 1
    %v4546 = vrot.slane %v4318, 1
    %v4547 = vsel %vm2917, %v4545, %v4546
    %v4548 = vrot.slane %v4319, 1
    %v4549 = vsel %vm2917, %v4546, %v4548
    %v4550 = vrot.slane %v4320, 1
    %v4551 = vrot.slane %v4321, 1
    %v4552 = vsel %vm2917, %v4550, %v4551
    %v4553 = vrot.slane %v4322, 1
    %v4554 = vsel %vm2917, %v4551, %v4553
    %v4555 = vrot.slane %v4323, 1
    %v4556 = vrot.slane %v4324, 1
    %v4557 = vsel %vm2917, %v4555, %v4556
    %v4558 = vrot.slane %v4325, 1
    %v4559 = vsel %vm2917, %v4556, %v4558
    %v4560 = vrot.slane %v4326, 1
    %v4561 = vrot.slane %v4327, 1
    %v4562 = vsel %vm2917, %v4560, %v4561
    %v4563 = vrot.slane %v4328, 1
    %v4564 = vsel %vm2917, %v4561, %v4563
    %v4565 = vrot.slane %v4329, 1
    %v4566 = vrot.slane %v4330, 1
    %v4567 = vsel %vm2917, %v4565, %v4566
    %v4568 = vrot.slane %v4331, 1
    %v4569 = vsel %vm2917, %v4566, %v4568
    %v4570 = vrot.slane %v4332, 1
    %v4571 = vrot.slane %v4333, 1
    %v4572 = vsel %vm2917, %v4570, %v4571
    %v4573 = vrot.slane %v4334, 1
    %v4574 = vsel %vm2917, %v4571, %v4573
    %v4575 = vrot.slane %v4335, 1
    %v4576 = vrot.slane %v4336, 1
    %v4577 = vsel %vm2917, %v4575, %v4576
    %v4578 = vrot.slane %v4337, 1
    %v4579 = vsel %vm2917, %v4576, %v4578
    %v4580 = vrot.slane %v4338, 1
    %v4581 = vrot.slane %v4339, 1
    %v4582 = vsel %vm2917, %v4580, %v4581
    %v4583 = vrot.slane %v4340, 1
    %v4584 = vsel %vm2917, %v4581, %v4583
    %v4585 = vrot.slane %v4341, 1
    %v4586 = vrot.slane %v4342, 1
    %v4587 = vsel %vm2917, %v4585, %v4586
    %v4588 = vrot.slane %v4343, 1
    %v4589 = vsel %vm2917, %v4586, %v4588
    %v4590 = vrot.slane %v4344, 1
    %v4591 = vrot.slane %v4345, 1
    %v4592 = vsel %vm2917, %v4590, %v4591
    %v4593 = vrot.slane %v4346, 1
    %v4594 = vsel %vm2917, %v4591, %v4593
    %v4595 = vrot.slane %v4347, 1
    %v4596 = vrot.slane %v4348, 1
    %v4597 = vsel %vm2917, %v4595, %v4596
    %v4598 = vrot.slane %v4349, 1
    %v4599 = vsel %vm2917, %v4596, %v4598
    %v4600 = vrot.slane %v4350, 1
    %v4601 = vrot.slane %v4351, 1
    %v4602 = vsel %vm2917, %v4600, %v4601
    %v4603 = vrot.slane %v4352, 1
    %v4604 = vsel %vm2917, %v4601, %v4603
    %v4605 = vrot.slane %v4353, 1
    %v4606 = vrot.slane %v4354, 1
    %v4607 = vsel %vm2917, %v4605, %v4606
    %v4608 = vrot.slane %v4355, 1
    %v4609 = vsel %vm2917, %v4606, %v4608
    %v4610 = vrot.slane %v4356, 1
    %v4611 = vrot.slane %v4357, 1
    %v4612 = vsel %vm2917, %v4610, %v4611
    %v4613 = vrot.slane %v4358, 1
    %v4614 = vsel %vm2917, %v4611, %v4613
    %v4679 = vadd.f32 %v4199, %v4457
    %v4680 = vadd.f32 %v4200, %v4459
    %v4681 = vadd.f32 %v4201, %v4462
    %v4682 = vadd.f32 %v4202, %v4464
    %v4683 = vadd.f32 %v4203, %v4467
    %v4684 = vadd.f32 %v4204, %v4469
    %v4685 = vadd.f32 %v4205, %v4472
    %v4686 = vadd.f32 %v4206, %v4474
    %v4687 = vadd.f32 %v4207, %v4477
    %v4688 = vadd.f32 %v4208, %v4479
    %v4689 = vadd.f32 %v4209, %v4482
    %v4690 = vadd.f32 %v4210, %v4484
    %v4691 = vadd.f32 %v4211, %v4487
    %v4692 = vadd.f32 %v4212, %v4489
    %v4693 = vadd.f32 %v4213, %v4492
    %v4694 = vadd.f32 %v4214, %v4494
    %v4695 = vadd.f32 %v4215, %v4497
    %v4696 = vadd.f32 %v4216, %v4499
    %v4697 = vadd.f32 %v4217, %v4502
    %v4698 = vadd.f32 %v4218, %v4504
    %v4699 = vadd.f32 %v4219, %v4507
    %v4700 = vadd.f32 %v4220, %v4509
    %v4701 = vadd.f32 %v4221, %v4512
    %v4702 = vadd.f32 %v4222, %v4514
    %v4703 = vadd.f32 %v4223, %v4517
    %v4704 = vadd.f32 %v4224, %v4519
    %v4705 = vadd.f32 %v4225, %v4522
    %v4706 = vadd.f32 %v4226, %v4524
    %v4707 = vadd.f32 %v4227, %v4527
    %v4708 = vadd.f32 %v4228, %v4529
    %v4709 = vadd.f32 %v4229, %v4532
    %v4710 = vadd.f32 %v4230, %v4534
    %v4711 = vadd.f32 %v4231, %v4537
    %v4712 = vadd.f32 %v4232, %v4539
    %v4713 = vadd.f32 %v4233, %v4542
    %v4714 = vadd.f32 %v4234, %v4544
    %v4715 = vadd.f32 %v4235, %v4547
    %v4716 = vadd.f32 %v4236, %v4549
    %v4717 = vadd.f32 %v4237, %v4552
    %v4718 = vadd.f32 %v4238, %v4554
    %v4719 = vadd.f32 %v4239, %v4557
    %v4720 = vadd.f32 %v4240, %v4559
    %v4721 = vadd.f32 %v4241, %v4562
    %v4722 = vadd.f32 %v4242, %v4564
    %v4723 = vadd.f32 %v4243, %v4567
    %v4724 = vadd.f32 %v4244, %v4569
    %v4725 = vadd.f32 %v4245, %v4572
    %v4726 = vadd.f32 %v4246, %v4574
    %v4727 = vadd.f32 %v4247, %v4577
    %v4728 = vadd.f32 %v4248, %v4579
    %v4729 = vadd.f32 %v4249, %v4582
    %v4730 = vadd.f32 %v4250, %v4584
    %v4731 = vadd.f32 %v4251, %v4587
    %v4732 = vadd.f32 %v4252, %v4589
    %v4733 = vadd.f32 %v4253, %v4592
    %v4734 = vadd.f32 %v4254, %v4594
    %v4735 = vadd.f32 %v4255, %v4597
    %v4736 = vadd.f32 %v4256, %v4599
    %v4737 = vadd.f32 %v4257, %v4602
    %v4738 = vadd.f32 %v4258, %v4604
    %v4739 = vadd.f32 %v4259, %v4607
    %v4740 = vadd.f32 %v4260, %v4609
    %v4741 = vadd.f32 %v4261, %v4612
    %v4742 = vadd.f32 %v4262, %v4614
    %v4743 = vld [vmem:[%s2402 + $0x8] sm:$0xfc]
    %v4744 = vld [vmem:[%s2402 + $0x38] sm:$0x3]
    %v4745 = vld [vmem:[%s2402 + $0x50] sm:$0xfc]
    %v4746 = vld [vmem:[%s2402 + $0x80] sm:$0x3]
    %v4747 = vld [vmem:[%s2402 + $0x98] sm:$0xfc]
    %v4748 = vld [vmem:[%s2402 + $0xc8] sm:$0x3]
    %v4749 = vld [vmem:[%s2402 + $0xe0] sm:$0xfc]
    %v4750 = vld [vmem:[%s2402 + $0x110] sm:$0x3]
    %v4751 = vld [vmem:[%s2402 + $0x128] sm:$0xfc]
    %v4752 = vld [vmem:[%s2402 + $0x158] sm:$0x3]
    %v4753 = vld [vmem:[%s2402 + $0x170] sm:$0xfc]
    %v4754 = vld [vmem:[%s2402 + $0x1a0] sm:$0x3]
    %v4755 = vld [vmem:[%s2402 + $0x1b8] sm:$0xfc]
    %v4756 = vld [vmem:[%s2402 + $0x1e8] sm:$0x3]
    %v4757 = vld [vmem:[%s2402 + $0x200] sm:$0xfc]
    %v4758 = vld [vmem:[%s2402 + $0x230] sm:$0x3]
    %v4759 = vld [vmem:[%s2402 + $0x248] sm:$0xfc]
    %v4760 = vld [vmem:[%s2402 + $0x278] sm:$0x3]
    %v4761 = vld [vmem:[%s2402 + $0x290] sm:$0xfc]
    %v4762 = vld [vmem:[%s2402 + $0x2c0] sm:$0x3]
    %v4763 = vld [vmem:[%s2402 + $0x2d8] sm:$0xfc]
    %v4764 = vld [vmem:[%s2402 + $0x308] sm:$0x3]
    %v4765 = vld [vmem:[%s2402 + $0x320] sm:$0xfc]
    %v4766 = vld [vmem:[%s2402 + $0x350] sm:$0x3]
    %v4767 = vld [vmem:[%s2402 + $0x368] sm:$0xfc]
    %v4768 = vld [vmem:[%s2402 + $0x398] sm:$0x3]
    %v4769 = vld [vmem:[%s2402 + $0x3b0] sm:$0xfc]
    %v4770 = vld [vmem:[%s2402 + $0x3e0] sm:$0x3]
    %v4771 = vld [vmem:[%s2402 + $0x3f8] sm:$0xfc]
    %v4772 = vld [vmem:[%s2402 + $0x428] sm:$0x3]
    %v4773 = vld [vmem:[%s2402 + $0x440] sm:$0xfc]
    %v4774 = vld [vmem:[%s2402 + $0x470] sm:$0x3]
    %v4775 = vld [vmem:[%s2402 + $0x518] sm:$0xfc]
    %v4776 = vld [vmem:[%s2402 + $0x548] sm:$0x3]
    %v4777 = vld [vmem:[%s2402 + $0x560] sm:$0xfc]
    %v4778 = vld [vmem:[%s2402 + $0x590] sm:$0x3]
    %v4779 = vld [vmem:[%s2402 + $0x5a8] sm:$0xfc]
    %v4780 = vld [vmem:[%s2402 + $0x5d8] sm:$0x3]
    %v4781 = vld [vmem:[%s2402 + $0x5f0] sm:$0xfc]
    %v4782 = vld [vmem:[%s2402 + $0x620] sm:$0x3]
    %v4783 = vld [vmem:[%s2402 + $0x638] sm:$0xfc]
    %v4784 = vld [vmem:[%s2402 + $0x668] sm:$0x3]
    %v4785 = vld [vmem:[%s2402 + $0x680] sm:$0xfc]
    %v4786 = vld [vmem:[%s2402 + $0x6b0] sm:$0x3]
    %v4787 = vld [vmem:[%s2402 + $0x6c8] sm:$0xfc]
    %v4788 = vld [vmem:[%s2402 + $0x6f8] sm:$0x3]
    %v4789 = vld [vmem:[%s2402 + $0x710] sm:$0xfc]
    %v4790 = vld [vmem:[%s2402 + $0x740] sm:$0x3]
    %v4791 = vld [vmem:[%s2402 + $0x758] sm:$0xfc]
    %v4792 = vld [vmem:[%s2402 + $0x788] sm:$0x3]
    %v4793 = vld [vmem:[%s2402 + $0x7a0] sm:$0xfc]
    %v4794 = vld [vmem:[%s2402 + $0x7d0] sm:$0x3]
    %v4795 = vld [vmem:[%s2402 + $0x7e8] sm:$0xfc]
    %v4796 = vld [vmem:[%s2402 + $0x818] sm:$0x3]
    %v4797 = vld [vmem:[%s2402 + $0x830] sm:$0xfc]
    %v4798 = vld [vmem:[%s2402 + $0x860] sm:$0x3]
    %v4799 = vld [vmem:[%s2402 + $0x878] sm:$0xfc]
    %v4800 = vld [vmem:[%s2402 + $0x8a8] sm:$0x3]
    %v4801 = vld [vmem:[%s2402 + $0x8c0] sm:$0xfc]
    %v4802 = vld [vmem:[%s2402 + $0x8f0] sm:$0x3]
    %v4803 = vld [vmem:[%s2402 + $0x908] sm:$0xfc]
    %v4804 = vld [vmem:[%s2402 + $0x938] sm:$0x3]
    %v4805 = vld [vmem:[%s2402 + $0x950] sm:$0xfc]
    %v4806 = vld [vmem:[%s2402 + $0x980] sm:$0x3]
    %v4871 = vrot.slane %v4743, 2
    %v4872 = vrot.slane %v4264, 2
    %v4873 = vsel %vm3462, %v4871, %v4872
    %v4874 = vrot.slane %v4744, 2
    %v4875 = vsel %vm3462, %v4872, %v4874
    %v4876 = vrot.slane %v4745, 2
    %v4877 = vrot.slane %v4267, 2
    %v4878 = vsel %vm3462, %v4876, %v4877
    %v4879 = vrot.slane %v4746, 2
    %v4880 = vsel %vm3462, %v4877, %v4879
    %v4881 = vrot.slane %v4747, 2
    %v4882 = vrot.slane %v4270, 2
    %v4883 = vsel %vm3462, %v4881, %v4882
    %v4884 = vrot.slane %v4748, 2
    %v4885 = vsel %vm3462, %v4882, %v4884
    %v4886 = vrot.slane %v4749, 2
    %v4887 = vrot.slane %v4273, 2
    %v4888 = vsel %vm3462, %v4886, %v4887
    %v4889 = vrot.slane %v4750, 2
    %v4890 = vsel %vm3462, %v4887, %v4889
    %v4891 = vrot.slane %v4751, 2
    %v4892 = vrot.slane %v4276, 2
    %v4893 = vsel %vm3462, %v4891, %v4892
    %v4894 = vrot.slane %v4752, 2
    %v4895 = vsel %vm3462, %v4892, %v4894
    %v4896 = vrot.slane %v4753, 2
    %v4897 = vrot.slane %v4279, 2
    %v4898 = vsel %vm3462, %v4896, %v4897
    %v4899 = vrot.slane %v4754, 2
    %v4900 = vsel %vm3462, %v4897, %v4899
    %v4901 = vrot.slane %v4755, 2
    %v4902 = vrot.slane %v4282, 2
    %v4903 = vsel %vm3462, %v4901, %v4902
    %v4904 = vrot.slane %v4756, 2
    %v4905 = vsel %vm3462, %v4902, %v4904
    %v4906 = vrot.slane %v4757, 2
    %v4907 = vrot.slane %v4285, 2
    %v4908 = vsel %vm3462, %v4906, %v4907
    %v4909 = vrot.slane %v4758, 2
    %v4910 = vsel %vm3462, %v4907, %v4909
    %v4911 = vrot.slane %v4759, 2
    %v4912 = vrot.slane %v4288, 2
    %v4913 = vsel %vm3462, %v4911, %v4912
    %v4914 = vrot.slane %v4760, 2
    %v4915 = vsel %vm3462, %v4912, %v4914
    %v4916 = vrot.slane %v4761, 2
    %v4917 = vrot.slane %v4291, 2
    %v4918 = vsel %vm3462, %v4916, %v4917
    %v4919 = vrot.slane %v4762, 2
    %v4920 = vsel %vm3462, %v4917, %v4919
    %v4921 = vrot.slane %v4763, 2
    %v4922 = vrot.slane %v4294, 2
    %v4923 = vsel %vm3462, %v4921, %v4922
    %v4924 = vrot.slane %v4764, 2
    %v4925 = vsel %vm3462, %v4922, %v4924
    %v4926 = vrot.slane %v4765, 2
    %v4927 = vrot.slane %v4297, 2
    %v4928 = vsel %vm3462, %v4926, %v4927
    %v4929 = vrot.slane %v4766, 2
    %v4930 = vsel %vm3462, %v4927, %v4929
    %v4931 = vrot.slane %v4767, 2
    %v4932 = vrot.slane %v4300, 2
    %v4933 = vsel %vm3462, %v4931, %v4932
    %v4934 = vrot.slane %v4768, 2
    %v4935 = vsel %vm3462, %v4932, %v4934
    %v4936 = vrot.slane %v4769, 2
    %v4937 = vrot.slane %v4303, 2
    %v4938 = vsel %vm3462, %v4936, %v4937
    %v4939 = vrot.slane %v4770, 2
    %v4940 = vsel %vm3462, %v4937, %v4939
    %v4941 = vrot.slane %v4771, 2
    %v4942 = vrot.slane %v4306, 2
    %v4943 = vsel %vm3462, %v4941, %v4942
    %v4944 = vrot.slane %v4772, 2
    %v4945 = vsel %vm3462, %v4942, %v4944
    %v4946 = vrot.slane %v4773, 2
    %v4947 = vrot.slane %v4309, 2
    %v4948 = vsel %vm3462, %v4946, %v4947
    %v4949 = vrot.slane %v4774, 2
    %v4950 = vsel %vm3462, %v4947, %v4949
    %v4951 = vrot.slane %v4775, 2
    %v4952 = vrot.slane %v4312, 2
    %v4953 = vsel %vm3462, %v4951, %v4952
    %v4954 = vrot.slane %v4776, 2
    %v4955 = vsel %vm3462, %v4952, %v4954
    %v4956 = vrot.slane %v4777, 2
    %v4957 = vrot.slane %v4315, 2
    %v4958 = vsel %vm3462, %v4956, %v4957
    %v4959 = vrot.slane %v4778, 2
    %v4960 = vsel %vm3462, %v4957, %v4959
    %v4961 = vrot.slane %v4779, 2
    %v4962 = vrot.slane %v4318, 2
    %v4963 = vsel %vm3462, %v4961, %v4962
    %v4964 = vrot.slane %v4780, 2
    %v4965 = vsel %vm3462, %v4962, %v4964
    %v4966 = vrot.slane %v4781, 2
    %v4967 = vrot.slane %v4321, 2
    %v4968 = vsel %vm3462, %v4966, %v4967
    %v4969 = vrot.slane %v4782, 2
    %v4970 = vsel %vm3462, %v4967, %v4969
    %v4971 = vrot.slane %v4783, 2
    %v4972 = vrot.slane %v4324, 2
    %v4973 = vsel %vm3462, %v4971, %v4972
    %v4974 = vrot.slane %v4784, 2
    %v4975 = vsel %vm3462, %v4972, %v4974
    %v4976 = vrot.slane %v4785, 2
    %v4977 = vrot.slane %v4327, 2
    %v4978 = vsel %vm3462, %v4976, %v4977
    %v4979 = vrot.slane %v4786, 2
    %v4980 = vsel %vm3462, %v4977, %v4979
    %v4981 = vrot.slane %v4787, 2
    %v4982 = vrot.slane %v4330, 2
    %v4983 = vsel %vm3462, %v4981, %v4982
    %v4984 = vrot.slane %v4788, 2
    %v4985 = vsel %vm3462, %v4982, %v4984
    %v4986 = vrot.slane %v4789, 2
    %v4987 = vrot.slane %v4333, 2
    %v4988 = vsel %vm3462, %v4986, %v4987
    %v4989 = vrot.slane %v4790, 2
    %v4990 = vsel %vm3462, %v4987, %v4989
    %v4991 = vrot.slane %v4791, 2
    %v4992 = vrot.slane %v4336, 2
    %v4993 = vsel %vm3462, %v4991, %v4992
    %v4994 = vrot.slane %v4792, 2
    %v4995 = vsel %vm3462, %v4992, %v4994
    %v4996 = vrot.slane %v4793, 2
    %v4997 = vrot.slane %v4339, 2
    %v4998 = vsel %vm3462, %v4996, %v4997
    %v4999 = vrot.slane %v4794, 2
    %v5000 = vsel %vm3462, %v4997, %v4999
    %v5001 = vrot.slane %v4795, 2
    %v5002 = vrot.slane %v4342, 2
    %v5003 = vsel %vm3462, %v5001, %v5002
    %v5004 = vrot.slane %v4796, 2
    %v5005 = vsel %vm3462, %v5002, %v5004
    %v5006 = vrot.slane %v4797, 2
    %v5007 = vrot.slane %v4345, 2
    %v5008 = vsel %vm3462, %v5006, %v5007
    %v5009 = vrot.slane %v4798, 2
    %v5010 = vsel %vm3462, %v5007, %v5009
    %v5011 = vrot.slane %v4799, 2
    %v5012 = vrot.slane %v4348, 2
    %v5013 = vsel %vm3462, %v5011, %v5012
    %v5014 = vrot.slane %v4800, 2
    %v5015 = vsel %vm3462, %v5012, %v5014
    %v5016 = vrot.slane %v4801, 2
    %v5017 = vrot.slane %v4351, 2
    %v5018 = vsel %vm3462, %v5016, %v5017
    %v5019 = vrot.slane %v4802, 2
    %v5020 = vsel %vm3462, %v5017, %v5019
    %v5021 = vrot.slane %v4803, 2
    %v5022 = vrot.slane %v4354, 2
    %v5023 = vsel %vm3462, %v5021, %v5022
    %v5024 = vrot.slane %v4804, 2
    %v5025 = vsel %vm3462, %v5022, %v5024
    %v5026 = vrot.slane %v4805, 2
    %v5027 = vrot.slane %v4357, 2
    %v5028 = vsel %vm3462, %v5026, %v5027
    %v5029 = vrot.slane %v4806, 2
    %v5030 = vsel %vm3462, %v5027, %v5029
    %5031 = vrot.lane.b32.xlu0 %v4873, 96
    %v5032 = vpop.permute.xlu0 %5031
    %5033 = vrot.lane.b32.xlu0 %v4875, 96
    %v5034 = vpop.permute.xlu0 %5033
    %5035 = vrot.lane.b32.xlu0 %v4878, 96
    %v5036 = vpop.permute.xlu0 %5035
    %5037 = vrot.lane.b32.xlu0 %v4880, 96
    %v5038 = vpop.permute.xlu0 %5037
    %5039 = vrot.lane.b32.xlu0 %v4883, 96
    %v5040 = vpop.permute.xlu0 %5039
    %5041 = vrot.lane.b32.xlu0 %v4885, 96
    %v5042 = vpop.permute.xlu0 %5041
    %5043 = vrot.lane.b32.xlu0 %v4888, 96
    %v5044 = vpop.permute.xlu0 %5043
    %5045 = vrot.lane.b32.xlu0 %v4890, 96
    %v5046 = vpop.permute.xlu0 %5045
    %5047 = vrot.lane.b32.xlu0 %v4893, 96
    %v5048 = vpop.permute.xlu0 %5047
    %5049 = vrot.lane.b32.xlu0 %v4895, 96
    %v5050 = vpop.permute.xlu0 %5049
    %5051 = vrot.lane.b32.xlu0 %v4898, 96
    %v5052 = vpop.permute.xlu0 %5051
    %5053 = vrot.lane.b32.xlu0 %v4900, 96
    %v5054 = vpop.permute.xlu0 %5053
    %5055 = vrot.lane.b32.xlu0 %v4903, 96
    %v5056 = vpop.permute.xlu0 %5055
    %5057 = vrot.lane.b32.xlu0 %v4905, 96
    %v5058 = vpop.permute.xlu0 %5057
    %5059 = vrot.lane.b32.xlu0 %v4908, 96
    %v5060 = vpop.permute.xlu0 %5059
    %5061 = vrot.lane.b32.xlu0 %v4910, 96
    %v5062 = vpop.permute.xlu0 %5061
    %5063 = vrot.lane.b32.xlu0 %v4913, 96
    %v5064 = vpop.permute.xlu0 %5063
    %5065 = vrot.lane.b32.xlu0 %v4915, 96
    %v5066 = vpop.permute.xlu0 %5065
    %5067 = vrot.lane.b32.xlu0 %v4918, 96
    %v5068 = vpop.permute.xlu0 %5067
    %5069 = vrot.lane.b32.xlu0 %v4920, 96
    %v5070 = vpop.permute.xlu0 %5069
    %5071 = vrot.lane.b32.xlu0 %v4923, 96
    %v5072 = vpop.permute.xlu0 %5071
    %5073 = vrot.lane.b32.xlu0 %v4925, 96
    %v5074 = vpop.permute.xlu0 %5073
    %5075 = vrot.lane.b32.xlu0 %v4928, 96
    %v5076 = vpop.permute.xlu0 %5075
    %5077 = vrot.lane.b32.xlu0 %v4930, 96
    %v5078 = vpop.permute.xlu0 %5077
    %5079 = vrot.lane.b32.xlu0 %v4933, 96
    %v5080 = vpop.permute.xlu0 %5079
    %5081 = vrot.lane.b32.xlu0 %v4935, 96
    %v5082 = vpop.permute.xlu0 %5081
    %5083 = vrot.lane.b32.xlu0 %v4938, 96
    %v5084 = vpop.permute.xlu0 %5083
    %5085 = vrot.lane.b32.xlu0 %v4940, 96
    %v5086 = vpop.permute.xlu0 %5085
    %5087 = vrot.lane.b32.xlu0 %v4943, 96
    %v5088 = vpop.permute.xlu0 %5087
    %5089 = vrot.lane.b32.xlu0 %v4945, 96
    %v5090 = vpop.permute.xlu0 %5089
    %5091 = vrot.lane.b32.xlu0 %v4948, 96
    %v5092 = vpop.permute.xlu0 %5091
    %5093 = vrot.lane.b32.xlu0 %v4950, 96
    %v5094 = vpop.permute.xlu0 %5093
    %5095 = vrot.lane.b32.xlu0 %v4953, 96
    %v5096 = vpop.permute.xlu0 %5095
    %5097 = vrot.lane.b32.xlu0 %v4955, 96
    %v5098 = vpop.permute.xlu0 %5097
    %5099 = vrot.lane.b32.xlu0 %v4958, 96
    %v5100 = vpop.permute.xlu0 %5099
    %5101 = vrot.lane.b32.xlu0 %v4960, 96
    %v5102 = vpop.permute.xlu0 %5101
    %5103 = vrot.lane.b32.xlu0 %v4963, 96
    %v5104 = vpop.permute.xlu0 %5103
    %5105 = vrot.lane.b32.xlu0 %v4965, 96
    %v5106 = vpop.permute.xlu0 %5105
    %5107 = vrot.lane.b32.xlu0 %v4968, 96
    %v5108 = vpop.permute.xlu0 %5107
    %5109 = vrot.lane.b32.xlu0 %v4970, 96
    %v5110 = vpop.permute.xlu0 %5109
    %5111 = vrot.lane.b32.xlu0 %v4973, 96
    %v5112 = vpop.permute.xlu0 %5111
    %5113 = vrot.lane.b32.xlu0 %v4975, 96
    %v5114 = vpop.permute.xlu0 %5113
    %5115 = vrot.lane.b32.xlu0 %v4978, 96
    %v5116 = vpop.permute.xlu0 %5115
    %5117 = vrot.lane.b32.xlu0 %v4980, 96
    %v5118 = vpop.permute.xlu0 %5117
    %5119 = vrot.lane.b32.xlu0 %v4983, 96
    %v5120 = vpop.permute.xlu0 %5119
    %5121 = vrot.lane.b32.xlu0 %v4985, 96
    %v5122 = vpop.permute.xlu0 %5121
    %5123 = vrot.lane.b32.xlu0 %v4988, 96
    %v5124 = vpop.permute.xlu0 %5123
    %5125 = vrot.lane.b32.xlu0 %v4990, 96
    %v5126 = vpop.permute.xlu0 %5125
    %5127 = vrot.lane.b32.xlu0 %v4993, 96
    %v5128 = vpop.permute.xlu0 %5127
    %5129 = vrot.lane.b32.xlu0 %v4995, 96
    %v5130 = vpop.permute.xlu0 %5129
    %5131 = vrot.lane.b32.xlu0 %v4998, 96
    %v5132 = vpop.permute.xlu0 %5131
    %5133 = vrot.lane.b32.xlu0 %v5000, 96
    %v5134 = vpop.permute.xlu0 %5133
    %5135 = vrot.lane.b32.xlu0 %v5003, 96
    %v5136 = vpop.permute.xlu0 %5135
    %5137 = vrot.lane.b32.xlu0 %v5005, 96
    %v5138 = vpop.permute.xlu0 %5137
    %5139 = vrot.lane.b32.xlu0 %v5008, 96
    %v5140 = vpop.permute.xlu0 %5139
    %5141 = vrot.lane.b32.xlu0 %v5010, 96
    %v5142 = vpop.permute.xlu0 %5141
    %5143 = vrot.lane.b32.xlu0 %v5013, 96
    %v5144 = vpop.permute.xlu0 %5143
    %5145 = vrot.lane.b32.xlu0 %v5015, 96
    %v5146 = vpop.permute.xlu0 %5145
    %5147 = vrot.lane.b32.xlu0 %v5018, 96
    %v5148 = vpop.permute.xlu0 %5147
    %5149 = vrot.lane.b32.xlu0 %v5020, 96
    %v5150 = vpop.permute.xlu0 %5149
    %5151 = vrot.lane.b32.xlu0 %v5023, 96
    %v5152 = vpop.permute.xlu0 %5151
    %5153 = vrot.lane.b32.xlu0 %v5025, 96
    %v5154 = vpop.permute.xlu0 %5153
    %5155 = vrot.lane.b32.xlu0 %v5028, 96
    %v5156 = vpop.permute.xlu0 %5155
    %5157 = vrot.lane.b32.xlu0 %v5030, 96
    %v5158 = vpop.permute.xlu0 %5157
    %v5223 = vadd.f32 %v4679, %v5032
    %v5224 = vadd.f32 %v4680, %v5034
    %v5225 = vadd.f32 %v4681, %v5036
    %v5226 = vadd.f32 %v4682, %v5038
    %v5227 = vadd.f32 %v4683, %v5040
    %v5228 = vadd.f32 %v4684, %v5042
    %v5229 = vadd.f32 %v4685, %v5044
    %v5230 = vadd.f32 %v4686, %v5046
    %v5231 = vadd.f32 %v4687, %v5048
    %v5232 = vadd.f32 %v4688, %v5050
    %v5233 = vadd.f32 %v4689, %v5052
    %v5234 = vadd.f32 %v4690, %v5054
    %v5235 = vadd.f32 %v4691, %v5056
    %v5236 = vadd.f32 %v4692, %v5058
    %v5237 = vadd.f32 %v4693, %v5060
    %v5238 = vadd.f32 %v4694, %v5062
    %v5239 = vadd.f32 %v4695, %v5064
    %v5240 = vadd.f32 %v4696, %v5066
    %v5241 = vadd.f32 %v4697, %v5068
    %v5242 = vadd.f32 %v4698, %v5070
    %v5243 = vadd.f32 %v4699, %v5072
    %v5244 = vadd.f32 %v4700, %v5074
    %v5245 = vadd.f32 %v4701, %v5076
    %v5246 = vadd.f32 %v4702, %v5078
    %v5247 = vadd.f32 %v4703, %v5080
    %v5248 = vadd.f32 %v4704, %v5082
    %v5249 = vadd.f32 %v4705, %v5084
    %v5250 = vadd.f32 %v4706, %v5086
    %v5251 = vadd.f32 %v4707, %v5088
    %v5252 = vadd.f32 %v4708, %v5090
    %v5253 = vadd.f32 %v4709, %v5092
    %v5254 = vadd.f32 %v4710, %v5094
    %v5255 = vadd.f32 %v4711, %v5096
    %v5256 = vadd.f32 %v4712, %v5098
    %v5257 = vadd.f32 %v4713, %v5100
    %v5258 = vadd.f32 %v4714, %v5102
    %v5259 = vadd.f32 %v4715, %v5104
    %v5260 = vadd.f32 %v4716, %v5106
    %v5261 = vadd.f32 %v4717, %v5108
    %v5262 = vadd.f32 %v4718, %v5110
    %v5263 = vadd.f32 %v4719, %v5112
    %v5264 = vadd.f32 %v4720, %v5114
    %v5265 = vadd.f32 %v4721, %v5116
    %v5266 = vadd.f32 %v4722, %v5118
    %v5267 = vadd.f32 %v4723, %v5120
    %v5268 = vadd.f32 %v4724, %v5122
    %v5269 = vadd.f32 %v4725, %v5124
    %v5270 = vadd.f32 %v4726, %v5126
    %v5271 = vadd.f32 %v4727, %v5128
    %v5272 = vadd.f32 %v4728, %v5130
    %v5273 = vadd.f32 %v4729, %v5132
    %v5274 = vadd.f32 %v4730, %v5134
    %v5275 = vadd.f32 %v4731, %v5136
    %v5276 = vadd.f32 %v4732, %v5138
    %v5277 = vadd.f32 %v4733, %v5140
    %v5278 = vadd.f32 %v4734, %v5142
    %v5279 = vadd.f32 %v4735, %v5144
    %v5280 = vadd.f32 %v4736, %v5146
    %v5281 = vadd.f32 %v4737, %v5148
    %v5282 = vadd.f32 %v4738, %v5150
    %v5283 = vadd.f32 %v4739, %v5152
    %v5284 = vadd.f32 %v4740, %v5154
    %v5285 = vadd.f32 %v4741, %v5156
    %v5286 = vadd.f32 %v4742, %v5158
    %s5287 = scalar_lea.vmem [#allocation2], 144
    %v5288 = vld [vmem:[%s5287 + $0x8] sm:$0xff]
    %v5289 = vld [vmem:[%s5287 + $0x20] sm:$0xff]
    %v5290 = vld [vmem:[%s5287 + $0x50] sm:$0xff]
    %v5291 = vld [vmem:[%s5287 + $0x68] sm:$0xff]
    %v5292 = vld [vmem:[%s5287 + $0x98] sm:$0xff]
    %v5293 = vld [vmem:[%s5287 + $0xb0] sm:$0xff]
    %v5294 = vld [vmem:[%s5287 + $0xe0] sm:$0xff]
    %v5295 = vld [vmem:[%s5287 + $0xf8] sm:$0xff]
    %v5296 = vld [vmem:[%s5287 + $0x128] sm:$0xff]
    %v5297 = vld [vmem:[%s5287 + $0x140] sm:$0xff]
    %v5298 = vld [vmem:[%s5287 + $0x170] sm:$0xff]
    %v5299 = vld [vmem:[%s5287 + $0x188] sm:$0xff]
    %v5300 = vld [vmem:[%s5287 + $0x1b8] sm:$0xff]
    %v5301 = vld [vmem:[%s5287 + $0x1d0] sm:$0xff]
    %v5302 = vld [vmem:[%s5287 + $0x200] sm:$0xff]
    %v5303 = vld [vmem:[%s5287 + $0x218] sm:$0xff]
    %v5304 = vld [vmem:[%s5287 + $0x248] sm:$0xff]
    %v5305 = vld [vmem:[%s5287 + $0x260] sm:$0xff]
    %v5306 = vld [vmem:[%s5287 + $0x290] sm:$0xff]
    %v5307 = vld [vmem:[%s5287 + $0x2a8] sm:$0xff]
    %v5308 = vld [vmem:[%s5287 + $0x2d8] sm:$0xff]
    %v5309 = vld [vmem:[%s5287 + $0x2f0] sm:$0xff]
    %v5310 = vld [vmem:[%s5287 + $0x320] sm:$0xff]
    %v5311 = vld [vmem:[%s5287 + $0x338] sm:$0xff]
    %v5312 = vld [vmem:[%s5287 + $0x368] sm:$0xff]
    %v5313 = vld [vmem:[%s5287 + $0x380] sm:$0xff]
    %v5314 = vld [vmem:[%s5287 + $0x3b0] sm:$0xff]
    %v5315 = vld [vmem:[%s5287 + $0x3c8] sm:$0xff]
    %v5316 = vld [vmem:[%s5287 + $0x3f8] sm:$0xff]
    %v5317 = vld [vmem:[%s5287 + $0x410] sm:$0xff]
    %v5318 = vld [vmem:[%s5287 + $0x440] sm:$0xff]
    %v5319 = vld [vmem:[%s5287 + $0x458] sm:$0xff]
    %v5320 = vld [vmem:[%s5287 + $0x518] sm:$0xff]
    %v5321 = vld [vmem:[%s5287 + $0x530] sm:$0xff]
    %v5322 = vld [vmem:[%s5287 + $0x560] sm:$0xff]
    %v5323 = vld [vmem:[%s5287 + $0x578] sm:$0xff]
    %v5324 = vld [vmem:[%s5287 + $0x5a8] sm:$0xff]
    %v5325 = vld [vmem:[%s5287 + $0x5c0] sm:$0xff]
    %v5326 = vld [vmem:[%s5287 + $0x5f0] sm:$0xff]
    %v5327 = vld [vmem:[%s5287 + $0x608] sm:$0xff]
    %v5328 = vld [vmem:[%s5287 + $0x638] sm:$0xff]
    %v5329 = vld [vmem:[%s5287 + $0x650] sm:$0xff]
    %v5330 = vld [vmem:[%s5287 + $0x680] sm:$0xff]
    %v5331 = vld [vmem:[%s5287 + $0x698] sm:$0xff]
    %v5332 = vld [vmem:[%s5287 + $0x6c8] sm:$0xff]
    %v5333 = vld [vmem:[%s5287 + $0x6e0] sm:$0xff]
    %v5334 = vld [vmem:[%s5287 + $0x710] sm:$0xff]
    %v5335 = vld [vmem:[%s5287 + $0x728] sm:$0xff]
    %v5336 = vld [vmem:[%s5287 + $0x758] sm:$0xff]
    %v5337 = vld [vmem:[%s5287 + $0x770] sm:$0xff]
    %v5338 = vld [vmem:[%s5287 + $0x7a0] sm:$0xff]
    %v5339 = vld [vmem:[%s5287 + $0x7b8] sm:$0xff]
    %v5340 = vld [vmem:[%s5287 + $0x7e8] sm:$0xff]
    %v5341 = vld [vmem:[%s5287 + $0x800] sm:$0xff]
    %v5342 = vld [vmem:[%s5287 + $0x830] sm:$0xff]
    %v5343 = vld [vmem:[%s5287 + $0x848] sm:$0xff]
    %v5344 = vld [vmem:[%s5287 + $0x878] sm:$0xff]
    %v5345 = vld [vmem:[%s5287 + $0x890] sm:$0xff]
    %v5346 = vld [vmem:[%s5287 + $0x8c0] sm:$0xff]
    %v5347 = vld [vmem:[%s5287 + $0x8d8] sm:$0xff]
    %v5348 = vld [vmem:[%s5287 + $0x908] sm:$0xff]
    %v5349 = vld [vmem:[%s5287 + $0x920] sm:$0xff]
    %v5350 = vld [vmem:[%s5287 + $0x950] sm:$0xff]
    %v5351 = vld [vmem:[%s5287 + $0x968] sm:$0xff]
    %5416 = vrot.lane.b32.xlu0 %v5288, 64
    %v5417 = vpop.permute.xlu0 %5416
    %5418 = vrot.lane.b32.xlu0 %v5289, 64
    %v5419 = vpop.permute.xlu0 %5418
    %5420 = vrot.lane.b32.xlu0 %v5290, 64
    %v5421 = vpop.permute.xlu0 %5420
    %5422 = vrot.lane.b32.xlu0 %v5291, 64
    %v5423 = vpop.permute.xlu0 %5422
    %5424 = vrot.lane.b32.xlu0 %v5292, 64
    %v5425 = vpop.permute.xlu0 %5424
    %5426 = vrot.lane.b32.xlu0 %v5293, 64
    %v5427 = vpop.permute.xlu0 %5426
    %5428 = vrot.lane.b32.xlu0 %v5294, 64
    %v5429 = vpop.permute.xlu0 %5428
    %5430 = vrot.lane.b32.xlu0 %v5295, 64
    %v5431 = vpop.permute.xlu0 %5430
    %5432 = vrot.lane.b32.xlu0 %v5296, 64
    %v5433 = vpop.permute.xlu0 %5432
    %5434 = vrot.lane.b32.xlu0 %v5297, 64
    %v5435 = vpop.permute.xlu0 %5434
    %5436 = vrot.lane.b32.xlu0 %v5298, 64
    %v5437 = vpop.permute.xlu0 %5436
    %5438 = vrot.lane.b32.xlu0 %v5299, 64
    %v5439 = vpop.permute.xlu0 %5438
    %5440 = vrot.lane.b32.xlu0 %v5300, 64
    %v5441 = vpop.permute.xlu0 %5440
    %5442 = vrot.lane.b32.xlu0 %v5301, 64
    %v5443 = vpop.permute.xlu0 %5442
    %5444 = vrot.lane.b32.xlu0 %v5302, 64
    %v5445 = vpop.permute.xlu0 %5444
    %5446 = vrot.lane.b32.xlu0 %v5303, 64
    %v5447 = vpop.permute.xlu0 %5446
    %5448 = vrot.lane.b32.xlu0 %v5304, 64
    %v5449 = vpop.permute.xlu0 %5448
    %5450 = vrot.lane.b32.xlu0 %v5305, 64
    %v5451 = vpop.permute.xlu0 %5450
    %5452 = vrot.lane.b32.xlu0 %v5306, 64
    %v5453 = vpop.permute.xlu0 %5452
    %5454 = vrot.lane.b32.xlu0 %v5307, 64
    %v5455 = vpop.permute.xlu0 %5454
    %5456 = vrot.lane.b32.xlu0 %v5308, 64
    %v5457 = vpop.permute.xlu0 %5456
    %5458 = vrot.lane.b32.xlu0 %v5309, 64
    %v5459 = vpop.permute.xlu0 %5458
    %5460 = vrot.lane.b32.xlu0 %v5310, 64
    %v5461 = vpop.permute.xlu0 %5460
    %5462 = vrot.lane.b32.xlu0 %v5311, 64
    %v5463 = vpop.permute.xlu0 %5462
    %5464 = vrot.lane.b32.xlu0 %v5312, 64
    %v5465 = vpop.permute.xlu0 %5464
    %5466 = vrot.lane.b32.xlu0 %v5313, 64
    %v5467 = vpop.permute.xlu0 %5466
    %5468 = vrot.lane.b32.xlu0 %v5314, 64
    %v5469 = vpop.permute.xlu0 %5468
    %5470 = vrot.lane.b32.xlu0 %v5315, 64
    %v5471 = vpop.permute.xlu0 %5470
    %5472 = vrot.lane.b32.xlu0 %v5316, 64
    %v5473 = vpop.permute.xlu0 %5472
    %5474 = vrot.lane.b32.xlu0 %v5317, 64
    %v5475 = vpop.permute.xlu0 %5474
    %5476 = vrot.lane.b32.xlu0 %v5318, 64
    %v5477 = vpop.permute.xlu0 %5476
    %5478 = vrot.lane.b32.xlu0 %v5319, 64
    %v5479 = vpop.permute.xlu0 %5478
    %5480 = vrot.lane.b32.xlu0 %v5320, 64
    %v5481 = vpop.permute.xlu0 %5480
    %5482 = vrot.lane.b32.xlu0 %v5321, 64
    %v5483 = vpop.permute.xlu0 %5482
    %5484 = vrot.lane.b32.xlu0 %v5322, 64
    %v5485 = vpop.permute.xlu0 %5484
    %5486 = vrot.lane.b32.xlu0 %v5323, 64
    %v5487 = vpop.permute.xlu0 %5486
    %5488 = vrot.lane.b32.xlu0 %v5324, 64
    %v5489 = vpop.permute.xlu0 %5488
    %5490 = vrot.lane.b32.xlu0 %v5325, 64
    %v5491 = vpop.permute.xlu0 %5490
    %5492 = vrot.lane.b32.xlu0 %v5326, 64
    %v5493 = vpop.permute.xlu0 %5492
    %5494 = vrot.lane.b32.xlu0 %v5327, 64
    %v5495 = vpop.permute.xlu0 %5494
    %5496 = vrot.lane.b32.xlu0 %v5328, 64
    %v5497 = vpop.permute.xlu0 %5496
    %5498 = vrot.lane.b32.xlu0 %v5329, 64
    %v5499 = vpop.permute.xlu0 %5498
    %5500 = vrot.lane.b32.xlu0 %v5330, 64
    %v5501 = vpop.permute.xlu0 %5500
    %5502 = vrot.lane.b32.xlu0 %v5331, 64
    %v5503 = vpop.permute.xlu0 %5502
    %5504 = vrot.lane.b32.xlu0 %v5332, 64
    %v5505 = vpop.permute.xlu0 %5504
    %5506 = vrot.lane.b32.xlu0 %v5333, 64
    %v5507 = vpop.permute.xlu0 %5506
    %5508 = vrot.lane.b32.xlu0 %v5334, 64
    %v5509 = vpop.permute.xlu0 %5508
    %5510 = vrot.lane.b32.xlu0 %v5335, 64
    %v5511 = vpop.permute.xlu0 %5510
    %5512 = vrot.lane.b32.xlu0 %v5336, 64
    %v5513 = vpop.permute.xlu0 %5512
    %5514 = vrot.lane.b32.xlu0 %v5337, 64
    %v5515 = vpop.permute.xlu0 %5514
    %5516 = vrot.lane.b32.xlu0 %v5338, 64
    %v5517 = vpop.permute.xlu0 %5516
    %5518 = vrot.lane.b32.xlu0 %v5339, 64
    %v5519 = vpop.permute.xlu0 %5518
    %5520 = vrot.lane.b32.xlu0 %v5340, 64
    %v5521 = vpop.permute.xlu0 %5520
    %5522 = vrot.lane.b32.xlu0 %v5341, 64
    %v5523 = vpop.permute.xlu0 %5522
    %5524 = vrot.lane.b32.xlu0 %v5342, 64
    %v5525 = vpop.permute.xlu0 %5524
    %5526 = vrot.lane.b32.xlu0 %v5343, 64
    %v5527 = vpop.permute.xlu0 %5526
    %5528 = vrot.lane.b32.xlu0 %v5344, 64
    %v5529 = vpop.permute.xlu0 %5528
    %5530 = vrot.lane.b32.xlu0 %v5345, 64
    %v5531 = vpop.permute.xlu0 %5530
    %5532 = vrot.lane.b32.xlu0 %v5346, 64
    %v5533 = vpop.permute.xlu0 %5532
    %5534 = vrot.lane.b32.xlu0 %v5347, 64
    %v5535 = vpop.permute.xlu0 %5534
    %5536 = vrot.lane.b32.xlu0 %v5348, 64
    %v5537 = vpop.permute.xlu0 %5536
    %5538 = vrot.lane.b32.xlu0 %v5349, 64
    %v5539 = vpop.permute.xlu0 %5538
    %5540 = vrot.lane.b32.xlu0 %v5350, 64
    %v5541 = vpop.permute.xlu0 %5540
    %5542 = vrot.lane.b32.xlu0 %v5351, 64
    %v5543 = vpop.permute.xlu0 %5542
    %v5608 = vadd.f32 %v5223, %v5417
    %v5609 = vadd.f32 %v5224, %v5419
    %v5610 = vadd.f32 %v5225, %v5421
    %v5611 = vadd.f32 %v5226, %v5423
    %v5612 = vadd.f32 %v5227, %v5425
    %v5613 = vadd.f32 %v5228, %v5427
    %v5614 = vadd.f32 %v5229, %v5429
    %v5615 = vadd.f32 %v5230, %v5431
    %v5616 = vadd.f32 %v5231, %v5433
    %v5617 = vadd.f32 %v5232, %v5435
    %v5618 = vadd.f32 %v5233, %v5437
    %v5619 = vadd.f32 %v5234, %v5439
    %v5620 = vadd.f32 %v5235, %v5441
    %v5621 = vadd.f32 %v5236, %v5443
    %v5622 = vadd.f32 %v5237, %v5445
    %v5623 = vadd.f32 %v5238, %v5447
    %v5624 = vadd.f32 %v5239, %v5449
    %v5625 = vadd.f32 %v5240, %v5451
    %v5626 = vadd.f32 %v5241, %v5453
    %v5627 = vadd.f32 %v5242, %v5455
    %v5628 = vadd.f32 %v5243, %v5457
    %v5629 = vadd.f32 %v5244, %v5459
    %v5630 = vadd.f32 %v5245, %v5461
    %v5631 = vadd.f32 %v5246, %v5463
    %v5632 = vadd.f32 %v5247, %v5465
    %v5633 = vadd.f32 %v5248, %v5467
    %v5634 = vadd.f32 %v5249, %v5469
    %v5635 = vadd.f32 %v5250, %v5471
    %v5636 = vadd.f32 %v5251, %v5473
    %v5637 = vadd.f32 %v5252, %v5475
    %v5638 = vadd.f32 %v5253, %v5477
    %v5639 = vadd.f32 %v5254, %v5479
    %v5640 = vadd.f32 %v5255, %v5481
    %v5641 = vadd.f32 %v5256, %v5483
    %v5642 = vadd.f32 %v5257, %v5485
    %v5643 = vadd.f32 %v5258, %v5487
    %v5644 = vadd.f32 %v5259, %v5489
    %v5645 = vadd.f32 %v5260, %v5491
    %v5646 = vadd.f32 %v5261, %v5493
    %v5647 = vadd.f32 %v5262, %v5495
    %v5648 = vadd.f32 %v5263, %v5497
    %v5649 = vadd.f32 %v5264, %v5499
    %v5650 = vadd.f32 %v5265, %v5501
    %v5651 = vadd.f32 %v5266, %v5503
    %v5652 = vadd.f32 %v5267, %v5505
    %v5653 = vadd.f32 %v5268, %v5507
    %v5654 = vadd.f32 %v5269, %v5509
    %v5655 = vadd.f32 %v5270, %v5511
    %v5656 = vadd.f32 %v5271, %v5513
    %v5657 = vadd.f32 %v5272, %v5515
    %v5658 = vadd.f32 %v5273, %v5517
    %v5659 = vadd.f32 %v5274, %v5519
    %v5660 = vadd.f32 %v5275, %v5521
    %v5661 = vadd.f32 %v5276, %v5523
    %v5662 = vadd.f32 %v5277, %v5525
    %v5663 = vadd.f32 %v5278, %v5527
    %v5664 = vadd.f32 %v5279, %v5529
    %v5665 = vadd.f32 %v5280, %v5531
    %v5666 = vadd.f32 %v5281, %v5533
    %v5667 = vadd.f32 %v5282, %v5535
    %v5668 = vadd.f32 %v5283, %v5537
    %v5669 = vadd.f32 %v5284, %v5539
    %v5670 = vadd.f32 %v5285, %v5541
    %v5671 = vadd.f32 %v5286, %v5543
    %v5672 = vld [vmem:[%s5287 + $0x8] sm:$0xfe]
    %v5673 = vld [vmem:[%s5287 + $0x38] sm:$0x1]
    %v5674 = vld [vmem:[%s5287 + $0x50] sm:$0xfe]
    %v5675 = vld [vmem:[%s5287 + $0x80] sm:$0x1]
    %v5676 = vld [vmem:[%s5287 + $0x98] sm:$0xfe]
    %v5677 = vld [vmem:[%s5287 + $0xc8] sm:$0x1]
    %v5678 = vld [vmem:[%s5287 + $0xe0] sm:$0xfe]
    %v5679 = vld [vmem:[%s5287 + $0x110] sm:$0x1]
    %v5680 = vld [vmem:[%s5287 + $0x128] sm:$0xfe]
    %v5681 = vld [vmem:[%s5287 + $0x158] sm:$0x1]
    %v5682 = vld [vmem:[%s5287 + $0x170] sm:$0xfe]
    %v5683 = vld [vmem:[%s5287 + $0x1a0] sm:$0x1]
    %v5684 = vld [vmem:[%s5287 + $0x1b8] sm:$0xfe]
    %v5685 = vld [vmem:[%s5287 + $0x1e8] sm:$0x1]
    %v5686 = vld [vmem:[%s5287 + $0x200] sm:$0xfe]
    %v5687 = vld [vmem:[%s5287 + $0x230] sm:$0x1]
    %v5688 = vld [vmem:[%s5287 + $0x248] sm:$0xfe]
    %v5689 = vld [vmem:[%s5287 + $0x278] sm:$0x1]
    %v5690 = vld [vmem:[%s5287 + $0x290] sm:$0xfe]
    %v5691 = vld [vmem:[%s5287 + $0x2c0] sm:$0x1]
    %v5692 = vld [vmem:[%s5287 + $0x2d8] sm:$0xfe]
    %v5693 = vld [vmem:[%s5287 + $0x308] sm:$0x1]
    %v5694 = vld [vmem:[%s5287 + $0x320] sm:$0xfe]
    %v5695 = vld [vmem:[%s5287 + $0x350] sm:$0x1]
    %v5696 = vld [vmem:[%s5287 + $0x368] sm:$0xfe]
    %v5697 = vld [vmem:[%s5287 + $0x398] sm:$0x1]
    %v5698 = vld [vmem:[%s5287 + $0x3b0] sm:$0xfe]
    %v5699 = vld [vmem:[%s5287 + $0x3e0] sm:$0x1]
    %v5700 = vld [vmem:[%s5287 + $0x3f8] sm:$0xfe]
    %v5701 = vld [vmem:[%s5287 + $0x428] sm:$0x1]
    %v5702 = vld [vmem:[%s5287 + $0x440] sm:$0xfe]
    %v5703 = vld [vmem:[%s5287 + $0x470] sm:$0x1]
    %v5704 = vld [vmem:[%s5287 + $0x518] sm:$0xfe]
    %v5705 = vld [vmem:[%s5287 + $0x548] sm:$0x1]
    %v5706 = vld [vmem:[%s5287 + $0x560] sm:$0xfe]
    %v5707 = vld [vmem:[%s5287 + $0x590] sm:$0x1]
    %v5708 = vld [vmem:[%s5287 + $0x5a8] sm:$0xfe]
    %v5709 = vld [vmem:[%s5287 + $0x5d8] sm:$0x1]
    %v5710 = vld [vmem:[%s5287 + $0x5f0] sm:$0xfe]
    %v5711 = vld [vmem:[%s5287 + $0x620] sm:$0x1]
    %v5712 = vld [vmem:[%s5287 + $0x638] sm:$0xfe]
    %v5713 = vld [vmem:[%s5287 + $0x668] sm:$0x1]
    %v5714 = vld [vmem:[%s5287 + $0x680] sm:$0xfe]
    %v5715 = vld [vmem:[%s5287 + $0x6b0] sm:$0x1]
    %v5716 = vld [vmem:[%s5287 + $0x6c8] sm:$0xfe]
    %v5717 = vld [vmem:[%s5287 + $0x6f8] sm:$0x1]
    %v5718 = vld [vmem:[%s5287 + $0x710] sm:$0xfe]
    %v5719 = vld [vmem:[%s5287 + $0x740] sm:$0x1]
    %v5720 = vld [vmem:[%s5287 + $0x758] sm:$0xfe]
    %v5721 = vld [vmem:[%s5287 + $0x788] sm:$0x1]
    %v5722 = vld [vmem:[%s5287 + $0x7a0] sm:$0xfe]
    %v5723 = vld [vmem:[%s5287 + $0x7d0] sm:$0x1]
    %v5724 = vld [vmem:[%s5287 + $0x7e8] sm:$0xfe]
    %v5725 = vld [vmem:[%s5287 + $0x818] sm:$0x1]
    %v5726 = vld [vmem:[%s5287 + $0x830] sm:$0xfe]
    %v5727 = vld [vmem:[%s5287 + $0x860] sm:$0x1]
    %v5728 = vld [vmem:[%s5287 + $0x878] sm:$0xfe]
    %v5729 = vld [vmem:[%s5287 + $0x8a8] sm:$0x1]
    %v5730 = vld [vmem:[%s5287 + $0x8c0] sm:$0xfe]
    %v5731 = vld [vmem:[%s5287 + $0x8f0] sm:$0x1]
    %v5732 = vld [vmem:[%s5287 + $0x908] sm:$0xfe]
    %v5733 = vld [vmem:[%s5287 + $0x938] sm:$0x1]
    %v5734 = vld [vmem:[%s5287 + $0x950] sm:$0xfe]
    %v5735 = vld [vmem:[%s5287 + $0x980] sm:$0x1]
    %v5800 = vrot.slane %v5672, 1
    %v5801 = vrot.slane %v5289, 1
    %v5802 = vsel %vm2917, %v5800, %v5801
    %v5803 = vrot.slane %v5673, 1
    %v5804 = vsel %vm2917, %v5801, %v5803
    %v5805 = vrot.slane %v5674, 1
    %v5806 = vrot.slane %v5291, 1
    %v5807 = vsel %vm2917, %v5805, %v5806
    %v5808 = vrot.slane %v5675, 1
    %v5809 = vsel %vm2917, %v5806, %v5808
    %v5810 = vrot.slane %v5676, 1
    %v5811 = vrot.slane %v5293, 1
    %v5812 = vsel %vm2917, %v5810, %v5811
    %v5813 = vrot.slane %v5677, 1
    %v5814 = vsel %vm2917, %v5811, %v5813
    %v5815 = vrot.slane %v5678, 1
    %v5816 = vrot.slane %v5295, 1
    %v5817 = vsel %vm2917, %v5815, %v5816
    %v5818 = vrot.slane %v5679, 1
    %v5819 = vsel %vm2917, %v5816, %v5818
    %v5820 = vrot.slane %v5680, 1
    %v5821 = vrot.slane %v5297, 1
    %v5822 = vsel %vm2917, %v5820, %v5821
    %v5823 = vrot.slane %v5681, 1
    %v5824 = vsel %vm2917, %v5821, %v5823
    %v5825 = vrot.slane %v5682, 1
    %v5826 = vrot.slane %v5299, 1
    %v5827 = vsel %vm2917, %v5825, %v5826
    %v5828 = vrot.slane %v5683, 1
    %v5829 = vsel %vm2917, %v5826, %v5828
    %v5830 = vrot.slane %v5684, 1
    %v5831 = vrot.slane %v5301, 1
    %v5832 = vsel %vm2917, %v5830, %v5831
    %v5833 = vrot.slane %v5685, 1
    %v5834 = vsel %vm2917, %v5831, %v5833
    %v5835 = vrot.slane %v5686, 1
    %v5836 = vrot.slane %v5303, 1
    %v5837 = vsel %vm2917, %v5835, %v5836
    %v5838 = vrot.slane %v5687, 1
    %v5839 = vsel %vm2917, %v5836, %v5838
    %v5840 = vrot.slane %v5688, 1
    %v5841 = vrot.slane %v5305, 1
    %v5842 = vsel %vm2917, %v5840, %v5841
    %v5843 = vrot.slane %v5689, 1
    %v5844 = vsel %vm2917, %v5841, %v5843
    %v5845 = vrot.slane %v5690, 1
    %v5846 = vrot.slane %v5307, 1
    %v5847 = vsel %vm2917, %v5845, %v5846
    %v5848 = vrot.slane %v5691, 1
    %v5849 = vsel %vm2917, %v5846, %v5848
    %v5850 = vrot.slane %v5692, 1
    %v5851 = vrot.slane %v5309, 1
    %v5852 = vsel %vm2917, %v5850, %v5851
    %v5853 = vrot.slane %v5693, 1
    %v5854 = vsel %vm2917, %v5851, %v5853
    %v5855 = vrot.slane %v5694, 1
    %v5856 = vrot.slane %v5311, 1
    %v5857 = vsel %vm2917, %v5855, %v5856
    %v5858 = vrot.slane %v5695, 1
    %v5859 = vsel %vm2917, %v5856, %v5858
    %v5860 = vrot.slane %v5696, 1
    %v5861 = vrot.slane %v5313, 1
    %v5862 = vsel %vm2917, %v5860, %v5861
    %v5863 = vrot.slane %v5697, 1
    %v5864 = vsel %vm2917, %v5861, %v5863
    %v5865 = vrot.slane %v5698, 1
    %v5866 = vrot.slane %v5315, 1
    %v5867 = vsel %vm2917, %v5865, %v5866
    %v5868 = vrot.slane %v5699, 1
    %v5869 = vsel %vm2917, %v5866, %v5868
    %v5870 = vrot.slane %v5700, 1
    %v5871 = vrot.slane %v5317, 1
    %v5872 = vsel %vm2917, %v5870, %v5871
    %v5873 = vrot.slane %v5701, 1
    %v5874 = vsel %vm2917, %v5871, %v5873
    %v5875 = vrot.slane %v5702, 1
    %v5876 = vrot.slane %v5319, 1
    %v5877 = vsel %vm2917, %v5875, %v5876
    %v5878 = vrot.slane %v5703, 1
    %v5879 = vsel %vm2917, %v5876, %v5878
    %v5880 = vrot.slane %v5704, 1
    %v5881 = vrot.slane %v5321, 1
    %v5882 = vsel %vm2917, %v5880, %v5881
    %v5883 = vrot.slane %v5705, 1
    %v5884 = vsel %vm2917, %v5881, %v5883
    %v5885 = vrot.slane %v5706, 1
    %v5886 = vrot.slane %v5323, 1
    %v5887 = vsel %vm2917, %v5885, %v5886
    %v5888 = vrot.slane %v5707, 1
    %v5889 = vsel %vm2917, %v5886, %v5888
    %v5890 = vrot.slane %v5708, 1
    %v5891 = vrot.slane %v5325, 1
    %v5892 = vsel %vm2917, %v5890, %v5891
    %v5893 = vrot.slane %v5709, 1
    %v5894 = vsel %vm2917, %v5891, %v5893
    %v5895 = vrot.slane %v5710, 1
    %v5896 = vrot.slane %v5327, 1
    %v5897 = vsel %vm2917, %v5895, %v5896
    %v5898 = vrot.slane %v5711, 1
    %v5899 = vsel %vm2917, %v5896, %v5898
    %v5900 = vrot.slane %v5712, 1
    %v5901 = vrot.slane %v5329, 1
    %v5902 = vsel %vm2917, %v5900, %v5901
    %v5903 = vrot.slane %v5713, 1
    %v5904 = vsel %vm2917, %v5901, %v5903
    %v5905 = vrot.slane %v5714, 1
    %v5906 = vrot.slane %v5331, 1
    %v5907 = vsel %vm2917, %v5905, %v5906
    %v5908 = vrot.slane %v5715, 1
    %v5909 = vsel %vm2917, %v5906, %v5908
    %v5910 = vrot.slane %v5716, 1
    %v5911 = vrot.slane %v5333, 1
    %v5912 = vsel %vm2917, %v5910, %v5911
    %v5913 = vrot.slane %v5717, 1
    %v5914 = vsel %vm2917, %v5911, %v5913
    %v5915 = vrot.slane %v5718, 1
    %v5916 = vrot.slane %v5335, 1
    %v5917 = vsel %vm2917, %v5915, %v5916
    %v5918 = vrot.slane %v5719, 1
    %v5919 = vsel %vm2917, %v5916, %v5918
    %v5920 = vrot.slane %v5720, 1
    %v5921 = vrot.slane %v5337, 1
    %v5922 = vsel %vm2917, %v5920, %v5921
    %v5923 = vrot.slane %v5721, 1
    %v5924 = vsel %vm2917, %v5921, %v5923
    %v5925 = vrot.slane %v5722, 1
    %v5926 = vrot.slane %v5339, 1
    %v5927 = vsel %vm2917, %v5925, %v5926
    %v5928 = vrot.slane %v5723, 1
    %v5929 = vsel %vm2917, %v5926, %v5928
    %v5930 = vrot.slane %v5724, 1
    %v5931 = vrot.slane %v5341, 1
    %v5932 = vsel %vm2917, %v5930, %v5931
    %v5933 = vrot.slane %v5725, 1
    %v5934 = vsel %vm2917, %v5931, %v5933
    %v5935 = vrot.slane %v5726, 1
    %v5936 = vrot.slane %v5343, 1
    %v5937 = vsel %vm2917, %v5935, %v5936
    %v5938 = vrot.slane %v5727, 1
    %v5939 = vsel %vm2917, %v5936, %v5938
    %v5940 = vrot.slane %v5728, 1
    %v5941 = vrot.slane %v5345, 1
    %v5942 = vsel %vm2917, %v5940, %v5941
    %v5943 = vrot.slane %v5729, 1
    %v5944 = vsel %vm2917, %v5941, %v5943
    %v5945 = vrot.slane %v5730, 1
    %v5946 = vrot.slane %v5347, 1
    %v5947 = vsel %vm2917, %v5945, %v5946
    %v5948 = vrot.slane %v5731, 1
    %v5949 = vsel %vm2917, %v5946, %v5948
    %v5950 = vrot.slane %v5732, 1
    %v5951 = vrot.slane %v5349, 1
    %v5952 = vsel %vm2917, %v5950, %v5951
    %v5953 = vrot.slane %v5733, 1
    %v5954 = vsel %vm2917, %v5951, %v5953
    %v5955 = vrot.slane %v5734, 1
    %v5956 = vrot.slane %v5351, 1
    %v5957 = vsel %vm2917, %v5955, %v5956
    %v5958 = vrot.slane %v5735, 1
    %v5959 = vsel %vm2917, %v5956, %v5958
    %5960 = vrot.lane.b32.xlu0 %v5802, 32
    %v5961 = vpop.permute.xlu0 %5960
    %5962 = vrot.lane.b32.xlu0 %v5804, 32
    %v5963 = vpop.permute.xlu0 %5962
    %5964 = vrot.lane.b32.xlu0 %v5807, 32
    %v5965 = vpop.permute.xlu0 %5964
    %5966 = vrot.lane.b32.xlu0 %v5809, 32
    %v5967 = vpop.permute.xlu0 %5966
    %5968 = vrot.lane.b32.xlu0 %v5812, 32
    %v5969 = vpop.permute.xlu0 %5968
    %5970 = vrot.lane.b32.xlu0 %v5814, 32
    %v5971 = vpop.permute.xlu0 %5970
    %5972 = vrot.lane.b32.xlu0 %v5817, 32
    %v5973 = vpop.permute.xlu0 %5972
    %5974 = vrot.lane.b32.xlu0 %v5819, 32
    %v5975 = vpop.permute.xlu0 %5974
    %5976 = vrot.lane.b32.xlu0 %v5822, 32
    %v5977 = vpop.permute.xlu0 %5976
    %5978 = vrot.lane.b32.xlu0 %v5824, 32
    %v5979 = vpop.permute.xlu0 %5978
    %5980 = vrot.lane.b32.xlu0 %v5827, 32
    %v5981 = vpop.permute.xlu0 %5980
    %5982 = vrot.lane.b32.xlu0 %v5829, 32
    %v5983 = vpop.permute.xlu0 %5982
    %5984 = vrot.lane.b32.xlu0 %v5832, 32
    %v5985 = vpop.permute.xlu0 %5984
    %5986 = vrot.lane.b32.xlu0 %v5834, 32
    %v5987 = vpop.permute.xlu0 %5986
    %5988 = vrot.lane.b32.xlu0 %v5837, 32
    %v5989 = vpop.permute.xlu0 %5988
    %5990 = vrot.lane.b32.xlu0 %v5839, 32
    %v5991 = vpop.permute.xlu0 %5990
    %5992 = vrot.lane.b32.xlu0 %v5842, 32
    %v5993 = vpop.permute.xlu0 %5992
    %5994 = vrot.lane.b32.xlu0 %v5844, 32
    %v5995 = vpop.permute.xlu0 %5994
    %5996 = vrot.lane.b32.xlu0 %v5847, 32
    %v5997 = vpop.permute.xlu0 %5996
    %5998 = vrot.lane.b32.xlu0 %v5849, 32
    %v5999 = vpop.permute.xlu0 %5998
    %6000 = vrot.lane.b32.xlu0 %v5852, 32
    %v6001 = vpop.permute.xlu0 %6000
    %6002 = vrot.lane.b32.xlu0 %v5854, 32
    %v6003 = vpop.permute.xlu0 %6002
    %6004 = vrot.lane.b32.xlu0 %v5857, 32
    %v6005 = vpop.permute.xlu0 %6004
    %6006 = vrot.lane.b32.xlu0 %v5859, 32
    %v6007 = vpop.permute.xlu0 %6006
    %6008 = vrot.lane.b32.xlu0 %v5862, 32
    %v6009 = vpop.permute.xlu0 %6008
    %6010 = vrot.lane.b32.xlu0 %v5864, 32
    %v6011 = vpop.permute.xlu0 %6010
    %6012 = vrot.lane.b32.xlu0 %v5867, 32
    %v6013 = vpop.permute.xlu0 %6012
    %6014 = vrot.lane.b32.xlu0 %v5869, 32
    %v6015 = vpop.permute.xlu0 %6014
    %6016 = vrot.lane.b32.xlu0 %v5872, 32
    %v6017 = vpop.permute.xlu0 %6016
    %6018 = vrot.lane.b32.xlu0 %v5874, 32
    %v6019 = vpop.permute.xlu0 %6018
    %6020 = vrot.lane.b32.xlu0 %v5877, 32
    %v6021 = vpop.permute.xlu0 %6020
    %6022 = vrot.lane.b32.xlu0 %v5879, 32
    %v6023 = vpop.permute.xlu0 %6022
    %6024 = vrot.lane.b32.xlu0 %v5882, 32
    %v6025 = vpop.permute.xlu0 %6024
    %6026 = vrot.lane.b32.xlu0 %v5884, 32
    %v6027 = vpop.permute.xlu0 %6026
    %6028 = vrot.lane.b32.xlu0 %v5887, 32
    %v6029 = vpop.permute.xlu0 %6028
    %6030 = vrot.lane.b32.xlu0 %v5889, 32
    %v6031 = vpop.permute.xlu0 %6030
    %6032 = vrot.lane.b32.xlu0 %v5892, 32
    %v6033 = vpop.permute.xlu0 %6032
    %6034 = vrot.lane.b32.xlu0 %v5894, 32
    %v6035 = vpop.permute.xlu0 %6034
    %6036 = vrot.lane.b32.xlu0 %v5897, 32
    %v6037 = vpop.permute.xlu0 %6036
    %6038 = vrot.lane.b32.xlu0 %v5899, 32
    %v6039 = vpop.permute.xlu0 %6038
    %6040 = vrot.lane.b32.xlu0 %v5902, 32
    %v6041 = vpop.permute.xlu0 %6040
    %6042 = vrot.lane.b32.xlu0 %v5904, 32
    %v6043 = vpop.permute.xlu0 %6042
    %6044 = vrot.lane.b32.xlu0 %v5907, 32
    %v6045 = vpop.permute.xlu0 %6044
    %6046 = vrot.lane.b32.xlu0 %v5909, 32
    %v6047 = vpop.permute.xlu0 %6046
    %6048 = vrot.lane.b32.xlu0 %v5912, 32
    %v6049 = vpop.permute.xlu0 %6048
    %6050 = vrot.lane.b32.xlu0 %v5914, 32
    %v6051 = vpop.permute.xlu0 %6050
    %6052 = vrot.lane.b32.xlu0 %v5917, 32
    %v6053 = vpop.permute.xlu0 %6052
    %6054 = vrot.lane.b32.xlu0 %v5919, 32
    %v6055 = vpop.permute.xlu0 %6054
    %6056 = vrot.lane.b32.xlu0 %v5922, 32
    %v6057 = vpop.permute.xlu0 %6056
    %6058 = vrot.lane.b32.xlu0 %v5924, 32
    %v6059 = vpop.permute.xlu0 %6058
    %6060 = vrot.lane.b32.xlu0 %v5927, 32
    %v6061 = vpop.permute.xlu0 %6060
    %6062 = vrot.lane.b32.xlu0 %v5929, 32
    %v6063 = vpop.permute.xlu0 %6062
    %6064 = vrot.lane.b32.xlu0 %v5932, 32
    %v6065 = vpop.permute.xlu0 %6064
    %6066 = vrot.lane.b32.xlu0 %v5934, 32
    %v6067 = vpop.permute.xlu0 %6066
    %6068 = vrot.lane.b32.xlu0 %v5937, 32
    %v6069 = vpop.permute.xlu0 %6068
    %6070 = vrot.lane.b32.xlu0 %v5939, 32
    %v6071 = vpop.permute.xlu0 %6070
    %6072 = vrot.lane.b32.xlu0 %v5942, 32
    %v6073 = vpop.permute.xlu0 %6072
    %6074 = vrot.lane.b32.xlu0 %v5944, 32
    %v6075 = vpop.permute.xlu0 %6074
    %6076 = vrot.lane.b32.xlu0 %v5947, 32
    %v6077 = vpop.permute.xlu0 %6076
    %6078 = vrot.lane.b32.xlu0 %v5949, 32
    %v6079 = vpop.permute.xlu0 %6078
    %6080 = vrot.lane.b32.xlu0 %v5952, 32
    %v6081 = vpop.permute.xlu0 %6080
    %6082 = vrot.lane.b32.xlu0 %v5954, 32
    %v6083 = vpop.permute.xlu0 %6082
    %6084 = vrot.lane.b32.xlu0 %v5957, 32
    %v6085 = vpop.permute.xlu0 %6084
    %6086 = vrot.lane.b32.xlu0 %v5959, 32
    %v6087 = vpop.permute.xlu0 %6086
    %v6152 = vadd.f32 %v5608, %v5961
    %v6153 = vadd.f32 %v5609, %v5963
    %v6154 = vadd.f32 %v5610, %v5965
    %v6155 = vadd.f32 %v5611, %v5967
    %v6156 = vadd.f32 %v5612, %v5969
    %v6157 = vadd.f32 %v5613, %v5971
    %v6158 = vadd.f32 %v5614, %v5973
    %v6159 = vadd.f32 %v5615, %v5975
    %v6160 = vadd.f32 %v5616, %v5977
    %v6161 = vadd.f32 %v5617, %v5979
    %v6162 = vadd.f32 %v5618, %v5981
    %v6163 = vadd.f32 %v5619, %v5983
    %v6164 = vadd.f32 %v5620, %v5985
    %v6165 = vadd.f32 %v5621, %v5987
    %v6166 = vadd.f32 %v5622, %v5989
    %v6167 = vadd.f32 %v5623, %v5991
    %v6168 = vadd.f32 %v5624, %v5993
    %v6169 = vadd.f32 %v5625, %v5995
    %v6170 = vadd.f32 %v5626, %v5997
    %v6171 = vadd.f32 %v5627, %v5999
    %v6172 = vadd.f32 %v5628, %v6001
    %v6173 = vadd.f32 %v5629, %v6003
    %v6174 = vadd.f32 %v5630, %v6005
    %v6175 = vadd.f32 %v5631, %v6007
    %v6176 = vadd.f32 %v5632, %v6009
    %v6177 = vadd.f32 %v5633, %v6011
    %v6178 = vadd.f32 %v5634, %v6013
    %v6179 = vadd.f32 %v5635, %v6015
    %v6180 = vadd.f32 %v5636, %v6017
    %v6181 = vadd.f32 %v5637, %v6019
    %v6182 = vadd.f32 %v5638, %v6021
    %v6183 = vadd.f32 %v5639, %v6023
    %v6184 = vadd.f32 %v5640, %v6025
    %v6185 = vadd.f32 %v5641, %v6027
    %v6186 = vadd.f32 %v5642, %v6029
    %v6187 = vadd.f32 %v5643, %v6031
    %v6188 = vadd.f32 %v5644, %v6033
    %v6189 = vadd.f32 %v5645, %v6035
    %v6190 = vadd.f32 %v5646, %v6037
    %v6191 = vadd.f32 %v5647, %v6039
    %v6192 = vadd.f32 %v5648, %v6041
    %v6193 = vadd.f32 %v5649, %v6043
    %v6194 = vadd.f32 %v5650, %v6045
    %v6195 = vadd.f32 %v5651, %v6047
    %v6196 = vadd.f32 %v5652, %v6049
    %v6197 = vadd.f32 %v5653, %v6051
    %v6198 = vadd.f32 %v5654, %v6053
    %v6199 = vadd.f32 %v5655, %v6055
    %v6200 = vadd.f32 %v5656, %v6057
    %v6201 = vadd.f32 %v5657, %v6059
    %v6202 = vadd.f32 %v5658, %v6061
    %v6203 = vadd.f32 %v5659, %v6063
    %v6204 = vadd.f32 %v5660, %v6065
    %v6205 = vadd.f32 %v5661, %v6067
    %v6206 = vadd.f32 %v5662, %v6069
    %v6207 = vadd.f32 %v5663, %v6071
    %v6208 = vadd.f32 %v5664, %v6073
    %v6209 = vadd.f32 %v5665, %v6075
    %v6210 = vadd.f32 %v5666, %v6077
    %v6211 = vadd.f32 %v5667, %v6079
    %v6212 = vadd.f32 %v5668, %v6081
    %v6213 = vadd.f32 %v5669, %v6083
    %v6214 = vadd.f32 %v5670, %v6085
    %v6215 = vadd.f32 %v5671, %v6087
    %v6216 = vld [vmem:[%s5287 + $0x10] sm:$0xfc]
    %v6217 = vld [vmem:[%s5287 + $0x28] sm:$0xff]
    %v6218 = vld [vmem:[%s5287 + $0x40] sm:$0x3]
    %v6219 = vld [vmem:[%s5287 + $0x58] sm:$0xfc]
    %v6220 = vld [vmem:[%s5287 + $0x70] sm:$0xff]
    %v6221 = vld [vmem:[%s5287 + $0x88] sm:$0x3]
    %v6222 = vld [vmem:[%s5287 + $0xa0] sm:$0xfc]
    %v6223 = vld [vmem:[%s5287 + $0xb8] sm:$0xff]
    %v6224 = vld [vmem:[%s5287 + $0xd0] sm:$0x3]
    %v6225 = vld [vmem:[%s5287 + $0xe8] sm:$0xfc]
    %v6226 = vld [vmem:[%s5287 + $0x100] sm:$0xff]
    %v6227 = vld [vmem:[%s5287 + $0x118] sm:$0x3]
    %v6228 = vld [vmem:[%s5287 + $0x130] sm:$0xfc]
    %v6229 = vld [vmem:[%s5287 + $0x148] sm:$0xff]
    %v6230 = vld [vmem:[%s5287 + $0x160] sm:$0x3]
    %v6231 = vld [vmem:[%s5287 + $0x178] sm:$0xfc]
    %v6232 = vld [vmem:[%s5287 + $0x190] sm:$0xff]
    %v6233 = vld [vmem:[%s5287 + $0x1a8] sm:$0x3]
    %v6234 = vld [vmem:[%s5287 + $0x1c0] sm:$0xfc]
    %v6235 = vld [vmem:[%s5287 + $0x1d8] sm:$0xff]
    %v6236 = vld [vmem:[%s5287 + $0x1f0] sm:$0x3]
    %v6237 = vld [vmem:[%s5287 + $0x208] sm:$0xfc]
    %v6238 = vld [vmem:[%s5287 + $0x220] sm:$0xff]
    %v6239 = vld [vmem:[%s5287 + $0x238] sm:$0x3]
    %v6240 = vld [vmem:[%s5287 + $0x250] sm:$0xfc]
    %v6241 = vld [vmem:[%s5287 + $0x268] sm:$0xff]
    %v6242 = vld [vmem:[%s5287 + $0x280] sm:$0x3]
    %v6243 = vld [vmem:[%s5287 + $0x298] sm:$0xfc]
    %v6244 = vld [vmem:[%s5287 + $0x2b0] sm:$0xff]
    %v6245 = vld [vmem:[%s5287 + $0x2c8] sm:$0x3]
    %v6246 = vld [vmem:[%s5287 + $0x2e0] sm:$0xfc]
    %v6247 = vld [vmem:[%s5287 + $0x2f8] sm:$0xff]
    %v6248 = vld [vmem:[%s5287 + $0x310] sm:$0x3]
    %v6249 = vld [vmem:[%s5287 + $0x328] sm:$0xfc]
    %v6250 = vld [vmem:[%s5287 + $0x340] sm:$0xff]
    %v6251 = vld [vmem:[%s5287 + $0x358] sm:$0x3]
    %v6252 = vld [vmem:[%s5287 + $0x370] sm:$0xfc]
    %v6253 = vld [vmem:[%s5287 + $0x388] sm:$0xff]
    %v6254 = vld [vmem:[%s5287 + $0x3a0] sm:$0x3]
    %v6255 = vld [vmem:[%s5287 + $0x3b8] sm:$0xfc]
    %v6256 = vld [vmem:[%s5287 + $0x3d0] sm:$0xff]
    %v6257 = vld [vmem:[%s5287 + $0x3e8] sm:$0x3]
    %v6258 = vld [vmem:[%s5287 + $0x400] sm:$0xfc]
    %v6259 = vld [vmem:[%s5287 + $0x418] sm:$0xff]
    %v6260 = vld [vmem:[%s5287 + $0x430] sm:$0x3]
    %v6261 = vld [vmem:[%s5287 + $0x448] sm:$0xfc]
    %v6262 = vld [vmem:[%s5287 + $0x460] sm:$0xff]
    %v6263 = vld [vmem:[%s5287 + $0x478] sm:$0x3]
    %v6264 = vld [vmem:[%s5287 + $0x520] sm:$0xfc]
    %v6265 = vld [vmem:[%s5287 + $0x538] sm:$0xff]
    %v6266 = vld [vmem:[%s5287 + $0x550] sm:$0x3]
    %v6267 = vld [vmem:[%s5287 + $0x568] sm:$0xfc]
    %v6268 = vld [vmem:[%s5287 + $0x580] sm:$0xff]
    %v6269 = vld [vmem:[%s5287 + $0x598] sm:$0x3]
    %v6270 = vld [vmem:[%s5287 + $0x5b0] sm:$0xfc]
    %v6271 = vld [vmem:[%s5287 + $0x5c8] sm:$0xff]
    %v6272 = vld [vmem:[%s5287 + $0x5e0] sm:$0x3]
    %v6273 = vld [vmem:[%s5287 + $0x5f8] sm:$0xfc]
    %v6274 = vld [vmem:[%s5287 + $0x610] sm:$0xff]
    %v6275 = vld [vmem:[%s5287 + $0x628] sm:$0x3]
    %v6276 = vld [vmem:[%s5287 + $0x640] sm:$0xfc]
    %v6277 = vld [vmem:[%s5287 + $0x658] sm:$0xff]
    %v6278 = vld [vmem:[%s5287 + $0x670] sm:$0x3]
    %v6279 = vld [vmem:[%s5287 + $0x688] sm:$0xfc]
    %v6280 = vld [vmem:[%s5287 + $0x6a0] sm:$0xff]
    %v6281 = vld [vmem:[%s5287 + $0x6b8] sm:$0x3]
    %v6282 = vld [vmem:[%s5287 + $0x6d0] sm:$0xfc]
    %v6283 = vld [vmem:[%s5287 + $0x6e8] sm:$0xff]
    %v6284 = vld [vmem:[%s5287 + $0x700] sm:$0x3]
    %v6285 = vld [vmem:[%s5287 + $0x718] sm:$0xfc]
    %v6286 = vld [vmem:[%s5287 + $0x730] sm:$0xff]
    %v6287 = vld [vmem:[%s5287 + $0x748] sm:$0x3]
    %v6288 = vld [vmem:[%s5287 + $0x760] sm:$0xfc]
    %v6289 = vld [vmem:[%s5287 + $0x778] sm:$0xff]
    %v6290 = vld [vmem:[%s5287 + $0x790] sm:$0x3]
    %v6291 = vld [vmem:[%s5287 + $0x7a8] sm:$0xfc]
    %v6292 = vld [vmem:[%s5287 + $0x7c0] sm:$0xff]
    %v6293 = vld [vmem:[%s5287 + $0x7d8] sm:$0x3]
    %v6294 = vld [vmem:[%s5287 + $0x7f0] sm:$0xfc]
    %v6295 = vld [vmem:[%s5287 + $0x808] sm:$0xff]
    %v6296 = vld [vmem:[%s5287 + $0x820] sm:$0x3]
    %v6297 = vld [vmem:[%s5287 + $0x838] sm:$0xfc]
    %v6298 = vld [vmem:[%s5287 + $0x850] sm:$0xff]
    %v6299 = vld [vmem:[%s5287 + $0x868] sm:$0x3]
    %v6300 = vld [vmem:[%s5287 + $0x880] sm:$0xfc]
    %v6301 = vld [vmem:[%s5287 + $0x898] sm:$0xff]
    %v6302 = vld [vmem:[%s5287 + $0x8b0] sm:$0x3]
    %v6303 = vld [vmem:[%s5287 + $0x8c8] sm:$0xfc]
    %v6304 = vld [vmem:[%s5287 + $0x8e0] sm:$0xff]
    %v6305 = vld [vmem:[%s5287 + $0x8f8] sm:$0x3]
    %v6306 = vld [vmem:[%s5287 + $0x910] sm:$0xfc]
    %v6307 = vld [vmem:[%s5287 + $0x928] sm:$0xff]
    %v6308 = vld [vmem:[%s5287 + $0x940] sm:$0x3]
    %v6309 = vld [vmem:[%s5287 + $0x958] sm:$0xfc]
    %v6310 = vld [vmem:[%s5287 + $0x970] sm:$0xff]
    %v6311 = vld [vmem:[%s5287 + $0x988] sm:$0x3]
    %v6408 = vrot.slane %v6216, 2
    %v6409 = vrot.slane %v6217, 2
    %v6410 = vsel %vm3462, %v6408, %v6409
    %v6411 = vrot.slane %v6218, 2
    %v6412 = vsel %vm3462, %v6409, %v6411
    %v6413 = vrot.slane %v6219, 2
    %v6414 = vrot.slane %v6220, 2
    %v6415 = vsel %vm3462, %v6413, %v6414
    %v6416 = vrot.slane %v6221, 2
    %v6417 = vsel %vm3462, %v6414, %v6416
    %v6418 = vrot.slane %v6222, 2
    %v6419 = vrot.slane %v6223, 2
    %v6420 = vsel %vm3462, %v6418, %v6419
    %v6421 = vrot.slane %v6224, 2
    %v6422 = vsel %vm3462, %v6419, %v6421
    %v6423 = vrot.slane %v6225, 2
    %v6424 = vrot.slane %v6226, 2
    %v6425 = vsel %vm3462, %v6423, %v6424
    %v6426 = vrot.slane %v6227, 2
    %v6427 = vsel %vm3462, %v6424, %v6426
    %v6428 = vrot.slane %v6228, 2
    %v6429 = vrot.slane %v6229, 2
    %v6430 = vsel %vm3462, %v6428, %v6429
    %v6431 = vrot.slane %v6230, 2
    %v6432 = vsel %vm3462, %v6429, %v6431
    %v6433 = vrot.slane %v6231, 2
    %v6434 = vrot.slane %v6232, 2
    %v6435 = vsel %vm3462, %v6433, %v6434
    %v6436 = vrot.slane %v6233, 2
    %v6437 = vsel %vm3462, %v6434, %v6436
    %v6438 = vrot.slane %v6234, 2
    %v6439 = vrot.slane %v6235, 2
    %v6440 = vsel %vm3462, %v6438, %v6439
    %v6441 = vrot.slane %v6236, 2
    %v6442 = vsel %vm3462, %v6439, %v6441
    %v6443 = vrot.slane %v6237, 2
    %v6444 = vrot.slane %v6238, 2
    %v6445 = vsel %vm3462, %v6443, %v6444
    %v6446 = vrot.slane %v6239, 2
    %v6447 = vsel %vm3462, %v6444, %v6446
    %v6448 = vrot.slane %v6240, 2
    %v6449 = vrot.slane %v6241, 2
    %v6450 = vsel %vm3462, %v6448, %v6449
    %v6451 = vrot.slane %v6242, 2
    %v6452 = vsel %vm3462, %v6449, %v6451
    %v6453 = vrot.slane %v6243, 2
    %v6454 = vrot.slane %v6244, 2
    %v6455 = vsel %vm3462, %v6453, %v6454
    %v6456 = vrot.slane %v6245, 2
    %v6457 = vsel %vm3462, %v6454, %v6456
    %v6458 = vrot.slane %v6246, 2
    %v6459 = vrot.slane %v6247, 2
    %v6460 = vsel %vm3462, %v6458, %v6459
    %v6461 = vrot.slane %v6248, 2
    %v6462 = vsel %vm3462, %v6459, %v6461
    %v6463 = vrot.slane %v6249, 2
    %v6464 = vrot.slane %v6250, 2
    %v6465 = vsel %vm3462, %v6463, %v6464
    %v6466 = vrot.slane %v6251, 2
    %v6467 = vsel %vm3462, %v6464, %v6466
    %v6468 = vrot.slane %v6252, 2
    %v6469 = vrot.slane %v6253, 2
    %v6470 = vsel %vm3462, %v6468, %v6469
    %v6471 = vrot.slane %v6254, 2
    %v6472 = vsel %vm3462, %v6469, %v6471
    %v6473 = vrot.slane %v6255, 2
    %v6474 = vrot.slane %v6256, 2
    %v6475 = vsel %vm3462, %v6473, %v6474
    %v6476 = vrot.slane %v6257, 2
    %v6477 = vsel %vm3462, %v6474, %v6476
    %v6478 = vrot.slane %v6258, 2
    %v6479 = vrot.slane %v6259, 2
    %v6480 = vsel %vm3462, %v6478, %v6479
    %v6481 = vrot.slane %v6260, 2
    %v6482 = vsel %vm3462, %v6479, %v6481
    %v6483 = vrot.slane %v6261, 2
    %v6484 = vrot.slane %v6262, 2
    %v6485 = vsel %vm3462, %v6483, %v6484
    %v6486 = vrot.slane %v6263, 2
    %v6487 = vsel %vm3462, %v6484, %v6486
    %v6488 = vrot.slane %v6264, 2
    %v6489 = vrot.slane %v6265, 2
    %v6490 = vsel %vm3462, %v6488, %v6489
    %v6491 = vrot.slane %v6266, 2
    %v6492 = vsel %vm3462, %v6489, %v6491
    %v6493 = vrot.slane %v6267, 2
    %v6494 = vrot.slane %v6268, 2
    %v6495 = vsel %vm3462, %v6493, %v6494
    %v6496 = vrot.slane %v6269, 2
    %v6497 = vsel %vm3462, %v6494, %v6496
    %v6498 = vrot.slane %v6270, 2
    %v6499 = vrot.slane %v6271, 2
    %v6500 = vsel %vm3462, %v6498, %v6499
    %v6501 = vrot.slane %v6272, 2
    %v6502 = vsel %vm3462, %v6499, %v6501
    %v6503 = vrot.slane %v6273, 2
    %v6504 = vrot.slane %v6274, 2
    %v6505 = vsel %vm3462, %v6503, %v6504
    %v6506 = vrot.slane %v6275, 2
    %v6507 = vsel %vm3462, %v6504, %v6506
    %v6508 = vrot.slane %v6276, 2
    %v6509 = vrot.slane %v6277, 2
    %v6510 = vsel %vm3462, %v6508, %v6509
    %v6511 = vrot.slane %v6278, 2
    %v6512 = vsel %vm3462, %v6509, %v6511
    %v6513 = vrot.slane %v6279, 2
    %v6514 = vrot.slane %v6280, 2
    %v6515 = vsel %vm3462, %v6513, %v6514
    %v6516 = vrot.slane %v6281, 2
    %v6517 = vsel %vm3462, %v6514, %v6516
    %v6518 = vrot.slane %v6282, 2
    %v6519 = vrot.slane %v6283, 2
    %v6520 = vsel %vm3462, %v6518, %v6519
    %v6521 = vrot.slane %v6284, 2
    %v6522 = vsel %vm3462, %v6519, %v6521
    %v6523 = vrot.slane %v6285, 2
    %v6524 = vrot.slane %v6286, 2
    %v6525 = vsel %vm3462, %v6523, %v6524
    %v6526 = vrot.slane %v6287, 2
    %v6527 = vsel %vm3462, %v6524, %v6526
    %v6528 = vrot.slane %v6288, 2
    %v6529 = vrot.slane %v6289, 2
    %v6530 = vsel %vm3462, %v6528, %v6529
    %v6531 = vrot.slane %v6290, 2
    %v6532 = vsel %vm3462, %v6529, %v6531
    %v6533 = vrot.slane %v6291, 2
    %v6534 = vrot.slane %v6292, 2
    %v6535 = vsel %vm3462, %v6533, %v6534
    %v6536 = vrot.slane %v6293, 2
    %v6537 = vsel %vm3462, %v6534, %v6536
    %v6538 = vrot.slane %v6294, 2
    %v6539 = vrot.slane %v6295, 2
    %v6540 = vsel %vm3462, %v6538, %v6539
    %v6541 = vrot.slane %v6296, 2
    %v6542 = vsel %vm3462, %v6539, %v6541
    %v6543 = vrot.slane %v6297, 2
    %v6544 = vrot.slane %v6298, 2
    %v6545 = vsel %vm3462, %v6543, %v6544
    %v6546 = vrot.slane %v6299, 2
    %v6547 = vsel %vm3462, %v6544, %v6546
    %v6548 = vrot.slane %v6300, 2
    %v6549 = vrot.slane %v6301, 2
    %v6550 = vsel %vm3462, %v6548, %v6549
    %v6551 = vrot.slane %v6302, 2
    %v6552 = vsel %vm3462, %v6549, %v6551
    %v6553 = vrot.slane %v6303, 2
    %v6554 = vrot.slane %v6304, 2
    %v6555 = vsel %vm3462, %v6553, %v6554
    %v6556 = vrot.slane %v6305, 2
    %v6557 = vsel %vm3462, %v6554, %v6556
    %v6558 = vrot.slane %v6306, 2
    %v6559 = vrot.slane %v6307, 2
    %v6560 = vsel %vm3462, %v6558, %v6559
    %v6561 = vrot.slane %v6308, 2
    %v6562 = vsel %vm3462, %v6559, %v6561
    %v6563 = vrot.slane %v6309, 2
    %v6564 = vrot.slane %v6310, 2
    %v6565 = vsel %vm3462, %v6563, %v6564
    %v6566 = vrot.slane %v6311, 2
    %v6567 = vsel %vm3462, %v6564, %v6566
    %v6632 = vadd.f32 %v6152, %v6410
    %v6633 = vadd.f32 %v6153, %v6412
    %v6634 = vadd.f32 %v6154, %v6415
    %v6635 = vadd.f32 %v6155, %v6417
    %v6636 = vadd.f32 %v6156, %v6420
    %v6637 = vadd.f32 %v6157, %v6422
    %v6638 = vadd.f32 %v6158, %v6425
    %v6639 = vadd.f32 %v6159, %v6427
    %v6640 = vadd.f32 %v6160, %v6430
    %v6641 = vadd.f32 %v6161, %v6432
    %v6642 = vadd.f32 %v6162, %v6435
    %v6643 = vadd.f32 %v6163, %v6437
    %v6644 = vadd.f32 %v6164, %v6440
    %v6645 = vadd.f32 %v6165, %v6442
    %v6646 = vadd.f32 %v6166, %v6445
    %v6647 = vadd.f32 %v6167, %v6447
    %v6648 = vadd.f32 %v6168, %v6450
    %v6649 = vadd.f32 %v6169, %v6452
    %v6650 = vadd.f32 %v6170, %v6455
    %v6651 = vadd.f32 %v6171, %v6457
    %v6652 = vadd.f32 %v6172, %v6460
    %v6653 = vadd.f32 %v6173, %v6462
    %v6654 = vadd.f32 %v6174, %v6465
    %v6655 = vadd.f32 %v6175, %v6467
    %v6656 = vadd.f32 %v6176, %v6470
    %v6657 = vadd.f32 %v6177, %v6472
    %v6658 = vadd.f32 %v6178, %v6475
    %v6659 = vadd.f32 %v6179, %v6477
    %v6660 = vadd.f32 %v6180, %v6480
    %v6661 = vadd.f32 %v6181, %v6482
    %v6662 = vadd.f32 %v6182, %v6485
    %v6663 = vadd.f32 %v6183, %v6487
    %v6664 = vadd.f32 %v6184, %v6490
    %v6665 = vadd.f32 %v6185, %v6492
    %v6666 = vadd.f32 %v6186, %v6495
    %v6667 = vadd.f32 %v6187, %v6497
    %v6668 = vadd.f32 %v6188, %v6500
    %v6669 = vadd.f32 %v6189, %v6502
    %v6670 = vadd.f32 %v6190, %v6505
    %v6671 = vadd.f32 %v6191, %v6507
    %v6672 = vadd.f32 %v6192, %v6510
    %v6673 = vadd.f32 %v6193, %v6512
    %v6674 = vadd.f32 %v6194, %v6515
    %v6675 = vadd.f32 %v6195, %v6517
    %v6676 = vadd.f32 %v6196, %v6520
    %v6677 = vadd.f32 %v6197, %v6522
    %v6678 = vadd.f32 %v6198, %v6525
    %v6679 = vadd.f32 %v6199, %v6527
    %v6680 = vadd.f32 %v6200, %v6530
    %v6681 = vadd.f32 %v6201, %v6532
    %v6682 = vadd.f32 %v6202, %v6535
    %v6683 = vadd.f32 %v6203, %v6537
    %v6684 = vadd.f32 %v6204, %v6540
    %v6685 = vadd.f32 %v6205, %v6542
    %v6686 = vadd.f32 %v6206, %v6545
    %v6687 = vadd.f32 %v6207, %v6547
    %v6688 = vadd.f32 %v6208, %v6550
    %v6689 = vadd.f32 %v6209, %v6552
    %v6690 = vadd.f32 %v6210, %v6555
    %v6691 = vadd.f32 %v6211, %v6557
    %v6692 = vadd.f32 %v6212, %v6560
    %v6693 = vadd.f32 %v6213, %v6562
    %v6694 = vadd.f32 %v6214, %v6565
    %v6695 = vadd.f32 %v6215, %v6567
    %v6696 = vld [vmem:[%s4] sm:$0x1]
    %v6698 = vlaneseq
    %v6699 = vshrl.u32 %v6698, 7
    %v6700 = vsub.s32 0, %v6699
    %v6701 = vrot.slane %v6696, %v6700
    %v6703 = vadd.f32 %v6632, %v6701
    %v6704 = vadd.f32 %v6633, %v6701
    %v6705 = vadd.f32 %v6634, %v6701
    %v6706 = vadd.f32 %v6635, %v6701
    %v6707 = vadd.f32 %v6636, %v6701
    %v6708 = vadd.f32 %v6637, %v6701
    %v6709 = vadd.f32 %v6638, %v6701
    %v6710 = vadd.f32 %v6639, %v6701
    %v6711 = vadd.f32 %v6640, %v6701
    %v6712 = vadd.f32 %v6641, %v6701
    %v6713 = vadd.f32 %v6642, %v6701
    %v6714 = vadd.f32 %v6643, %v6701
    %v6715 = vadd.f32 %v6644, %v6701
    %v6716 = vadd.f32 %v6645, %v6701
    %v6717 = vadd.f32 %v6646, %v6701
    %v6718 = vadd.f32 %v6647, %v6701
    %v6719 = vadd.f32 %v6648, %v6701
    %v6720 = vadd.f32 %v6649, %v6701
    %v6721 = vadd.f32 %v6650, %v6701
    %v6722 = vadd.f32 %v6651, %v6701
    %v6723 = vadd.f32 %v6652, %v6701
    %v6724 = vadd.f32 %v6653, %v6701
    %v6725 = vadd.f32 %v6654, %v6701
    %v6726 = vadd.f32 %v6655, %v6701
    %v6727 = vadd.f32 %v6656, %v6701
    %v6728 = vadd.f32 %v6657, %v6701
    %v6729 = vadd.f32 %v6658, %v6701
    %v6730 = vadd.f32 %v6659, %v6701
    %v6731 = vadd.f32 %v6660, %v6701
    %v6732 = vadd.f32 %v6661, %v6701
    %v6733 = vadd.f32 %v6662, %v6701
    %v6734 = vadd.f32 %v6663, %v6701
    %v6735 = vadd.f32 %v6664, %v6701
    %v6736 = vadd.f32 %v6665, %v6701
    %v6737 = vadd.f32 %v6666, %v6701
    %v6738 = vadd.f32 %v6667, %v6701
    %v6739 = vadd.f32 %v6668, %v6701
    %v6740 = vadd.f32 %v6669, %v6701
    %v6741 = vadd.f32 %v6670, %v6701
    %v6742 = vadd.f32 %v6671, %v6701
    %v6743 = vadd.f32 %v6672, %v6701
    %v6744 = vadd.f32 %v6673, %v6701
    %v6745 = vadd.f32 %v6674, %v6701
    %v6746 = vadd.f32 %v6675, %v6701
    %v6747 = vadd.f32 %v6676, %v6701
    %v6748 = vadd.f32 %v6677, %v6701
    %v6749 = vadd.f32 %v6678, %v6701
    %v6750 = vadd.f32 %v6679, %v6701
    %v6751 = vadd.f32 %v6680, %v6701
    %v6752 = vadd.f32 %v6681, %v6701
    %v6753 = vadd.f32 %v6682, %v6701
    %v6754 = vadd.f32 %v6683, %v6701
    %v6755 = vadd.f32 %v6684, %v6701
    %v6756 = vadd.f32 %v6685, %v6701
    %v6757 = vadd.f32 %v6686, %v6701
    %v6758 = vadd.f32 %v6687, %v6701
    %v6759 = vadd.f32 %v6688, %v6701
    %v6760 = vadd.f32 %v6689, %v6701
    %v6761 = vadd.f32 %v6690, %v6701
    %v6762 = vadd.f32 %v6691, %v6701
    %v6763 = vadd.f32 %v6692, %v6701
    %v6764 = vadd.f32 %v6693, %v6701
    %v6765 = vadd.f32 %v6694, %v6701
    %v6766 = vadd.f32 %v6695, %v6701
    %v6767 = vmax.f32 %v6703, 0.0
    %v6768 = vmax.f32 %v6704, 0.0
    %v6769 = vmax.f32 %v6705, 0.0
    %v6770 = vmax.f32 %v6706, 0.0
    %v6771 = vmax.f32 %v6707, 0.0
    %v6772 = vmax.f32 %v6708, 0.0
    %v6773 = vmax.f32 %v6709, 0.0
    %v6774 = vmax.f32 %v6710, 0.0
    %v6775 = vmax.f32 %v6711, 0.0
    %v6776 = vmax.f32 %v6712, 0.0
    %v6777 = vmax.f32 %v6713, 0.0
    %v6778 = vmax.f32 %v6714, 0.0
    %v6779 = vmax.f32 %v6715, 0.0
    %v6780 = vmax.f32 %v6716, 0.0
    %v6781 = vmax.f32 %v6717, 0.0
    %v6782 = vmax.f32 %v6718, 0.0
    %v6783 = vmax.f32 %v6719, 0.0
    %v6784 = vmax.f32 %v6720, 0.0
    %v6785 = vmax.f32 %v6721, 0.0
    %v6786 = vmax.f32 %v6722, 0.0
    %v6787 = vmax.f32 %v6723, 0.0
    %v6788 = vmax.f32 %v6724, 0.0
    %v6789 = vmax.f32 %v6725, 0.0
    %v6790 = vmax.f32 %v6726, 0.0
    %v6791 = vmax.f32 %v6727, 0.0
    %v6792 = vmax.f32 %v6728, 0.0
    %v6793 = vmax.f32 %v6729, 0.0
    %v6794 = vmax.f32 %v6730, 0.0
    %v6795 = vmax.f32 %v6731, 0.0
    %v6796 = vmax.f32 %v6732, 0.0
    %v6797 = vmax.f32 %v6733, 0.0
    %v6798 = vmax.f32 %v6734, 0.0
    %v6799 = vmax.f32 %v6735, 0.0
    %v6800 = vmax.f32 %v6736, 0.0
    %v6801 = vmax.f32 %v6737, 0.0
    %v6802 = vmax.f32 %v6738, 0.0
    %v6803 = vmax.f32 %v6739, 0.0
    %v6804 = vmax.f32 %v6740, 0.0
    %v6805 = vmax.f32 %v6741, 0.0
    %v6806 = vmax.f32 %v6742, 0.0
    %v6807 = vmax.f32 %v6743, 0.0
    %v6808 = vmax.f32 %v6744, 0.0
    %v6809 = vmax.f32 %v6745, 0.0
    %v6810 = vmax.f32 %v6746, 0.0
    %v6811 = vmax.f32 %v6747, 0.0
    %v6812 = vmax.f32 %v6748, 0.0
    %v6813 = vmax.f32 %v6749, 0.0
    %v6814 = vmax.f32 %v6750, 0.0
    %v6815 = vmax.f32 %v6751, 0.0
    %v6816 = vmax.f32 %v6752, 0.0
    %v6817 = vmax.f32 %v6753, 0.0
    %v6818 = vmax.f32 %v6754, 0.0
    %v6819 = vmax.f32 %v6755, 0.0
    %v6820 = vmax.f32 %v6756, 0.0
    %v6821 = vmax.f32 %v6757, 0.0
    %v6822 = vmax.f32 %v6758, 0.0
    %v6823 = vmax.f32 %v6759, 0.0
    %v6824 = vmax.f32 %v6760, 0.0
    %v6825 = vmax.f32 %v6761, 0.0
    %v6826 = vmax.f32 %v6762, 0.0
    %v6827 = vmax.f32 %v6763, 0.0
    %v6828 = vmax.f32 %v6764, 0.0
    %v6829 = vmax.f32 %v6765, 0.0
    %v6830 = vmax.f32 %v6766, 0.0
    %v6831 = vpack.c.bf16 %v6768, %v6767
    %v6832 = vpack.c.bf16 %v6770, %v6769
    %v6833 = vpack.c.bf16 %v6772, %v6771
    %v6834 = vpack.c.bf16 %v6774, %v6773
    %v6835 = vpack.c.bf16 %v6776, %v6775
    %v6836 = vpack.c.bf16 %v6778, %v6777
    %v6837 = vpack.c.bf16 %v6780, %v6779
    %v6838 = vpack.c.bf16 %v6782, %v6781
    %v6839 = vpack.c.bf16 %v6784, %v6783
    %v6840 = vpack.c.bf16 %v6786, %v6785
    %v6841 = vpack.c.bf16 %v6788, %v6787
    %v6842 = vpack.c.bf16 %v6790, %v6789
    %v6843 = vpack.c.bf16 %v6792, %v6791
    %v6844 = vpack.c.bf16 %v6794, %v6793
    %v6845 = vpack.c.bf16 %v6796, %v6795
    %v6846 = vpack.c.bf16 %v6798, %v6797
    %v6847 = vpack.c.bf16 %v6800, %v6799
    %v6848 = vpack.c.bf16 %v6802, %v6801
    %v6849 = vpack.c.bf16 %v6804, %v6803
    %v6850 = vpack.c.bf16 %v6806, %v6805
    %v6851 = vpack.c.bf16 %v6808, %v6807
    %v6852 = vpack.c.bf16 %v6810, %v6809
    %v6853 = vpack.c.bf16 %v6812, %v6811
    %v6854 = vpack.c.bf16 %v6814, %v6813
    %v6855 = vpack.c.bf16 %v6816, %v6815
    %v6856 = vpack.c.bf16 %v6818, %v6817
    %v6857 = vpack.c.bf16 %v6820, %v6819
    %v6858 = vpack.c.bf16 %v6822, %v6821
    %v6859 = vpack.c.bf16 %v6824, %v6823
    %v6860 = vpack.c.bf16 %v6826, %v6825
    %v6861 = vpack.c.bf16 %v6828, %v6827
    %v6862 = vpack.c.bf16 %v6830, %v6829
    %v6863 = vld [vmem:[%s5] sm:$0xf]
    %v6864 = vld [vmem:[%s5 + $0x4] sm:$0xf]
    %v6865 = vld [vmem:[%s5 + $0x8] sm:$0xf]
    %v6866 = vld [vmem:[%s5 + $0xc] sm:$0xf]
    %v6867 = vld [vmem:[%s6] sm:$0x1]
    %v6869 = vlaneseq
    %v6870 = vshrl.u32 %v6869, 7
    %v6871 = vsub.s32 0, %v6870
    %v6872 = vrot.slane %v6867, %v6871
    %v6878 = vunpack.c.l.b16 %v6863
    %v6879 = vunpack.c.l.b16 %v6864
    %v6880 = vunpack.c.l.b16 %v6865
    %v6881 = vunpack.c.l.b16 %v6866
    %v6882 = vpack.c.b16 %v6879, %v6878
    %v6883 = vpack.c.b16 %v6881, %v6880
    %v6887 = vsel %vm637, %v6831, 0
    %v6890 = vsel %vm637, %v6832, 0
    %v6893 = vsel %vm637, %v6833, 0
    %v6896 = vsel %vm637, %v6834, 0
    %v6899 = vsel %vm637, %v6835, 0
    %v6902 = vsel %vm637, %v6836, 0
    %v6905 = vsel %vm637, %v6837, 0
    %v6908 = vsel %vm637, %v6838, 0
    %v6911 = vsel %vm637, %v6839, 0
    %v6914 = vsel %vm637, %v6840, 0
    %v6917 = vsel %vm637, %v6841, 0
    %v6920 = vsel %vm637, %v6842, 0
    %v6923 = vsel %vm637, %v6843, 0
    %v6926 = vsel %vm637, %v6844, 0
    %v6929 = vsel %vm637, %v6845, 0
    %v6932 = vsel %vm637, %v6846, 0
    %v6935 = vsel %vm637, %v6847, 0
    %v6938 = vsel %vm637, %v6848, 0
    %v6941 = vsel %vm637, %v6849, 0
    %v6944 = vsel %vm637, %v6850, 0
    %v6947 = vsel %vm637, %v6851, 0
    %v6950 = vsel %vm637, %v6852, 0
    %v6953 = vsel %vm637, %v6853, 0
    %v6956 = vsel %vm637, %v6854, 0
    %v6959 = vsel %vm637, %v6855, 0
    %v6962 = vsel %vm637, %v6856, 0
    %v6965 = vsel %vm637, %v6857, 0
    %v6968 = vsel %vm637, %v6858, 0
    %v6971 = vsel %vm637, %v6859, 0
    %v6974 = vsel %vm637, %v6860, 0
    %v6977 = vsel %vm637, %v6861, 0
    %v6980 = vsel %vm637, %v6862, 0
    %6982 = vmatprep.subr.bf16.mxu0 0
    %6983 = vmatpush1.bf16.msra.mxu0 %v6882
    %6984 = vmatprep.subr.bf16.mxu0 0
    %6985 = vmatpush1.bf16.msra.mxu0 %v6883
    %6986 = vmatprep.subr.bf16.mxu0 0
    %6987 = vmatpush1.bf16.msra.mxu0 0
    %6988 = vmatprep.subr.bf16.mxu0 0
    %6989 = vmatpush1.bf16.msra.mxu0 0
    %6990 = vmatprep.subr.bf16.mxu0 0
    %6991 = vmatpush1.bf16.msra.mxu0 0
    %6992 = vmatprep.subr.bf16.mxu0 0
    %6993 = vmatpush1.bf16.msra.mxu0 0
    %6994 = vmatprep.subr.bf16.mxu0 0
    %6995 = vmatpush1.bf16.msra.mxu0 0
    %6996 = vmatprep.subr.bf16.mxu0 0
    %6997 = vmatpush1.bf16.msra.mxu0 0
    %6998 = vmatprep.subr.bf16.mxu0 0
    %6999 = vmatpush1.bf16.msra.mxu0 0
    %7000 = vmatprep.subr.bf16.mxu0 0
    %7001 = vmatpush1.bf16.msra.mxu0 0
    %7002 = vmatprep.subr.bf16.mxu0 0
    %7003 = vmatpush1.bf16.msra.mxu0 0
    %7004 = vmatprep.subr.bf16.mxu0 0
    %7005 = vmatpush1.bf16.msra.mxu0 0
    %7006 = vmatprep.subr.bf16.mxu0 0
    %7007 = vmatpush1.bf16.msra.mxu0 0
    %7008 = vmatprep.subr.bf16.mxu0 0
    %7009 = vmatpush1.bf16.msra.mxu0 0
    %7010 = vmatprep.subr.bf16.mxu0 0
    %7011 = vmatpush1.bf16.msra.mxu0 0
    %7012 = vmatprep.subr.bf16.mxu0 0
    %7013 = vmatpush1.bf16.msra.mxu0 0
    %7014 = vmatprep.mubr.bf16.mxu0 0
    %7015 = vmatmul.mubr.bf16.gmra.mrb[0].mxu0 %v6887
    %v7016 = vpop.f32.mrb[0].mxu0
    %v7017 = vadd.f32 %v6872, %v7016
    %v7018 = vpop.f32.mrb[0].mxu0
    %v7019 = vpop.f32.mrb[0].mxu0
    %v7020 = vadd.f32 %v6872, %v7019
    %v7021 = vpop.f32.mrb[0].mxu0
    %7022 = vmatprep.mubr.bf16.mxu0 0
    %7023 = vmatmul.mubr.bf16.gmra.mrb[0].mxu0 %v6890
    %v7024 = vpop.f32.mrb[0].mxu0
    %v7025 = vadd.f32 %v6872, %v7024
    %v7026 = vpop.f32.mrb[0].mxu0
    %v7027 = vpop.f32.mrb[0].mxu0
    %v7028 = vadd.f32 %v6872, %v7027
    %v7029 = vpop.f32.mrb[0].mxu0
    %7030 = vmatprep.mubr.bf16.mxu0 0
    %7031 = vmatmul.mubr.bf16.gmra.mrb[0].mxu0 %v6893
    %v7032 = vpop.f32.mrb[0].mxu0
    %v7033 = vadd.f32 %v6872, %v7032
    %v7034 = vpop.f32.mrb[0].mxu0
    %v7035 = vpop.f32.mrb[0].mxu0
    %v7036 = vadd.f32 %v6872, %v7035
    %v7037 = vpop.f32.mrb[0].mxu0
    %7038 = vmatprep.mubr.bf16.mxu0 0
    %7039 = vmatmul.mubr.bf16.gmra.mrb[0].mxu0 %v6896
    %v7040 = vpop.f32.mrb[0].mxu0
    %v7041 = vadd.f32 %v6872, %v7040
    %v7042 = vpop.f32.mrb[0].mxu0
    %v7043 = vpop.f32.mrb[0].mxu0
    %v7044 = vadd.f32 %v6872, %v7043
    %v7045 = vpop.f32.mrb[0].mxu0
    %7046 = vmatprep.mubr.bf16.mxu0 0
    %7047 = vmatmul.mubr.bf16.gmra.mrb[0].mxu0 %v6899
    %v7048 = vpop.f32.mrb[0].mxu0
    %v7049 = vadd.f32 %v6872, %v7048
    %v7050 = vpop.f32.mrb[0].mxu0
    %v7051 = vpop.f32.mrb[0].mxu0
    %v7052 = vadd.f32 %v6872, %v7051
    %v7053 = vpop.f32.mrb[0].mxu0
    %7054 = vmatprep.mubr.bf16.mxu0 0
    %7055 = vmatmul.mubr.bf16.gmra.mrb[0].mxu0 %v6902
    %v7056 = vpop.f32.mrb[0].mxu0
    %v7057 = vadd.f32 %v6872, %v7056
    %v7058 = vpop.f32.mrb[0].mxu0
    %v7059 = vpop.f32.mrb[0].mxu0
    %v7060 = vadd.f32 %v6872, %v7059
    %v7061 = vpop.f32.mrb[0].mxu0
    %7062 = vmatprep.mubr.bf16.mxu0 0
    %7063 = vmatmul.mubr.bf16.gmra.mrb[0].mxu0 %v6905
    %v7064 = vpop.f32.mrb[0].mxu0
    %v7065 = vadd.f32 %v6872, %v7064
    %v7066 = vpop.f32.mrb[0].mxu0
    %v7067 = vpop.f32.mrb[0].mxu0
    %v7068 = vadd.f32 %v6872, %v7067
    %v7069 = vpop.f32.mrb[0].mxu0
    %7070 = vmatprep.mubr.bf16.mxu0 0
    %7071 = vmatmul.mubr.bf16.gmra.mrb[0].mxu0 %v6908
    %v7072 = vpop.f32.mrb[0].mxu0
    %v7073 = vadd.f32 %v6872, %v7072
    %v7074 = vpop.f32.mrb[0].mxu0
    %v7075 = vpop.f32.mrb[0].mxu0
    %v7076 = vadd.f32 %v6872, %v7075
    %v7077 = vpop.f32.mrb[0].mxu0
    %7078 = vmatprep.mubr.bf16.mxu0 0
    %7079 = vmatmul.mubr.bf16.gmra.mrb[0].mxu0 %v6911
    %v7080 = vpop.f32.mrb[0].mxu0
    %v7081 = vadd.f32 %v6872, %v7080
    %v7082 = vpop.f32.mrb[0].mxu0
    %v7083 = vpop.f32.mrb[0].mxu0
    %v7084 = vadd.f32 %v6872, %v7083
    %v7085 = vpop.f32.mrb[0].mxu0
    %7086 = vmatprep.mubr.bf16.mxu0 0
    %7087 = vmatmul.mubr.bf16.gmra.mrb[0].mxu0 %v6914
    %v7088 = vpop.f32.mrb[0].mxu0
    %v7089 = vadd.f32 %v6872, %v7088
    %v7090 = vpop.f32.mrb[0].mxu0
    %v7091 = vpop.f32.mrb[0].mxu0
    %v7092 = vadd.f32 %v6872, %v7091
    %v7093 = vpop.f32.mrb[0].mxu0
    %7094 = vmatprep.mubr.bf16.mxu0 0
    %7095 = vmatmul.mubr.bf16.gmra.mrb[0].mxu0 %v6917
    %v7096 = vpop.f32.mrb[0].mxu0
    %v7097 = vadd.f32 %v6872, %v7096
    %v7098 = vpop.f32.mrb[0].mxu0
    %v7099 = vpop.f32.mrb[0].mxu0
    %v7100 = vadd.f32 %v6872, %v7099
    %v7101 = vpop.f32.mrb[0].mxu0
    %7102 = vmatprep.mubr.bf16.mxu0 0
    %7103 = vmatmul.mubr.bf16.gmra.mrb[0].mxu0 %v6920
    %v7104 = vpop.f32.mrb[0].mxu0
    %v7105 = vadd.f32 %v6872, %v7104
    %v7106 = vpop.f32.mrb[0].mxu0
    %v7107 = vpop.f32.mrb[0].mxu0
    %v7108 = vadd.f32 %v6872, %v7107
    %v7109 = vpop.f32.mrb[0].mxu0
    %7110 = vmatprep.mubr.bf16.mxu0 0
    %7111 = vmatmul.mubr.bf16.gmra.mrb[0].mxu0 %v6923
    %v7112 = vpop.f32.mrb[0].mxu0
    %v7113 = vadd.f32 %v6872, %v7112
    %v7114 = vpop.f32.mrb[0].mxu0
    %v7115 = vpop.f32.mrb[0].mxu0
    %v7116 = vadd.f32 %v6872, %v7115
    %v7117 = vpop.f32.mrb[0].mxu0
    %7118 = vmatprep.mubr.bf16.mxu0 0
    %7119 = vmatmul.mubr.bf16.gmra.mrb[0].mxu0 %v6926
    %v7120 = vpop.f32.mrb[0].mxu0
    %v7121 = vadd.f32 %v6872, %v7120
    %v7122 = vpop.f32.mrb[0].mxu0
    %v7123 = vpop.f32.mrb[0].mxu0
    %v7124 = vadd.f32 %v6872, %v7123
    %v7125 = vpop.f32.mrb[0].mxu0
    %7126 = vmatprep.mubr.bf16.mxu0 0
    %7127 = vmatmul.mubr.bf16.gmra.mrb[0].mxu0 %v6929
    %v7128 = vpop.f32.mrb[0].mxu0
    %v7129 = vadd.f32 %v6872, %v7128
    %v7130 = vpop.f32.mrb[0].mxu0
    %v7131 = vpop.f32.mrb[0].mxu0
    %v7132 = vadd.f32 %v6872, %v7131
    %v7133 = vpop.f32.mrb[0].mxu0
    %7134 = vmatprep.mubr.bf16.mxu0 0
    %7135 = vmatmul.mubr.bf16.gmra.mrb[0].mxu0 %v6932
    %v7136 = vpop.f32.mrb[0].mxu0
    %v7137 = vadd.f32 %v6872, %v7136
    %v7138 = vpop.f32.mrb[0].mxu0
    %v7139 = vpop.f32.mrb[0].mxu0
    %v7140 = vadd.f32 %v6872, %v7139
    %v7141 = vpop.f32.mrb[0].mxu0
    %7142 = vmatprep.mubr.bf16.mxu0 0
    %7143 = vmatmul.mubr.bf16.gmra.mrb[0].mxu0 %v6935
    %v7144 = vpop.f32.mrb[0].mxu0
    %v7145 = vadd.f32 %v6872, %v7144
    %v7146 = vpop.f32.mrb[0].mxu0
    %v7147 = vpop.f32.mrb[0].mxu0
    %v7148 = vadd.f32 %v6872, %v7147
    %v7149 = vpop.f32.mrb[0].mxu0
    %7150 = vmatprep.mubr.bf16.mxu0 0
    %7151 = vmatmul.mubr.bf16.gmra.mrb[0].mxu0 %v6938
    %v7152 = vpop.f32.mrb[0].mxu0
    %v7153 = vadd.f32 %v6872, %v7152
    %v7154 = vpop.f32.mrb[0].mxu0
    %v7155 = vpop.f32.mrb[0].mxu0
    %v7156 = vadd.f32 %v6872, %v7155
    %v7157 = vpop.f32.mrb[0].mxu0
    %7158 = vmatprep.mubr.bf16.mxu0 0
    %7159 = vmatmul.mubr.bf16.gmra.mrb[0].mxu0 %v6941
    %v7160 = vpop.f32.mrb[0].mxu0
    %v7161 = vadd.f32 %v6872, %v7160
    %v7162 = vpop.f32.mrb[0].mxu0
    %v7163 = vpop.f32.mrb[0].mxu0
    %v7164 = vadd.f32 %v6872, %v7163
    %v7165 = vpop.f32.mrb[0].mxu0
    %7166 = vmatprep.mubr.bf16.mxu0 0
    %7167 = vmatmul.mubr.bf16.gmra.mrb[0].mxu0 %v6944
    %v7168 = vpop.f32.mrb[0].mxu0
    %v7169 = vadd.f32 %v6872, %v7168
    %v7170 = vpop.f32.mrb[0].mxu0
    %v7171 = vpop.f32.mrb[0].mxu0
    %v7172 = vadd.f32 %v6872, %v7171
    %v7173 = vpop.f32.mrb[0].mxu0
    %7174 = vmatprep.mubr.bf16.mxu0 0
    %7175 = vmatmul.mubr.bf16.gmra.mrb[0].mxu0 %v6947
    %v7176 = vpop.f32.mrb[0].mxu0
    %v7177 = vadd.f32 %v6872, %v7176
    %v7178 = vpop.f32.mrb[0].mxu0
    %v7179 = vpop.f32.mrb[0].mxu0
    %v7180 = vadd.f32 %v6872, %v7179
    %v7181 = vpop.f32.mrb[0].mxu0
    %7182 = vmatprep.mubr.bf16.mxu0 0
    %7183 = vmatmul.mubr.bf16.gmra.mrb[0].mxu0 %v6950
    %v7184 = vpop.f32.mrb[0].mxu0
    %v7185 = vadd.f32 %v6872, %v7184
    %v7186 = vpop.f32.mrb[0].mxu0
    %v7187 = vpop.f32.mrb[0].mxu0
    %v7188 = vadd.f32 %v6872, %v7187
    %v7189 = vpop.f32.mrb[0].mxu0
    %7190 = vmatprep.mubr.bf16.mxu0 0
    %7191 = vmatmul.mubr.bf16.gmra.mrb[0].mxu0 %v6953
    %v7192 = vpop.f32.mrb[0].mxu0
    %v7193 = vadd.f32 %v6872, %v7192
    %v7194 = vpop.f32.mrb[0].mxu0
    %v7195 = vpop.f32.mrb[0].mxu0
    %v7196 = vadd.f32 %v6872, %v7195
    %v7197 = vpop.f32.mrb[0].mxu0
    %7198 = vmatprep.mubr.bf16.mxu0 0
    %7199 = vmatmul.mubr.bf16.gmra.mrb[0].mxu0 %v6956
    %v7200 = vpop.f32.mrb[0].mxu0
    %v7201 = vadd.f32 %v6872, %v7200
    %v7202 = vpop.f32.mrb[0].mxu0
    %v7203 = vpop.f32.mrb[0].mxu0
    %v7204 = vadd.f32 %v6872, %v7203
    %v7205 = vpop.f32.mrb[0].mxu0
    %7206 = vmatprep.mubr.bf16.mxu0 0
    %7207 = vmatmul.mubr.bf16.gmra.mrb[0].mxu0 %v6959
    %v7208 = vpop.f32.mrb[0].mxu0
    %v7209 = vadd.f32 %v6872, %v7208
    %v7210 = vpop.f32.mrb[0].mxu0
    %v7211 = vpop.f32.mrb[0].mxu0
    %v7212 = vadd.f32 %v6872, %v7211
    %v7213 = vpop.f32.mrb[0].mxu0
    %7214 = vmatprep.mubr.bf16.mxu0 0
    %7215 = vmatmul.mubr.bf16.gmra.mrb[0].mxu0 %v6962
    %v7216 = vpop.f32.mrb[0].mxu0
    %v7217 = vadd.f32 %v6872, %v7216
    %v7218 = vpop.f32.mrb[0].mxu0
    %v7219 = vpop.f32.mrb[0].mxu0
    %v7220 = vadd.f32 %v6872, %v7219
    %v7221 = vpop.f32.mrb[0].mxu0
    %7222 = vmatprep.mubr.bf16.mxu0 0
    %7223 = vmatmul.mubr.bf16.gmra.mrb[0].mxu0 %v6965
    %v7224 = vpop.f32.mrb[0].mxu0
    %v7225 = vadd.f32 %v6872, %v7224
    %v7226 = vpop.f32.mrb[0].mxu0
    %v7227 = vpop.f32.mrb[0].mxu0
    %v7228 = vadd.f32 %v6872, %v7227
    %v7229 = vpop.f32.mrb[0].mxu0
    %7230 = vmatprep.mubr.bf16.mxu0 0
    %7231 = vmatmul.mubr.bf16.gmra.mrb[0].mxu0 %v6968
    %v7232 = vpop.f32.mrb[0].mxu0
    %v7233 = vadd.f32 %v6872, %v7232
    %v7234 = vpop.f32.mrb[0].mxu0
    %v7235 = vpop.f32.mrb[0].mxu0
    %v7236 = vadd.f32 %v6872, %v7235
    %v7237 = vpop.f32.mrb[0].mxu0
    %7238 = vmatprep.mubr.bf16.mxu0 0
    %7239 = vmatmul.mubr.bf16.gmra.mrb[0].mxu0 %v6971
    %v7240 = vpop.f32.mrb[0].mxu0
    %v7241 = vadd.f32 %v6872, %v7240
    %v7242 = vpop.f32.mrb[0].mxu0
    %v7243 = vpop.f32.mrb[0].mxu0
    %v7244 = vadd.f32 %v6872, %v7243
    %v7245 = vpop.f32.mrb[0].mxu0
    %7246 = vmatprep.mubr.bf16.mxu0 0
    %7247 = vmatmul.mubr.bf16.gmra.mrb[0].mxu0 %v6974
    %v7248 = vpop.f32.mrb[0].mxu0
    %v7249 = vadd.f32 %v6872, %v7248
    %v7250 = vpop.f32.mrb[0].mxu0
    %v7251 = vpop.f32.mrb[0].mxu0
    %v7252 = vadd.f32 %v6872, %v7251
    %v7253 = vpop.f32.mrb[0].mxu0
    %7254 = vmatprep.mubr.bf16.mxu0 0
    %7255 = vmatmul.mubr.bf16.gmra.mrb[0].mxu0 %v6977
    %v7256 = vpop.f32.mrb[0].mxu0
    %v7257 = vadd.f32 %v6872, %v7256
    %v7258 = vpop.f32.mrb[0].mxu0
    %v7259 = vpop.f32.mrb[0].mxu0
    %v7260 = vadd.f32 %v6872, %v7259
    %v7261 = vpop.f32.mrb[0].mxu0
    %7262 = vmatprep.mubr.bf16.mxu0 0
    %7263 = vmatmul.mubr.bf16.gmra.mrb[0].mxu0 %v6980
    %v7264 = vpop.f32.mrb[0].mxu0
    %v7265 = vadd.f32 %v6872, %v7264
    %v7266 = vpop.f32.mrb[0].mxu0
    %v7267 = vpop.f32.mrb[0].mxu0
    %v7268 = vadd.f32 %v6872, %v7267
    %v7269 = vpop.f32.mrb[0].mxu0
    %7270 = vdwg.mxu0
    %v7271 = vadd.f32 %v45, %v7017
    %v7272 = vadd.f32 %v46, %v7020
    %v7273 = vadd.f32 %v47, %v7025
    %v7274 = vadd.f32 %v48, %v7028
    %v7275 = vadd.f32 %v49, %v7033
    %v7276 = vadd.f32 %v50, %v7036
    %v7277 = vadd.f32 %v51, %v7041
    %v7278 = vadd.f32 %v52, %v7044
    %v7279 = vadd.f32 %v53, %v7049
    %v7280 = vadd.f32 %v54, %v7052
    %v7281 = vadd.f32 %v55, %v7057
    %v7282 = vadd.f32 %v56, %v7060
    %v7283 = vadd.f32 %v57, %v7065
    %v7284 = vadd.f32 %v58, %v7068
    %v7285 = vadd.f32 %v59, %v7073
    %v7286 = vadd.f32 %v60, %v7076
    %v7287 = vadd.f32 %v61, %v7081
    %v7288 = vadd.f32 %v62, %v7084
    %v7289 = vadd.f32 %v63, %v7089
    %v7290 = vadd.f32 %v64, %v7092
    %v7291 = vadd.f32 %v65, %v7097
    %v7292 = vadd.f32 %v66, %v7100
    %v7293 = vadd.f32 %v67, %v7105
    %v7294 = vadd.f32 %v68, %v7108
    %v7295 = vadd.f32 %v69, %v7113
    %v7296 = vadd.f32 %v70, %v7116
    %v7297 = vadd.f32 %v71, %v7121
    %v7298 = vadd.f32 %v72, %v7124
    %v7299 = vadd.f32 %v73, %v7129
    %v7300 = vadd.f32 %v74, %v7132
    %v7301 = vadd.f32 %v75, %v7137
    %v7302 = vadd.f32 %v76, %v7140
    %v7303 = vadd.f32 %v77, %v7145
    %v7304 = vadd.f32 %v78, %v7148
    %v7305 = vadd.f32 %v79, %v7153
    %v7306 = vadd.f32 %v80, %v7156
    %v7307 = vadd.f32 %v81, %v7161
    %v7308 = vadd.f32 %v82, %v7164
    %v7309 = vadd.f32 %v83, %v7169
    %v7310 = vadd.f32 %v84, %v7172
    %v7311 = vadd.f32 %v85, %v7177
    %v7312 = vadd.f32 %v86, %v7180
    %v7313 = vadd.f32 %v87, %v7185
    %v7314 = vadd.f32 %v88, %v7188
    %v7315 = vadd.f32 %v89, %v7193
    %v7316 = vadd.f32 %v90, %v7196
    %v7317 = vadd.f32 %v91, %v7201
    %v7318 = vadd.f32 %v92, %v7204
    %v7319 = vadd.f32 %v93, %v7209
    %v7320 = vadd.f32 %v94, %v7212
    %v7321 = vadd.f32 %v95, %v7217
    %v7322 = vadd.f32 %v96, %v7220
    %v7323 = vadd.f32 %v97, %v7225
    %v7324 = vadd.f32 %v98, %v7228
    %v7325 = vadd.f32 %v99, %v7233
    %v7326 = vadd.f32 %v100, %v7236
    %v7327 = vadd.f32 %v101, %v7241
    %v7328 = vadd.f32 %v102, %v7244
    %v7329 = vadd.f32 %v103, %v7249
    %v7330 = vadd.f32 %v104, %v7252
    %v7331 = vadd.f32 %v105, %v7257
    %v7332 = vadd.f32 %v106, %v7260
    %v7333 = vadd.f32 %v107, %v7265
    %v7334 = vadd.f32 %v108, %v7268
    %v7335 = vmax.f32 %v7271, 0.0
    %v7336 = vmax.f32 %v7272, 0.0
    %v7337 = vmax.f32 %v7273, 0.0
    %v7338 = vmax.f32 %v7274, 0.0
    %v7339 = vmax.f32 %v7275, 0.0
    %v7340 = vmax.f32 %v7276, 0.0
    %v7341 = vmax.f32 %v7277, 0.0
    %v7342 = vmax.f32 %v7278, 0.0
    %v7343 = vmax.f32 %v7279, 0.0
    %v7344 = vmax.f32 %v7280, 0.0
    %v7345 = vmax.f32 %v7281, 0.0
    %v7346 = vmax.f32 %v7282, 0.0
    %v7347 = vmax.f32 %v7283, 0.0
    %v7348 = vmax.f32 %v7284, 0.0
    %v7349 = vmax.f32 %v7285, 0.0
    %v7350 = vmax.f32 %v7286, 0.0
    %v7351 = vmax.f32 %v7287, 0.0
    %v7352 = vmax.f32 %v7288, 0.0
    %v7353 = vmax.f32 %v7289, 0.0
    %v7354 = vmax.f32 %v7290, 0.0
    %v7355 = vmax.f32 %v7291, 0.0
    %v7356 = vmax.f32 %v7292, 0.0
    %v7357 = vmax.f32 %v7293, 0.0
    %v7358 = vmax.f32 %v7294, 0.0
    %v7359 = vmax.f32 %v7295, 0.0
    %v7360 = vmax.f32 %v7296, 0.0
    %v7361 = vmax.f32 %v7297, 0.0
    %v7362 = vmax.f32 %v7298, 0.0
    %v7363 = vmax.f32 %v7299, 0.0
    %v7364 = vmax.f32 %v7300, 0.0
    %v7365 = vmax.f32 %v7301, 0.0
    %v7366 = vmax.f32 %v7302, 0.0
    %v7367 = vmax.f32 %v7303, 0.0
    %v7368 = vmax.f32 %v7304, 0.0
    %v7369 = vmax.f32 %v7305, 0.0
    %v7370 = vmax.f32 %v7306, 0.0
    %v7371 = vmax.f32 %v7307, 0.0
    %v7372 = vmax.f32 %v7308, 0.0
    %v7373 = vmax.f32 %v7309, 0.0
    %v7374 = vmax.f32 %v7310, 0.0
    %v7375 = vmax.f32 %v7311, 0.0
    %v7376 = vmax.f32 %v7312, 0.0
    %v7377 = vmax.f32 %v7313, 0.0
    %v7378 = vmax.f32 %v7314, 0.0
    %v7379 = vmax.f32 %v7315, 0.0
    %v7380 = vmax.f32 %v7316, 0.0
    %v7381 = vmax.f32 %v7317, 0.0
    %v7382 = vmax.f32 %v7318, 0.0
    %v7383 = vmax.f32 %v7319, 0.0
    %v7384 = vmax.f32 %v7320, 0.0
    %v7385 = vmax.f32 %v7321, 0.0
    %v7386 = vmax.f32 %v7322, 0.0
    %v7387 = vmax.f32 %v7323, 0.0
    %v7388 = vmax.f32 %v7324, 0.0
    %v7389 = vmax.f32 %v7325, 0.0
    %v7390 = vmax.f32 %v7326, 0.0
    %v7391 = vmax.f32 %v7327, 0.0
    %v7392 = vmax.f32 %v7328, 0.0
    %v7393 = vmax.f32 %v7329, 0.0
    %v7394 = vmax.f32 %v7330, 0.0
    %v7395 = vmax.f32 %v7331, 0.0
    %v7396 = vmax.f32 %v7332, 0.0
    %v7397 = vmax.f32 %v7333, 0.0
    %v7398 = vmax.f32 %v7334, 0.0
    %7399 = vst [vmem:[#allocation7] sm:$0xff] %v7017
    %7400 = vst [vmem:[#allocation7 + $0x8] sm:$0xff] %v7020
    %7401 = vst [vmem:[#allocation7 + $0x10] sm:$0xff] %v7025
    %7402 = vst [vmem:[#allocation7 + $0x18] sm:$0xff] %v7028
    %7403 = vst [vmem:[#allocation7 + $0x20] sm:$0xff] %v7033
    %7404 = vst [vmem:[#allocation7 + $0x28] sm:$0xff] %v7036
    %7405 = vst [vmem:[#allocation7 + $0x30] sm:$0xff] %v7041
    %7406 = vst [vmem:[#allocation7 + $0x38] sm:$0xff] %v7044
    %7407 = vst [vmem:[#allocation7 + $0x40] sm:$0xff] %v7049
    %7408 = vst [vmem:[#allocation7 + $0x48] sm:$0xff] %v7052
    %7409 = vst [vmem:[#allocation7 + $0x50] sm:$0xff] %v7057
    %7410 = vst [vmem:[#allocation7 + $0x58] sm:$0xff] %v7060
    %7411 = vst [vmem:[#allocation7 + $0x60] sm:$0xff] %v7065
    %7412 = vst [vmem:[#allocation7 + $0x68] sm:$0xff] %v7068
    %7413 = vst [vmem:[#allocation7 + $0x70] sm:$0xff] %v7073
    %7414 = vst [vmem:[#allocation7 + $0x78] sm:$0xff] %v7076
    %7415 = vst [vmem:[#allocation7 + $0x80] sm:$0xff] %v7081
    %7416 = vst [vmem:[#allocation7 + $0x88] sm:$0xff] %v7084
    %7417 = vst [vmem:[#allocation7 + $0x90] sm:$0xff] %v7089
    %7418 = vst [vmem:[#allocation7 + $0x98] sm:$0xff] %v7092
    %7419 = vst [vmem:[#allocation7 + $0xa0] sm:$0xff] %v7097
    %7420 = vst [vmem:[#allocation7 + $0xa8] sm:$0xff] %v7100
    %7421 = vst [vmem:[#allocation7 + $0xb0] sm:$0xff] %v7105
    %7422 = vst [vmem:[#allocation7 + $0xb8] sm:$0xff] %v7108
    %7423 = vst [vmem:[#allocation7 + $0xc0] sm:$0xff] %v7113
    %7424 = vst [vmem:[#allocation7 + $0xc8] sm:$0xff] %v7116
    %7425 = vst [vmem:[#allocation7 + $0xd0] sm:$0xff] %v7121
    %7426 = vst [vmem:[#allocation7 + $0xd8] sm:$0xff] %v7124
    %7427 = vst [vmem:[#allocation7 + $0xe0] sm:$0xff] %v7129
    %7428 = vst [vmem:[#allocation7 + $0xe8] sm:$0xff] %v7132
    %7429 = vst [vmem:[#allocation7 + $0xf0] sm:$0xff] %v7137
    %7430 = vst [vmem:[#allocation7 + $0xf8] sm:$0xff] %v7140
    %7431 = vst [vmem:[#allocation7 + $0x100] sm:$0xff] %v7145
    %7432 = vst [vmem:[#allocation7 + $0x108] sm:$0xff] %v7148
    %7433 = vst [vmem:[#allocation7 + $0x110] sm:$0xff] %v7153
    %7434 = vst [vmem:[#allocation7 + $0x118] sm:$0xff] %v7156
    %7435 = vst [vmem:[#allocation7 + $0x120] sm:$0xff] %v7161
    %7436 = vst [vmem:[#allocation7 + $0x128] sm:$0xff] %v7164
    %7437 = vst [vmem:[#allocation7 + $0x130] sm:$0xff] %v7169
    %7438 = vst [vmem:[#allocation7 + $0x138] sm:$0xff] %v7172
    %7439 = vst [vmem:[#allocation7 + $0x140] sm:$0xff] %v7177
    %7440 = vst [vmem:[#allocation7 + $0x148] sm:$0xff] %v7180
    %7441 = vst [vmem:[#allocation7 + $0x150] sm:$0xff] %v7185
    %7442 = vst [vmem:[#allocation7 + $0x158] sm:$0xff] %v7188
    %7443 = vst [vmem:[#allocation7 + $0x160] sm:$0xff] %v7193
    %7444 = vst [vmem:[#allocation7 + $0x168] sm:$0xff] %v7196
    %7445 = vst [vmem:[#allocation7 + $0x170] sm:$0xff] %v7201
    %7446 = vst [vmem:[#allocation7 + $0x178] sm:$0xff] %v7204
    %7447 = vst [vmem:[#allocation7 + $0x180] sm:$0xff] %v7209
    %7448 = vst [vmem:[#allocation7 + $0x188] sm:$0xff] %v7212
    %7449 = vst [vmem:[#allocation7 + $0x190] sm:$0xff] %v7217
    %7450 = vst [vmem:[#allocation7 + $0x198] sm:$0xff] %v7220
    %7451 = vst [vmem:[#allocation7 + $0x1a0] sm:$0xff] %v7225
    %7452 = vst [vmem:[#allocation7 + $0x1a8] sm:$0xff] %v7228
    %7453 = vst [vmem:[#allocation7 + $0x1b0] sm:$0xff] %v7233
    %7454 = vst [vmem:[#allocation7 + $0x1b8] sm:$0xff] %v7236
    %7455 = vst [vmem:[#allocation7 + $0x1c0] sm:$0xff] %v7241
    %7456 = vst [vmem:[#allocation7 + $0x1c8] sm:$0xff] %v7244
    %7457 = vst [vmem:[#allocation7 + $0x1d0] sm:$0xff] %v7249
    %7458 = vst [vmem:[#allocation7 + $0x1d8] sm:$0xff] %v7252
    %7459 = vst [vmem:[#allocation7 + $0x1e0] sm:$0xff] %v7257
    %7460 = vst [vmem:[#allocation7 + $0x1e8] sm:$0xff] %v7260
    %7461 = vst [vmem:[#allocation7 + $0x1f0] sm:$0xff] %v7265
    %7462 = vst [vmem:[#allocation7 + $0x1f8] sm:$0xff] %v7268
    %7463 = vst [vmem:[#allocation6] sm:$0xff] %v7335
    %7464 = vst [vmem:[#allocation6 + $0x8] sm:$0xff] %v7336
    %7465 = vst [vmem:[#allocation6 + $0x10] sm:$0xff] %v7337
    %7466 = vst [vmem:[#allocation6 + $0x18] sm:$0xff] %v7338
    %7467 = vst [vmem:[#allocation6 + $0x20] sm:$0xff] %v7339
    %7468 = vst [vmem:[#allocation6 + $0x28] sm:$0xff] %v7340
    %7469 = vst [vmem:[#allocation6 + $0x30] sm:$0xff] %v7341
    %7470 = vst [vmem:[#allocation6 + $0x38] sm:$0xff] %v7342
    %7471 = vst [vmem:[#allocation6 + $0x40] sm:$0xff] %v7343
    %7472 = vst [vmem:[#allocation6 + $0x48] sm:$0xff] %v7344
    %7473 = vst [vmem:[#allocation6 + $0x50] sm:$0xff] %v7345
    %7474 = vst [vmem:[#allocation6 + $0x58] sm:$0xff] %v7346
    %7475 = vst [vmem:[#allocation6 + $0x60] sm:$0xff] %v7347
    %7476 = vst [vmem:[#allocation6 + $0x68] sm:$0xff] %v7348
    %7477 = vst [vmem:[#allocation6 + $0x70] sm:$0xff] %v7349
    %7478 = vst [vmem:[#allocation6 + $0x78] sm:$0xff] %v7350
    %7479 = vst [vmem:[#allocation6 + $0x80] sm:$0xff] %v7351
    %7480 = vst [vmem:[#allocation6 + $0x88] sm:$0xff] %v7352
    %7481 = vst [vmem:[#allocation6 + $0x90] sm:$0xff] %v7353
    %7482 = vst [vmem:[#allocation6 + $0x98] sm:$0xff] %v7354
    %7483 = vst [vmem:[#allocation6 + $0xa0] sm:$0xff] %v7355
    %7484 = vst [vmem:[#allocation6 + $0xa8] sm:$0xff] %v7356
    %7485 = vst [vmem:[#allocation6 + $0xb0] sm:$0xff] %v7357
    %7486 = vst [vmem:[#allocation6 + $0xb8] sm:$0xff] %v7358
    %7487 = vst [vmem:[#allocation6 + $0xc0] sm:$0xff] %v7359
    %7488 = vst [vmem:[#allocation6 + $0xc8] sm:$0xff] %v7360
    %7489 = vst [vmem:[#allocation6 + $0xd0] sm:$0xff] %v7361
    %7490 = vst [vmem:[#allocation6 + $0xd8] sm:$0xff] %v7362
    %7491 = vst [vmem:[#allocation6 + $0xe0] sm:$0xff] %v7363
    %7492 = vst [vmem:[#allocation6 + $0xe8] sm:$0xff] %v7364
    %7493 = vst [vmem:[#allocation6 + $0xf0] sm:$0xff] %v7365
    %7494 = vst [vmem:[#allocation6 + $0xf8] sm:$0xff] %v7366
    %7495 = vst [vmem:[#allocation6 + $0x100] sm:$0xff] %v7367
    %7496 = vst [vmem:[#allocation6 + $0x108] sm:$0xff] %v7368
    %7497 = vst [vmem:[#allocation6 + $0x110] sm:$0xff] %v7369
    %7498 = vst [vmem:[#allocation6 + $0x118] sm:$0xff] %v7370
    %7499 = vst [vmem:[#allocation6 + $0x120] sm:$0xff] %v7371
    %7500 = vst [vmem:[#allocation6 + $0x128] sm:$0xff] %v7372
    %7501 = vst [vmem:[#allocation6 + $0x130] sm:$0xff] %v7373
    %7502 = vst [vmem:[#allocation6 + $0x138] sm:$0xff] %v7374
    %7503 = vst [vmem:[#allocation6 + $0x140] sm:$0xff] %v7375
    %7504 = vst [vmem:[#allocation6 + $0x148] sm:$0xff] %v7376
    %7505 = vst [vmem:[#allocation6 + $0x150] sm:$0xff] %v7377
    %7506 = vst [vmem:[#allocation6 + $0x158] sm:$0xff] %v7378
    %7507 = vst [vmem:[#allocation6 + $0x160] sm:$0xff] %v7379
    %7508 = vst [vmem:[#allocation6 + $0x168] sm:$0xff] %v7380
    %7509 = vst [vmem:[#allocation6 + $0x170] sm:$0xff] %v7381
    %7510 = vst [vmem:[#allocation6 + $0x178] sm:$0xff] %v7382
    %7511 = vst [vmem:[#allocation6 + $0x180] sm:$0xff] %v7383
    %7512 = vst [vmem:[#allocation6 + $0x188] sm:$0xff] %v7384
    %7513 = vst [vmem:[#allocation6 + $0x190] sm:$0xff] %v7385
    %7514 = vst [vmem:[#allocation6 + $0x198] sm:$0xff] %v7386
    %7515 = vst [vmem:[#allocation6 + $0x1a0] sm:$0xff] %v7387
    %7516 = vst [vmem:[#allocation6 + $0x1a8] sm:$0xff] %v7388
    %7517 = vst [vmem:[#allocation6 + $0x1b0] sm:$0xff] %v7389
    %7518 = vst [vmem:[#allocation6 + $0x1b8] sm:$0xff] %v7390
    %7519 = vst [vmem:[#allocation6 + $0x1c0] sm:$0xff] %v7391
    %7520 = vst [vmem:[#allocation6 + $0x1c8] sm:$0xff] %v7392
    %7521 = vst [vmem:[#allocation6 + $0x1d0] sm:$0xff] %v7393
    %7522 = vst [vmem:[#allocation6 + $0x1d8] sm:$0xff] %v7394
    %7523 = vst [vmem:[#allocation6 + $0x1e0] sm:$0xff] %v7395
    %7524 = vst [vmem:[#allocation6 + $0x1e8] sm:$0xff] %v7396
    %7525 = vst [vmem:[#allocation6 + $0x1f0] sm:$0xff] %v7397
    %7526 = vst [vmem:[#allocation6 + $0x1f8] sm:$0xff] %v7398
    // Predicated region
    $region34: #{bottleneck1_forward.1} parent=1 // pred_check
      _
    $region35: #{bottleneck1_forward.1} parent=1 // pred_check_branch
      %7528 = sbr.rel (0) target = $region37
    $region36: #{bottleneck1_forward.1} parent=1 // pred_region
      %s7530 = ssub.s32 8192, 8192
      %7531 = vsyncadd [#allocation5], %s7530
      %s7532 = sshll.u32 [#allocation6], 4
      %s7533 = int_to_ptr.vmem [resolvable:$true] %s7532
      %7538 = dma.vmem_to_hbm [thread:$0]  %s7533, 8192, %s7, [#allocation5], 128, 128, 8
    $region37: #{bottleneck1_forward.1} parent=1 // pred_fallthru
      _
    // Predicated region
    $region38: #{bottleneck1_forward.1} parent=1 // pred_check
      _
    $region39: #{bottleneck1_forward.1} parent=1 // pred_check_branch
      %7540 = sbr.rel (0) target = $region41
    $region40: #{bottleneck1_forward.1} parent=1 // pred_region
      %s7542 = ssub.s32 8192, 8192
      %7543 = vsyncadd [#allocation8], %s7542
      %s7544 = sshll.u32 [#allocation7], 4
      %s7545 = int_to_ptr.vmem [resolvable:$true] %s7544
      %7550 = dma.vmem_to_hbm [thread:$0]  %s7545, 8192, %s8, [#allocation8], 128, 128, 8
    $region41: #{bottleneck1_forward.1} parent=1 // pred_fallthru
      _
    // Predicated region
    $region42: #{bottleneck1_forward.1} parent=1 // pred_check
      _
    $region43: #{bottleneck1_forward.1} parent=1 // pred_check_branch
      %7552 = sbr.rel (0) target = $region45
    $region44: #{bottleneck1_forward.1} parent=1 // pred_region
      %7553 = dma.done [#allocation5], 8192
    $region45: #{bottleneck1_forward.1} parent=1 // pred_fallthru
      _
    // Predicated region
    $region46: #{bottleneck1_forward.1} parent=1 // pred_check
      _
    $region47: #{bottleneck1_forward.1} parent=1 // pred_check_branch
      %7555 = sbr.rel (0) target = $region49
    $region48: #{bottleneck1_forward.1} parent=1 // pred_region
      %7556 = dma.done [#allocation8], 8192
    $region49: #{bottleneck1_forward.1} parent=1 // pred_fallthru
      _
    %7557 = vsyncpa [#allocation4], 1
    %7558 = vsyncpa [#allocation5], 1
    %7559 = vsyncpa [#allocation8], 1

</llo_original>
